<compile_context>
chip_gen: v5e
topology: v5e:2x2
jax: 0.10.0
libtpu: 0.0.40
codegen_flags: <defaults>
</compile_context>

<pallas_src>
import math

import jax
import jax.numpy as jnp
from jax.experimental import pallas as pl
from jax.experimental.pallas import tpu as pltpu


def get_padding(kernel_size: int, dilation: int = 1) -> int:
    return int((kernel_size * dilation - dilation) / 2)


def _round_up(a: int, m: int) -> int:
    return ((a + m - 1) // m) * m


# ---------------------------------------------------------------------------
# Fused dilated Conv1d kernel:
#   out = [lrelu]( sum_k lrelu?(x)[t + k*d] @ W[k] + b [+ residual] )
# ---------------------------------------------------------------------------
def _make_conv_kernel(K, dilation, tm, act_in, act_out, has_res):
    def kernel(*refs):
        if has_res:
            x0_ref, x1_ref, w_ref, b_ref, r_ref, o_ref, xcat_ref = refs
        else:
            x0_ref, x1_ref, w_ref, b_ref, o_ref, xcat_ref = refs
            r_ref = None

        def prep(v):
            v = v.astype(jnp.float32)
            if act_in:
                v = jnp.where(v >= 0.0, v, 0.1 * v)     # leaky_relu(0.1) fused
            return v

        # Fill the halo scratch: [current tile | next tile]  (covers all taps).
        xcat_ref[0:tm, :] = prep(x0_ref[0])
        xcat_ref[tm:2 * tm, :] = prep(x1_ref[0])

        cout = o_ref.shape[-1]
        acc = jnp.zeros((tm, cout), jnp.float32)
        for k in range(K):                               # static unroll over taps
            off = k * dilation
            xk = xcat_ref[off:off + tm, :].astype(jnp.bfloat16)
            acc = acc + jnp.dot(xk, w_ref[k],
                                preferred_element_type=jnp.float32)
        acc = acc + b_ref[...]
        if has_res:
            acc = acc + r_ref[0].astype(jnp.float32)     # ResBlock skip fused
        if act_out:
            acc = jnp.where(acc >= 0.0, acc, 0.1 * acc)  # leaky_relu(0.1) fused
        o_ref[0] = acc.astype(o_ref.dtype)

    return kernel


def conv1d_fused(x, w_kio, bias, *, dilation=1, padding=0,
                 act_in=False, act_out=False, residual=None,
                 out_dtype=jnp.bfloat16, tm_max=128):
    """Stride-1 dilated Conv1d.  x: (B, T, Cin), w_kio: (K, Cin, Cout)."""
    B, T, Cin = x.shape
    K, Cin2, Cout = w_kio.shape
    assert Cin == Cin2
    halo = (K - 1) * dilation
    Tout = T + 2 * padding - halo
    assert Tout > 0

    tm = min(tm_max, _round_up(Tout, 16))
    tm = max(tm, _round_up(max(halo, 1), 16))            # window fits in 2 tiles
    jt = (Tout + tm - 1) // tm
    t_alloc = (jt + 1) * tm                               # block j+1 stays in bounds

    xp = jnp.pad(x.astype(jnp.bfloat16),
                 ((0, 0), (padding, t_alloc - padding - T), (0, 0)))
    wb = w_kio.astype(jnp.bfloat16)
    b2 = bias.reshape(1, Cout).astype(jnp.float32)

    in_specs = [
        pl.BlockSpec((1, tm, Cin), lambda b, j: (b, j, 0)),        # x tile
        pl.BlockSpec((1, tm, Cin), lambda b, j: (b, j + 1, 0)),    # halo tile
        pl.BlockSpec((K, Cin, Cout), lambda b, j: (0, 0, 0)),      # resident W
        pl.BlockSpec((1, Cout), lambda b, j: (0, 0)),              # resident bias
    ]
    args = [xp, xp, wb, b2]
    if residual is not None:
        rp = jnp.pad(residual.astype(jnp.bfloat16),
                     ((0, 0), (0, jt * tm - residual.shape[1]), (0, 0)))
        in_specs.append(pl.BlockSpec((1, tm, Cout), lambda b, j: (b, j, 0)))
        args.append(rp)

    out = pl.pallas_call(
        _make_conv_kernel(K, dilation, tm, act_in, act_out, residual is not None),
        out_shape=jax.ShapeDtypeStruct((B, jt * tm, Cout), out_dtype),
        grid=(B, jt),
        in_specs=in_specs,
        out_specs=pl.BlockSpec((1, tm, Cout), lambda b, j: (b, j, 0)),
        scratch_shapes=[pltpu.VMEM((2 * tm, Cin), jnp.float32)],
        compiler_params=pltpu.CompilerParams(
            dimension_semantics=("parallel", "parallel")),
    )(*args)
    return out[:, :Tout, :]


def conv_transpose1d_fused(x, w_torch, bias, *, stride, padding, act_out=False):
    """ConvTranspose1d via zero-stuffing + regular conv with the flipped kernel.
    w_torch: (Cin, Cout, K) PyTorch ConvTranspose1d layout."""
    B, T, Cin = x.shape
    Cin2, Cout, K = w_torch.shape
    assert Cin == Cin2
    # TODO(synk): a polyphase (sub-pixel) decomposition would avoid the
    # stride-factor zero-multiplications of this zero-stuffing formulation.
    if stride > 1:
        z = jnp.concatenate(
            [x[:, :, None, :],
             jnp.zeros((B, T, stride - 1, Cin), x.dtype)], axis=2)
        z = z.reshape(B, T * stride, Cin)
    else:
        z = x
    w_kio = jnp.transpose(jnp.flip(w_torch, axis=-1), (2, 0, 1))   # (K,Cin,Cout)
    out = conv1d_fused(z, w_kio, bias, dilation=1, padding=K - 1 - padding,
                       act_out=act_out)
    out_len = (T - 1) * stride - 2 * padding + K
    return out[:, :out_len, :]


# ---------------------------------------------------------------------------
# conv_post (Cout = 1) + final leaky_relu + tanh: lane-dense VPU reduction
# (keeps the degenerate N=1 matmul off the MXU; output last dim = time tile).
# ---------------------------------------------------------------------------
def _make_post_kernel(K, tm):
    def kernel(x0_ref, x1_ref, w_ref, b_ref, o_ref, xcat_ref):
        def prep(v):
            v = v.astype(jnp.float32)
            return jnp.where(v >= 0.0, v, 0.1 * v)        # final leaky_relu fused

        xcat_ref[:, 0:tm, :] = prep(x0_ref[...])
        xcat_ref[:, tm:2 * tm, :] = prep(x1_ref[...])

        bsz, _, cin = x0_ref.shape
        acc = jnp.zeros((bsz, tm, cin), jnp.float32)
        for k in range(K):                                # VPU multiply-add taps
            acc = acc + xcat_ref[:, k:k + tm, :] * w_ref[k]
        val = acc.sum(axis=-1) + b_ref[...]               # lane reduce -> (B, tm)
        o_ref[...] = jnp.tanh(val).astype(o_ref.dtype)    # EUP tanh, lane-dense

    return kernel


def conv_post_fused(x, w_torch, bias, *, padding):
    """x: (B, T, Cin), w_torch: (1, Cin, K) PyTorch Conv1d layout, bias: (1,)."""
    B, T, Cin = x.shape
    _, Cin2, K = w_torch.shape
    assert Cin == Cin2
    halo = K - 1
    Tout = T + 2 * padding - halo
    if Tout <= 128:
        tm = max(_round_up(Tout, 16), _round_up(halo, 16))
    else:
        tm = 128                                          # lane-dense output tiles
    jt = (Tout + tm - 1) // tm
    t_alloc = (jt + 1) * tm

    xp = jnp.pad(x.astype(jnp.bfloat16),
                 ((0, 0), (padding, t_alloc - padding - T), (0, 0)))
    w = jnp.transpose(w_torch[0], (1, 0)).reshape(K, 1, Cin).astype(jnp.float32)
    b2 = bias.reshape(1, 1).astype(jnp.float32)

    out = pl.pallas_call(
        _make_post_kernel(K, tm),
        out_shape=jax.ShapeDtypeStruct((B, jt * tm), jnp.float32),
        grid=(jt,),
        in_specs=[
            pl.BlockSpec((B, tm, Cin), lambda j: (0, j, 0)),
            pl.BlockSpec((B, tm, Cin), lambda j: (0, j + 1, 0)),
            pl.BlockSpec((K, 1, Cin), lambda j: (0, 0, 0)),
            pl.BlockSpec((1, 1), lambda j: (0, 0)),
        ],
        out_specs=pl.BlockSpec((B, tm), lambda j: (0, j)),
        scratch_shapes=[pltpu.VMEM((B, 2 * tm, Cin), jnp.float32)],
        compiler_params=pltpu.CompilerParams(
            dimension_semantics=("parallel",)),
    )(xp, xp, w, b2)
    return out[:, :Tout]


# ---------------------------------------------------------------------------
# Module forward
# ---------------------------------------------------------------------------
def resblock_forward(x, convs, kernel_size, dilations):
    """ResBlock: for each dilation: x = conv2(lrelu(conv1(lrelu(x)))) + x."""
    for ((w1, b1), (w2, b2)), dil in zip(convs, dilations):
        t = conv1d_fused(x, w1, b1, dilation=dil,
                         padding=get_padding(kernel_size, dil),
                         act_in=True, act_out=True)
        x = conv1d_fused(t, w2, b2, dilation=1,
                         padding=get_padding(kernel_size, 1),
                         residual=x)
    return x


def soft_hifigan_generator_forward(soft_units, params, config):
    """soft_units: (B, S, soft_unit_dim) -> audio: (B, 1, S * prod(rates))."""
    # Soft-unit embedding == K=1 conv (channels-last, so no transpose needed).
    emb_w = params["embedding"][None, :, :]               # (1, U, E)
    h = conv1d_fused(soft_units, emb_w,
                     jnp.zeros((emb_w.shape[-1],), jnp.float32))
    # conv_pre (K=7, pad=3) with the following leaky_relu fused in.
    w, b = params["conv_pre"]
    h = conv1d_fused(h, w, b, padding=3, act_out=True)

    nk = len(config["resblock_kernel_sizes"])
    for i, (rate, kern) in enumerate(zip(config["upsample_rates"],
                                         config["upsample_kernel_sizes"])):
        w, b = params["ups"][i]
        h = conv_transpose1d_fused(h, w, b, stride=rate,
                                   padding=(kern - rate) // 2, act_out=True)
        xs = None
        for j in range(nk):
            idx = i * nk + j
            r = resblock_forward(h, params["resblocks"][idx],
                                 config["resblock_kernel_sizes"][j],
                                 config["resblock_dilation_sizes"][j])
            xs = r if xs is None else xs + r
        h = (xs.astype(jnp.float32) / nk).astype(jnp.bfloat16)

    # final leaky_relu + conv_post + tanh, fused in the lane-dense VPU kernel
    w, b = params["conv_post"]
    audio = conv_post_fused(h, w, b, padding=3)
    return audio[:, None, :]


# ---------------------------------------------------------------------------
# Deterministic synthetic parameters (PyTorch layouts, converted at build time).
# TODO(synk): weight_norm reparameterization is not modeled; forward uses the
#             effective (already-folded) weights directly.
# ---------------------------------------------------------------------------
def init_params(key, config):
    U, E = config["soft_unit_dim"], config["embedding_dim"]
    upc = config["upsample_initial_channel"]
    keys = iter(jax.random.split(key, 256))

    def conv_w(cout, cin, k):
        # PyTorch Conv1d layout (Cout, Cin, K) -> kernel layout (K, Cin, Cout)
        w = jax.random.normal(next(keys), (cout, cin, k), jnp.float32) * 0.01
        return jnp.transpose(w, (2, 1, 0))

    def bias(c):
        return jax.random.normal(next(keys), (c,), jnp.float32) * 0.01

    params = {"embedding": jax.random.normal(next(keys), (U, E), jnp.float32) * 0.1,
              "conv_pre": (conv_w(upc, E, 7), bias(upc)),
              "ups": [], "resblocks": []}

    ch = upc
    for i, (rate, kern) in enumerate(zip(config["upsample_rates"],
                                         config["upsample_kernel_sizes"])):
        cin, cout = upc // (2 ** i), upc // (2 ** (i + 1))
        # PyTorch ConvTranspose1d layout (Cin, Cout, K)
        w = jax.random.normal(next(keys), (cin, cout, kern), jnp.float32) * 0.01
        params["ups"].append((w, bias(cout)))
        ch = cout

    for i in range(len(config["upsample_rates"])):
        c = upc // (2 ** (i + 1))
        for ks, dils in zip(config["resblock_kernel_sizes"],
                            config["resblock_dilation_sizes"]):
            convs = []
            for _dil in dils:
                convs.append(((conv_w(c, c, ks), bias(c)),
                              (conv_w(c, c, ks), bias(c))))
            params["resblocks"].append(convs)

    # conv_post kept in PyTorch layout (1, Cin, K); the VPU kernel converts it.
    w_post = jax.random.normal(next(keys), (1, ch, 7), jnp.float32) * 0.01
    params["conv_post"] = (w_post, bias(1))
    return params


if __name__ == "__main__":
    config = {
        "soft_unit_dim": 128,
        "embedding_dim": 64,
        "upsample_initial_channel": 64,
        "upsample_rates": (2, 2),
        "upsample_kernel_sizes": (4, 4),
        "resblock_kernel_sizes": (3,),
        "resblock_dilation_sizes": ((1, 3),),
    }

    key = jax.random.PRNGKey(0)
    k_param, k_x = jax.random.split(key)
    B, S = 2, 16
    soft_units = jax.nn.softmax(
        jax.random.normal(k_x, (B, S, config["soft_unit_dim"]), jnp.float32),
        axis=-1)
    params = init_params(k_param, config)

    @jax.jit
    def fwd(units, p):
        return soft_hifigan_generator_forward(units, p, config)

    audio = jax.block_until_ready(fwd(soft_units, params))

    expected_len = S * math.prod(config["upsample_rates"])
    assert audio.shape == (B, 1, expected_len), audio.shape
    assert bool(jnp.all(jnp.isfinite(audio)))
    assert bool(jnp.max(jnp.abs(audio)) <= 1.0 + 1e-3)   # tanh output range
    print("KERNEL_OK")
</pallas_src>

<mosaic_0001>
module attributes {stable_mosaic.version = 11 : i64} {
  func.func @kernel(%arg0: i32, %arg1: i32, %arg2: memref<1x16x128xbf16, #tpu.memory_space<vmem>>, %arg3: memref<1x16x128xbf16, #tpu.memory_space<vmem>>, %arg4: memref<1x128x64xbf16, #tpu.memory_space<vmem>>, %arg5: memref<1x64xf32, #tpu.memory_space<vmem>>, %arg6: memref<1x16x64xbf16, #tpu.memory_space<vmem>>, %arg7: memref<32x128xf32, #tpu.memory_space<vmem>>) attributes {dimension_semantics = [#tpu.dimension_semantics<parallel>, #tpu.dimension_semantics<parallel>], iteration_bounds = array<i64: 2, 1>, scalar_prefetch = 0 : i64, scratch_operands = 1 : i64, tpu.core_type = #tpu.core_type<tc>, window_params = [{transform_indices = @transform_0, window_bounds = array<i64: 1, 16, 128>}, {transform_indices = @transform_1, window_bounds = array<i64: 1, 16, 128>}, {pipeline_mode = #tpu.pipeline_mode<synchronous>, transform_indices = @transform_2, window_bounds = array<i64: 1, 128, 64>}, {pipeline_mode = #tpu.pipeline_mode<synchronous>, transform_indices = @transform_3, window_bounds = array<i64: 1, 64>}, {transform_indices = @transform_4, window_bounds = array<i64: 1, 16, 64>}]} {
    %c0 = arith.constant 0 : index
    %c0_0 = arith.constant 0 : index
    %c0_1 = arith.constant 0 : index
    %0 = vector.load %arg2[%c0, %c0_0, %c0_1] : memref<1x16x128xbf16, #tpu.memory_space<vmem>>, vector<1x16x128xbf16>
    %1 = vector.shape_cast %0 : vector<1x16x128xbf16> to vector<16x128xbf16>
    %2 = arith.extf %1 : vector<16x128xbf16> to vector<16x128xf32>
    %c0_2 = arith.constant 0 : index
    %c0_3 = arith.constant 0 : index
    %3 = vector.load %arg7[%c0_2, %c0_3] : memref<32x128xf32, #tpu.memory_space<vmem>>, vector<16x128xf32>
    tpu.vector_store %arg7[%c0_2, %c0_3], %2 {strides = array<i32>} : memref<32x128xf32, #tpu.memory_space<vmem>>, vector<16x128xf32>,
    %c0_4 = arith.constant 0 : index
    %c0_5 = arith.constant 0 : index
    %c0_6 = arith.constant 0 : index
    %4 = vector.load %arg3[%c0_4, %c0_5, %c0_6] : memref<1x16x128xbf16, #tpu.memory_space<vmem>>, vector<1x16x128xbf16>
    %5 = vector.shape_cast %4 : vector<1x16x128xbf16> to vector<16x128xbf16>
    %6 = arith.extf %5 : vector<16x128xbf16> to vector<16x128xf32>
    %c16 = arith.constant 16 : index
    %c0_7 = arith.constant 0 : index
    %7 = vector.load %arg7[%c16, %c0_7] : memref<32x128xf32, #tpu.memory_space<vmem>>, vector<16x128xf32>
    tpu.vector_store %arg7[%c16, %c0_7], %6 {strides = array<i32>} : memref<32x128xf32, #tpu.memory_space<vmem>>, vector<16x128xf32>,
    %cst = arith.constant 0.000000e+00 : f32
    %8 = vector.broadcast %cst : f32 to vector<16x64xf32>
    %c0_8 = arith.constant 0 : index
    %c0_9 = arith.constant 0 : index
    %9 = vector.load %arg7[%c0_8, %c0_9] : memref<32x128xf32, #tpu.memory_space<vmem>>, vector<16x128xf32>
    %10 = arith.truncf %9 : vector<16x128xf32> to vector<16x128xbf16>
    %c0_10 = arith.constant 0 : index
    %c0_11 = arith.constant 0 : index
    %c0_12 = arith.constant 0 : index
    %11 = vector.load %arg4[%c0_10, %c0_11, %c0_12] : memref<1x128x64xbf16, #tpu.memory_space<vmem>>, vector<1x128x64xbf16>
    %12 = vector.shape_cast %11 : vector<1x128x64xbf16> to vector<128x64xbf16>
    %cst_13 = arith.constant dense<0.000000e+00> : vector<16x64xf32>
    %13 = tpu.matmul %10, %12, %cst_13 {dimension_numbers = #tpu.dot_dimension_numbers<[1], [0], [0], [1], [0, 0, 1, 1], [], []>} : vector<16x128xbf16>, vector<128x64xbf16>, vector<16x64xf32> -> vector<16x64xf32>
    %14 = arith.addf %8, %13 : vector<16x64xf32>
    %c0_14 = arith.constant 0 : index
    %c0_15 = arith.constant 0 : index
    %15 = vector.load %arg5[%c0_14, %c0_15] : memref<1x64xf32, #tpu.memory_space<vmem>>, vector<1x64xf32>
    %16 = vector.broadcast %15 : vector<1x64xf32> to vector<16x64xf32>
    %17 = arith.addf %14, %16 : vector<16x64xf32>
    %18 = arith.truncf %17 : vector<16x64xf32> to vector<16x64xbf16>
    %c0_16 = arith.constant 0 : index
    %c0_17 = arith.constant 0 : index
    %c0_18 = arith.constant 0 : index
    %19 = vector.load %arg6[%c0_16, %c0_17, %c0_18] : memref<1x16x64xbf16, #tpu.memory_space<vmem>>, vector<1x16x64xbf16>
    %20 = vector.shape_cast %19 : vector<1x16x64xbf16> to vector<16x64xbf16>
    %21 = vector.shape_cast %18 : vector<16x64xbf16> to vector<1x16x64xbf16>
    tpu.vector_store %arg6[%c0_16, %c0_17, %c0_18], %21 {strides = array<i32>} : memref<1x16x64xbf16, #tpu.memory_space<vmem>>, vector<1x16x64xbf16>,
    return
  }
  func.func @transform_0(%arg0: i32, %arg1: i32) -> (i32, i32, i32) {
    %c0_i32 = arith.constant 0 : i32
    %c0_i32_0 = arith.constant 0 : i32
    return %arg0, %arg1, %c0_i32 : i32, i32, i32
  }
  func.func @transform_1(%arg0: i32, %arg1: i32) -> (i32, i32, i32) {
    %c1_i32 = arith.constant 1 : i32
    %0 = arith.addi %arg1, %c1_i32 : i32
    %c0_i32 = arith.constant 0 : i32
    %c0_i32_0 = arith.constant 0 : i32
    return %arg0, %0, %c0_i32 : i32, i32, i32
  }
  func.func @transform_2(%arg0: i32, %arg1: i32) -> (i32, i32, i32) {
    %c0_i32 = arith.constant 0 : i32
    %c0_i32_0 = arith.constant 0 : i32
    %c0_i32_1 = arith.constant 0 : i32
    %c0_i32_2 = arith.constant 0 : i32
    return %c0_i32, %c0_i32_0, %c0_i32_1 : i32, i32, i32
  }
  func.func @transform_3(%arg0: i32, %arg1: i32) -> (i32, i32) {
    %c0_i32 = arith.constant 0 : i32
    %c0_i32_0 = arith.constant 0 : i32
    %c0_i32_1 = arith.constant 0 : i32
    return %c0_i32, %c0_i32_0 : i32, i32
  }
  func.func @transform_4(%arg0: i32, %arg1: i32) -> (i32, i32, i32) {
    %c0_i32 = arith.constant 0 : i32
    %c0_i32_0 = arith.constant 0 : i32
    return %arg0, %arg1, %c0_i32 : i32, i32, i32
  }
}

module attributes {stable_mosaic.version = 11 : i64} {
  func.func @kernel(%arg0: i32, %arg1: i32, %arg2: memref<1x16x64xbf16, #tpu.memory_space<vmem>>, %arg3: memref<1x16x64xbf16, #tpu.memory_space<vmem>>, %arg4: memref<7x64x64xbf16, #tpu.memory_space<vmem>>, %arg5: memref<1x64xf32, #tpu.memory_space<vmem>>, %arg6: memref<1x16x64xbf16, #tpu.memory_space<vmem>>, %arg7: memref<32x64xf32, #tpu.memory_space<vmem>>) attributes {dimension_semantics = [#tpu.dimension_semantics<parallel>, #tpu.dimension_semantics<parallel>], iteration_bounds = array<i64: 2, 1>, scalar_prefetch = 0 : i64, scratch_operands = 1 : i64, tpu.core_type = #tpu.core_type<tc>, window_params = [{transform_indices = @transform_0, window_bounds = array<i64: 1, 16, 64>}, {transform_indices = @transform_1, window_bounds = array<i64: 1, 16, 64>}, {pipeline_mode = #tpu.pipeline_mode<synchronous>, transform_indices = @transform_2, window_bounds = array<i64: 7, 64, 64>}, {pipeline_mode = #tpu.pipeline_mode<synchronous>, transform_indices = @transform_3, window_bounds = array<i64: 1, 64>}, {transform_indices = @transform_4, window_bounds = array<i64: 1, 16, 64>}]} {
    %c0 = arith.constant 0 : index
    %c0_0 = arith.constant 0 : index
    %c0_1 = arith.constant 0 : index
    %0 = vector.load %arg2[%c0, %c0_0, %c0_1] : memref<1x16x64xbf16, #tpu.memory_space<vmem>>, vector<1x16x64xbf16>
    %1 = vector.shape_cast %0 : vector<1x16x64xbf16> to vector<16x64xbf16>
    %2 = arith.extf %1 : vector<16x64xbf16> to vector<16x64xf32>
    %c0_2 = arith.constant 0 : index
    %c0_3 = arith.constant 0 : index
    %3 = vector.load %arg7[%c0_2, %c0_3] : memref<32x64xf32, #tpu.memory_space<vmem>>, vector<16x64xf32>
    tpu.vector_store %arg7[%c0_2, %c0_3], %2 {strides = array<i32>} : memref<32x64xf32, #tpu.memory_space<vmem>>, vector<16x64xf32>,
    %c0_4 = arith.constant 0 : index
    %c0_5 = arith.constant 0 : index
    %c0_6 = arith.constant 0 : index
    %4 = vector.load %arg3[%c0_4, %c0_5, %c0_6] : memref<1x16x64xbf16, #tpu.memory_space<vmem>>, vector<1x16x64xbf16>
    %5 = vector.shape_cast %4 : vector<1x16x64xbf16> to vector<16x64xbf16>
    %6 = arith.extf %5 : vector<16x64xbf16> to vector<16x64xf32>
    %c16 = arith.constant 16 : index
    %c0_7 = arith.constant 0 : index
    %7 = vector.load %arg7[%c16, %c0_7] : memref<32x64xf32, #tpu.memory_space<vmem>>, vector<16x64xf32>
    tpu.vector_store %arg7[%c16, %c0_7], %6 {strides = array<i32>} : memref<32x64xf32, #tpu.memory_space<vmem>>, vector<16x64xf32>,
    %cst = arith.constant 0.000000e+00 : f32
    %8 = vector.broadcast %cst : f32 to vector<16x64xf32>
    %c0_8 = arith.constant 0 : index
    %c0_9 = arith.constant 0 : index
    %9 = vector.load %arg7[%c0_8, %c0_9] : memref<32x64xf32, #tpu.memory_space<vmem>>, vector<16x64xf32>
    %10 = arith.truncf %9 : vector<16x64xf32> to vector<16x64xbf16>
    %c0_10 = arith.constant 0 : index
    %c0_11 = arith.constant 0 : index
    %c0_12 = arith.constant 0 : index
    %11 = vector.load %arg4[%c0_10, %c0_11, %c0_12] : memref<7x64x64xbf16, #tpu.memory_space<vmem>>, vector<1x64x64xbf16>
    %12 = vector.shape_cast %11 : vector<1x64x64xbf16> to vector<64x64xbf16>
    %cst_13 = arith.constant dense<0.000000e+00> : vector<16x64xf32>
    %13 = tpu.matmul %10, %12, %cst_13 {dimension_numbers = #tpu.dot_dimension_numbers<[1], [0], [0], [1], [0, 0, 1, 1], [], []>} : vector<16x64xbf16>, vector<64x64xbf16>, vector<16x64xf32> -> vector<16x64xf32>
    %14 = arith.addf %8, %13 : vector<16x64xf32>
    %c1 = arith.constant 1 : index
    %c0_14 = arith.constant 0 : index
    %15 = vector.load %arg7[%c1, %c0_14] : memref<32x64xf32, #tpu.memory_space<vmem>>, vector<16x64xf32>
    %16 = arith.truncf %15 : vector<16x64xf32> to vector<16x64xbf16>
    %c1_15 = arith.constant 1 : index
    %c0_16 = arith.constant 0 : index
    %c0_17 = arith.constant 0 : index
    %17 = vector.load %arg4[%c1_15, %c0_16, %c0_17] : memref<7x64x64xbf16, #tpu.memory_space<vmem>>, vector<1x64x64xbf16>
    %18 = vector.shape_cast %17 : vector<1x64x64xbf16> to vector<64x64xbf16>
    %cst_18 = arith.constant dense<0.000000e+00> : vector<16x64xf32>
    %19 = tpu.matmul %16, %18, %cst_18 {dimension_numbers = #tpu.dot_dimension_numbers<[1], [0], [0], [1], [0, 0, 1, 1], [], []>} : vector<16x64xbf16>, vector<64x64xbf16>, vector<16x64xf32> -> vector<16x64xf32>
    %20 = arith.addf %14, %19 : vector<16x64xf32>
    %c2 = arith.constant 2 : index
    %c0_19 = arith.constant 0 : index
    %21 = vector.load %arg7[%c2, %c0_19] : memref<32x64xf32, #tpu.memory_space<vmem>>, vector<16x64xf32>
    %22 = arith.truncf %21 : vector<16x64xf32> to vector<16x64xbf16>
    %c2_20 = arith.constant 2 : index
    %c0_21 = arith.constant 0 : index
    %c0_22 = arith.constant 0 : index
    %23 = vector.load %arg4[%c2_20, %c0_21, %c0_22] : memref<7x64x64xbf16, #tpu.memory_space<vmem>>, vector<1x64x64xbf16>
    %24 = vector.shape_cast %23 : vector<1x64x64xbf16> to vector<64x64xbf16>
    %cst_23 = arith.constant dense<0.000000e+00> : vector<16x64xf32>
    %25 = tpu.matmul %22, %24, %cst_23 {dimension_numbers = #tpu.dot_dimension_numbers<[1], [0], [0], [1], [0, 0, 1, 1], [], []>} : vector<16x64xbf16>, vector<64x64xbf16>, vector<16x64xf32> -> vector<16x64xf32>
    %26 = arith.addf %20, %25 : vector<16x64xf32>
    %c3 = arith.constant 3 : index
    %c0_24 = arith.constant 0 : index
    %27 = vector.load %arg7[%c3, %c0_24] : memref<32x64xf32, #tpu.memory_space<vmem>>, vector<16x64xf32>
    %28 = arith.truncf %27 : vector<16x64xf32> to vector<16x64xbf16>
    %c3_25 = arith.constant 3 : index
    %c0_26 = arith.constant 0 : index
    %c0_27 = arith.constant 0 : index
    %29 = vector.load %arg4[%c3_25, %c0_26, %c0_27] : memref<7x64x64xbf16, #tpu.memory_space<vmem>>, vector<1x64x64xbf16>
    %30 = vector.shape_cast %29 : vector<1x64x64xbf16> to vector<64x64xbf16>
    %cst_28 = arith.constant dense<0.000000e+00> : vector<16x64xf32>
    %31 = tpu.matmul %28, %30, %cst_28 {dimension_numbers = #tpu.dot_dimension_numbers<[1], [0], [0], [1], [0, 0, 1, 1], [], []>} : vector<16x64xbf16>, vector<64x64xbf16>, vector<16x64xf32> -> vector<16x64xf32>
    %32 = arith.addf %26, %31 : vector<16x64xf32>
    %c4 = arith.constant 4 : index
    %c0_29 = arith.constant 0 : index
    %33 = vector.load %arg7[%c4, %c0_29] : memref<32x64xf32, #tpu.memory_space<vmem>>, vector<16x64xf32>
    %34 = arith.truncf %33 : vector<16x64xf32> to vector<16x64xbf16>
    %c4_30 = arith.constant 4 : index
    %c0_31 = arith.constant 0 : index
    %c0_32 = arith.constant 0 : index
    %35 = vector.load %arg4[%c4_30, %c0_31, %c0_32] : memref<7x64x64xbf16, #tpu.memory_space<vmem>>, vector<1x64x64xbf16>
    %36 = vector.shape_cast %35 : vector<1x64x64xbf16> to vector<64x64xbf16>
    %cst_33 = arith.constant dense<0.000000e+00> : vector<16x64xf32>
    %37 = tpu.matmul %34, %36, %cst_33 {dimension_numbers = #tpu.dot_dimension_numbers<[1], [0], [0], [1], [0, 0, 1, 1], [], []>} : vector<16x64xbf16>, vector<64x64xbf16>, vector<16x64xf32> -> vector<16x64xf32>
    %38 = arith.addf %32, %37 : vector<16x64xf32>
    %c5 = arith.constant 5 : index
    %c0_34 = arith.constant 0 : index
    %39 = vector.load %arg7[%c5, %c0_34] : memref<32x64xf32, #tpu.memory_space<vmem>>, vector<16x64xf32>
    %40 = arith.truncf %39 : vector<16x64xf32> to vector<16x64xbf16>
    %c5_35 = arith.constant 5 : index
    %c0_36 = arith.constant 0 : index
    %c0_37 = arith.constant 0 : index
    %41 = vector.load %arg4[%c5_35, %c0_36, %c0_37] : memref<7x64x64xbf16, #tpu.memory_space<vmem>>, vector<1x64x64xbf16>
    %42 = vector.shape_cast %41 : vector<1x64x64xbf16> to vector<64x64xbf16>
    %cst_38 = arith.constant dense<0.000000e+00> : vector<16x64xf32>
    %43 = tpu.matmul %40, %42, %cst_38 {dimension_numbers = #tpu.dot_dimension_numbers<[1], [0], [0], [1], [0, 0, 1, 1], [], []>} : vector<16x64xbf16>, vector<64x64xbf16>, vector<16x64xf32> -> vector<16x64xf32>
    %44 = arith.addf %38, %43 : vector<16x64xf32>
    %c6 = arith.constant 6 : index
    %c0_39 = arith.constant 0 : index
    %45 = vector.load %arg7[%c6, %c0_39] : memref<32x64xf32, #tpu.memory_space<vmem>>, vector<16x64xf32>
    %46 = arith.truncf %45 : vector<16x64xf32> to vector<16x64xbf16>
    %c6_40 = arith.constant 6 : index
    %c0_41 = arith.constant 0 : index
    %c0_42 = arith.constant 0 : index
    %47 = vector.load %arg4[%c6_40, %c0_41, %c0_42] : memref<7x64x64xbf16, #tpu.memory_space<vmem>>, vector<1x64x64xbf16>
    %48 = vector.shape_cast %47 : vector<1x64x64xbf16> to vector<64x64xbf16>
    %cst_43 = arith.constant dense<0.000000e+00> : vector<16x64xf32>
    %49 = tpu.matmul %46, %48, %cst_43 {dimension_numbers = #tpu.dot_dimension_numbers<[1], [0], [0], [1], [0, 0, 1, 1], [], []>} : vector<16x64xbf16>, vector<64x64xbf16>, vector<16x64xf32> -> vector<16x64xf32>
    %50 = arith.addf %44, %49 : vector<16x64xf32>
    %c0_44 = arith.constant 0 : index
    %c0_45 = arith.constant 0 : index
    %51 = vector.load %arg5[%c0_44, %c0_45] : memref<1x64xf32, #tpu.memory_space<vmem>>, vector<1x64xf32>
    %52 = vector.broadcast %51 : vector<1x64xf32> to vector<16x64xf32>
    %53 = arith.addf %50, %52 : vector<16x64xf32>
    %cst_46 = arith.constant 0.000000e+00 : f32
    %54 = vector.broadcast %cst_46 : f32 to vector<16x64xf32>
    %55 = arith.cmpf oge, %53, %54 : vector<16x64xf32>
    %cst_47 = arith.constant 1.000000e-01 : f32
    %56 = vector.broadcast %cst_47 : f32 to vector<16x64xf32>
    %57 = arith.mulf %56, %53 : vector<16x64xf32>
    %58 = arith.select %55, %53, %57 : vector<16x64xi1>, vector<16x64xf32>
    %59 = arith.truncf %58 : vector<16x64xf32> to vector<16x64xbf16>
    %c0_48 = arith.constant 0 : index
    %c0_49 = arith.constant 0 : index
    %c0_50 = arith.constant 0 : index
    %60 = vector.load %arg6[%c0_48, %c0_49, %c0_50] : memref<1x16x64xbf16, #tpu.memory_space<vmem>>, vector<1x16x64xbf16>
    %61 = vector.shape_cast %60 : vector<1x16x64xbf16> to vector<16x64xbf16>
    %62 = vector.shape_cast %59 : vector<16x64xbf16> to vector<1x16x64xbf16>
    tpu.vector_store %arg6[%c0_48, %c0_49, %c0_50], %62 {strides = array<i32>} : memref<1x16x64xbf16, #tpu.memory_space<vmem>>, vector<1x16x64xbf16>,
    return
  }
  func.func @transform_0(%arg0: i32, %arg1: i32) -> (i32, i32, i32) {
    %c0_i32 = arith.constant 0 : i32
    %c0_i32_0 = arith.constant 0 : i32
    return %arg0, %arg1, %c0_i32 : i32, i32, i32
  }
  func.func @transform_1(%arg0: i32, %arg1: i32) -> (i32, i32, i32) {
    %c1_i32 = arith.constant 1 : i32
    %0 = arith.addi %arg1, %c1_i32 : i32
    %c0_i32 = arith.constant 0 : i32
    %c0_i32_0 = arith.constant 0 : i32
    return %arg0, %0, %c0_i32 : i32, i32, i32
  }
  func.func @transform_2(%arg0: i32, %arg1: i32) -> (i32, i32, i32) {
    %c0_i32 = arith.constant 0 : i32
    %c0_i32_0 = arith.constant 0 : i32
    %c0_i32_1 = arith.constant 0 : i32
    %c0_i32_2 = arith.constant 0 : i32
    return %c0_i32, %c0_i32_0, %c0_i32_1 : i32, i32, i32
  }
  func.func @transform_3(%arg0: i32, %arg1: i32) -> (i32, i32) {
    %c0_i32 = arith.constant 0 : i32
    %c0_i32_0 = arith.constant 0 : i32
    %c0_i32_1 = arith.constant 0 : i32
    return %c0_i32, %c0_i32_0 : i32, i32
  }
  func.func @transform_4(%arg0: i32, %arg1: i32) -> (i32, i32, i32) {
    %c0_i32 = arith.constant 0 : i32
    %c0_i32_0 = arith.constant 0 : i32
    return %arg0, %arg1, %c0_i32 : i32, i32, i32
  }
}

module attributes {stable_mosaic.version = 11 : i64} {
  func.func @kernel(%arg0: i32, %arg1: i32, %arg2: memref<1x48x64xbf16, #tpu.memory_space<vmem>>, %arg3: memref<1x48x64xbf16, #tpu.memory_space<vmem>>, %arg4: memref<4x64x32xbf16, #tpu.memory_space<vmem>>, %arg5: memref<1x32xf32, #tpu.memory_space<vmem>>, %arg6: memref<1x48x32xbf16, #tpu.memory_space<vmem>>, %arg7: memref<96x64xf32, #tpu.memory_space<vmem>>) attributes {dimension_semantics = [#tpu.dimension_semantics<parallel>, #tpu.dimension_semantics<parallel>], iteration_bounds = array<i64: 2, 1>, scalar_prefetch = 0 : i64, scratch_operands = 1 : i64, tpu.core_type = #tpu.core_type<tc>, window_params = [{transform_indices = @transform_0, window_bounds = array<i64: 1, 48, 64>}, {transform_indices = @transform_1, window_bounds = array<i64: 1, 48, 64>}, {pipeline_mode = #tpu.pipeline_mode<synchronous>, transform_indices = @transform_2, window_bounds = array<i64: 4, 64, 32>}, {pipeline_mode = #tpu.pipeline_mode<synchronous>, transform_indices = @transform_3, window_bounds = array<i64: 1, 32>}, {transform_indices = @transform_4, window_bounds = array<i64: 1, 48, 32>}]} {
    %c0 = arith.constant 0 : index
    %c0_0 = arith.constant 0 : index
    %c0_1 = arith.constant 0 : index
    %0 = vector.load %arg2[%c0, %c0_0, %c0_1] : memref<1x48x64xbf16, #tpu.memory_space<vmem>>, vector<1x48x64xbf16>
    %1 = vector.shape_cast %0 : vector<1x48x64xbf16> to vector<48x64xbf16>
    %2 = arith.extf %1 : vector<48x64xbf16> to vector<48x64xf32>
    %c0_2 = arith.constant 0 : index
    %c0_3 = arith.constant 0 : index
    %3 = vector.load %arg7[%c0_2, %c0_3] : memref<96x64xf32, #tpu.memory_space<vmem>>, vector<48x64xf32>
    tpu.vector_store %arg7[%c0_2, %c0_3], %2 {strides = array<i32>} : memref<96x64xf32, #tpu.memory_space<vmem>>, vector<48x64xf32>,
    %c0_4 = arith.constant 0 : index
    %c0_5 = arith.constant 0 : index
    %c0_6 = arith.constant 0 : index
    %4 = vector.load %arg3[%c0_4, %c0_5, %c0_6] : memref<1x48x64xbf16, #tpu.memory_space<vmem>>, vector<1x48x64xbf16>
    %5 = vector.shape_cast %4 : vector<1x48x64xbf16> to vector<48x64xbf16>
    %6 = arith.extf %5 : vector<48x64xbf16> to vector<48x64xf32>
    %c48 = arith.constant 48 : index
    %c0_7 = arith.constant 0 : index
    %7 = vector.load %arg7[%c48, %c0_7] : memref<96x64xf32, #tpu.memory_space<vmem>>, vector<48x64xf32>
    tpu.vector_store %arg7[%c48, %c0_7], %6 {strides = array<i32>} : memref<96x64xf32, #tpu.memory_space<vmem>>, vector<48x64xf32>,
    %cst = arith.constant 0.000000e+00 : f32
    %8 = vector.broadcast %cst : f32 to vector<48x32xf32>
    %c0_8 = arith.constant 0 : index
    %c0_9 = arith.constant 0 : index
    %9 = vector.load %arg7[%c0_8, %c0_9] : memref<96x64xf32, #tpu.memory_space<vmem>>, vector<48x64xf32>
    %10 = arith.truncf %9 : vector<48x64xf32> to vector<48x64xbf16>
    %c0_10 = arith.constant 0 : index
    %c0_11 = arith.constant 0 : index
    %c0_12 = arith.constant 0 : index
    %11 = vector.load %arg4[%c0_10, %c0_11, %c0_12] : memref<4x64x32xbf16, #tpu.memory_space<vmem>>, vector<1x64x32xbf16>
    %12 = vector.shape_cast %11 : vector<1x64x32xbf16> to vector<64x32xbf16>
    %cst_13 = arith.constant dense<0.000000e+00> : vector<48x32xf32>
    %13 = tpu.matmul %10, %12, %cst_13 {dimension_numbers = #tpu.dot_dimension_numbers<[1], [0], [0], [1], [0, 0, 1, 1], [], []>} : vector<48x64xbf16>, vector<64x32xbf16>, vector<48x32xf32> -> vector<48x32xf32>
    %14 = arith.addf %8, %13 : vector<48x32xf32>
    %c1 = arith.constant 1 : index
    %c0_14 = arith.constant 0 : index
    %15 = vector.load %arg7[%c1, %c0_14] : memref<96x64xf32, #tpu.memory_space<vmem>>, vector<48x64xf32>
    %16 = arith.truncf %15 : vector<48x64xf32> to vector<48x64xbf16>
    %c1_15 = arith.constant 1 : index
    %c0_16 = arith.constant 0 : index
    %c0_17 = arith.constant 0 : index
    %17 = vector.load %arg4[%c1_15, %c0_16, %c0_17] : memref<4x64x32xbf16, #tpu.memory_space<vmem>>, vector<1x64x32xbf16>
    %18 = vector.shape_cast %17 : vector<1x64x32xbf16> to vector<64x32xbf16>
    %cst_18 = arith.constant dense<0.000000e+00> : vector<48x32xf32>
    %19 = tpu.matmul %16, %18, %cst_18 {dimension_numbers = #tpu.dot_dimension_numbers<[1], [0], [0], [1], [0, 0, 1, 1], [], []>} : vector<48x64xbf16>, vector<64x32xbf16>, vector<48x32xf32> -> vector<48x32xf32>
    %20 = arith.addf %14, %19 : vector<48x32xf32>
    %c2 = arith.constant 2 : index
    %c0_19 = arith.constant 0 : index
    %21 = vector.load %arg7[%c2, %c0_19] : memref<96x64xf32, #tpu.memory_space<vmem>>, vector<48x64xf32>
    %22 = arith.truncf %21 : vector<48x64xf32> to vector<48x64xbf16>
    %c2_20 = arith.constant 2 : index
    %c0_21 = arith.constant 0 : index
    %c0_22 = arith.constant 0 : index
    %23 = vector.load %arg4[%c2_20, %c0_21, %c0_22] : memref<4x64x32xbf16, #tpu.memory_space<vmem>>, vector<1x64x32xbf16>
    %24 = vector.shape_cast %23 : vector<1x64x32xbf16> to vector<64x32xbf16>
    %cst_23 = arith.constant dense<0.000000e+00> : vector<48x32xf32>
    %25 = tpu.matmul %22, %24, %cst_23 {dimension_numbers = #tpu.dot_dimension_numbers<[1], [0], [0], [1], [0, 0, 1, 1], [], []>} : vector<48x64xbf16>, vector<64x32xbf16>, vector<48x32xf32> -> vector<48x32xf32>
    %26 = arith.addf %20, %25 : vector<48x32xf32>
    %c3 = arith.constant 3 : index
    %c0_24 = arith.constant 0 : index
    %27 = vector.load %arg7[%c3, %c0_24] : memref<96x64xf32, #tpu.memory_space<vmem>>, vector<48x64xf32>
    %28 = arith.truncf %27 : vector<48x64xf32> to vector<48x64xbf16>
    %c3_25 = arith.constant 3 : index
    %c0_26 = arith.constant 0 : index
    %c0_27 = arith.constant 0 : index
    %29 = vector.load %arg4[%c3_25, %c0_26, %c0_27] : memref<4x64x32xbf16, #tpu.memory_space<vmem>>, vector<1x64x32xbf16>
    %30 = vector.shape_cast %29 : vector<1x64x32xbf16> to vector<64x32xbf16>
    %cst_28 = arith.constant dense<0.000000e+00> : vector<48x32xf32>
    %31 = tpu.matmul %28, %30, %cst_28 {dimension_numbers = #tpu.dot_dimension_numbers<[1], [0], [0], [1], [0, 0, 1, 1], [], []>} : vector<48x64xbf16>, vector<64x32xbf16>, vector<48x32xf32> -> vector<48x32xf32>
    %32 = arith.addf %26, %31 : vector<48x32xf32>
    %c0_29 = arith.constant 0 : index
    %c0_30 = arith.constant 0 : index
    %33 = vector.load %arg5[%c0_29, %c0_30] : memref<1x32xf32, #tpu.memory_space<vmem>>, vector<1x32xf32>
    %34 = vector.broadcast %33 : vector<1x32xf32> to vector<48x32xf32>
    %35 = arith.addf %32, %34 : vector<48x32xf32>
    %cst_31 = arith.constant 0.000000e+00 : f32
    %36 = vector.broadcast %cst_31 : f32 to vector<48x32xf32>
    %37 = arith.cmpf oge, %35, %36 : vector<48x32xf32>
    %cst_32 = arith.constant 1.000000e-01 : f32
    %38 = vector.broadcast %cst_32 : f32 to vector<48x32xf32>
    %39 = arith.mulf %38, %35 : vector<48x32xf32>
    %40 = arith.select %37, %35, %39 : vector<48x32xi1>, vector<48x32xf32>
    %41 = arith.truncf %40 : vector<48x32xf32> to vector<48x32xbf16>
    %c0_33 = arith.constant 0 : index
    %c0_34 = arith.constant 0 : index
    %c0_35 = arith.constant 0 : index
    %42 = vector.load %arg6[%c0_33, %c0_34, %c0_35] : memref<1x48x32xbf16, #tpu.memory_space<vmem>>, vector<1x48x32xbf16>
    %43 = vector.shape_cast %42 : vector<1x48x32xbf16> to vector<48x32xbf16>
    %44 = vector.shape_cast %41 : vector<48x32xbf16> to vector<1x48x32xbf16>
    tpu.vector_store %arg6[%c0_33, %c0_34, %c0_35], %44 {strides = array<i32>} : memref<1x48x32xbf16, #tpu.memory_space<vmem>>, vector<1x48x32xbf16>,
    return
  }
  func.func @transform_0(%arg0: i32, %arg1: i32) -> (i32, i32, i32) {
    %c0_i32 = arith.constant 0 : i32
    %c0_i32_0 = arith.constant 0 : i32
    return %arg0, %arg1, %c0_i32 : i32, i32, i32
  }
  func.func @transform_1(%arg0: i32, %arg1: i32) -> (i32, i32, i32) {
    %c1_i32 = arith.constant 1 : i32
    %0 = arith.addi %arg1, %c1_i32 : i32
    %c0_i32 = arith.constant 0 : i32
    %c0_i32_0 = arith.constant 0 : i32
    return %arg0, %0, %c0_i32 : i32, i32, i32
  }
  func.func @transform_2(%arg0: i32, %arg1: i32) -> (i32, i32, i32) {
    %c0_i32 = arith.constant 0 : i32
    %c0_i32_0 = arith.constant 0 : i32
    %c0_i32_1 = arith.constant 0 : i32
    %c0_i32_2 = arith.constant 0 : i32
    return %c0_i32, %c0_i32_0, %c0_i32_1 : i32, i32, i32
  }
  func.func @transform_3(%arg0: i32, %arg1: i32) -> (i32, i32) {
    %c0_i32 = arith.constant 0 : i32
    %c0_i32_0 = arith.constant 0 : i32
    %c0_i32_1 = arith.constant 0 : i32
    return %c0_i32, %c0_i32_0 : i32, i32
  }
  func.func @transform_4(%arg0: i32, %arg1: i32) -> (i32, i32, i32) {
    %c0_i32 = arith.constant 0 : i32
    %c0_i32_0 = arith.constant 0 : i32
    return %arg0, %arg1, %c0_i32 : i32, i32, i32
  }
}

module attributes {stable_mosaic.version = 11 : i64} {
  func.func @kernel(%arg0: i32, %arg1: i32, %arg2: memref<1x32x32xbf16, #tpu.memory_space<vmem>>, %arg3: memref<1x32x32xbf16, #tpu.memory_space<vmem>>, %arg4: memref<3x32x32xbf16, #tpu.memory_space<vmem>>, %arg5: memref<1x32xf32, #tpu.memory_space<vmem>>, %arg6: memref<1x32x32xbf16, #tpu.memory_space<vmem>>, %arg7: memref<1x32x32xbf16, #tpu.memory_space<vmem>>, %arg8: memref<64x32xf32, #tpu.memory_space<vmem>>) attributes {dimension_semantics = [#tpu.dimension_semantics<parallel>, #tpu.dimension_semantics<parallel>], iteration_bounds = array<i64: 2, 1>, scalar_prefetch = 0 : i64, scratch_operands = 1 : i64, tpu.core_type = #tpu.core_type<tc>, window_params = [{transform_indices = @transform_0, window_bounds = array<i64: 1, 32, 32>}, {transform_indices = @transform_1, window_bounds = array<i64: 1, 32, 32>}, {pipeline_mode = #tpu.pipeline_mode<synchronous>, transform_indices = @transform_2, window_bounds = array<i64: 3, 32, 32>}, {pipeline_mode = #tpu.pipeline_mode<synchronous>, transform_indices = @transform_3, window_bounds = array<i64: 1, 32>}, {transform_indices = @transform_4, window_bounds = array<i64: 1, 32, 32>}, {transform_indices = @transform_5, window_bounds = array<i64: 1, 32, 32>}]} {
    %c0 = arith.constant 0 : index
    %c0_0 = arith.constant 0 : index
    %c0_1 = arith.constant 0 : index
    %0 = vector.load %arg2[%c0, %c0_0, %c0_1] : memref<1x32x32xbf16, #tpu.memory_space<vmem>>, vector<1x32x32xbf16>
    %1 = vector.shape_cast %0 : vector<1x32x32xbf16> to vector<32x32xbf16>
    %2 = arith.extf %1 : vector<32x32xbf16> to vector<32x32xf32>
    %c0_2 = arith.constant 0 : index
    %c0_3 = arith.constant 0 : index
    %3 = vector.load %arg8[%c0_2, %c0_3] : memref<64x32xf32, #tpu.memory_space<vmem>>, vector<32x32xf32>
    tpu.vector_store %arg8[%c0_2, %c0_3], %2 {strides = array<i32>} : memref<64x32xf32, #tpu.memory_space<vmem>>, vector<32x32xf32>,
    %c0_4 = arith.constant 0 : index
    %c0_5 = arith.constant 0 : index
    %c0_6 = arith.constant 0 : index
    %4 = vector.load %arg3[%c0_4, %c0_5, %c0_6] : memref<1x32x32xbf16, #tpu.memory_space<vmem>>, vector<1x32x32xbf16>
    %5 = vector.shape_cast %4 : vector<1x32x32xbf16> to vector<32x32xbf16>
    %6 = arith.extf %5 : vector<32x32xbf16> to vector<32x32xf32>
    %c32 = arith.constant 32 : index
    %c0_7 = arith.constant 0 : index
    %7 = vector.load %arg8[%c32, %c0_7] : memref<64x32xf32, #tpu.memory_space<vmem>>, vector<32x32xf32>
    tpu.vector_store %arg8[%c32, %c0_7], %6 {strides = array<i32>} : memref<64x32xf32, #tpu.memory_space<vmem>>, vector<32x32xf32>,
    %cst = arith.constant 0.000000e+00 : f32
    %8 = vector.broadcast %cst : f32 to vector<32x32xf32>
    %c0_8 = arith.constant 0 : index
    %c0_9 = arith.constant 0 : index
    %9 = vector.load %arg8[%c0_8, %c0_9] : memref<64x32xf32, #tpu.memory_space<vmem>>, vector<32x32xf32>
    %10 = arith.truncf %9 : vector<32x32xf32> to vector<32x32xbf16>
    %c0_10 = arith.constant 0 : index
    %c0_11 = arith.constant 0 : index
    %c0_12 = arith.constant 0 : index
    %11 = vector.load %arg4[%c0_10, %c0_11, %c0_12] : memref<3x32x32xbf16, #tpu.memory_space<vmem>>, vector<1x32x32xbf16>
    %12 = vector.shape_cast %11 : vector<1x32x32xbf16> to vector<32x32xbf16>
    %cst_13 = arith.constant dense<0.000000e+00> : vector<32x32xf32>
    %13 = tpu.matmul %10, %12, %cst_13 {dimension_numbers = #tpu.dot_dimension_numbers<[1], [0], [0], [1], [0, 0, 1, 1], [], []>} : vector<32x32xbf16>, vector<32x32xbf16>, vector<32x32xf32> -> vector<32x32xf32>
    %14 = arith.addf %8, %13 : vector<32x32xf32>
    %c1 = arith.constant 1 : index
    %c0_14 = arith.constant 0 : index
    %15 = vector.load %arg8[%c1, %c0_14] : memref<64x32xf32, #tpu.memory_space<vmem>>, vector<32x32xf32>
    %16 = arith.truncf %15 : vector<32x32xf32> to vector<32x32xbf16>
    %c1_15 = arith.constant 1 : index
    %c0_16 = arith.constant 0 : index
    %c0_17 = arith.constant 0 : index
    %17 = vector.load %arg4[%c1_15, %c0_16, %c0_17] : memref<3x32x32xbf16, #tpu.memory_space<vmem>>, vector<1x32x32xbf16>
    %18 = vector.shape_cast %17 : vector<1x32x32xbf16> to vector<32x32xbf16>
    %cst_18 = arith.constant dense<0.000000e+00> : vector<32x32xf32>
    %19 = tpu.matmul %16, %18, %cst_18 {dimension_numbers = #tpu.dot_dimension_numbers<[1], [0], [0], [1], [0, 0, 1, 1], [], []>} : vector<32x32xbf16>, vector<32x32xbf16>, vector<32x32xf32> -> vector<32x32xf32>
    %20 = arith.addf %14, %19 : vector<32x32xf32>
    %c2 = arith.constant 2 : index
    %c0_19 = arith.constant 0 : index
    %21 = vector.load %arg8[%c2, %c0_19] : memref<64x32xf32, #tpu.memory_space<vmem>>, vector<32x32xf32>
    %22 = arith.truncf %21 : vector<32x32xf32> to vector<32x32xbf16>
    %c2_20 = arith.constant 2 : index
    %c0_21 = arith.constant 0 : index
    %c0_22 = arith.constant 0 : index
    %23 = vector.load %arg4[%c2_20, %c0_21, %c0_22] : memref<3x32x32xbf16, #tpu.memory_space<vmem>>, vector<1x32x32xbf16>
    %24 = vector.shape_cast %23 : vector<1x32x32xbf16> to vector<32x32xbf16>
    %cst_23 = arith.constant dense<0.000000e+00> : vector<32x32xf32>
    %25 = tpu.matmul %22, %24, %cst_23 {dimension_numbers = #tpu.dot_dimension_numbers<[1], [0], [0], [1], [0, 0, 1, 1], [], []>} : vector<32x32xbf16>, vector<32x32xbf16>, vector<32x32xf32> -> vector<32x32xf32>
    %26 = arith.addf %20, %25 : vector<32x32xf32>
    %c0_24 = arith.constant 0 : index
    %c0_25 = arith.constant 0 : index
    %27 = vector.load %arg5[%c0_24, %c0_25] : memref<1x32xf32, #tpu.memory_space<vmem>>, vector<1x32xf32>
    %28 = vector.broadcast %27 : vector<1x32xf32> to vector<32x32xf32>
    %29 = arith.addf %26, %28 : vector<32x32xf32>
    %c0_26 = arith.constant 0 : index
    %c0_27 = arith.constant 0 : index
    %c0_28 = arith.constant 0 : index
    %30 = vector.load %arg6[%c0_26, %c0_27, %c0_28] : memref<1x32x32xbf16, #tpu.memory_space<vmem>>, vector<1x32x32xbf16>
    %31 = vector.shape_cast %30 : vector<1x32x32xbf16> to vector<32x32xbf16>
    %32 = arith.extf %31 : vector<32x32xbf16> to vector<32x32xf32>
    %33 = arith.addf %29, %32 : vector<32x32xf32>
    %34 = arith.truncf %33 : vector<32x32xf32> to vector<32x32xbf16>
    %c0_29 = arith.constant 0 : index
    %c0_30 = arith.constant 0 : index
    %c0_31 = arith.constant 0 : index
    %35 = vector.load %arg7[%c0_29, %c0_30, %c0_31] : memref<1x32x32xbf16, #tpu.memory_space<vmem>>, vector<1x32x32xbf16>
    %36 = vector.shape_cast %35 : vector<1x32x32xbf16> to vector<32x32xbf16>
    %37 = vector.shape_cast %34 : vector<32x32xbf16> to vector<1x32x32xbf16>
    tpu.vector_store %arg7[%c0_29, %c0_30, %c0_31], %37 {strides = array<i32>} : memref<1x32x32xbf16, #tpu.memory_space<vmem>>, vector<1x32x32xbf16>,
    return
  }
  func.func @transform_0(%arg0: i32, %arg1: i32) -> (i32, i32, i32) {
    %c0_i32 = arith.constant 0 : i32
    %c0_i32_0 = arith.constant 0 : i32
    return %arg0, %arg1, %c0_i32 : i32, i32, i32
  }
  func.func @transform_1(%arg0: i32, %arg1: i32) -> (i32, i32, i32) {
    %c1_i32 = arith.constant 1 : i32
    %0 = arith.addi %arg1, %c1_i32 : i32
    %c0_i32 = arith.constant 0 : i32
    %c0_i32_0 = arith.constant 0 : i32
    return %arg0, %0, %c0_i32 : i32, i32, i32
  }
  func.func @transform_2(%arg0: i32, %arg1: i32) -> (i32, i32, i32) {
    %c0_i32 = arith.constant 0 : i32
    %c0_i32_0 = arith.constant 0 : i32
    %c0_i32_1 = arith.constant 0 : i32
    %c0_i32_2 = arith.constant 0 : i32
    return %c0_i32, %c0_i32_0, %c0_i32_1 : i32, i32, i32
  }
  func.func @transform_3(%arg0: i32, %arg1: i32) -> (i32, i32) {
    %c0_i32 = arith.constant 0 : i32
    %c0_i32_0 = arith.constant 0 : i32
    %c0_i32_1 = arith.constant 0 : i32
    return %c0_i32, %c0_i32_0 : i32, i32
  }
  func.func @transform_4(%arg0: i32, %arg1: i32) -> (i32, i32, i32) {
    %c0_i32 = arith.constant 0 : i32
    %c0_i32_0 = arith.constant 0 : i32
    return %arg0, %arg1, %c0_i32 : i32, i32, i32
  }
  func.func @transform_5(%arg0: i32, %arg1: i32) -> (i32, i32, i32) {
    %c0_i32 = arith.constant 0 : i32
    %c0_i32_0 = arith.constant 0 : i32
    return %arg0, %arg1, %c0_i32 : i32, i32, i32
  }
}

module attributes {stable_mosaic.version = 11 : i64} {
  func.func @kernel(%arg0: i32, %arg1: i32, %arg2: memref<1x32x32xbf16, #tpu.memory_space<vmem>>, %arg3: memref<1x32x32xbf16, #tpu.memory_space<vmem>>, %arg4: memref<3x32x32xbf16, #tpu.memory_space<vmem>>, %arg5: memref<1x32xf32, #tpu.memory_space<vmem>>, %arg6: memref<1x32x32xbf16, #tpu.memory_space<vmem>>, %arg7: memref<64x32xf32, #tpu.memory_space<vmem>>) attributes {dimension_semantics = [#tpu.dimension_semantics<parallel>, #tpu.dimension_semantics<parallel>], iteration_bounds = array<i64: 2, 1>, scalar_prefetch = 0 : i64, scratch_operands = 1 : i64, tpu.core_type = #tpu.core_type<tc>, window_params = [{transform_indices = @transform_0, window_bounds = array<i64: 1, 32, 32>}, {transform_indices = @transform_1, window_bounds = array<i64: 1, 32, 32>}, {pipeline_mode = #tpu.pipeline_mode<synchronous>, transform_indices = @transform_2, window_bounds = array<i64: 3, 32, 32>}, {pipeline_mode = #tpu.pipeline_mode<synchronous>, transform_indices = @transform_3, window_bounds = array<i64: 1, 32>}, {transform_indices = @transform_4, window_bounds = array<i64: 1, 32, 32>}]} {
    %c0 = arith.constant 0 : index
    %c0_0 = arith.constant 0 : index
    %c0_1 = arith.constant 0 : index
    %0 = vector.load %arg2[%c0, %c0_0, %c0_1] : memref<1x32x32xbf16, #tpu.memory_space<vmem>>, vector<1x32x32xbf16>
    %1 = vector.shape_cast %0 : vector<1x32x32xbf16> to vector<32x32xbf16>
    %2 = arith.extf %1 : vector<32x32xbf16> to vector<32x32xf32>
    %cst = arith.constant 0.000000e+00 : f32
    %3 = vector.broadcast %cst : f32 to vector<32x32xf32>
    %4 = arith.cmpf oge, %2, %3 : vector<32x32xf32>
    %cst_2 = arith.constant 1.000000e-01 : f32
    %5 = vector.broadcast %cst_2 : f32 to vector<32x32xf32>
    %6 = arith.mulf %5, %2 : vector<32x32xf32>
    %7 = arith.select %4, %2, %6 : vector<32x32xi1>, vector<32x32xf32>
    %c0_3 = arith.constant 0 : index
    %c0_4 = arith.constant 0 : index
    %8 = vector.load %arg7[%c0_3, %c0_4] : memref<64x32xf32, #tpu.memory_space<vmem>>, vector<32x32xf32>
    tpu.vector_store %arg7[%c0_3, %c0_4], %7 {strides = array<i32>} : memref<64x32xf32, #tpu.memory_space<vmem>>, vector<32x32xf32>,
    %c0_5 = arith.constant 0 : index
    %c0_6 = arith.constant 0 : index
    %c0_7 = arith.constant 0 : index
    %9 = vector.load %arg3[%c0_5, %c0_6, %c0_7] : memref<1x32x32xbf16, #tpu.memory_space<vmem>>, vector<1x32x32xbf16>
    %10 = vector.shape_cast %9 : vector<1x32x32xbf16> to vector<32x32xbf16>
    %11 = arith.extf %10 : vector<32x32xbf16> to vector<32x32xf32>
    %cst_8 = arith.constant 0.000000e+00 : f32
    %12 = vector.broadcast %cst_8 : f32 to vector<32x32xf32>
    %13 = arith.cmpf oge, %11, %12 : vector<32x32xf32>
    %cst_9 = arith.constant 1.000000e-01 : f32
    %14 = vector.broadcast %cst_9 : f32 to vector<32x32xf32>
    %15 = arith.mulf %14, %11 : vector<32x32xf32>
    %16 = arith.select %13, %11, %15 : vector<32x32xi1>, vector<32x32xf32>
    %c32 = arith.constant 32 : index
    %c0_10 = arith.constant 0 : index
    %17 = vector.load %arg7[%c32, %c0_10] : memref<64x32xf32, #tpu.memory_space<vmem>>, vector<32x32xf32>
    tpu.vector_store %arg7[%c32, %c0_10], %16 {strides = array<i32>} : memref<64x32xf32, #tpu.memory_space<vmem>>, vector<32x32xf32>,
    %cst_11 = arith.constant 0.000000e+00 : f32
    %18 = vector.broadcast %cst_11 : f32 to vector<32x32xf32>
    %c0_12 = arith.constant 0 : index
    %c0_13 = arith.constant 0 : index
    %19 = vector.load %arg7[%c0_12, %c0_13] : memref<64x32xf32, #tpu.memory_space<vmem>>, vector<32x32xf32>
    %20 = arith.truncf %19 : vector<32x32xf32> to vector<32x32xbf16>
    %c0_14 = arith.constant 0 : index
    %c0_15 = arith.constant 0 : index
    %c0_16 = arith.constant 0 : index
    %21 = vector.load %arg4[%c0_14, %c0_15, %c0_16] : memref<3x32x32xbf16, #tpu.memory_space<vmem>>, vector<1x32x32xbf16>
    %22 = vector.shape_cast %21 : vector<1x32x32xbf16> to vector<32x32xbf16>
    %cst_17 = arith.constant dense<0.000000e+00> : vector<32x32xf32>
    %23 = tpu.matmul %20, %22, %cst_17 {dimension_numbers = #tpu.dot_dimension_numbers<[1], [0], [0], [1], [0, 0, 1, 1], [], []>} : vector<32x32xbf16>, vector<32x32xbf16>, vector<32x32xf32> -> vector<32x32xf32>
    %24 = arith.addf %18, %23 : vector<32x32xf32>
    %c3 = arith.constant 3 : index
    %c0_18 = arith.constant 0 : index
    %25 = vector.load %arg7[%c3, %c0_18] : memref<64x32xf32, #tpu.memory_space<vmem>>, vector<32x32xf32>
    %26 = arith.truncf %25 : vector<32x32xf32> to vector<32x32xbf16>
    %c1 = arith.constant 1 : index
    %c0_19 = arith.constant 0 : index
    %c0_20 = arith.constant 0 : index
    %27 = vector.load %arg4[%c1, %c0_19, %c0_20] : memref<3x32x32xbf16, #tpu.memory_space<vmem>>, vector<1x32x32xbf16>
    %28 = vector.shape_cast %27 : vector<1x32x32xbf16> to vector<32x32xbf16>
    %cst_21 = arith.constant dense<0.000000e+00> : vector<32x32xf32>
    %29 = tpu.matmul %26, %28, %cst_21 {dimension_numbers = #tpu.dot_dimension_numbers<[1], [0], [0], [1], [0, 0, 1, 1], [], []>} : vector<32x32xbf16>, vector<32x32xbf16>, vector<32x32xf32> -> vector<32x32xf32>
    %30 = arith.addf %24, %29 : vector<32x32xf32>
    %c6 = arith.constant 6 : index
    %c0_22 = arith.constant 0 : index
    %31 = vector.load %arg7[%c6, %c0_22] : memref<64x32xf32, #tpu.memory_space<vmem>>, vector<32x32xf32>
    %32 = arith.truncf %31 : vector<32x32xf32> to vector<32x32xbf16>
    %c2 = arith.constant 2 : index
    %c0_23 = arith.constant 0 : index
    %c0_24 = arith.constant 0 : index
    %33 = vector.load %arg4[%c2, %c0_23, %c0_24] : memref<3x32x32xbf16, #tpu.memory_space<vmem>>, vector<1x32x32xbf16>
    %34 = vector.shape_cast %33 : vector<1x32x32xbf16> to vector<32x32xbf16>
    %cst_25 = arith.constant dense<0.000000e+00> : vector<32x32xf32>
    %35 = tpu.matmul %32, %34, %cst_25 {dimension_numbers = #tpu.dot_dimension_numbers<[1], [0], [0], [1], [0, 0, 1, 1], [], []>} : vector<32x32xbf16>, vector<32x32xbf16>, vector<32x32xf32> -> vector<32x32xf32>
    %36 = arith.addf %30, %35 : vector<32x32xf32>
    %c0_26 = arith.constant 0 : index
    %c0_27 = arith.constant 0 : index
    %37 = vector.load %arg5[%c0_26, %c0_27] : memref<1x32xf32, #tpu.memory_space<vmem>>, vector<1x32xf32>
    %38 = vector.broadcast %37 : vector<1x32xf32> to vector<32x32xf32>
    %39 = arith.addf %36, %38 : vector<32x32xf32>
    %cst_28 = arith.constant 0.000000e+00 : f32
    %40 = vector.broadcast %cst_28 : f32 to vector<32x32xf32>
    %41 = arith.cmpf oge, %39, %40 : vector<32x32xf32>
    %cst_29 = arith.constant 1.000000e-01 : f32
    %42 = vector.broadcast %cst_29 : f32 to vector<32x32xf32>
    %43 = arith.mulf %42, %39 : vector<32x32xf32>
    %44 = arith.select %41, %39, %43 : vector<32x32xi1>, vector<32x32xf32>
    %45 = arith.truncf %44 : vector<32x32xf32> to vector<32x32xbf16>
    %c0_30 = arith.constant 0 : index
    %c0_31 = arith.constant 0 : index
    %c0_32 = arith.constant 0 : index
    %46 = vector.load %arg6[%c0_30, %c0_31, %c0_32] : memref<1x32x32xbf16, #tpu.memory_space<vmem>>, vector<1x32x32xbf16>
    %47 = vector.shape_cast %46 : vector<1x32x32xbf16> to vector<32x32xbf16>
    %48 = vector.shape_cast %45 : vector<32x32xbf16> to vector<1x32x32xbf16>
    tpu.vector_store %arg6[%c0_30, %c0_31, %c0_32], %48 {strides = array<i32>} : memref<1x32x32xbf16, #tpu.memory_space<vmem>>, vector<1x32x32xbf16>,
    return
  }
  func.func @transform_0(%arg0: i32, %arg1: i32) -> (i32, i32, i32) {
    %c0_i32 = arith.constant 0 : i32
    %c0_i32_0 = arith.constant 0 : i32
    return %arg0, %arg1, %c0_i32 : i32, i32, i32
  }
  func.func @transform_1(%arg0: i32, %arg1: i32) -> (i32, i32, i32) {
    %c1_i32 = arith.constant 1 : i32
    %0 = arith.addi %arg1, %c1_i32 : i32
    %c0_i32 = arith.constant 0 : i32
    %c0_i32_0 = arith.constant 0 : i32
    return %arg0, %0, %c0_i32 : i32, i32, i32
  }
  func.func @transform_2(%arg0: i32, %arg1: i32) -> (i32, i32, i32) {
    %c0_i32 = arith.constant 0 : i32
    %c0_i32_0 = arith.constant 0 : i32
    %c0_i32_1 = arith.constant 0 : i32
    %c0_i32_2 = arith.constant 0 : i32
    return %c0_i32, %c0_i32_0, %c0_i32_1 : i32, i32, i32
  }
  func.func @transform_3(%arg0: i32, %arg1: i32) -> (i32, i32) {
    %c0_i32 = arith.constant 0 : i32
    %c0_i32_0 = arith.constant 0 : i32
    %c0_i32_1 = arith.constant 0 : i32
    return %c0_i32, %c0_i32_0 : i32, i32
  }
  func.func @transform_4(%arg0: i32, %arg1: i32) -> (i32, i32, i32) {
    %c0_i32 = arith.constant 0 : i32
    %c0_i32_0 = arith.constant 0 : i32
    return %arg0, %arg1, %c0_i32 : i32, i32, i32
  }
}

module attributes {stable_mosaic.version = 11 : i64} {
  func.func @kernel(%arg0: i32, %arg1: i32, %arg2: memref<1x32x32xbf16, #tpu.memory_space<vmem>>, %arg3: memref<1x32x32xbf16, #tpu.memory_space<vmem>>, %arg4: memref<3x32x32xbf16, #tpu.memory_space<vmem>>, %arg5: memref<1x32xf32, #tpu.memory_space<vmem>>, %arg6: memref<1x32x32xbf16, #tpu.memory_space<vmem>>, %arg7: memref<64x32xf32, #tpu.memory_space<vmem>>) attributes {dimension_semantics = [#tpu.dimension_semantics<parallel>, #tpu.dimension_semantics<parallel>], iteration_bounds = array<i64: 2, 1>, scalar_prefetch = 0 : i64, scratch_operands = 1 : i64, tpu.core_type = #tpu.core_type<tc>, window_params = [{transform_indices = @transform_0, window_bounds = array<i64: 1, 32, 32>}, {transform_indices = @transform_1, window_bounds = array<i64: 1, 32, 32>}, {pipeline_mode = #tpu.pipeline_mode<synchronous>, transform_indices = @transform_2, window_bounds = array<i64: 3, 32, 32>}, {pipeline_mode = #tpu.pipeline_mode<synchronous>, transform_indices = @transform_3, window_bounds = array<i64: 1, 32>}, {transform_indices = @transform_4, window_bounds = array<i64: 1, 32, 32>}]} {
    %c0 = arith.constant 0 : index
    %c0_0 = arith.constant 0 : index
    %c0_1 = arith.constant 0 : index
    %0 = vector.load %arg2[%c0, %c0_0, %c0_1] : memref<1x32x32xbf16, #tpu.memory_space<vmem>>, vector<1x32x32xbf16>
    %1 = vector.shape_cast %0 : vector<1x32x32xbf16> to vector<32x32xbf16>
    %2 = arith.extf %1 : vector<32x32xbf16> to vector<32x32xf32>
    %cst = arith.constant 0.000000e+00 : f32
    %3 = vector.broadcast %cst : f32 to vector<32x32xf32>
    %4 = arith.cmpf oge, %2, %3 : vector<32x32xf32>
    %cst_2 = arith.constant 1.000000e-01 : f32
    %5 = vector.broadcast %cst_2 : f32 to vector<32x32xf32>
    %6 = arith.mulf %5, %2 : vector<32x32xf32>
    %7 = arith.select %4, %2, %6 : vector<32x32xi1>, vector<32x32xf32>
    %c0_3 = arith.constant 0 : index
    %c0_4 = arith.constant 0 : index
    %8 = vector.load %arg7[%c0_3, %c0_4] : memref<64x32xf32, #tpu.memory_space<vmem>>, vector<32x32xf32>
    tpu.vector_store %arg7[%c0_3, %c0_4], %7 {strides = array<i32>} : memref<64x32xf32, #tpu.memory_space<vmem>>, vector<32x32xf32>,
    %c0_5 = arith.constant 0 : index
    %c0_6 = arith.constant 0 : index
    %c0_7 = arith.constant 0 : index
    %9 = vector.load %arg3[%c0_5, %c0_6, %c0_7] : memref<1x32x32xbf16, #tpu.memory_space<vmem>>, vector<1x32x32xbf16>
    %10 = vector.shape_cast %9 : vector<1x32x32xbf16> to vector<32x32xbf16>
    %11 = arith.extf %10 : vector<32x32xbf16> to vector<32x32xf32>
    %cst_8 = arith.constant 0.000000e+00 : f32
    %12 = vector.broadcast %cst_8 : f32 to vector<32x32xf32>
    %13 = arith.cmpf oge, %11, %12 : vector<32x32xf32>
    %cst_9 = arith.constant 1.000000e-01 : f32
    %14 = vector.broadcast %cst_9 : f32 to vector<32x32xf32>
    %15 = arith.mulf %14, %11 : vector<32x32xf32>
    %16 = arith.select %13, %11, %15 : vector<32x32xi1>, vector<32x32xf32>
    %c32 = arith.constant 32 : index
    %c0_10 = arith.constant 0 : index
    %17 = vector.load %arg7[%c32, %c0_10] : memref<64x32xf32, #tpu.memory_space<vmem>>, vector<32x32xf32>
    tpu.vector_store %arg7[%c32, %c0_10], %16 {strides = array<i32>} : memref<64x32xf32, #tpu.memory_space<vmem>>, vector<32x32xf32>,
    %cst_11 = arith.constant 0.000000e+00 : f32
    %18 = vector.broadcast %cst_11 : f32 to vector<32x32xf32>
    %c0_12 = arith.constant 0 : index
    %c0_13 = arith.constant 0 : index
    %19 = vector.load %arg7[%c0_12, %c0_13] : memref<64x32xf32, #tpu.memory_space<vmem>>, vector<32x32xf32>
    %20 = arith.truncf %19 : vector<32x32xf32> to vector<32x32xbf16>
    %c0_14 = arith.constant 0 : index
    %c0_15 = arith.constant 0 : index
    %c0_16 = arith.constant 0 : index
    %21 = vector.load %arg4[%c0_14, %c0_15, %c0_16] : memref<3x32x32xbf16, #tpu.memory_space<vmem>>, vector<1x32x32xbf16>
    %22 = vector.shape_cast %21 : vector<1x32x32xbf16> to vector<32x32xbf16>
    %cst_17 = arith.constant dense<0.000000e+00> : vector<32x32xf32>
    %23 = tpu.matmul %20, %22, %cst_17 {dimension_numbers = #tpu.dot_dimension_numbers<[1], [0], [0], [1], [0, 0, 1, 1], [], []>} : vector<32x32xbf16>, vector<32x32xbf16>, vector<32x32xf32> -> vector<32x32xf32>
    %24 = arith.addf %18, %23 : vector<32x32xf32>
    %c1 = arith.constant 1 : index
    %c0_18 = arith.constant 0 : index
    %25 = vector.load %arg7[%c1, %c0_18] : memref<64x32xf32, #tpu.memory_space<vmem>>, vector<32x32xf32>
    %26 = arith.truncf %25 : vector<32x32xf32> to vector<32x32xbf16>
    %c1_19 = arith.constant 1 : index
    %c0_20 = arith.constant 0 : index
    %c0_21 = arith.constant 0 : index
    %27 = vector.load %arg4[%c1_19, %c0_20, %c0_21] : memref<3x32x32xbf16, #tpu.memory_space<vmem>>, vector<1x32x32xbf16>
    %28 = vector.shape_cast %27 : vector<1x32x32xbf16> to vector<32x32xbf16>
    %cst_22 = arith.constant dense<0.000000e+00> : vector<32x32xf32>
    %29 = tpu.matmul %26, %28, %cst_22 {dimension_numbers = #tpu.dot_dimension_numbers<[1], [0], [0], [1], [0, 0, 1, 1], [], []>} : vector<32x32xbf16>, vector<32x32xbf16>, vector<32x32xf32> -> vector<32x32xf32>
    %30 = arith.addf %24, %29 : vector<32x32xf32>
    %c2 = arith.constant 2 : index
    %c0_23 = arith.constant 0 : index
    %31 = vector.load %arg7[%c2, %c0_23] : memref<64x32xf32, #tpu.memory_space<vmem>>, vector<32x32xf32>
    %32 = arith.truncf %31 : vector<32x32xf32> to vector<32x32xbf16>
    %c2_24 = arith.constant 2 : index
    %c0_25 = arith.constant 0 : index
    %c0_26 = arith.constant 0 : index
    %33 = vector.load %arg4[%c2_24, %c0_25, %c0_26] : memref<3x32x32xbf16, #tpu.memory_space<vmem>>, vector<1x32x32xbf16>
    %34 = vector.shape_cast %33 : vector<1x32x32xbf16> to vector<32x32xbf16>
    %cst_27 = arith.constant dense<0.000000e+00> : vector<32x32xf32>
    %35 = tpu.matmul %32, %34, %cst_27 {dimension_numbers = #tpu.dot_dimension_numbers<[1], [0], [0], [1], [0, 0, 1, 1], [], []>} : vector<32x32xbf16>, vector<32x32xbf16>, vector<32x32xf32> -> vector<32x32xf32>
    %36 = arith.addf %30, %35 : vector<32x32xf32>
    %c0_28 = arith.constant 0 : index
    %c0_29 = arith.constant 0 : index
    %37 = vector.load %arg5[%c0_28, %c0_29] : memref<1x32xf32, #tpu.memory_space<vmem>>, vector<1x32xf32>
    %38 = vector.broadcast %37 : vector<1x32xf32> to vector<32x32xf32>
    %39 = arith.addf %36, %38 : vector<32x32xf32>
    %cst_30 = arith.constant 0.000000e+00 : f32
    %40 = vector.broadcast %cst_30 : f32 to vector<32x32xf32>
    %41 = arith.cmpf oge, %39, %40 : vector<32x32xf32>
    %cst_31 = arith.constant 1.000000e-01 : f32
    %42 = vector.broadcast %cst_31 : f32 to vector<32x32xf32>
    %43 = arith.mulf %42, %39 : vector<32x32xf32>
    %44 = arith.select %41, %39, %43 : vector<32x32xi1>, vector<32x32xf32>
    %45 = arith.truncf %44 : vector<32x32xf32> to vector<32x32xbf16>
    %c0_32 = arith.constant 0 : index
    %c0_33 = arith.constant 0 : index
    %c0_34 = arith.constant 0 : index
    %46 = vector.load %arg6[%c0_32, %c0_33, %c0_34] : memref<1x32x32xbf16, #tpu.memory_space<vmem>>, vector<1x32x32xbf16>
    %47 = vector.shape_cast %46 : vector<1x32x32xbf16> to vector<32x32xbf16>
    %48 = vector.shape_cast %45 : vector<32x32xbf16> to vector<1x32x32xbf16>
    tpu.vector_store %arg6[%c0_32, %c0_33, %c0_34], %48 {strides = array<i32>} : memref<1x32x32xbf16, #tpu.memory_space<vmem>>, vector<1x32x32xbf16>,
    return
  }
  func.func @transform_0(%arg0: i32, %arg1: i32) -> (i32, i32, i32) {
    %c0_i32 = arith.constant 0 : i32
    %c0_i32_0 = arith.constant 0 : i32
    return %arg0, %arg1, %c0_i32 : i32, i32, i32
  }
  func.func @transform_1(%arg0: i32, %arg1: i32) -> (i32, i32, i32) {
    %c1_i32 = arith.constant 1 : i32
    %0 = arith.addi %arg1, %c1_i32 : i32
    %c0_i32 = arith.constant 0 : i32
    %c0_i32_0 = arith.constant 0 : i32
    return %arg0, %0, %c0_i32 : i32, i32, i32
  }
  func.func @transform_2(%arg0: i32, %arg1: i32) -> (i32, i32, i32) {
    %c0_i32 = arith.constant 0 : i32
    %c0_i32_0 = arith.constant 0 : i32
    %c0_i32_1 = arith.constant 0 : i32
    %c0_i32_2 = arith.constant 0 : i32
    return %c0_i32, %c0_i32_0, %c0_i32_1 : i32, i32, i32
  }
  func.func @transform_3(%arg0: i32, %arg1: i32) -> (i32, i32) {
    %c0_i32 = arith.constant 0 : i32
    %c0_i32_0 = arith.constant 0 : i32
    %c0_i32_1 = arith.constant 0 : i32
    return %c0_i32, %c0_i32_0 : i32, i32
  }
  func.func @transform_4(%arg0: i32, %arg1: i32) -> (i32, i32, i32) {
    %c0_i32 = arith.constant 0 : i32
    %c0_i32_0 = arith.constant 0 : i32
    return %arg0, %arg1, %c0_i32 : i32, i32, i32
  }
}

module attributes {stable_mosaic.version = 11 : i64} {
  func.func @kernel(%arg0: i32, %arg1: i32, %arg2: memref<1x80x32xbf16, #tpu.memory_space<vmem>>, %arg3: memref<1x80x32xbf16, #tpu.memory_space<vmem>>, %arg4: memref<4x32x16xbf16, #tpu.memory_space<vmem>>, %arg5: memref<1x16xf32, #tpu.memory_space<vmem>>, %arg6: memref<1x80x16xbf16, #tpu.memory_space<vmem>>, %arg7: memref<160x32xf32, #tpu.memory_space<vmem>>) attributes {dimension_semantics = [#tpu.dimension_semantics<parallel>, #tpu.dimension_semantics<parallel>], iteration_bounds = array<i64: 2, 1>, scalar_prefetch = 0 : i64, scratch_operands = 1 : i64, tpu.core_type = #tpu.core_type<tc>, window_params = [{transform_indices = @transform_0, window_bounds = array<i64: 1, 80, 32>}, {transform_indices = @transform_1, window_bounds = array<i64: 1, 80, 32>}, {pipeline_mode = #tpu.pipeline_mode<synchronous>, transform_indices = @transform_2, window_bounds = array<i64: 4, 32, 16>}, {pipeline_mode = #tpu.pipeline_mode<synchronous>, transform_indices = @transform_3, window_bounds = array<i64: 1, 16>}, {transform_indices = @transform_4, window_bounds = array<i64: 1, 80, 16>}]} {
    %c0 = arith.constant 0 : index
    %c0_0 = arith.constant 0 : index
    %c0_1 = arith.constant 0 : index
    %0 = vector.load %arg2[%c0, %c0_0, %c0_1] : memref<1x80x32xbf16, #tpu.memory_space<vmem>>, vector<1x80x32xbf16>
    %1 = vector.shape_cast %0 : vector<1x80x32xbf16> to vector<80x32xbf16>
    %2 = arith.extf %1 : vector<80x32xbf16> to vector<80x32xf32>
    %c0_2 = arith.constant 0 : index
    %c0_3 = arith.constant 0 : index
    %3 = vector.load %arg7[%c0_2, %c0_3] : memref<160x32xf32, #tpu.memory_space<vmem>>, vector<80x32xf32>
    tpu.vector_store %arg7[%c0_2, %c0_3], %2 {strides = array<i32>} : memref<160x32xf32, #tpu.memory_space<vmem>>, vector<80x32xf32>,
    %c0_4 = arith.constant 0 : index
    %c0_5 = arith.constant 0 : index
    %c0_6 = arith.constant 0 : index
    %4 = vector.load %arg3[%c0_4, %c0_5, %c0_6] : memref<1x80x32xbf16, #tpu.memory_space<vmem>>, vector<1x80x32xbf16>
    %5 = vector.shape_cast %4 : vector<1x80x32xbf16> to vector<80x32xbf16>
    %6 = arith.extf %5 : vector<80x32xbf16> to vector<80x32xf32>
    %c80 = arith.constant 80 : index
    %c0_7 = arith.constant 0 : index
    %7 = vector.load %arg7[%c80, %c0_7] : memref<160x32xf32, #tpu.memory_space<vmem>>, vector<80x32xf32>
    tpu.vector_store %arg7[%c80, %c0_7], %6 {strides = array<i32>} : memref<160x32xf32, #tpu.memory_space<vmem>>, vector<80x32xf32>,
    %cst = arith.constant 0.000000e+00 : f32
    %8 = vector.broadcast %cst : f32 to vector<80x16xf32>
    %c0_8 = arith.constant 0 : index
    %c0_9 = arith.constant 0 : index
    %9 = vector.load %arg7[%c0_8, %c0_9] : memref<160x32xf32, #tpu.memory_space<vmem>>, vector<80x32xf32>
    %10 = arith.truncf %9 : vector<80x32xf32> to vector<80x32xbf16>
    %c0_10 = arith.constant 0 : index
    %c0_11 = arith.constant 0 : index
    %c0_12 = arith.constant 0 : index
    %11 = vector.load %arg4[%c0_10, %c0_11, %c0_12] : memref<4x32x16xbf16, #tpu.memory_space<vmem>>, vector<1x32x16xbf16>
    %12 = vector.shape_cast %11 : vector<1x32x16xbf16> to vector<32x16xbf16>
    %cst_13 = arith.constant dense<0.000000e+00> : vector<80x16xf32>
    %13 = tpu.matmul %10, %12, %cst_13 {dimension_numbers = #tpu.dot_dimension_numbers<[1], [0], [0], [1], [0, 0, 1, 1], [], []>} : vector<80x32xbf16>, vector<32x16xbf16>, vector<80x16xf32> -> vector<80x16xf32>
    %14 = arith.addf %8, %13 : vector<80x16xf32>
    %c1 = arith.constant 1 : index
    %c0_14 = arith.constant 0 : index
    %15 = vector.load %arg7[%c1, %c0_14] : memref<160x32xf32, #tpu.memory_space<vmem>>, vector<80x32xf32>
    %16 = arith.truncf %15 : vector<80x32xf32> to vector<80x32xbf16>
    %c1_15 = arith.constant 1 : index
    %c0_16 = arith.constant 0 : index
    %c0_17 = arith.constant 0 : index
    %17 = vector.load %arg4[%c1_15, %c0_16, %c0_17] : memref<4x32x16xbf16, #tpu.memory_space<vmem>>, vector<1x32x16xbf16>
    %18 = vector.shape_cast %17 : vector<1x32x16xbf16> to vector<32x16xbf16>
    %cst_18 = arith.constant dense<0.000000e+00> : vector<80x16xf32>
    %19 = tpu.matmul %16, %18, %cst_18 {dimension_numbers = #tpu.dot_dimension_numbers<[1], [0], [0], [1], [0, 0, 1, 1], [], []>} : vector<80x32xbf16>, vector<32x16xbf16>, vector<80x16xf32> -> vector<80x16xf32>
    %20 = arith.addf %14, %19 : vector<80x16xf32>
    %c2 = arith.constant 2 : index
    %c0_19 = arith.constant 0 : index
    %21 = vector.load %arg7[%c2, %c0_19] : memref<160x32xf32, #tpu.memory_space<vmem>>, vector<80x32xf32>
    %22 = arith.truncf %21 : vector<80x32xf32> to vector<80x32xbf16>
    %c2_20 = arith.constant 2 : index
    %c0_21 = arith.constant 0 : index
    %c0_22 = arith.constant 0 : index
    %23 = vector.load %arg4[%c2_20, %c0_21, %c0_22] : memref<4x32x16xbf16, #tpu.memory_space<vmem>>, vector<1x32x16xbf16>
    %24 = vector.shape_cast %23 : vector<1x32x16xbf16> to vector<32x16xbf16>
    %cst_23 = arith.constant dense<0.000000e+00> : vector<80x16xf32>
    %25 = tpu.matmul %22, %24, %cst_23 {dimension_numbers = #tpu.dot_dimension_numbers<[1], [0], [0], [1], [0, 0, 1, 1], [], []>} : vector<80x32xbf16>, vector<32x16xbf16>, vector<80x16xf32> -> vector<80x16xf32>
    %26 = arith.addf %20, %25 : vector<80x16xf32>
    %c3 = arith.constant 3 : index
    %c0_24 = arith.constant 0 : index
    %27 = vector.load %arg7[%c3, %c0_24] : memref<160x32xf32, #tpu.memory_space<vmem>>, vector<80x32xf32>
    %28 = arith.truncf %27 : vector<80x32xf32> to vector<80x32xbf16>
    %c3_25 = arith.constant 3 : index
    %c0_26 = arith.constant 0 : index
    %c0_27 = arith.constant 0 : index
    %29 = vector.load %arg4[%c3_25, %c0_26, %c0_27] : memref<4x32x16xbf16, #tpu.memory_space<vmem>>, vector<1x32x16xbf16>
    %30 = vector.shape_cast %29 : vector<1x32x16xbf16> to vector<32x16xbf16>
    %cst_28 = arith.constant dense<0.000000e+00> : vector<80x16xf32>
    %31 = tpu.matmul %28, %30, %cst_28 {dimension_numbers = #tpu.dot_dimension_numbers<[1], [0], [0], [1], [0, 0, 1, 1], [], []>} : vector<80x32xbf16>, vector<32x16xbf16>, vector<80x16xf32> -> vector<80x16xf32>
    %32 = arith.addf %26, %31 : vector<80x16xf32>
    %c0_29 = arith.constant 0 : index
    %c0_30 = arith.constant 0 : index
    %33 = vector.load %arg5[%c0_29, %c0_30] : memref<1x16xf32, #tpu.memory_space<vmem>>, vector<1x16xf32>
    %34 = vector.broadcast %33 : vector<1x16xf32> to vector<80x16xf32>
    %35 = arith.addf %32, %34 : vector<80x16xf32>
    %cst_31 = arith.constant 0.000000e+00 : f32
    %36 = vector.broadcast %cst_31 : f32 to vector<80x16xf32>
    %37 = arith.cmpf oge, %35, %36 : vector<80x16xf32>
    %cst_32 = arith.constant 1.000000e-01 : f32
    %38 = vector.broadcast %cst_32 : f32 to vector<80x16xf32>
    %39 = arith.mulf %38, %35 : vector<80x16xf32>
    %40 = arith.select %37, %35, %39 : vector<80x16xi1>, vector<80x16xf32>
    %41 = arith.truncf %40 : vector<80x16xf32> to vector<80x16xbf16>
    %c0_33 = arith.constant 0 : index
    %c0_34 = arith.constant 0 : index
    %c0_35 = arith.constant 0 : index
    %42 = vector.load %arg6[%c0_33, %c0_34, %c0_35] : memref<1x80x16xbf16, #tpu.memory_space<vmem>>, vector<1x80x16xbf16>
    %43 = vector.shape_cast %42 : vector<1x80x16xbf16> to vector<80x16xbf16>
    %44 = vector.shape_cast %41 : vector<80x16xbf16> to vector<1x80x16xbf16>
    tpu.vector_store %arg6[%c0_33, %c0_34, %c0_35], %44 {strides = array<i32>} : memref<1x80x16xbf16, #tpu.memory_space<vmem>>, vector<1x80x16xbf16>,
    return
  }
  func.func @transform_0(%arg0: i32, %arg1: i32) -> (i32, i32, i32) {
    %c0_i32 = arith.constant 0 : i32
    %c0_i32_0 = arith.constant 0 : i32
    return %arg0, %arg1, %c0_i32 : i32, i32, i32
  }
  func.func @transform_1(%arg0: i32, %arg1: i32) -> (i32, i32, i32) {
    %c1_i32 = arith.constant 1 : i32
    %0 = arith.addi %arg1, %c1_i32 : i32
    %c0_i32 = arith.constant 0 : i32
    %c0_i32_0 = arith.constant 0 : i32
    return %arg0, %0, %c0_i32 : i32, i32, i32
  }
  func.func @transform_2(%arg0: i32, %arg1: i32) -> (i32, i32, i32) {
    %c0_i32 = arith.constant 0 : i32
    %c0_i32_0 = arith.constant 0 : i32
    %c0_i32_1 = arith.constant 0 : i32
    %c0_i32_2 = arith.constant 0 : i32
    return %c0_i32, %c0_i32_0, %c0_i32_1 : i32, i32, i32
  }
  func.func @transform_3(%arg0: i32, %arg1: i32) -> (i32, i32) {
    %c0_i32 = arith.constant 0 : i32
    %c0_i32_0 = arith.constant 0 : i32
    %c0_i32_1 = arith.constant 0 : i32
    return %c0_i32, %c0_i32_0 : i32, i32
  }
  func.func @transform_4(%arg0: i32, %arg1: i32) -> (i32, i32, i32) {
    %c0_i32 = arith.constant 0 : i32
    %c0_i32_0 = arith.constant 0 : i32
    return %arg0, %arg1, %c0_i32 : i32, i32, i32
  }
}

module attributes {stable_mosaic.version = 11 : i64} {
  func.func @kernel(%arg0: i32, %arg1: i32, %arg2: memref<1x64x16xbf16, #tpu.memory_space<vmem>>, %arg3: memref<1x64x16xbf16, #tpu.memory_space<vmem>>, %arg4: memref<3x16x16xbf16, #tpu.memory_space<vmem>>, %arg5: memref<1x16xf32, #tpu.memory_space<vmem>>, %arg6: memref<1x64x16xbf16, #tpu.memory_space<vmem>>, %arg7: memref<128x16xf32, #tpu.memory_space<vmem>>) attributes {dimension_semantics = [#tpu.dimension_semantics<parallel>, #tpu.dimension_semantics<parallel>], iteration_bounds = array<i64: 2, 1>, scalar_prefetch = 0 : i64, scratch_operands = 1 : i64, tpu.core_type = #tpu.core_type<tc>, window_params = [{transform_indices = @transform_0, window_bounds = array<i64: 1, 64, 16>}, {transform_indices = @transform_1, window_bounds = array<i64: 1, 64, 16>}, {pipeline_mode = #tpu.pipeline_mode<synchronous>, transform_indices = @transform_2, window_bounds = array<i64: 3, 16, 16>}, {pipeline_mode = #tpu.pipeline_mode<synchronous>, transform_indices = @transform_3, window_bounds = array<i64: 1, 16>}, {transform_indices = @transform_4, window_bounds = array<i64: 1, 64, 16>}]} {
    %c0 = arith.constant 0 : index
    %c0_0 = arith.constant 0 : index
    %c0_1 = arith.constant 0 : index
    %0 = vector.load %arg2[%c0, %c0_0, %c0_1] : memref<1x64x16xbf16, #tpu.memory_space<vmem>>, vector<1x64x16xbf16>
    %1 = vector.shape_cast %0 : vector<1x64x16xbf16> to vector<64x16xbf16>
    %2 = arith.extf %1 : vector<64x16xbf16> to vector<64x16xf32>
    %cst = arith.constant 0.000000e+00 : f32
    %3 = vector.broadcast %cst : f32 to vector<64x16xf32>
    %4 = arith.cmpf oge, %2, %3 : vector<64x16xf32>
    %cst_2 = arith.constant 1.000000e-01 : f32
    %5 = vector.broadcast %cst_2 : f32 to vector<64x16xf32>
    %6 = arith.mulf %5, %2 : vector<64x16xf32>
    %7 = arith.select %4, %2, %6 : vector<64x16xi1>, vector<64x16xf32>
    %c0_3 = arith.constant 0 : index
    %c0_4 = arith.constant 0 : index
    %8 = vector.load %arg7[%c0_3, %c0_4] : memref<128x16xf32, #tpu.memory_space<vmem>>, vector<64x16xf32>
    tpu.vector_store %arg7[%c0_3, %c0_4], %7 {strides = array<i32>} : memref<128x16xf32, #tpu.memory_space<vmem>>, vector<64x16xf32>,
    %c0_5 = arith.constant 0 : index
    %c0_6 = arith.constant 0 : index
    %c0_7 = arith.constant 0 : index
    %9 = vector.load %arg3[%c0_5, %c0_6, %c0_7] : memref<1x64x16xbf16, #tpu.memory_space<vmem>>, vector<1x64x16xbf16>
    %10 = vector.shape_cast %9 : vector<1x64x16xbf16> to vector<64x16xbf16>
    %11 = arith.extf %10 : vector<64x16xbf16> to vector<64x16xf32>
    %cst_8 = arith.constant 0.000000e+00 : f32
    %12 = vector.broadcast %cst_8 : f32 to vector<64x16xf32>
    %13 = arith.cmpf oge, %11, %12 : vector<64x16xf32>
    %cst_9 = arith.constant 1.000000e-01 : f32
    %14 = vector.broadcast %cst_9 : f32 to vector<64x16xf32>
    %15 = arith.mulf %14, %11 : vector<64x16xf32>
    %16 = arith.select %13, %11, %15 : vector<64x16xi1>, vector<64x16xf32>
    %c64 = arith.constant 64 : index
    %c0_10 = arith.constant 0 : index
    %17 = vector.load %arg7[%c64, %c0_10] : memref<128x16xf32, #tpu.memory_space<vmem>>, vector<64x16xf32>
    tpu.vector_store %arg7[%c64, %c0_10], %16 {strides = array<i32>} : memref<128x16xf32, #tpu.memory_space<vmem>>, vector<64x16xf32>,
    %cst_11 = arith.constant 0.000000e+00 : f32
    %18 = vector.broadcast %cst_11 : f32 to vector<64x16xf32>
    %c0_12 = arith.constant 0 : index
    %c0_13 = arith.constant 0 : index
    %19 = vector.load %arg7[%c0_12, %c0_13] : memref<128x16xf32, #tpu.memory_space<vmem>>, vector<64x16xf32>
    %20 = arith.truncf %19 : vector<64x16xf32> to vector<64x16xbf16>
    %c0_14 = arith.constant 0 : index
    %c0_15 = arith.constant 0 : index
    %c0_16 = arith.constant 0 : index
    %21 = vector.load %arg4[%c0_14, %c0_15, %c0_16] : memref<3x16x16xbf16, #tpu.memory_space<vmem>>, vector<1x16x16xbf16>
    %22 = vector.shape_cast %21 : vector<1x16x16xbf16> to vector<16x16xbf16>
    %cst_17 = arith.constant dense<0.000000e+00> : vector<64x16xf32>
    %23 = tpu.matmul %20, %22, %cst_17 {dimension_numbers = #tpu.dot_dimension_numbers<[1], [0], [0], [1], [0, 0, 1, 1], [], []>} : vector<64x16xbf16>, vector<16x16xbf16>, vector<64x16xf32> -> vector<64x16xf32>
    %24 = arith.addf %18, %23 : vector<64x16xf32>
    %c1 = arith.constant 1 : index
    %c0_18 = arith.constant 0 : index
    %25 = vector.load %arg7[%c1, %c0_18] : memref<128x16xf32, #tpu.memory_space<vmem>>, vector<64x16xf32>
    %26 = arith.truncf %25 : vector<64x16xf32> to vector<64x16xbf16>
    %c1_19 = arith.constant 1 : index
    %c0_20 = arith.constant 0 : index
    %c0_21 = arith.constant 0 : index
    %27 = vector.load %arg4[%c1_19, %c0_20, %c0_21] : memref<3x16x16xbf16, #tpu.memory_space<vmem>>, vector<1x16x16xbf16>
    %28 = vector.shape_cast %27 : vector<1x16x16xbf16> to vector<16x16xbf16>
    %cst_22 = arith.constant dense<0.000000e+00> : vector<64x16xf32>
    %29 = tpu.matmul %26, %28, %cst_22 {dimension_numbers = #tpu.dot_dimension_numbers<[1], [0], [0], [1], [0, 0, 1, 1], [], []>} : vector<64x16xbf16>, vector<16x16xbf16>, vector<64x16xf32> -> vector<64x16xf32>
    %30 = arith.addf %24, %29 : vector<64x16xf32>
    %c2 = arith.constant 2 : index
    %c0_23 = arith.constant 0 : index
    %31 = vector.load %arg7[%c2, %c0_23] : memref<128x16xf32, #tpu.memory_space<vmem>>, vector<64x16xf32>
    %32 = arith.truncf %31 : vector<64x16xf32> to vector<64x16xbf16>
    %c2_24 = arith.constant 2 : index
    %c0_25 = arith.constant 0 : index
    %c0_26 = arith.constant 0 : index
    %33 = vector.load %arg4[%c2_24, %c0_25, %c0_26] : memref<3x16x16xbf16, #tpu.memory_space<vmem>>, vector<1x16x16xbf16>
    %34 = vector.shape_cast %33 : vector<1x16x16xbf16> to vector<16x16xbf16>
    %cst_27 = arith.constant dense<0.000000e+00> : vector<64x16xf32>
    %35 = tpu.matmul %32, %34, %cst_27 {dimension_numbers = #tpu.dot_dimension_numbers<[1], [0], [0], [1], [0, 0, 1, 1], [], []>} : vector<64x16xbf16>, vector<16x16xbf16>, vector<64x16xf32> -> vector<64x16xf32>
    %36 = arith.addf %30, %35 : vector<64x16xf32>
    %c0_28 = arith.constant 0 : index
    %c0_29 = arith.constant 0 : index
    %37 = vector.load %arg5[%c0_28, %c0_29] : memref<1x16xf32, #tpu.memory_space<vmem>>, vector<1x16xf32>
    %38 = vector.broadcast %37 : vector<1x16xf32> to vector<64x16xf32>
    %39 = arith.addf %36, %38 : vector<64x16xf32>
    %cst_30 = arith.constant 0.000000e+00 : f32
    %40 = vector.broadcast %cst_30 : f32 to vector<64x16xf32>
    %41 = arith.cmpf oge, %39, %40 : vector<64x16xf32>
    %cst_31 = arith.constant 1.000000e-01 : f32
    %42 = vector.broadcast %cst_31 : f32 to vector<64x16xf32>
    %43 = arith.mulf %42, %39 : vector<64x16xf32>
    %44 = arith.select %41, %39, %43 : vector<64x16xi1>, vector<64x16xf32>
    %45 = arith.truncf %44 : vector<64x16xf32> to vector<64x16xbf16>
    %c0_32 = arith.constant 0 : index
    %c0_33 = arith.constant 0 : index
    %c0_34 = arith.constant 0 : index
    %46 = vector.load %arg6[%c0_32, %c0_33, %c0_34] : memref<1x64x16xbf16, #tpu.memory_space<vmem>>, vector<1x64x16xbf16>
    %47 = vector.shape_cast %46 : vector<1x64x16xbf16> to vector<64x16xbf16>
    %48 = vector.shape_cast %45 : vector<64x16xbf16> to vector<1x64x16xbf16>
    tpu.vector_store %arg6[%c0_32, %c0_33, %c0_34], %48 {strides = array<i32>} : memref<1x64x16xbf16, #tpu.memory_space<vmem>>, vector<1x64x16xbf16>,
    return
  }
  func.func @transform_0(%arg0: i32, %arg1: i32) -> (i32, i32, i32) {
    %c0_i32 = arith.constant 0 : i32
    %c0_i32_0 = arith.constant 0 : i32
    return %arg0, %arg1, %c0_i32 : i32, i32, i32
  }
  func.func @transform_1(%arg0: i32, %arg1: i32) -> (i32, i32, i32) {
    %c1_i32 = arith.constant 1 : i32
    %0 = arith.addi %arg1, %c1_i32 : i32
    %c0_i32 = arith.constant 0 : i32
    %c0_i32_0 = arith.constant 0 : i32
    return %arg0, %0, %c0_i32 : i32, i32, i32
  }
  func.func @transform_2(%arg0: i32, %arg1: i32) -> (i32, i32, i32) {
    %c0_i32 = arith.constant 0 : i32
    %c0_i32_0 = arith.constant 0 : i32
    %c0_i32_1 = arith.constant 0 : i32
    %c0_i32_2 = arith.constant 0 : i32
    return %c0_i32, %c0_i32_0, %c0_i32_1 : i32, i32, i32
  }
  func.func @transform_3(%arg0: i32, %arg1: i32) -> (i32, i32) {
    %c0_i32 = arith.constant 0 : i32
    %c0_i32_0 = arith.constant 0 : i32
    %c0_i32_1 = arith.constant 0 : i32
    return %c0_i32, %c0_i32_0 : i32, i32
  }
  func.func @transform_4(%arg0: i32, %arg1: i32) -> (i32, i32, i32) {
    %c0_i32 = arith.constant 0 : i32
    %c0_i32_0 = arith.constant 0 : i32
    return %arg0, %arg1, %c0_i32 : i32, i32, i32
  }
}

module attributes {stable_mosaic.version = 11 : i64} {
  func.func @kernel(%arg0: i32, %arg1: i32, %arg2: memref<1x64x16xbf16, #tpu.memory_space<vmem>>, %arg3: memref<1x64x16xbf16, #tpu.memory_space<vmem>>, %arg4: memref<3x16x16xbf16, #tpu.memory_space<vmem>>, %arg5: memref<1x16xf32, #tpu.memory_space<vmem>>, %arg6: memref<1x64x16xbf16, #tpu.memory_space<vmem>>, %arg7: memref<1x64x16xbf16, #tpu.memory_space<vmem>>, %arg8: memref<128x16xf32, #tpu.memory_space<vmem>>) attributes {dimension_semantics = [#tpu.dimension_semantics<parallel>, #tpu.dimension_semantics<parallel>], iteration_bounds = array<i64: 2, 1>, scalar_prefetch = 0 : i64, scratch_operands = 1 : i64, tpu.core_type = #tpu.core_type<tc>, window_params = [{transform_indices = @transform_0, window_bounds = array<i64: 1, 64, 16>}, {transform_indices = @transform_1, window_bounds = array<i64: 1, 64, 16>}, {pipeline_mode = #tpu.pipeline_mode<synchronous>, transform_indices = @transform_2, window_bounds = array<i64: 3, 16, 16>}, {pipeline_mode = #tpu.pipeline_mode<synchronous>, transform_indices = @transform_3, window_bounds = array<i64: 1, 16>}, {transform_indices = @transform_4, window_bounds = array<i64: 1, 64, 16>}, {transform_indices = @transform_5, window_bounds = array<i64: 1, 64, 16>}]} {
    %c0 = arith.constant 0 : index
    %c0_0 = arith.constant 0 : index
    %c0_1 = arith.constant 0 : index
    %0 = vector.load %arg2[%c0, %c0_0, %c0_1] : memref<1x64x16xbf16, #tpu.memory_space<vmem>>, vector<1x64x16xbf16>
    %1 = vector.shape_cast %0 : vector<1x64x16xbf16> to vector<64x16xbf16>
    %2 = arith.extf %1 : vector<64x16xbf16> to vector<64x16xf32>
    %c0_2 = arith.constant 0 : index
    %c0_3 = arith.constant 0 : index
    %3 = vector.load %arg8[%c0_2, %c0_3] : memref<128x16xf32, #tpu.memory_space<vmem>>, vector<64x16xf32>
    tpu.vector_store %arg8[%c0_2, %c0_3], %2 {strides = array<i32>} : memref<128x16xf32, #tpu.memory_space<vmem>>, vector<64x16xf32>,
    %c0_4 = arith.constant 0 : index
    %c0_5 = arith.constant 0 : index
    %c0_6 = arith.constant 0 : index
    %4 = vector.load %arg3[%c0_4, %c0_5, %c0_6] : memref<1x64x16xbf16, #tpu.memory_space<vmem>>, vector<1x64x16xbf16>
    %5 = vector.shape_cast %4 : vector<1x64x16xbf16> to vector<64x16xbf16>
    %6 = arith.extf %5 : vector<64x16xbf16> to vector<64x16xf32>
    %c64 = arith.constant 64 : index
    %c0_7 = arith.constant 0 : index
    %7 = vector.load %arg8[%c64, %c0_7] : memref<128x16xf32, #tpu.memory_space<vmem>>, vector<64x16xf32>
    tpu.vector_store %arg8[%c64, %c0_7], %6 {strides = array<i32>} : memref<128x16xf32, #tpu.memory_space<vmem>>, vector<64x16xf32>,
    %cst = arith.constant 0.000000e+00 : f32
    %8 = vector.broadcast %cst : f32 to vector<64x16xf32>
    %c0_8 = arith.constant 0 : index
    %c0_9 = arith.constant 0 : index
    %9 = vector.load %arg8[%c0_8, %c0_9] : memref<128x16xf32, #tpu.memory_space<vmem>>, vector<64x16xf32>
    %10 = arith.truncf %9 : vector<64x16xf32> to vector<64x16xbf16>
    %c0_10 = arith.constant 0 : index
    %c0_11 = arith.constant 0 : index
    %c0_12 = arith.constant 0 : index
    %11 = vector.load %arg4[%c0_10, %c0_11, %c0_12] : memref<3x16x16xbf16, #tpu.memory_space<vmem>>, vector<1x16x16xbf16>
    %12 = vector.shape_cast %11 : vector<1x16x16xbf16> to vector<16x16xbf16>
    %cst_13 = arith.constant dense<0.000000e+00> : vector<64x16xf32>
    %13 = tpu.matmul %10, %12, %cst_13 {dimension_numbers = #tpu.dot_dimension_numbers<[1], [0], [0], [1], [0, 0, 1, 1], [], []>} : vector<64x16xbf16>, vector<16x16xbf16>, vector<64x16xf32> -> vector<64x16xf32>
    %14 = arith.addf %8, %13 : vector<64x16xf32>
    %c1 = arith.constant 1 : index
    %c0_14 = arith.constant 0 : index
    %15 = vector.load %arg8[%c1, %c0_14] : memref<128x16xf32, #tpu.memory_space<vmem>>, vector<64x16xf32>
    %16 = arith.truncf %15 : vector<64x16xf32> to vector<64x16xbf16>
    %c1_15 = arith.constant 1 : index
    %c0_16 = arith.constant 0 : index
    %c0_17 = arith.constant 0 : index
    %17 = vector.load %arg4[%c1_15, %c0_16, %c0_17] : memref<3x16x16xbf16, #tpu.memory_space<vmem>>, vector<1x16x16xbf16>
    %18 = vector.shape_cast %17 : vector<1x16x16xbf16> to vector<16x16xbf16>
    %cst_18 = arith.constant dense<0.000000e+00> : vector<64x16xf32>
    %19 = tpu.matmul %16, %18, %cst_18 {dimension_numbers = #tpu.dot_dimension_numbers<[1], [0], [0], [1], [0, 0, 1, 1], [], []>} : vector<64x16xbf16>, vector<16x16xbf16>, vector<64x16xf32> -> vector<64x16xf32>
    %20 = arith.addf %14, %19 : vector<64x16xf32>
    %c2 = arith.constant 2 : index
    %c0_19 = arith.constant 0 : index
    %21 = vector.load %arg8[%c2, %c0_19] : memref<128x16xf32, #tpu.memory_space<vmem>>, vector<64x16xf32>
    %22 = arith.truncf %21 : vector<64x16xf32> to vector<64x16xbf16>
    %c2_20 = arith.constant 2 : index
    %c0_21 = arith.constant 0 : index
    %c0_22 = arith.constant 0 : index
    %23 = vector.load %arg4[%c2_20, %c0_21, %c0_22] : memref<3x16x16xbf16, #tpu.memory_space<vmem>>, vector<1x16x16xbf16>
    %24 = vector.shape_cast %23 : vector<1x16x16xbf16> to vector<16x16xbf16>
    %cst_23 = arith.constant dense<0.000000e+00> : vector<64x16xf32>
    %25 = tpu.matmul %22, %24, %cst_23 {dimension_numbers = #tpu.dot_dimension_numbers<[1], [0], [0], [1], [0, 0, 1, 1], [], []>} : vector<64x16xbf16>, vector<16x16xbf16>, vector<64x16xf32> -> vector<64x16xf32>
    %26 = arith.addf %20, %25 : vector<64x16xf32>
    %c0_24 = arith.constant 0 : index
    %c0_25 = arith.constant 0 : index
    %27 = vector.load %arg5[%c0_24, %c0_25] : memref<1x16xf32, #tpu.memory_space<vmem>>, vector<1x16xf32>
    %28 = vector.broadcast %27 : vector<1x16xf32> to vector<64x16xf32>
    %29 = arith.addf %26, %28 : vector<64x16xf32>
    %c0_26 = arith.constant 0 : index
    %c0_27 = arith.constant 0 : index
    %c0_28 = arith.constant 0 : index
    %30 = vector.load %arg6[%c0_26, %c0_27, %c0_28] : memref<1x64x16xbf16, #tpu.memory_space<vmem>>, vector<1x64x16xbf16>
    %31 = vector.shape_cast %30 : vector<1x64x16xbf16> to vector<64x16xbf16>
    %32 = arith.extf %31 : vector<64x16xbf16> to vector<64x16xf32>
    %33 = arith.addf %29, %32 : vector<64x16xf32>
    %34 = arith.truncf %33 : vector<64x16xf32> to vector<64x16xbf16>
    %c0_29 = arith.constant 0 : index
    %c0_30 = arith.constant 0 : index
    %c0_31 = arith.constant 0 : index
    %35 = vector.load %arg7[%c0_29, %c0_30, %c0_31] : memref<1x64x16xbf16, #tpu.memory_space<vmem>>, vector<1x64x16xbf16>
    %36 = vector.shape_cast %35 : vector<1x64x16xbf16> to vector<64x16xbf16>
    %37 = vector.shape_cast %34 : vector<64x16xbf16> to vector<1x64x16xbf16>
    tpu.vector_store %arg7[%c0_29, %c0_30, %c0_31], %37 {strides = array<i32>} : memref<1x64x16xbf16, #tpu.memory_space<vmem>>, vector<1x64x16xbf16>,
    return
  }
  func.func @transform_0(%arg0: i32, %arg1: i32) -> (i32, i32, i32) {
    %c0_i32 = arith.constant 0 : i32
    %c0_i32_0 = arith.constant 0 : i32
    return %arg0, %arg1, %c0_i32 : i32, i32, i32
  }
  func.func @transform_1(%arg0: i32, %arg1: i32) -> (i32, i32, i32) {
    %c1_i32 = arith.constant 1 : i32
    %0 = arith.addi %arg1, %c1_i32 : i32
    %c0_i32 = arith.constant 0 : i32
    %c0_i32_0 = arith.constant 0 : i32
    return %arg0, %0, %c0_i32 : i32, i32, i32
  }
  func.func @transform_2(%arg0: i32, %arg1: i32) -> (i32, i32, i32) {
    %c0_i32 = arith.constant 0 : i32
    %c0_i32_0 = arith.constant 0 : i32
    %c0_i32_1 = arith.constant 0 : i32
    %c0_i32_2 = arith.constant 0 : i32
    return %c0_i32, %c0_i32_0, %c0_i32_1 : i32, i32, i32
  }
  func.func @transform_3(%arg0: i32, %arg1: i32) -> (i32, i32) {
    %c0_i32 = arith.constant 0 : i32
    %c0_i32_0 = arith.constant 0 : i32
    %c0_i32_1 = arith.constant 0 : i32
    return %c0_i32, %c0_i32_0 : i32, i32
  }
  func.func @transform_4(%arg0: i32, %arg1: i32) -> (i32, i32, i32) {
    %c0_i32 = arith.constant 0 : i32
    %c0_i32_0 = arith.constant 0 : i32
    return %arg0, %arg1, %c0_i32 : i32, i32, i32
  }
  func.func @transform_5(%arg0: i32, %arg1: i32) -> (i32, i32, i32) {
    %c0_i32 = arith.constant 0 : i32
    %c0_i32_0 = arith.constant 0 : i32
    return %arg0, %arg1, %c0_i32 : i32, i32, i32
  }
}

module attributes {stable_mosaic.version = 11 : i64} {
  func.func @kernel(%arg0: i32, %arg1: i32, %arg2: memref<1x64x16xbf16, #tpu.memory_space<vmem>>, %arg3: memref<1x64x16xbf16, #tpu.memory_space<vmem>>, %arg4: memref<3x16x16xbf16, #tpu.memory_space<vmem>>, %arg5: memref<1x16xf32, #tpu.memory_space<vmem>>, %arg6: memref<1x64x16xbf16, #tpu.memory_space<vmem>>, %arg7: memref<128x16xf32, #tpu.memory_space<vmem>>) attributes {dimension_semantics = [#tpu.dimension_semantics<parallel>, #tpu.dimension_semantics<parallel>], iteration_bounds = array<i64: 2, 1>, scalar_prefetch = 0 : i64, scratch_operands = 1 : i64, tpu.core_type = #tpu.core_type<tc>, window_params = [{transform_indices = @transform_0, window_bounds = array<i64: 1, 64, 16>}, {transform_indices = @transform_1, window_bounds = array<i64: 1, 64, 16>}, {pipeline_mode = #tpu.pipeline_mode<synchronous>, transform_indices = @transform_2, window_bounds = array<i64: 3, 16, 16>}, {pipeline_mode = #tpu.pipeline_mode<synchronous>, transform_indices = @transform_3, window_bounds = array<i64: 1, 16>}, {transform_indices = @transform_4, window_bounds = array<i64: 1, 64, 16>}]} {
    %c0 = arith.constant 0 : index
    %c0_0 = arith.constant 0 : index
    %c0_1 = arith.constant 0 : index
    %0 = vector.load %arg2[%c0, %c0_0, %c0_1] : memref<1x64x16xbf16, #tpu.memory_space<vmem>>, vector<1x64x16xbf16>
    %1 = vector.shape_cast %0 : vector<1x64x16xbf16> to vector<64x16xbf16>
    %2 = arith.extf %1 : vector<64x16xbf16> to vector<64x16xf32>
    %cst = arith.constant 0.000000e+00 : f32
    %3 = vector.broadcast %cst : f32 to vector<64x16xf32>
    %4 = arith.cmpf oge, %2, %3 : vector<64x16xf32>
    %cst_2 = arith.constant 1.000000e-01 : f32
    %5 = vector.broadcast %cst_2 : f32 to vector<64x16xf32>
    %6 = arith.mulf %5, %2 : vector<64x16xf32>
    %7 = arith.select %4, %2, %6 : vector<64x16xi1>, vector<64x16xf32>
    %c0_3 = arith.constant 0 : index
    %c0_4 = arith.constant 0 : index
    %8 = vector.load %arg7[%c0_3, %c0_4] : memref<128x16xf32, #tpu.memory_space<vmem>>, vector<64x16xf32>
    tpu.vector_store %arg7[%c0_3, %c0_4], %7 {strides = array<i32>} : memref<128x16xf32, #tpu.memory_space<vmem>>, vector<64x16xf32>,
    %c0_5 = arith.constant 0 : index
    %c0_6 = arith.constant 0 : index
    %c0_7 = arith.constant 0 : index
    %9 = vector.load %arg3[%c0_5, %c0_6, %c0_7] : memref<1x64x16xbf16, #tpu.memory_space<vmem>>, vector<1x64x16xbf16>
    %10 = vector.shape_cast %9 : vector<1x64x16xbf16> to vector<64x16xbf16>
    %11 = arith.extf %10 : vector<64x16xbf16> to vector<64x16xf32>
    %cst_8 = arith.constant 0.000000e+00 : f32
    %12 = vector.broadcast %cst_8 : f32 to vector<64x16xf32>
    %13 = arith.cmpf oge, %11, %12 : vector<64x16xf32>
    %cst_9 = arith.constant 1.000000e-01 : f32
    %14 = vector.broadcast %cst_9 : f32 to vector<64x16xf32>
    %15 = arith.mulf %14, %11 : vector<64x16xf32>
    %16 = arith.select %13, %11, %15 : vector<64x16xi1>, vector<64x16xf32>
    %c64 = arith.constant 64 : index
    %c0_10 = arith.constant 0 : index
    %17 = vector.load %arg7[%c64, %c0_10] : memref<128x16xf32, #tpu.memory_space<vmem>>, vector<64x16xf32>
    tpu.vector_store %arg7[%c64, %c0_10], %16 {strides = array<i32>} : memref<128x16xf32, #tpu.memory_space<vmem>>, vector<64x16xf32>,
    %cst_11 = arith.constant 0.000000e+00 : f32
    %18 = vector.broadcast %cst_11 : f32 to vector<64x16xf32>
    %c0_12 = arith.constant 0 : index
    %c0_13 = arith.constant 0 : index
    %19 = vector.load %arg7[%c0_12, %c0_13] : memref<128x16xf32, #tpu.memory_space<vmem>>, vector<64x16xf32>
    %20 = arith.truncf %19 : vector<64x16xf32> to vector<64x16xbf16>
    %c0_14 = arith.constant 0 : index
    %c0_15 = arith.constant 0 : index
    %c0_16 = arith.constant 0 : index
    %21 = vector.load %arg4[%c0_14, %c0_15, %c0_16] : memref<3x16x16xbf16, #tpu.memory_space<vmem>>, vector<1x16x16xbf16>
    %22 = vector.shape_cast %21 : vector<1x16x16xbf16> to vector<16x16xbf16>
    %cst_17 = arith.constant dense<0.000000e+00> : vector<64x16xf32>
    %23 = tpu.matmul %20, %22, %cst_17 {dimension_numbers = #tpu.dot_dimension_numbers<[1], [0], [0], [1], [0, 0, 1, 1], [], []>} : vector<64x16xbf16>, vector<16x16xbf16>, vector<64x16xf32> -> vector<64x16xf32>
    %24 = arith.addf %18, %23 : vector<64x16xf32>
    %c3 = arith.constant 3 : index
    %c0_18 = arith.constant 0 : index
    %25 = vector.load %arg7[%c3, %c0_18] : memref<128x16xf32, #tpu.memory_space<vmem>>, vector<64x16xf32>
    %26 = arith.truncf %25 : vector<64x16xf32> to vector<64x16xbf16>
    %c1 = arith.constant 1 : index
    %c0_19 = arith.constant 0 : index
    %c0_20 = arith.constant 0 : index
    %27 = vector.load %arg4[%c1, %c0_19, %c0_20] : memref<3x16x16xbf16, #tpu.memory_space<vmem>>, vector<1x16x16xbf16>
    %28 = vector.shape_cast %27 : vector<1x16x16xbf16> to vector<16x16xbf16>
    %cst_21 = arith.constant dense<0.000000e+00> : vector<64x16xf32>
    %29 = tpu.matmul %26, %28, %cst_21 {dimension_numbers = #tpu.dot_dimension_numbers<[1], [0], [0], [1], [0, 0, 1, 1], [], []>} : vector<64x16xbf16>, vector<16x16xbf16>, vector<64x16xf32> -> vector<64x16xf32>
    %30 = arith.addf %24, %29 : vector<64x16xf32>
    %c6 = arith.constant 6 : index
    %c0_22 = arith.constant 0 : index
    %31 = vector.load %arg7[%c6, %c0_22] : memref<128x16xf32, #tpu.memory_space<vmem>>, vector<64x16xf32>
    %32 = arith.truncf %31 : vector<64x16xf32> to vector<64x16xbf16>
    %c2 = arith.constant 2 : index
    %c0_23 = arith.constant 0 : index
    %c0_24 = arith.constant 0 : index
    %33 = vector.load %arg4[%c2, %c0_23, %c0_24] : memref<3x16x16xbf16, #tpu.memory_space<vmem>>, vector<1x16x16xbf16>
    %34 = vector.shape_cast %33 : vector<1x16x16xbf16> to vector<16x16xbf16>
    %cst_25 = arith.constant dense<0.000000e+00> : vector<64x16xf32>
    %35 = tpu.matmul %32, %34, %cst_25 {dimension_numbers = #tpu.dot_dimension_numbers<[1], [0], [0], [1], [0, 0, 1, 1], [], []>} : vector<64x16xbf16>, vector<16x16xbf16>, vector<64x16xf32> -> vector<64x16xf32>
    %36 = arith.addf %30, %35 : vector<64x16xf32>
    %c0_26 = arith.constant 0 : index
    %c0_27 = arith.constant 0 : index
    %37 = vector.load %arg5[%c0_26, %c0_27] : memref<1x16xf32, #tpu.memory_space<vmem>>, vector<1x16xf32>
    %38 = vector.broadcast %37 : vector<1x16xf32> to vector<64x16xf32>
    %39 = arith.addf %36, %38 : vector<64x16xf32>
    %cst_28 = arith.constant 0.000000e+00 : f32
    %40 = vector.broadcast %cst_28 : f32 to vector<64x16xf32>
    %41 = arith.cmpf oge, %39, %40 : vector<64x16xf32>
    %cst_29 = arith.constant 1.000000e-01 : f32
    %42 = vector.broadcast %cst_29 : f32 to vector<64x16xf32>
    %43 = arith.mulf %42, %39 : vector<64x16xf32>
    %44 = arith.select %41, %39, %43 : vector<64x16xi1>, vector<64x16xf32>
    %45 = arith.truncf %44 : vector<64x16xf32> to vector<64x16xbf16>
    %c0_30 = arith.constant 0 : index
    %c0_31 = arith.constant 0 : index
    %c0_32 = arith.constant 0 : index
    %46 = vector.load %arg6[%c0_30, %c0_31, %c0_32] : memref<1x64x16xbf16, #tpu.memory_space<vmem>>, vector<1x64x16xbf16>
    %47 = vector.shape_cast %46 : vector<1x64x16xbf16> to vector<64x16xbf16>
    %48 = vector.shape_cast %45 : vector<64x16xbf16> to vector<1x64x16xbf16>
    tpu.vector_store %arg6[%c0_30, %c0_31, %c0_32], %48 {strides = array<i32>} : memref<1x64x16xbf16, #tpu.memory_space<vmem>>, vector<1x64x16xbf16>,
    return
  }
  func.func @transform_0(%arg0: i32, %arg1: i32) -> (i32, i32, i32) {
    %c0_i32 = arith.constant 0 : i32
    %c0_i32_0 = arith.constant 0 : i32
    return %arg0, %arg1, %c0_i32 : i32, i32, i32
  }
  func.func @transform_1(%arg0: i32, %arg1: i32) -> (i32, i32, i32) {
    %c1_i32 = arith.constant 1 : i32
    %0 = arith.addi %arg1, %c1_i32 : i32
    %c0_i32 = arith.constant 0 : i32
    %c0_i32_0 = arith.constant 0 : i32
    return %arg0, %0, %c0_i32 : i32, i32, i32
  }
  func.func @transform_2(%arg0: i32, %arg1: i32) -> (i32, i32, i32) {
    %c0_i32 = arith.constant 0 : i32
    %c0_i32_0 = arith.constant 0 : i32
    %c0_i32_1 = arith.constant 0 : i32
    %c0_i32_2 = arith.constant 0 : i32
    return %c0_i32, %c0_i32_0, %c0_i32_1 : i32, i32, i32
  }
  func.func @transform_3(%arg0: i32, %arg1: i32) -> (i32, i32) {
    %c0_i32 = arith.constant 0 : i32
    %c0_i32_0 = arith.constant 0 : i32
    %c0_i32_1 = arith.constant 0 : i32
    return %c0_i32, %c0_i32_0 : i32, i32
  }
  func.func @transform_4(%arg0: i32, %arg1: i32) -> (i32, i32, i32) {
    %c0_i32 = arith.constant 0 : i32
    %c0_i32_0 = arith.constant 0 : i32
    return %arg0, %arg1, %c0_i32 : i32, i32, i32
  }
}

module attributes {stable_mosaic.version = 11 : i64} {
  func.func @kernel(%arg0: i32, %arg1: memref<2x64x16xbf16, #tpu.memory_space<vmem>>, %arg2: memref<2x64x16xbf16, #tpu.memory_space<vmem>>, %arg3: memref<7x1x16xf32, #tpu.memory_space<vmem>>, %arg4: memref<1x1xf32, #tpu.memory_space<vmem>>, %arg5: memref<2x64xf32, #tpu.memory_space<vmem>>, %arg6: memref<2x128x16xf32, #tpu.memory_space<vmem>>) attributes {dimension_semantics = [#tpu.dimension_semantics<parallel>], iteration_bounds = array<i64: 1>, scalar_prefetch = 0 : i64, scratch_operands = 1 : i64, tpu.core_type = #tpu.core_type<tc>, window_params = [{transform_indices = @transform_0, window_bounds = array<i64: 2, 64, 16>}, {transform_indices = @transform_1, window_bounds = array<i64: 2, 64, 16>}, {pipeline_mode = #tpu.pipeline_mode<synchronous>, transform_indices = @transform_2, window_bounds = array<i64: 7, 1, 16>}, {pipeline_mode = #tpu.pipeline_mode<synchronous>, transform_indices = @transform_3, window_bounds = array<i64: 1, 1>}, {transform_indices = @transform_4, window_bounds = array<i64: 2, 64>}]} {
    %c0 = arith.constant 0 : index
    %c0_0 = arith.constant 0 : index
    %c0_1 = arith.constant 0 : index
    %0 = vector.load %arg1[%c0, %c0_0, %c0_1] : memref<2x64x16xbf16, #tpu.memory_space<vmem>>, vector<2x64x16xbf16>
    %1 = arith.extf %0 : vector<2x64x16xbf16> to vector<2x64x16xf32>
    %cst = arith.constant 0.000000e+00 : f32
    %2 = vector.broadcast %cst : f32 to vector<2x64x16xf32>
    %3 = arith.cmpf oge, %1, %2 : vector<2x64x16xf32>
    %cst_2 = arith.constant 1.000000e-01 : f32
    %4 = vector.broadcast %cst_2 : f32 to vector<2x64x16xf32>
    %5 = arith.mulf %4, %1 : vector<2x64x16xf32>
    %6 = arith.select %3, %1, %5 : vector<2x64x16xi1>, vector<2x64x16xf32>
    %c0_3 = arith.constant 0 : index
    %c0_4 = arith.constant 0 : index
    %c0_5 = arith.constant 0 : index
    %7 = vector.load %arg6[%c0_3, %c0_4, %c0_5] : memref<2x128x16xf32, #tpu.memory_space<vmem>>, vector<2x64x16xf32>
    tpu.vector_store %arg6[%c0_3, %c0_4, %c0_5], %6 {strides = array<i32>} : memref<2x128x16xf32, #tpu.memory_space<vmem>>, vector<2x64x16xf32>,
    %c0_6 = arith.constant 0 : index
    %c0_7 = arith.constant 0 : index
    %c0_8 = arith.constant 0 : index
    %8 = vector.load %arg2[%c0_6, %c0_7, %c0_8] : memref<2x64x16xbf16, #tpu.memory_space<vmem>>, vector<2x64x16xbf16>
    %9 = arith.extf %8 : vector<2x64x16xbf16> to vector<2x64x16xf32>
    %cst_9 = arith.constant 0.000000e+00 : f32
    %10 = vector.broadcast %cst_9 : f32 to vector<2x64x16xf32>
    %11 = arith.cmpf oge, %9, %10 : vector<2x64x16xf32>
    %cst_10 = arith.constant 1.000000e-01 : f32
    %12 = vector.broadcast %cst_10 : f32 to vector<2x64x16xf32>
    %13 = arith.mulf %12, %9 : vector<2x64x16xf32>
    %14 = arith.select %11, %9, %13 : vector<2x64x16xi1>, vector<2x64x16xf32>
    %c0_11 = arith.constant 0 : index
    %c64 = arith.constant 64 : index
    %c0_12 = arith.constant 0 : index
    %15 = vector.load %arg6[%c0_11, %c64, %c0_12] : memref<2x128x16xf32, #tpu.memory_space<vmem>>, vector<2x64x16xf32>
    tpu.vector_store %arg6[%c0_11, %c64, %c0_12], %14 {strides = array<i32>} : memref<2x128x16xf32, #tpu.memory_space<vmem>>, vector<2x64x16xf32>,
    %cst_13 = arith.constant 0.000000e+00 : f32
    %16 = vector.broadcast %cst_13 : f32 to vector<2x64x16xf32>
    %c0_14 = arith.constant 0 : index
    %c0_15 = arith.constant 0 : index
    %c0_16 = arith.constant 0 : index
    %17 = vector.load %arg6[%c0_14, %c0_15, %c0_16] : memref<2x128x16xf32, #tpu.memory_space<vmem>>, vector<2x64x16xf32>
    %c0_17 = arith.constant 0 : index
    %c0_18 = arith.constant 0 : index
    %c0_19 = arith.constant 0 : index
    %18 = vector.load %arg3[%c0_17, %c0_18, %c0_19] : memref<7x1x16xf32, #tpu.memory_space<vmem>>, vector<1x1x16xf32>
    %19 = vector.shape_cast %18 : vector<1x1x16xf32> to vector<1x16xf32>
    %20 = vector.shape_cast %19 : vector<1x16xf32> to vector<1x1x16xf32>
    %21 = vector.broadcast %20 : vector<1x1x16xf32> to vector<2x64x16xf32>
    %22 = arith.mulf %17, %21 : vector<2x64x16xf32>
    %23 = arith.addf %16, %22 : vector<2x64x16xf32>
    %c0_20 = arith.constant 0 : index
    %c1 = arith.constant 1 : index
    %c0_21 = arith.constant 0 : index
    %24 = vector.load %arg6[%c0_20, %c1, %c0_21] : memref<2x128x16xf32, #tpu.memory_space<vmem>>, vector<2x64x16xf32>
    %c1_22 = arith.constant 1 : index
    %c0_23 = arith.constant 0 : index
    %c0_24 = arith.constant 0 : index
    %25 = vector.load %arg3[%c1_22, %c0_23, %c0_24] : memref<7x1x16xf32, #tpu.memory_space<vmem>>, vector<1x1x16xf32>
    %26 = vector.shape_cast %25 : vector<1x1x16xf32> to vector<1x16xf32>
    %27 = vector.shape_cast %26 : vector<1x16xf32> to vector<1x1x16xf32>
    %28 = vector.broadcast %27 : vector<1x1x16xf32> to vector<2x64x16xf32>
    %29 = arith.mulf %24, %28 : vector<2x64x16xf32>
    %30 = arith.addf %23, %29 : vector<2x64x16xf32>
    %c0_25 = arith.constant 0 : index
    %c2 = arith.constant 2 : index
    %c0_26 = arith.constant 0 : index
    %31 = vector.load %arg6[%c0_25, %c2, %c0_26] : memref<2x128x16xf32, #tpu.memory_space<vmem>>, vector<2x64x16xf32>
    %c2_27 = arith.constant 2 : index
    %c0_28 = arith.constant 0 : index
    %c0_29 = arith.constant 0 : index
    %32 = vector.load %arg3[%c2_27, %c0_28, %c0_29] : memref<7x1x16xf32, #tpu.memory_space<vmem>>, vector<1x1x16xf32>
    %33 = vector.shape_cast %32 : vector<1x1x16xf32> to vector<1x16xf32>
    %34 = vector.shape_cast %33 : vector<1x16xf32> to vector<1x1x16xf32>
    %35 = vector.broadcast %34 : vector<1x1x16xf32> to vector<2x64x16xf32>
    %36 = arith.mulf %31, %35 : vector<2x64x16xf32>
    %37 = arith.addf %30, %36 : vector<2x64x16xf32>
    %c0_30 = arith.constant 0 : index
    %c3 = arith.constant 3 : index
    %c0_31 = arith.constant 0 : index
    %38 = vector.load %arg6[%c0_30, %c3, %c0_31] : memref<2x128x16xf32, #tpu.memory_space<vmem>>, vector<2x64x16xf32>
    %c3_32 = arith.constant 3 : index
    %c0_33 = arith.constant 0 : index
    %c0_34 = arith.constant 0 : index
    %39 = vector.load %arg3[%c3_32, %c0_33, %c0_34] : memref<7x1x16xf32, #tpu.memory_space<vmem>>, vector<1x1x16xf32>
    %40 = vector.shape_cast %39 : vector<1x1x16xf32> to vector<1x16xf32>
    %41 = vector.shape_cast %40 : vector<1x16xf32> to vector<1x1x16xf32>
    %42 = vector.broadcast %41 : vector<1x1x16xf32> to vector<2x64x16xf32>
    %43 = arith.mulf %38, %42 : vector<2x64x16xf32>
    %44 = arith.addf %37, %43 : vector<2x64x16xf32>
    %c0_35 = arith.constant 0 : index
    %c4 = arith.constant 4 : index
    %c0_36 = arith.constant 0 : index
    %45 = vector.load %arg6[%c0_35, %c4, %c0_36] : memref<2x128x16xf32, #tpu.memory_space<vmem>>, vector<2x64x16xf32>
    %c4_37 = arith.constant 4 : index
    %c0_38 = arith.constant 0 : index
    %c0_39 = arith.constant 0 : index
    %46 = vector.load %arg3[%c4_37, %c0_38, %c0_39] : memref<7x1x16xf32, #tpu.memory_space<vmem>>, vector<1x1x16xf32>
    %47 = vector.shape_cast %46 : vector<1x1x16xf32> to vector<1x16xf32>
    %48 = vector.shape_cast %47 : vector<1x16xf32> to vector<1x1x16xf32>
    %49 = vector.broadcast %48 : vector<1x1x16xf32> to vector<2x64x16xf32>
    %50 = arith.mulf %45, %49 : vector<2x64x16xf32>
    %51 = arith.addf %44, %50 : vector<2x64x16xf32>
    %c0_40 = arith.constant 0 : index
    %c5 = arith.constant 5 : index
    %c0_41 = arith.constant 0 : index
    %52 = vector.load %arg6[%c0_40, %c5, %c0_41] : memref<2x128x16xf32, #tpu.memory_space<vmem>>, vector<2x64x16xf32>
    %c5_42 = arith.constant 5 : index
    %c0_43 = arith.constant 0 : index
    %c0_44 = arith.constant 0 : index
    %53 = vector.load %arg3[%c5_42, %c0_43, %c0_44] : memref<7x1x16xf32, #tpu.memory_space<vmem>>, vector<1x1x16xf32>
    %54 = vector.shape_cast %53 : vector<1x1x16xf32> to vector<1x16xf32>
    %55 = vector.shape_cast %54 : vector<1x16xf32> to vector<1x1x16xf32>
    %56 = vector.broadcast %55 : vector<1x1x16xf32> to vector<2x64x16xf32>
    %57 = arith.mulf %52, %56 : vector<2x64x16xf32>
    %58 = arith.addf %51, %57 : vector<2x64x16xf32>
    %c0_45 = arith.constant 0 : index
    %c6 = arith.constant 6 : index
    %c0_46 = arith.constant 0 : index
    %59 = vector.load %arg6[%c0_45, %c6, %c0_46] : memref<2x128x16xf32, #tpu.memory_space<vmem>>, vector<2x64x16xf32>
    %c6_47 = arith.constant 6 : index
    %c0_48 = arith.constant 0 : index
    %c0_49 = arith.constant 0 : index
    %60 = vector.load %arg3[%c6_47, %c0_48, %c0_49] : memref<7x1x16xf32, #tpu.memory_space<vmem>>, vector<1x1x16xf32>
    %61 = vector.shape_cast %60 : vector<1x1x16xf32> to vector<1x16xf32>
    %62 = vector.shape_cast %61 : vector<1x16xf32> to vector<1x1x16xf32>
    %63 = vector.broadcast %62 : vector<1x1x16xf32> to vector<2x64x16xf32>
    %64 = arith.mulf %59, %63 : vector<2x64x16xf32>
    %65 = arith.addf %58, %64 : vector<2x64x16xf32>
    %cst_50 = arith.constant dense<0.000000e+00> : vector<2x64xf32>
    %66 = vector.multi_reduction <add>, %65, %cst_50 [2] : vector<2x64x16xf32> to vector<2x64xf32>
    %c0_51 = arith.constant 0 : index
    %c0_52 = arith.constant 0 : index
    %67 = vector.load %arg4[%c0_51, %c0_52] : memref<1x1xf32, #tpu.memory_space<vmem>>, vector<1x1xf32>
    %68 = vector.broadcast %67 : vector<1x1xf32> to vector<2x64xf32>
    %69 = arith.addf %66, %68 : vector<2x64xf32>
    %70 = math.tanh %69 : vector<2x64xf32>
    %c0_53 = arith.constant 0 : index
    %c0_54 = arith.constant 0 : index
    %71 = vector.load %arg5[%c0_53, %c0_54] : memref<2x64xf32, #tpu.memory_space<vmem>>, vector<2x64xf32>
    tpu.vector_store %arg5[%c0_53, %c0_54], %70 {strides = array<i32>} : memref<2x64xf32, #tpu.memory_space<vmem>>, vector<2x64xf32>,
    return
  }
  func.func @transform_0(%arg0: i32) -> (i32, i32, i32) {
    %c0_i32 = arith.constant 0 : i32
    %c0_i32_0 = arith.constant 0 : i32
    %c0_i32_1 = arith.constant 0 : i32
    return %c0_i32, %arg0, %c0_i32_0 : i32, i32, i32
  }
  func.func @transform_1(%arg0: i32) -> (i32, i32, i32) {
    %c1_i32 = arith.constant 1 : i32
    %0 = arith.addi %arg0, %c1_i32 : i32
    %c0_i32 = arith.constant 0 : i32
    %c0_i32_0 = arith.constant 0 : i32
    %c0_i32_1 = arith.constant 0 : i32
    return %c0_i32, %0, %c0_i32_0 : i32, i32, i32
  }
  func.func @transform_2(%arg0: i32) -> (i32, i32, i32) {
    %c0_i32 = arith.constant 0 : i32
    %c0_i32_0 = arith.constant 0 : i32
    %c0_i32_1 = arith.constant 0 : i32
    %c0_i32_2 = arith.constant 0 : i32
    return %c0_i32, %c0_i32_0, %c0_i32_1 : i32, i32, i32
  }
  func.func @transform_3(%arg0: i32) -> (i32, i32) {
    %c0_i32 = arith.constant 0 : i32
    %c0_i32_0 = arith.constant 0 : i32
    %c0_i32_1 = arith.constant 0 : i32
    return %c0_i32, %c0_i32_0 : i32, i32
  }
  func.func @transform_4(%arg0: i32) -> (i32, i32) {
    %c0_i32 = arith.constant 0 : i32
    %c0_i32_0 = arith.constant 0 : i32
    return %c0_i32, %arg0 : i32, i32
  }
}

</mosaic_0001>

<llo_original>
// kernel: fwd.13
$region0: #{fwd.13}
  #allocation0 [shape = 'u32[]', space=smem, size = 0x4, offset = 0x4, fixed_abs, tag = 'smem constant byte address 0x4 - core index']
  #allocation1 [shape = 'u32[72,128]{1,0:T(1,128)}', space=vmem, size = 0x9000, scoped, tag = 'internal scratch']
  #allocation2 [shape = 'f32[32,128]{1,0:T(8,128)}', space=vmem, size = 0x4000, scoped, tag = 'scratch operand']
  %s0 = inlined_call_operand.vmem [shape: bf16[2,32,128], index: 0, kind: input, shape index: {}, may-alias: {0,1}]
  %s1 = inlined_call_operand.vmem [shape: bf16[2,32,128], index: 1, kind: input, shape index: {}, may-alias: {0,1}]
  %s2 = inlined_call_operand.vmem [shape: bf16[1,128,64], index: 2, kind: input, shape index: {}]
  %s3 = inlined_call_operand.vmem [shape: f32[1,64], index: 3, kind: input, shape index: {}]
  %s4 = inlined_call_operand.vmem [shape: bf16[2,16,64], index: 4, kind: output, shape index: {}]
  %s5 = sld [smem:[#allocation0]]
  $region49: #{fwd.13} parent=0
    _
  %s7 = ssub.s32 1, %s5
  %s8 = scalar_select 0, %s7, %s5
  loop: start=0, step=1, limit=4
  $region2: #{fwd.13} parent=0 // loop_pre_header
    _
  $region3: #{fwd.13} parent=0 // loop_header
    %s10 = sphi 0, %s14
    %p11 = scmp.ge.s32.totalorder %s10, 4
    %s17 = sphi 0, %s29
    %s18 = sphi 0, %s25
    %s19 = sphi 0, %s17
    %s20 = sphi 0, %s18
    %s21 = sphi 0, %s19
    %s22 = sphi 0, %s20
    %s34 = sphi 0, %s36
    %s37 = sphi 0, %s34
    %s38 = sphi 0, %s37
    %s54 = sphi 0, %s38
    %s64 = sphi 0, %s66
    %s67 = sphi 0, %s64
    %s68 = sphi 0, %s67
    %s84 = sphi 0, %s68
    %s88 = sphi 0, %s88
    %s90 = sphi 0, %s88
    %s91 = sphi 0, %s90
    %s105 = sphi 0, %s91
    %s109 = sphi 0, %s109
    %s111 = sphi 0, %s109
    %s112 = sphi 0, %s111
    %s126 = sphi 0, %s112
    %s134 = sphi 0, %s136
    %s137 = sphi 0, %s134
    %s138 = sphi 0, %s137
    %s154 = sphi 0, %s138
  $region4: #{fwd.13} parent=0 // loop_header_branch
    %13 = sbr.rel (%p11) target = $region8
  $region5: #{fwd.13} parent=0 // loop_body
    %s15 = ssub.s32 %s10, 1
    %s16 = ssub.s32 %s10, 2
    %s23 = sadd.s32 1, %s18
    %p24 = scmp.ge.s32.totalorder %s23, 1
    %s25 = scalar_select %p24, 0, %s23
    %s26 = sadd.s32 1, %s17
    %s27 = scalar_select %p24, %s26, %s17
    %p28 = scmp.ge.s32.totalorder %s27, 2
    %s29 = scalar_select %p28, 0, %s27
    %s30 = ssub.s32 %s17, %s29
    %s31 = ssub.s32 %s18, %s25
    %s32 = sor.u32 %s30, %s31
    %p33 = scmp.eq.s32.totalorder %s32, 0
    %s35 = sadd.s32 %s34, 1
    %s36 = scalar_select %p33, %s34, %s35
    %p39 = pneg %p33
    %p40 = scmp.eq.s32.totalorder %s10, 1
    %p41 = por %p39, %p40
    %p42 = scmp.ne.s32.totalorder %s34, %s37
    %p43 = scmp.eq.s32.totalorder %s10, 0
    %p44 = por %p42, %p43
    %p45 = scmp.ne.s32.totalorder %s34, %s37
    %p46 = scmp.eq.s32.totalorder %s15, 1
    %p47 = por %p45, %p46
    %p48 = scmp.ne.s32.totalorder %s37, %s38
    %p49 = scmp.eq.s32.totalorder %s15, 0
    %p50 = por %p48, %p49
    %p51 = scmp.ne.s32.totalorder %s37, %s38
    %p52 = scmp.eq.s32.totalorder %s16, 1
    %p53 = por %p51, %p52
    %p55 = scmp.ne.s32.totalorder %s38, %s54
    %p56 = scmp.eq.s32.totalorder %s16, 0
    %p57 = por %p55, %p56
    %s58 = sadd.s32 %s18, 1
    %s59 = sadd.s32 %s25, 1
    %s60 = ssub.s32 %s17, %s29
    %s61 = ssub.s32 %s58, %s59
    %s62 = sor.u32 %s60, %s61
    %p63 = scmp.eq.s32.totalorder %s62, 0
    %s65 = sadd.s32 %s64, 1
    %s66 = scalar_select %p63, %s64, %s65
    %p69 = pneg %p63
    %p70 = scmp.eq.s32.totalorder %s10, 1
    %p71 = por %p69, %p70
    %p72 = scmp.ne.s32.totalorder %s64, %s67
    %p73 = scmp.eq.s32.totalorder %s10, 0
    %p74 = por %p72, %p73
    %p75 = scmp.ne.s32.totalorder %s64, %s67
    %p76 = scmp.eq.s32.totalorder %s15, 1
    %p77 = por %p75, %p76
    %p78 = scmp.ne.s32.totalorder %s67, %s68
    %p79 = scmp.eq.s32.totalorder %s15, 0
    %p80 = por %p78, %p79
    %p81 = scmp.ne.s32.totalorder %s67, %s68
    %p82 = scmp.eq.s32.totalorder %s16, 1
    %p83 = por %p81, %p82
    %p85 = scmp.ne.s32.totalorder %s68, %s84
    %p86 = scmp.eq.s32.totalorder %s16, 0
    %p87 = por %p85, %p86
    %s89 = sadd.s32 %s88, 1
    %p92 = scmp.eq.s32.totalorder %s10, 1
    %p93 = scmp.ne.s32.totalorder %s88, %s90
    %p94 = scmp.eq.s32.totalorder %s10, 0
    %p95 = por %p93, %p94
    %p96 = scmp.ne.s32.totalorder %s88, %s90
    %p97 = scmp.eq.s32.totalorder %s15, 1
    %p98 = por %p96, %p97
    %p99 = scmp.ne.s32.totalorder %s90, %s91
    %p100 = scmp.eq.s32.totalorder %s15, 0
    %p101 = por %p99, %p100
    %p102 = scmp.ne.s32.totalorder %s90, %s91
    %p103 = scmp.eq.s32.totalorder %s16, 1
    %p104 = por %p102, %p103
    %p106 = scmp.ne.s32.totalorder %s91, %s105
    %p107 = scmp.eq.s32.totalorder %s16, 0
    %p108 = por %p106, %p107
    %s110 = sadd.s32 %s109, 1
    %p113 = scmp.eq.s32.totalorder %s10, 1
    %p114 = scmp.ne.s32.totalorder %s109, %s111
    %p115 = scmp.eq.s32.totalorder %s10, 0
    %p116 = por %p114, %p115
    %p117 = scmp.ne.s32.totalorder %s109, %s111
    %p118 = scmp.eq.s32.totalorder %s15, 1
    %p119 = por %p117, %p118
    %p120 = scmp.ne.s32.totalorder %s111, %s112
    %p121 = scmp.eq.s32.totalorder %s15, 0
    %p122 = por %p120, %p121
    %p123 = scmp.ne.s32.totalorder %s111, %s112
    %p124 = scmp.eq.s32.totalorder %s16, 1
    %p125 = por %p123, %p124
    %p127 = scmp.ne.s32.totalorder %s112, %s126
    %p128 = scmp.eq.s32.totalorder %s16, 0
    %p129 = por %p127, %p128
    %s130 = ssub.s32 %s17, %s29
    %s131 = ssub.s32 %s18, %s25
    %s132 = sor.u32 %s130, %s131
    %p133 = scmp.eq.s32.totalorder %s132, 0
    %s135 = sadd.s32 %s134, 1
    %s136 = scalar_select %p133, %s134, %s135
    %p139 = pneg %p133
    %p140 = scmp.eq.s32.totalorder %s10, 1
    %p141 = por %p139, %p140
    %p142 = scmp.ne.s32.totalorder %s134, %s137
    %p143 = scmp.eq.s32.totalorder %s10, 0
    %p144 = por %p142, %p143
    %p145 = scmp.ne.s32.totalorder %s134, %s137
    %p146 = scmp.eq.s32.totalorder %s15, 1
    %p147 = por %p145, %p146
    %p148 = scmp.ne.s32.totalorder %s137, %s138
    %p149 = scmp.eq.s32.totalorder %s15, 0
    %p150 = por %p148, %p149
    %p151 = scmp.ne.s32.totalorder %s137, %s138
    %p152 = scmp.eq.s32.totalorder %s16, 1
    %p153 = por %p151, %p152
    %p155 = scmp.ne.s32.totalorder %s138, %s154
    %p156 = scmp.eq.s32.totalorder %s16, 0
    %p157 = por %p155, %p156
    %p158 = scmp.le.s32.totalorder 1, %s10
    %p159 = scmp.lt.s32.totalorder %s10, 3
    %p160 = pnand %p158, %p159
    %p161 = pneg %p160
    // Predicated region
    $region9: #{fwd.13} parent=5 // pred_check
      _
    $region10: #{fwd.13} parent=5 // pred_check_branch
      %163 = sbr.rel (%p160) target = $region12
    $region11: #{fwd.13} parent=5 // pred_region
      %s164 = ssub.s32 %s10, 1
      // Predicated region
      $region13: #{fwd.13} parent=11 // pred_check
        %p165 = pneg %p101
      $region14: #{fwd.13} parent=11 // pred_check_branch
        %167 = sbr.rel (%p165) target = $region16
      $region15: #{fwd.13} parent=11 // pred_region
        _
      $region16: #{fwd.13} parent=11 // pred_fallthru
        _
      // Predicated region
      $region17: #{fwd.13} parent=11 // pred_check
        %p168 = pneg %p122
      $region18: #{fwd.13} parent=11 // pred_check_branch
        %170 = sbr.rel (%p168) target = $region20
      $region19: #{fwd.13} parent=11 // pred_region
        _
      $region20: #{fwd.13} parent=11 // pred_fallthru
        _
    $region12: #{fwd.13} parent=5 // pred_fallthru
      _
    %p171 = scmp.lt.s32.totalorder %s10, 2
    // Predicated region
    $region21: #{fwd.13} parent=5 // pred_check
      %p172 = pneg %p171
    $region22: #{fwd.13} parent=5 // pred_check_branch
      %174 = sbr.rel (%p172) target = $region24
    $region23: #{fwd.13} parent=5 // pred_region
      // Predicated region
      $region25: #{fwd.13} parent=23 // pred_check
        %p175 = pneg %p44
      $region26: #{fwd.13} parent=23 // pred_check_branch
        %177 = sbr.rel (%p175) target = $region28
      $region27: #{fwd.13} parent=23 // pred_region
        %s178 = smul.u32 2, %s18
        %p179 = scmp.lt.s32.totalorder %s17, 1
        %s180 = scalar_select %p179, %s17, 1
        %p181 = scmp.lt.s32.totalorder %s178, 3
        %s182 = scalar_select %p181, %s178, 3
        %s183 = smul.addr %s180, 4
        %s184 = sadd.s32 %s182, %s183
        %s185 = smul.addr %s184, 4
        %s186 = scalar_lea.vmem %s0, %s185
        %s187 = smul.u32 2, %s18
      $region28: #{fwd.13} parent=23 // pred_fallthru
        _
      // Predicated region
      $region29: #{fwd.13} parent=23 // pred_check
        %p188 = pneg %p74
      $region30: #{fwd.13} parent=23 // pred_check_branch
        %190 = sbr.rel (%p188) target = $region32
      $region31: #{fwd.13} parent=23 // pred_region
        %s191 = sadd.s32 %s18, 1
        %s192 = smul.u32 2, %s191
        %p193 = scmp.lt.s32.totalorder %s17, 1
        %s194 = scalar_select %p193, %s17, 1
        %p195 = scmp.lt.s32.totalorder %s192, 3
        %s196 = scalar_select %p195, %s192, 3
        %s197 = smul.addr %s194, 4
        %s198 = sadd.s32 %s196, %s197
        %s199 = smul.addr %s198, 4
        %s200 = scalar_lea.vmem %s1, %s199
        %s201 = sadd.s32 %s18, 1
        %s202 = smul.u32 2, %s201
      $region32: #{fwd.13} parent=23 // pred_fallthru
        _
    $region24: #{fwd.13} parent=5 // pred_fallthru
      _
    %p203 = scmp.le.s32.totalorder 1, %s10
    %p204 = scmp.lt.s32.totalorder %s10, 3
    %p205 = pnand %p203, %p204
    %p206 = pneg %p205
    // Predicated region
    $region33: #{fwd.13} parent=5 // pred_check
      _
    $region34: #{fwd.13} parent=5 // pred_check_branch
      %208 = sbr.rel (%p205) target = $region36
    $region35: #{fwd.13} parent=5 // pred_region
      %s209 = ssub.s32 %s10, 1
      %s210 = smul.u32 2, %s20
      %p211 = scmp.lt.s32.totalorder %s19, 1
      %s212 = scalar_select %p211, %s19, 1
      %p213 = scmp.lt.s32.totalorder %s210, 3
      %s214 = scalar_select %p213, %s210, 3
      %s215 = smul.addr %s212, 4
      %s216 = sadd.s32 %s214, %s215
      %s217 = smul.addr %s216, 4
      %s218 = scalar_lea.vmem %s0, %s217
      %p219 = pneg %p50
      %p220 = pneg %p47
      %s221 = sadd.s32 %s20, 1
      %s222 = smul.u32 2, %s221
      %p223 = scmp.lt.s32.totalorder %s19, 1
      %s224 = scalar_select %p223, %s19, 1
      %p225 = scmp.lt.s32.totalorder %s222, 3
      %s226 = scalar_select %p225, %s222, 3
      %s227 = smul.addr %s224, 4
      %s228 = sadd.s32 %s226, %s227
      %s229 = smul.addr %s228, 4
      %s230 = scalar_lea.vmem %s1, %s229
      %p231 = pneg %p80
      %p232 = pneg %p77
      %p233 = pneg %p101
      %p234 = pneg %p98
      %p235 = pneg %p122
      %p236 = pneg %p119
      %p237 = pneg %p150
      %p238 = pneg %p147
      %s239 = smul.u32 2, %s20
      %p240 = scmp.lt.s32.totalorder %s19, 1
      %s241 = scalar_select %p240, %s19, 1
      %p242 = scmp.lt.s32.totalorder %s239, 1
      %s243 = scalar_select %p242, %s239, 1
      %s244 = smul.addr %s241, 2
      %s245 = sadd.s32 %s243, %s244
      %s246 = smul.addr %s245, 4
      %s247 = scalar_lea.vmem %s4, %s246
      %s248 = smul.u32 2, %s20
      %p249 = scmp.lt.s32.totalorder %s19, 1
      %s250 = scalar_select %p249, %s19, 1
      %p251 = scmp.lt.s32.totalorder %s248, 3
      %s252 = scalar_select %p251, %s248, 3
      %s253 = smul.addr %s250, 4
      %s254 = sadd.s32 %s252, %s253
      %s255 = smul.addr %s254, 4
      %s256 = scalar_lea.vmem %s0, %s255
      %s257 = smul.u32 2, %s20
      %s258 = sadd.s32 %s20, 1
      %s259 = smul.u32 2, %s258
      %p260 = scmp.lt.s32.totalorder %s19, 1
      %s261 = scalar_select %p260, %s19, 1
      %p262 = scmp.lt.s32.totalorder %s259, 3
      %s263 = scalar_select %p262, %s259, 3
      %s264 = smul.addr %s261, 4
      %s265 = sadd.s32 %s263, %s264
      %s266 = smul.addr %s265, 4
      %s267 = scalar_lea.vmem %s1, %s266
      %s268 = sadd.s32 %s20, 1
      %s269 = smul.u32 2, %s268
      %s270 = smul.u32 2, %s20
      %p271 = scmp.lt.s32.totalorder %s19, 1
      %s272 = scalar_select %p271, %s19, 1
      %p273 = scmp.lt.s32.totalorder %s270, 1
      %s274 = scalar_select %p273, %s270, 1
      %s275 = smul.addr %s272, 2
      %s276 = sadd.s32 %s274, %s275
      %s277 = smul.addr %s276, 4
      %s278 = scalar_lea.vmem %s4, %s277
      %s279 = smul.u32 2, %s20
      %v280 = vld [vmem:[%s256] sm:$0xf]
      %v281 = vld [vmem:[%s256 + $0x4] sm:$0xf]
      %v282 = vunpack.c.l.bf16 %v280
      %v283 = vunpack.c.l.bf16 %v281
      %284 = vst [vmem:[#allocation2] sm:$0xff] %v282
      %285 = vst [vmem:[#allocation2 + $0x8] sm:$0xff] %v283
      %v286 = vld [vmem:[%s267] sm:$0xf]
      %v287 = vld [vmem:[%s267 + $0x4] sm:$0xf]
      %v288 = vunpack.c.l.bf16 %v286
      %v289 = vunpack.c.l.bf16 %v287
      %290 = vst [vmem:[#allocation2 + $0x10] sm:$0xff] %v288
      %291 = vst [vmem:[#allocation2 + $0x18] sm:$0xff] %v289
      %v292 = vld [vmem:[#allocation2] sm:$0xff]
      %v293 = vld [vmem:[#allocation2 + $0x8] sm:$0xff]
      %v294 = vpack.c.bf16 %v293, %v292
      %v295 = vld [vmem:[%s2] sm:$0xf]
      %v296 = vld [vmem:[%s2 + $0x4] sm:$0xf]
      %v297 = vld [vmem:[%s2 + $0x8] sm:$0xf]
      %v298 = vld [vmem:[%s2 + $0xc] sm:$0xf]
      %v299 = vld [vmem:[%s2 + $0x10] sm:$0xf]
      %v300 = vld [vmem:[%s2 + $0x14] sm:$0xf]
      %v301 = vld [vmem:[%s2 + $0x18] sm:$0xf]
      %v302 = vld [vmem:[%s2 + $0x1c] sm:$0xf]
      %v303 = vld [vmem:[%s2 + $0x20] sm:$0xf]
      %v304 = vld [vmem:[%s2 + $0x24] sm:$0xf]
      %v305 = vld [vmem:[%s2 + $0x28] sm:$0xf]
      %v306 = vld [vmem:[%s2 + $0x2c] sm:$0xf]
      %v307 = vld [vmem:[%s2 + $0x30] sm:$0xf]
      %v308 = vld [vmem:[%s2 + $0x34] sm:$0xf]
      %v309 = vld [vmem:[%s2 + $0x38] sm:$0xf]
      %v310 = vld [vmem:[%s2 + $0x3c] sm:$0xf]
      %v311 = vld [vmem:[%s3] sm:$0x1]
      %v313 = vperm.slane %v311, 0
      %v331 = vunpack.c.l.b16 %v295
      %v332 = vunpack.c.l.b16 %v296
      %v333 = vunpack.c.l.b16 %v297
      %v334 = vunpack.c.l.b16 %v298
      %v335 = vunpack.c.l.b16 %v299
      %v336 = vunpack.c.l.b16 %v300
      %v337 = vunpack.c.l.b16 %v301
      %v338 = vunpack.c.l.b16 %v302
      %v339 = vunpack.c.l.b16 %v303
      %v340 = vunpack.c.l.b16 %v304
      %v341 = vunpack.c.l.b16 %v305
      %v342 = vunpack.c.l.b16 %v306
      %v343 = vunpack.c.l.b16 %v307
      %v344 = vunpack.c.l.b16 %v308
      %v345 = vunpack.c.l.b16 %v309
      %v346 = vunpack.c.l.b16 %v310
      %v347 = vpack.c.b16 %v332, %v331
      %v348 = vpack.c.b16 %v334, %v333
      %v349 = vpack.c.b16 %v336, %v335
      %v350 = vpack.c.b16 %v338, %v337
      %v351 = vpack.c.b16 %v340, %v339
      %v352 = vpack.c.b16 %v342, %v341
      %v353 = vpack.c.b16 %v344, %v343
      %v354 = vpack.c.b16 %v346, %v345
      %363 = vmatpush.bf16.msra.mxu0 %v354
      %364 = vmatpush.bf16.msra.mxu0 %v353
      %365 = vmatpush.bf16.msra.mxu0 %v352
      %366 = vmatpush.bf16.msra.mxu0 %v351
      %367 = vmatpush.bf16.msra.mxu0 %v350
      %368 = vmatpush.bf16.msra.mxu0 %v349
      %369 = vmatpush.bf16.msra.mxu0 %v348
      %370 = vmatpush.bf16.msra.mxu0 %v347
      %371 = vmatmul.bf16.gmra.mxu0 %v294
      %v372 = vpop.f32.mrf.mxu0
      %v373 = vadd.f32 %v313, %v372
      %v374 = vpop.f32.mrf.mxu0
      %v375 = vadd.f32 %v313, %v374
      %376 = vdwg.mxu0
      %v377 = vpack.c.bf16 %v373, %v373
      %v378 = vpack.c.bf16 %v375, %v375
      %vm379 = vcmask 519168
      %380 = vst.msk [vmem:[%s278] sm:$0xf] %vm379, %v377
      %381 = vst.msk [vmem:[%s278 + $0x4] sm:$0xf] %vm379, %v378
      %s382 = smul.u32 2, %s20
      %p383 = scmp.lt.s32.totalorder %s19, 1
      %s384 = scalar_select %p383, %s19, 1
      %p385 = scmp.lt.s32.totalorder %s382, 1
      %s386 = scalar_select %p385, %s382, 1
      %s387 = smul.addr %s384, 2
      %s388 = sadd.s32 %s386, %s387
      %s389 = smul.addr %s388, 4
      %s390 = scalar_lea.vmem %s4, %s389
      // Predicated region
      $region37: #{fwd.13} parent=35 // pred_check
        %p391 = pneg %p147
      $region38: #{fwd.13} parent=35 // pred_check_branch
        %393 = sbr.rel (%p391) target = $region40
      $region39: #{fwd.13} parent=35 // pred_region
        %s394 = smul.u32 2, %s20
      $region40: #{fwd.13} parent=35 // pred_fallthru
        _
    $region36: #{fwd.13} parent=5 // pred_fallthru
      _
    %p395 = scmp.le.s32.totalorder 2, %s10
    // Predicated region
    $region41: #{fwd.13} parent=5 // pred_check
      %p396 = pneg %p395
    $region42: #{fwd.13} parent=5 // pred_check_branch
      %398 = sbr.rel (%p396) target = $region44
    $region43: #{fwd.13} parent=5 // pred_region
      %s399 = ssub.s32 %s10, 2
      // Predicated region
      $region45: #{fwd.13} parent=43 // pred_check
        %p400 = pneg %p153
      $region46: #{fwd.13} parent=43 // pred_check_branch
        %402 = sbr.rel (%p400) target = $region48
      $region47: #{fwd.13} parent=43 // pred_region
        %s403 = smul.u32 2, %s22
        %p404 = scmp.lt.s32.totalorder %s21, 1
        %s405 = scalar_select %p404, %s21, 1
        %p406 = scmp.lt.s32.totalorder %s403, 1
        %s407 = scalar_select %p406, %s403, 1
        %s408 = smul.addr %s405, 2
        %s409 = sadd.s32 %s407, %s408
        %s410 = smul.addr %s409, 4
        %s411 = scalar_lea.vmem %s4, %s410
      $region48: #{fwd.13} parent=43 // pred_fallthru
        _
    $region44: #{fwd.13} parent=5 // pred_fallthru
      _
  $region6: #{fwd.13} parent=0 // loop_footer
    %s14 = sadd.s32 1, %s10
  $region7: #{fwd.13} parent=0 // loop_footer_branch
    %9 = sbr.rel target = $region3
  $region8: #{fwd.13} parent=0 // loop_exit
    _

// kernel: fwd.14
$region0: #{fwd.14}
  #allocation0 [shape = 'u32[]', space=smem, size = 0x4, offset = 0x4, fixed_abs, tag = 'smem constant byte address 0x4 - core index']
  #allocation1 [shape = 'u32[72,128]{1,0:T(1,128)}', space=vmem, size = 0x9000, scoped, tag = 'internal scratch']
  #allocation2 [shape = 'f32[32,64]{1,0:T(8,128)}', space=vmem, size = 0x4000, scoped, tag = 'scratch operand']
  %s0 = inlined_call_operand.vmem [shape: bf16[2,32,64], index: 0, kind: input, shape index: {}, may-alias: {0,1}]
  %s1 = inlined_call_operand.vmem [shape: bf16[2,32,64], index: 1, kind: input, shape index: {}, may-alias: {0,1}]
  %s2 = inlined_call_operand.vmem [shape: bf16[7,64,64], index: 2, kind: input, shape index: {}]
  %s3 = inlined_call_operand.vmem [shape: f32[1,64], index: 3, kind: input, shape index: {}]
  %s4 = inlined_call_operand.vmem [shape: bf16[2,16,64], index: 4, kind: output, shape index: {}]
  %s5 = sld [smem:[#allocation0]]
  $region49: #{fwd.14} parent=0
    _
  %s7 = ssub.s32 1, %s5
  %s8 = scalar_select 0, %s7, %s5
  loop: start=0, step=1, limit=4
  $region2: #{fwd.14} parent=0 // loop_pre_header
    _
  $region3: #{fwd.14} parent=0 // loop_header
    %s10 = sphi 0, %s14
    %p11 = scmp.ge.s32.totalorder %s10, 4
    %s17 = sphi 0, %s29
    %s18 = sphi 0, %s25
    %s19 = sphi 0, %s17
    %s20 = sphi 0, %s18
    %s21 = sphi 0, %s19
    %s22 = sphi 0, %s20
    %s34 = sphi 0, %s36
    %s37 = sphi 0, %s34
    %s38 = sphi 0, %s37
    %s54 = sphi 0, %s38
    %s64 = sphi 0, %s66
    %s67 = sphi 0, %s64
    %s68 = sphi 0, %s67
    %s84 = sphi 0, %s68
    %s88 = sphi 0, %s88
    %s90 = sphi 0, %s88
    %s91 = sphi 0, %s90
    %s105 = sphi 0, %s91
    %s109 = sphi 0, %s109
    %s111 = sphi 0, %s109
    %s112 = sphi 0, %s111
    %s126 = sphi 0, %s112
    %s134 = sphi 0, %s136
    %s137 = sphi 0, %s134
    %s138 = sphi 0, %s137
    %s154 = sphi 0, %s138
  $region4: #{fwd.14} parent=0 // loop_header_branch
    %13 = sbr.rel (%p11) target = $region8
  $region5: #{fwd.14} parent=0 // loop_body
    %s15 = ssub.s32 %s10, 1
    %s16 = ssub.s32 %s10, 2
    %s23 = sadd.s32 1, %s18
    %p24 = scmp.ge.s32.totalorder %s23, 1
    %s25 = scalar_select %p24, 0, %s23
    %s26 = sadd.s32 1, %s17
    %s27 = scalar_select %p24, %s26, %s17
    %p28 = scmp.ge.s32.totalorder %s27, 2
    %s29 = scalar_select %p28, 0, %s27
    %s30 = ssub.s32 %s17, %s29
    %s31 = ssub.s32 %s18, %s25
    %s32 = sor.u32 %s30, %s31
    %p33 = scmp.eq.s32.totalorder %s32, 0
    %s35 = sadd.s32 %s34, 1
    %s36 = scalar_select %p33, %s34, %s35
    %p39 = pneg %p33
    %p40 = scmp.eq.s32.totalorder %s10, 1
    %p41 = por %p39, %p40
    %p42 = scmp.ne.s32.totalorder %s34, %s37
    %p43 = scmp.eq.s32.totalorder %s10, 0
    %p44 = por %p42, %p43
    %p45 = scmp.ne.s32.totalorder %s34, %s37
    %p46 = scmp.eq.s32.totalorder %s15, 1
    %p47 = por %p45, %p46
    %p48 = scmp.ne.s32.totalorder %s37, %s38
    %p49 = scmp.eq.s32.totalorder %s15, 0
    %p50 = por %p48, %p49
    %p51 = scmp.ne.s32.totalorder %s37, %s38
    %p52 = scmp.eq.s32.totalorder %s16, 1
    %p53 = por %p51, %p52
    %p55 = scmp.ne.s32.totalorder %s38, %s54
    %p56 = scmp.eq.s32.totalorder %s16, 0
    %p57 = por %p55, %p56
    %s58 = sadd.s32 %s18, 1
    %s59 = sadd.s32 %s25, 1
    %s60 = ssub.s32 %s17, %s29
    %s61 = ssub.s32 %s58, %s59
    %s62 = sor.u32 %s60, %s61
    %p63 = scmp.eq.s32.totalorder %s62, 0
    %s65 = sadd.s32 %s64, 1
    %s66 = scalar_select %p63, %s64, %s65
    %p69 = pneg %p63
    %p70 = scmp.eq.s32.totalorder %s10, 1
    %p71 = por %p69, %p70
    %p72 = scmp.ne.s32.totalorder %s64, %s67
    %p73 = scmp.eq.s32.totalorder %s10, 0
    %p74 = por %p72, %p73
    %p75 = scmp.ne.s32.totalorder %s64, %s67
    %p76 = scmp.eq.s32.totalorder %s15, 1
    %p77 = por %p75, %p76
    %p78 = scmp.ne.s32.totalorder %s67, %s68
    %p79 = scmp.eq.s32.totalorder %s15, 0
    %p80 = por %p78, %p79
    %p81 = scmp.ne.s32.totalorder %s67, %s68
    %p82 = scmp.eq.s32.totalorder %s16, 1
    %p83 = por %p81, %p82
    %p85 = scmp.ne.s32.totalorder %s68, %s84
    %p86 = scmp.eq.s32.totalorder %s16, 0
    %p87 = por %p85, %p86
    %s89 = sadd.s32 %s88, 1
    %p92 = scmp.eq.s32.totalorder %s10, 1
    %p93 = scmp.ne.s32.totalorder %s88, %s90
    %p94 = scmp.eq.s32.totalorder %s10, 0
    %p95 = por %p93, %p94
    %p96 = scmp.ne.s32.totalorder %s88, %s90
    %p97 = scmp.eq.s32.totalorder %s15, 1
    %p98 = por %p96, %p97
    %p99 = scmp.ne.s32.totalorder %s90, %s91
    %p100 = scmp.eq.s32.totalorder %s15, 0
    %p101 = por %p99, %p100
    %p102 = scmp.ne.s32.totalorder %s90, %s91
    %p103 = scmp.eq.s32.totalorder %s16, 1
    %p104 = por %p102, %p103
    %p106 = scmp.ne.s32.totalorder %s91, %s105
    %p107 = scmp.eq.s32.totalorder %s16, 0
    %p108 = por %p106, %p107
    %s110 = sadd.s32 %s109, 1
    %p113 = scmp.eq.s32.totalorder %s10, 1
    %p114 = scmp.ne.s32.totalorder %s109, %s111
    %p115 = scmp.eq.s32.totalorder %s10, 0
    %p116 = por %p114, %p115
    %p117 = scmp.ne.s32.totalorder %s109, %s111
    %p118 = scmp.eq.s32.totalorder %s15, 1
    %p119 = por %p117, %p118
    %p120 = scmp.ne.s32.totalorder %s111, %s112
    %p121 = scmp.eq.s32.totalorder %s15, 0
    %p122 = por %p120, %p121
    %p123 = scmp.ne.s32.totalorder %s111, %s112
    %p124 = scmp.eq.s32.totalorder %s16, 1
    %p125 = por %p123, %p124
    %p127 = scmp.ne.s32.totalorder %s112, %s126
    %p128 = scmp.eq.s32.totalorder %s16, 0
    %p129 = por %p127, %p128
    %s130 = ssub.s32 %s17, %s29
    %s131 = ssub.s32 %s18, %s25
    %s132 = sor.u32 %s130, %s131
    %p133 = scmp.eq.s32.totalorder %s132, 0
    %s135 = sadd.s32 %s134, 1
    %s136 = scalar_select %p133, %s134, %s135
    %p139 = pneg %p133
    %p140 = scmp.eq.s32.totalorder %s10, 1
    %p141 = por %p139, %p140
    %p142 = scmp.ne.s32.totalorder %s134, %s137
    %p143 = scmp.eq.s32.totalorder %s10, 0
    %p144 = por %p142, %p143
    %p145 = scmp.ne.s32.totalorder %s134, %s137
    %p146 = scmp.eq.s32.totalorder %s15, 1
    %p147 = por %p145, %p146
    %p148 = scmp.ne.s32.totalorder %s137, %s138
    %p149 = scmp.eq.s32.totalorder %s15, 0
    %p150 = por %p148, %p149
    %p151 = scmp.ne.s32.totalorder %s137, %s138
    %p152 = scmp.eq.s32.totalorder %s16, 1
    %p153 = por %p151, %p152
    %p155 = scmp.ne.s32.totalorder %s138, %s154
    %p156 = scmp.eq.s32.totalorder %s16, 0
    %p157 = por %p155, %p156
    %p158 = scmp.le.s32.totalorder 1, %s10
    %p159 = scmp.lt.s32.totalorder %s10, 3
    %p160 = pnand %p158, %p159
    %p161 = pneg %p160
    // Predicated region
    $region9: #{fwd.14} parent=5 // pred_check
      _
    $region10: #{fwd.14} parent=5 // pred_check_branch
      %163 = sbr.rel (%p160) target = $region12
    $region11: #{fwd.14} parent=5 // pred_region
      %s164 = ssub.s32 %s10, 1
      // Predicated region
      $region13: #{fwd.14} parent=11 // pred_check
        %p165 = pneg %p101
      $region14: #{fwd.14} parent=11 // pred_check_branch
        %167 = sbr.rel (%p165) target = $region16
      $region15: #{fwd.14} parent=11 // pred_region
        _
      $region16: #{fwd.14} parent=11 // pred_fallthru
        _
      // Predicated region
      $region17: #{fwd.14} parent=11 // pred_check
        %p168 = pneg %p122
      $region18: #{fwd.14} parent=11 // pred_check_branch
        %170 = sbr.rel (%p168) target = $region20
      $region19: #{fwd.14} parent=11 // pred_region
        _
      $region20: #{fwd.14} parent=11 // pred_fallthru
        _
    $region12: #{fwd.14} parent=5 // pred_fallthru
      _
    %p171 = scmp.lt.s32.totalorder %s10, 2
    // Predicated region
    $region21: #{fwd.14} parent=5 // pred_check
      %p172 = pneg %p171
    $region22: #{fwd.14} parent=5 // pred_check_branch
      %174 = sbr.rel (%p172) target = $region24
    $region23: #{fwd.14} parent=5 // pred_region
      // Predicated region
      $region25: #{fwd.14} parent=23 // pred_check
        %p175 = pneg %p44
      $region26: #{fwd.14} parent=23 // pred_check_branch
        %177 = sbr.rel (%p175) target = $region28
      $region27: #{fwd.14} parent=23 // pred_region
        %s178 = smul.u32 2, %s18
        %p179 = scmp.lt.s32.totalorder %s17, 1
        %s180 = scalar_select %p179, %s17, 1
        %p181 = scmp.lt.s32.totalorder %s178, 3
        %s182 = scalar_select %p181, %s178, 3
        %s183 = smul.addr %s180, 4
        %s184 = sadd.s32 %s182, %s183
        %s185 = smul.addr %s184, 4
        %s186 = scalar_lea.vmem %s0, %s185
        %s187 = smul.u32 2, %s18
      $region28: #{fwd.14} parent=23 // pred_fallthru
        _
      // Predicated region
      $region29: #{fwd.14} parent=23 // pred_check
        %p188 = pneg %p74
      $region30: #{fwd.14} parent=23 // pred_check_branch
        %190 = sbr.rel (%p188) target = $region32
      $region31: #{fwd.14} parent=23 // pred_region
        %s191 = sadd.s32 %s18, 1
        %s192 = smul.u32 2, %s191
        %p193 = scmp.lt.s32.totalorder %s17, 1
        %s194 = scalar_select %p193, %s17, 1
        %p195 = scmp.lt.s32.totalorder %s192, 3
        %s196 = scalar_select %p195, %s192, 3
        %s197 = smul.addr %s194, 4
        %s198 = sadd.s32 %s196, %s197
        %s199 = smul.addr %s198, 4
        %s200 = scalar_lea.vmem %s1, %s199
        %s201 = sadd.s32 %s18, 1
        %s202 = smul.u32 2, %s201
      $region32: #{fwd.14} parent=23 // pred_fallthru
        _
    $region24: #{fwd.14} parent=5 // pred_fallthru
      _
    %p203 = scmp.le.s32.totalorder 1, %s10
    %p204 = scmp.lt.s32.totalorder %s10, 3
    %p205 = pnand %p203, %p204
    %p206 = pneg %p205
    // Predicated region
    $region33: #{fwd.14} parent=5 // pred_check
      _
    $region34: #{fwd.14} parent=5 // pred_check_branch
      %208 = sbr.rel (%p205) target = $region36
    $region35: #{fwd.14} parent=5 // pred_region
      %s209 = ssub.s32 %s10, 1
      %s210 = smul.u32 2, %s20
      %p211 = scmp.lt.s32.totalorder %s19, 1
      %s212 = scalar_select %p211, %s19, 1
      %p213 = scmp.lt.s32.totalorder %s210, 3
      %s214 = scalar_select %p213, %s210, 3
      %s215 = smul.addr %s212, 4
      %s216 = sadd.s32 %s214, %s215
      %s217 = smul.addr %s216, 4
      %s218 = scalar_lea.vmem %s0, %s217
      %p219 = pneg %p50
      %p220 = pneg %p47
      %s221 = sadd.s32 %s20, 1
      %s222 = smul.u32 2, %s221
      %p223 = scmp.lt.s32.totalorder %s19, 1
      %s224 = scalar_select %p223, %s19, 1
      %p225 = scmp.lt.s32.totalorder %s222, 3
      %s226 = scalar_select %p225, %s222, 3
      %s227 = smul.addr %s224, 4
      %s228 = sadd.s32 %s226, %s227
      %s229 = smul.addr %s228, 4
      %s230 = scalar_lea.vmem %s1, %s229
      %p231 = pneg %p80
      %p232 = pneg %p77
      %p233 = pneg %p101
      %p234 = pneg %p98
      %p235 = pneg %p122
      %p236 = pneg %p119
      %p237 = pneg %p150
      %p238 = pneg %p147
      %s239 = smul.u32 2, %s20
      %p240 = scmp.lt.s32.totalorder %s19, 1
      %s241 = scalar_select %p240, %s19, 1
      %p242 = scmp.lt.s32.totalorder %s239, 1
      %s243 = scalar_select %p242, %s239, 1
      %s244 = smul.addr %s241, 2
      %s245 = sadd.s32 %s243, %s244
      %s246 = smul.addr %s245, 4
      %s247 = scalar_lea.vmem %s4, %s246
      %s248 = smul.u32 2, %s20
      %p249 = scmp.lt.s32.totalorder %s19, 1
      %s250 = scalar_select %p249, %s19, 1
      %p251 = scmp.lt.s32.totalorder %s248, 3
      %s252 = scalar_select %p251, %s248, 3
      %s253 = smul.addr %s250, 4
      %s254 = sadd.s32 %s252, %s253
      %s255 = smul.addr %s254, 4
      %s256 = scalar_lea.vmem %s0, %s255
      %s257 = smul.u32 2, %s20
      %s258 = sadd.s32 %s20, 1
      %s259 = smul.u32 2, %s258
      %p260 = scmp.lt.s32.totalorder %s19, 1
      %s261 = scalar_select %p260, %s19, 1
      %p262 = scmp.lt.s32.totalorder %s259, 3
      %s263 = scalar_select %p262, %s259, 3
      %s264 = smul.addr %s261, 4
      %s265 = sadd.s32 %s263, %s264
      %s266 = smul.addr %s265, 4
      %s267 = scalar_lea.vmem %s1, %s266
      %s268 = sadd.s32 %s20, 1
      %s269 = smul.u32 2, %s268
      %s270 = smul.u32 2, %s20
      %p271 = scmp.lt.s32.totalorder %s19, 1
      %s272 = scalar_select %p271, %s19, 1
      %p273 = scmp.lt.s32.totalorder %s270, 1
      %s274 = scalar_select %p273, %s270, 1
      %s275 = smul.addr %s272, 2
      %s276 = sadd.s32 %s274, %s275
      %s277 = smul.addr %s276, 4
      %s278 = scalar_lea.vmem %s4, %s277
      %s279 = smul.u32 2, %s20
      %v281 = vld [vmem:[%s256] sm:$0xf]
      %v282 = vld [vmem:[%s256 + $0x4] sm:$0xf]
      %v283 = vunpack.c.l.bf16 %v281
      %v284 = vunpack.c.l.bf16 %v282
      %vm285 = vcmask 523264
      %286 = vst.msk [vmem:[#allocation2] sm:$0xff] %vm285, %v283
      %287 = vst.msk [vmem:[#allocation2 + $0x8] sm:$0xff] %vm285, %v284
      %v288 = vld [vmem:[%s267] sm:$0xf]
      %v289 = vld [vmem:[%s267 + $0x4] sm:$0xf]
      %v290 = vunpack.c.l.bf16 %v288
      %v291 = vunpack.c.l.bf16 %v289
      %292 = vst.msk [vmem:[#allocation2 + $0x10] sm:$0xff] %vm285, %v290
      %293 = vst.msk [vmem:[#allocation2 + $0x18] sm:$0xff] %vm285, %v291
      %v294 = vld [vmem:[#allocation2] sm:$0xff]
      %v295 = vld [vmem:[#allocation2 + $0x8] sm:$0xff]
      %v296 = vpack.c.bf16 %v295, %v294
      %v297 = vld [vmem:[%s2] sm:$0xf]
      %v298 = vld [vmem:[%s2 + $0x4] sm:$0xf]
      %v299 = vld [vmem:[%s2 + $0x8] sm:$0xf]
      %v300 = vld [vmem:[%s2 + $0xc] sm:$0xf]
      %v301 = vld [vmem:[%s2 + $0x10] sm:$0xf]
      %v302 = vld [vmem:[%s2 + $0x14] sm:$0xf]
      %v303 = vld [vmem:[%s2 + $0x18] sm:$0xf]
      %v304 = vld [vmem:[%s2 + $0x1c] sm:$0xf]
      %v305 = vld [vmem:[#allocation2 + $0x1] sm:$0xff]
      %v306 = vld [vmem:[#allocation2 + $0x9] sm:$0xff]
      %v307 = vpack.c.bf16 %v306, %v305
      %s308 = scalar_lea.vmem %s2, 32
      %v309 = vld [vmem:[%s308] sm:$0xf]
      %v310 = vld [vmem:[%s308 + $0x4] sm:$0xf]
      %v311 = vld [vmem:[%s308 + $0x8] sm:$0xf]
      %v312 = vld [vmem:[%s308 + $0xc] sm:$0xf]
      %v313 = vld [vmem:[%s308 + $0x10] sm:$0xf]
      %v314 = vld [vmem:[%s308 + $0x14] sm:$0xf]
      %v315 = vld [vmem:[%s308 + $0x18] sm:$0xf]
      %v316 = vld [vmem:[%s308 + $0x1c] sm:$0xf]
      %v325 = vunpack.c.l.b16 %v309
      %v326 = vunpack.c.l.b16 %v310
      %v327 = vunpack.c.l.b16 %v311
      %v328 = vunpack.c.l.b16 %v312
      %v329 = vunpack.c.l.b16 %v313
      %v330 = vunpack.c.l.b16 %v314
      %v331 = vunpack.c.l.b16 %v315
      %v332 = vunpack.c.l.b16 %v316
      %v333 = vpack.c.b16 %v326, %v325
      %v334 = vpack.c.b16 %v328, %v327
      %v335 = vpack.c.b16 %v330, %v329
      %v336 = vpack.c.b16 %v332, %v331
      %v342 = vsel %vm285, %v307, 0
      %344 = vmatpush.bf16.msra.mxu0 0
      %345 = vmatpush.bf16.msra.mxu0 0
      %346 = vmatpush.bf16.msra.mxu0 0
      %347 = vmatpush.bf16.msra.mxu0 0
      %348 = vmatpush.bf16.msra.mxu0 %v336
      %349 = vmatpush.bf16.msra.mxu0 %v335
      %350 = vmatpush.bf16.msra.mxu0 %v334
      %351 = vmatpush.bf16.msra.mxu0 %v333
      %352 = vmatmul.bf16.gmra.mxu0 %v342
      %v353 = vpop.f32.mrf.mxu0
      %v354 = vadd.f32 0.0, %v353
      %v355 = vpop.f32.mrf.mxu0
      %v356 = vadd.f32 0.0, %v355
      %357 = vdwg.mxu0
      %v366 = vunpack.c.l.b16 %v297
      %v367 = vunpack.c.l.b16 %v298
      %v368 = vunpack.c.l.b16 %v299
      %v369 = vunpack.c.l.b16 %v300
      %v370 = vunpack.c.l.b16 %v301
      %v371 = vunpack.c.l.b16 %v302
      %v372 = vunpack.c.l.b16 %v303
      %v373 = vunpack.c.l.b16 %v304
      %v374 = vpack.c.b16 %v367, %v366
      %v375 = vpack.c.b16 %v369, %v368
      %v376 = vpack.c.b16 %v371, %v370
      %v377 = vpack.c.b16 %v373, %v372
      %v383 = vsel %vm285, %v296, 0
      %385 = vmatpush.bf16.msra.mxu0 0
      %386 = vmatpush.bf16.msra.mxu0 0
      %387 = vmatpush.bf16.msra.mxu0 0
      %388 = vmatpush.bf16.msra.mxu0 0
      %389 = vmatpush.bf16.msra.mxu0 %v377
      %390 = vmatpush.bf16.msra.mxu0 %v376
      %391 = vmatpush.bf16.msra.mxu0 %v375
      %392 = vmatpush.bf16.msra.mxu0 %v374
      %393 = vmatmul.bf16.gmra.mxu0 %v383
      %v394 = vpop.f32.mrf.mxu0
      %v395 = vadd.f32 %v354, %v394
      %v396 = vpop.f32.mrf.mxu0
      %v397 = vadd.f32 %v356, %v396
      %398 = vdwg.mxu0
      %v399 = vld [vmem:[#allocation2 + $0x2] sm:$0xff]
      %v400 = vld [vmem:[#allocation2 + $0xa] sm:$0xff]
      %v401 = vpack.c.bf16 %v400, %v399
      %s402 = scalar_lea.vmem %s2, 64
      %v403 = vld [vmem:[%s402] sm:$0xf]
      %v404 = vld [vmem:[%s402 + $0x4] sm:$0xf]
      %v405 = vld [vmem:[%s402 + $0x8] sm:$0xf]
      %v406 = vld [vmem:[%s402 + $0xc] sm:$0xf]
      %v407 = vld [vmem:[%s402 + $0x10] sm:$0xf]
      %v408 = vld [vmem:[%s402 + $0x14] sm:$0xf]
      %v409 = vld [vmem:[%s402 + $0x18] sm:$0xf]
      %v410 = vld [vmem:[%s402 + $0x1c] sm:$0xf]
      %v419 = vunpack.c.l.b16 %v403
      %v420 = vunpack.c.l.b16 %v404
      %v421 = vunpack.c.l.b16 %v405
      %v422 = vunpack.c.l.b16 %v406
      %v423 = vunpack.c.l.b16 %v407
      %v424 = vunpack.c.l.b16 %v408
      %v425 = vunpack.c.l.b16 %v409
      %v426 = vunpack.c.l.b16 %v410
      %v427 = vpack.c.b16 %v420, %v419
      %v428 = vpack.c.b16 %v422, %v421
      %v429 = vpack.c.b16 %v424, %v423
      %v430 = vpack.c.b16 %v426, %v425
      %v436 = vsel %vm285, %v401, 0
      %438 = vmatpush.bf16.msra.mxu0 0
      %439 = vmatpush.bf16.msra.mxu0 0
      %440 = vmatpush.bf16.msra.mxu0 0
      %441 = vmatpush.bf16.msra.mxu0 0
      %442 = vmatpush.bf16.msra.mxu0 %v430
      %443 = vmatpush.bf16.msra.mxu0 %v429
      %444 = vmatpush.bf16.msra.mxu0 %v428
      %445 = vmatpush.bf16.msra.mxu0 %v427
      %446 = vmatmul.bf16.gmra.mxu0 %v436
      %v447 = vpop.f32.mrf.mxu0
      %v448 = vadd.f32 0.0, %v447
      %v449 = vpop.f32.mrf.mxu0
      %v450 = vadd.f32 0.0, %v449
      %451 = vdwg.mxu0
      %v452 = vadd.f32 %v395, %v448
      %v453 = vadd.f32 %v397, %v450
      %v454 = vld [vmem:[#allocation2 + $0x3] sm:$0xff]
      %v455 = vld [vmem:[#allocation2 + $0xb] sm:$0xff]
      %v456 = vpack.c.bf16 %v455, %v454
      %s457 = scalar_lea.vmem %s2, 96
      %v458 = vld [vmem:[%s457] sm:$0xf]
      %v459 = vld [vmem:[%s457 + $0x4] sm:$0xf]
      %v460 = vld [vmem:[%s457 + $0x8] sm:$0xf]
      %v461 = vld [vmem:[%s457 + $0xc] sm:$0xf]
      %v462 = vld [vmem:[%s457 + $0x10] sm:$0xf]
      %v463 = vld [vmem:[%s457 + $0x14] sm:$0xf]
      %v464 = vld [vmem:[%s457 + $0x18] sm:$0xf]
      %v465 = vld [vmem:[%s457 + $0x1c] sm:$0xf]
      %v474 = vunpack.c.l.b16 %v458
      %v475 = vunpack.c.l.b16 %v459
      %v476 = vunpack.c.l.b16 %v460
      %v477 = vunpack.c.l.b16 %v461
      %v478 = vunpack.c.l.b16 %v462
      %v479 = vunpack.c.l.b16 %v463
      %v480 = vunpack.c.l.b16 %v464
      %v481 = vunpack.c.l.b16 %v465
      %v482 = vpack.c.b16 %v475, %v474
      %v483 = vpack.c.b16 %v477, %v476
      %v484 = vpack.c.b16 %v479, %v478
      %v485 = vpack.c.b16 %v481, %v480
      %v491 = vsel %vm285, %v456, 0
      %493 = vmatpush.bf16.msra.mxu0 0
      %494 = vmatpush.bf16.msra.mxu0 0
      %495 = vmatpush.bf16.msra.mxu0 0
      %496 = vmatpush.bf16.msra.mxu0 0
      %497 = vmatpush.bf16.msra.mxu0 %v485
      %498 = vmatpush.bf16.msra.mxu0 %v484
      %499 = vmatpush.bf16.msra.mxu0 %v483
      %500 = vmatpush.bf16.msra.mxu0 %v482
      %501 = vmatmul.bf16.gmra.mxu0 %v491
      %v502 = vpop.f32.mrf.mxu0
      %v503 = vadd.f32 0.0, %v502
      %v504 = vpop.f32.mrf.mxu0
      %v505 = vadd.f32 0.0, %v504
      %506 = vdwg.mxu0
      %v507 = vadd.f32 %v452, %v503
      %v508 = vadd.f32 %v453, %v505
      %v509 = vld [vmem:[#allocation2 + $0x4] sm:$0xff]
      %v510 = vld [vmem:[#allocation2 + $0xc] sm:$0xff]
      %v511 = vpack.c.bf16 %v510, %v509
      %s512 = scalar_lea.vmem %s2, 128
      %v513 = vld [vmem:[%s512] sm:$0xf]
      %v514 = vld [vmem:[%s512 + $0x4] sm:$0xf]
      %v515 = vld [vmem:[%s512 + $0x8] sm:$0xf]
      %v516 = vld [vmem:[%s512 + $0xc] sm:$0xf]
      %v517 = vld [vmem:[%s512 + $0x10] sm:$0xf]
      %v518 = vld [vmem:[%s512 + $0x14] sm:$0xf]
      %v519 = vld [vmem:[%s512 + $0x18] sm:$0xf]
      %v520 = vld [vmem:[%s512 + $0x1c] sm:$0xf]
      %v529 = vunpack.c.l.b16 %v513
      %v530 = vunpack.c.l.b16 %v514
      %v531 = vunpack.c.l.b16 %v515
      %v532 = vunpack.c.l.b16 %v516
      %v533 = vunpack.c.l.b16 %v517
      %v534 = vunpack.c.l.b16 %v518
      %v535 = vunpack.c.l.b16 %v519
      %v536 = vunpack.c.l.b16 %v520
      %v537 = vpack.c.b16 %v530, %v529
      %v538 = vpack.c.b16 %v532, %v531
      %v539 = vpack.c.b16 %v534, %v533
      %v540 = vpack.c.b16 %v536, %v535
      %v546 = vsel %vm285, %v511, 0
      %548 = vmatpush.bf16.msra.mxu0 0
      %549 = vmatpush.bf16.msra.mxu0 0
      %550 = vmatpush.bf16.msra.mxu0 0
      %551 = vmatpush.bf16.msra.mxu0 0
      %552 = vmatpush.bf16.msra.mxu0 %v540
      %553 = vmatpush.bf16.msra.mxu0 %v539
      %554 = vmatpush.bf16.msra.mxu0 %v538
      %555 = vmatpush.bf16.msra.mxu0 %v537
      %556 = vmatmul.bf16.gmra.mxu0 %v546
      %v557 = vpop.f32.mrf.mxu0
      %v558 = vadd.f32 0.0, %v557
      %v559 = vpop.f32.mrf.mxu0
      %v560 = vadd.f32 0.0, %v559
      %561 = vdwg.mxu0
      %v562 = vadd.f32 %v507, %v558
      %v563 = vadd.f32 %v508, %v560
      %v564 = vld [vmem:[#allocation2 + $0x5] sm:$0xff]
      %v565 = vld [vmem:[#allocation2 + $0xd] sm:$0xff]
      %v566 = vpack.c.bf16 %v565, %v564
      %s567 = scalar_lea.vmem %s2, 160
      %v568 = vld [vmem:[%s567] sm:$0xf]
      %v569 = vld [vmem:[%s567 + $0x4] sm:$0xf]
      %v570 = vld [vmem:[%s567 + $0x8] sm:$0xf]
      %v571 = vld [vmem:[%s567 + $0xc] sm:$0xf]
      %v572 = vld [vmem:[%s567 + $0x10] sm:$0xf]
      %v573 = vld [vmem:[%s567 + $0x14] sm:$0xf]
      %v574 = vld [vmem:[%s567 + $0x18] sm:$0xf]
      %v575 = vld [vmem:[%s567 + $0x1c] sm:$0xf]
      %v584 = vunpack.c.l.b16 %v568
      %v585 = vunpack.c.l.b16 %v569
      %v586 = vunpack.c.l.b16 %v570
      %v587 = vunpack.c.l.b16 %v571
      %v588 = vunpack.c.l.b16 %v572
      %v589 = vunpack.c.l.b16 %v573
      %v590 = vunpack.c.l.b16 %v574
      %v591 = vunpack.c.l.b16 %v575
      %v592 = vpack.c.b16 %v585, %v584
      %v593 = vpack.c.b16 %v587, %v586
      %v594 = vpack.c.b16 %v589, %v588
      %v595 = vpack.c.b16 %v591, %v590
      %v601 = vsel %vm285, %v566, 0
      %603 = vmatpush.bf16.msra.mxu0 0
      %604 = vmatpush.bf16.msra.mxu0 0
      %605 = vmatpush.bf16.msra.mxu0 0
      %606 = vmatpush.bf16.msra.mxu0 0
      %607 = vmatpush.bf16.msra.mxu0 %v595
      %608 = vmatpush.bf16.msra.mxu0 %v594
      %609 = vmatpush.bf16.msra.mxu0 %v593
      %610 = vmatpush.bf16.msra.mxu0 %v592
      %611 = vmatmul.bf16.gmra.mxu0 %v601
      %v612 = vpop.f32.mrf.mxu0
      %v613 = vadd.f32 0.0, %v612
      %v614 = vpop.f32.mrf.mxu0
      %v615 = vadd.f32 0.0, %v614
      %616 = vdwg.mxu0
      %v617 = vadd.f32 %v562, %v613
      %v618 = vadd.f32 %v563, %v615
      %v619 = vld [vmem:[#allocation2 + $0x6] sm:$0xff]
      %v620 = vld [vmem:[#allocation2 + $0xe] sm:$0xff]
      %v621 = vpack.c.bf16 %v620, %v619
      %s622 = scalar_lea.vmem %s2, 192
      %v623 = vld [vmem:[%s622] sm:$0xf]
      %v624 = vld [vmem:[%s622 + $0x4] sm:$0xf]
      %v625 = vld [vmem:[%s622 + $0x8] sm:$0xf]
      %v626 = vld [vmem:[%s622 + $0xc] sm:$0xf]
      %v627 = vld [vmem:[%s622 + $0x10] sm:$0xf]
      %v628 = vld [vmem:[%s622 + $0x14] sm:$0xf]
      %v629 = vld [vmem:[%s622 + $0x18] sm:$0xf]
      %v630 = vld [vmem:[%s622 + $0x1c] sm:$0xf]
      %v639 = vunpack.c.l.b16 %v623
      %v640 = vunpack.c.l.b16 %v624
      %v641 = vunpack.c.l.b16 %v625
      %v642 = vunpack.c.l.b16 %v626
      %v643 = vunpack.c.l.b16 %v627
      %v644 = vunpack.c.l.b16 %v628
      %v645 = vunpack.c.l.b16 %v629
      %v646 = vunpack.c.l.b16 %v630
      %v647 = vpack.c.b16 %v640, %v639
      %v648 = vpack.c.b16 %v642, %v641
      %v649 = vpack.c.b16 %v644, %v643
      %v650 = vpack.c.b16 %v646, %v645
      %v656 = vsel %vm285, %v621, 0
      %658 = vmatpush.bf16.msra.mxu0 0
      %659 = vmatpush.bf16.msra.mxu0 0
      %660 = vmatpush.bf16.msra.mxu0 0
      %661 = vmatpush.bf16.msra.mxu0 0
      %662 = vmatpush.bf16.msra.mxu0 %v650
      %663 = vmatpush.bf16.msra.mxu0 %v649
      %664 = vmatpush.bf16.msra.mxu0 %v648
      %665 = vmatpush.bf16.msra.mxu0 %v647
      %666 = vmatmul.bf16.gmra.mxu0 %v656
      %v667 = vpop.f32.mrf.mxu0
      %v668 = vadd.f32 0.0, %v667
      %v669 = vpop.f32.mrf.mxu0
      %v670 = vadd.f32 0.0, %v669
      %671 = vdwg.mxu0
      %v672 = vadd.f32 %v617, %v668
      %v673 = vadd.f32 %v618, %v670
      %v674 = vld [vmem:[%s3] sm:$0x1]
      %v676 = vperm.slane %v674, 0
      %v678 = vadd.f32 %v672, %v676
      %v679 = vadd.f32 %v673, %v676
      %vm680 = vcmp.ge.f32.partialorder %v678, 0.0
      %vm681 = vcmp.ge.f32.partialorder %v679, 0.0
      %v682 = vmul.f32 %v678, 0.1
      %v683 = vmul.f32 %v679, 0.1
      %v684 = vsel %vm680, %v678, %v682
      %v685 = vsel %vm681, %v679, %v683
      %v686 = vpack.c.bf16 %v684, %v684
      %v687 = vpack.c.bf16 %v685, %v685
      %vm688 = vcmask 519168
      %689 = vst.msk [vmem:[%s278] sm:$0xf] %vm688, %v686
      %690 = vst.msk [vmem:[%s278 + $0x4] sm:$0xf] %vm688, %v687
      %s691 = smul.u32 2, %s20
      %p692 = scmp.lt.s32.totalorder %s19, 1
      %s693 = scalar_select %p692, %s19, 1
      %p694 = scmp.lt.s32.totalorder %s691, 1
      %s695 = scalar_select %p694, %s691, 1
      %s696 = smul.addr %s693, 2
      %s697 = sadd.s32 %s695, %s696
      %s698 = smul.addr %s697, 4
      %s699 = scalar_lea.vmem %s4, %s698
      // Predicated region
      $region37: #{fwd.14} parent=35 // pred_check
        %p700 = pneg %p147
      $region38: #{fwd.14} parent=35 // pred_check_branch
        %702 = sbr.rel (%p700) target = $region40
      $region39: #{fwd.14} parent=35 // pred_region
        %s703 = smul.u32 2, %s20
      $region40: #{fwd.14} parent=35 // pred_fallthru
        _
    $region36: #{fwd.14} parent=5 // pred_fallthru
      _
    %p704 = scmp.le.s32.totalorder 2, %s10
    // Predicated region
    $region41: #{fwd.14} parent=5 // pred_check
      %p705 = pneg %p704
    $region42: #{fwd.14} parent=5 // pred_check_branch
      %707 = sbr.rel (%p705) target = $region44
    $region43: #{fwd.14} parent=5 // pred_region
      %s708 = ssub.s32 %s10, 2
      // Predicated region
      $region45: #{fwd.14} parent=43 // pred_check
        %p709 = pneg %p153
      $region46: #{fwd.14} parent=43 // pred_check_branch
        %711 = sbr.rel (%p709) target = $region48
      $region47: #{fwd.14} parent=43 // pred_region
        %s712 = smul.u32 2, %s22
        %p713 = scmp.lt.s32.totalorder %s21, 1
        %s714 = scalar_select %p713, %s21, 1
        %p715 = scmp.lt.s32.totalorder %s712, 1
        %s716 = scalar_select %p715, %s712, 1
        %s717 = smul.addr %s714, 2
        %s718 = sadd.s32 %s716, %s717
        %s719 = smul.addr %s718, 4
        %s720 = scalar_lea.vmem %s4, %s719
      $region48: #{fwd.14} parent=43 // pred_fallthru
        _
    $region44: #{fwd.14} parent=5 // pred_fallthru
      _
  $region6: #{fwd.14} parent=0 // loop_footer
    %s14 = sadd.s32 1, %s10
  $region7: #{fwd.14} parent=0 // loop_footer_branch
    %9 = sbr.rel target = $region3
  $region8: #{fwd.14} parent=0 // loop_exit
    _

// kernel: fwd.15
$region0: #{fwd.15}
  #allocation0 [shape = 'u32[]', space=smem, size = 0x4, offset = 0x4, fixed_abs, tag = 'smem constant byte address 0x4 - core index']
  #allocation1 [shape = 'u32[72,128]{1,0:T(1,128)}', space=vmem, size = 0x9000, scoped, tag = 'internal scratch']
  #allocation2 [shape = 'f32[96,64]{1,0:T(8,128)}', space=vmem, size = 0xc000, scoped, tag = 'scratch operand']
  %s0 = inlined_call_operand.vmem [shape: bf16[2,96,64], index: 0, kind: input, shape index: {}, may-alias: {0,1}]
  %s1 = inlined_call_operand.vmem [shape: bf16[2,96,64], index: 1, kind: input, shape index: {}, may-alias: {0,1}]
  %s2 = inlined_call_operand.vmem [shape: bf16[4,64,32], index: 2, kind: input, shape index: {}]
  %s3 = inlined_call_operand.vmem [shape: f32[1,32], index: 3, kind: input, shape index: {}]
  %s4 = inlined_call_operand.vmem [shape: bf16[2,48,32], index: 4, kind: output, shape index: {}]
  %s5 = sld [smem:[#allocation0]]
  $region49: #{fwd.15} parent=0
    _
  %s7 = ssub.s32 1, %s5
  %s8 = scalar_select 0, %s7, %s5
  loop: start=0, step=1, limit=4
  $region2: #{fwd.15} parent=0 // loop_pre_header
    _
  $region3: #{fwd.15} parent=0 // loop_header
    %s10 = sphi 0, %s14
    %p11 = scmp.ge.s32.totalorder %s10, 4
    %s17 = sphi 0, %s29
    %s18 = sphi 0, %s25
    %s19 = sphi 0, %s17
    %s20 = sphi 0, %s18
    %s21 = sphi 0, %s19
    %s22 = sphi 0, %s20
    %s34 = sphi 0, %s36
    %s37 = sphi 0, %s34
    %s38 = sphi 0, %s37
    %s54 = sphi 0, %s38
    %s64 = sphi 0, %s66
    %s67 = sphi 0, %s64
    %s68 = sphi 0, %s67
    %s84 = sphi 0, %s68
    %s88 = sphi 0, %s88
    %s90 = sphi 0, %s88
    %s91 = sphi 0, %s90
    %s105 = sphi 0, %s91
    %s109 = sphi 0, %s109
    %s111 = sphi 0, %s109
    %s112 = sphi 0, %s111
    %s126 = sphi 0, %s112
    %s134 = sphi 0, %s136
    %s137 = sphi 0, %s134
    %s138 = sphi 0, %s137
    %s154 = sphi 0, %s138
  $region4: #{fwd.15} parent=0 // loop_header_branch
    %13 = sbr.rel (%p11) target = $region8
  $region5: #{fwd.15} parent=0 // loop_body
    %s15 = ssub.s32 %s10, 1
    %s16 = ssub.s32 %s10, 2
    %s23 = sadd.s32 1, %s18
    %p24 = scmp.ge.s32.totalorder %s23, 1
    %s25 = scalar_select %p24, 0, %s23
    %s26 = sadd.s32 1, %s17
    %s27 = scalar_select %p24, %s26, %s17
    %p28 = scmp.ge.s32.totalorder %s27, 2
    %s29 = scalar_select %p28, 0, %s27
    %s30 = ssub.s32 %s17, %s29
    %s31 = ssub.s32 %s18, %s25
    %s32 = sor.u32 %s30, %s31
    %p33 = scmp.eq.s32.totalorder %s32, 0
    %s35 = sadd.s32 %s34, 1
    %s36 = scalar_select %p33, %s34, %s35
    %p39 = pneg %p33
    %p40 = scmp.eq.s32.totalorder %s10, 1
    %p41 = por %p39, %p40
    %p42 = scmp.ne.s32.totalorder %s34, %s37
    %p43 = scmp.eq.s32.totalorder %s10, 0
    %p44 = por %p42, %p43
    %p45 = scmp.ne.s32.totalorder %s34, %s37
    %p46 = scmp.eq.s32.totalorder %s15, 1
    %p47 = por %p45, %p46
    %p48 = scmp.ne.s32.totalorder %s37, %s38
    %p49 = scmp.eq.s32.totalorder %s15, 0
    %p50 = por %p48, %p49
    %p51 = scmp.ne.s32.totalorder %s37, %s38
    %p52 = scmp.eq.s32.totalorder %s16, 1
    %p53 = por %p51, %p52
    %p55 = scmp.ne.s32.totalorder %s38, %s54
    %p56 = scmp.eq.s32.totalorder %s16, 0
    %p57 = por %p55, %p56
    %s58 = sadd.s32 %s18, 1
    %s59 = sadd.s32 %s25, 1
    %s60 = ssub.s32 %s17, %s29
    %s61 = ssub.s32 %s58, %s59
    %s62 = sor.u32 %s60, %s61
    %p63 = scmp.eq.s32.totalorder %s62, 0
    %s65 = sadd.s32 %s64, 1
    %s66 = scalar_select %p63, %s64, %s65
    %p69 = pneg %p63
    %p70 = scmp.eq.s32.totalorder %s10, 1
    %p71 = por %p69, %p70
    %p72 = scmp.ne.s32.totalorder %s64, %s67
    %p73 = scmp.eq.s32.totalorder %s10, 0
    %p74 = por %p72, %p73
    %p75 = scmp.ne.s32.totalorder %s64, %s67
    %p76 = scmp.eq.s32.totalorder %s15, 1
    %p77 = por %p75, %p76
    %p78 = scmp.ne.s32.totalorder %s67, %s68
    %p79 = scmp.eq.s32.totalorder %s15, 0
    %p80 = por %p78, %p79
    %p81 = scmp.ne.s32.totalorder %s67, %s68
    %p82 = scmp.eq.s32.totalorder %s16, 1
    %p83 = por %p81, %p82
    %p85 = scmp.ne.s32.totalorder %s68, %s84
    %p86 = scmp.eq.s32.totalorder %s16, 0
    %p87 = por %p85, %p86
    %s89 = sadd.s32 %s88, 1
    %p92 = scmp.eq.s32.totalorder %s10, 1
    %p93 = scmp.ne.s32.totalorder %s88, %s90
    %p94 = scmp.eq.s32.totalorder %s10, 0
    %p95 = por %p93, %p94
    %p96 = scmp.ne.s32.totalorder %s88, %s90
    %p97 = scmp.eq.s32.totalorder %s15, 1
    %p98 = por %p96, %p97
    %p99 = scmp.ne.s32.totalorder %s90, %s91
    %p100 = scmp.eq.s32.totalorder %s15, 0
    %p101 = por %p99, %p100
    %p102 = scmp.ne.s32.totalorder %s90, %s91
    %p103 = scmp.eq.s32.totalorder %s16, 1
    %p104 = por %p102, %p103
    %p106 = scmp.ne.s32.totalorder %s91, %s105
    %p107 = scmp.eq.s32.totalorder %s16, 0
    %p108 = por %p106, %p107
    %s110 = sadd.s32 %s109, 1
    %p113 = scmp.eq.s32.totalorder %s10, 1
    %p114 = scmp.ne.s32.totalorder %s109, %s111
    %p115 = scmp.eq.s32.totalorder %s10, 0
    %p116 = por %p114, %p115
    %p117 = scmp.ne.s32.totalorder %s109, %s111
    %p118 = scmp.eq.s32.totalorder %s15, 1
    %p119 = por %p117, %p118
    %p120 = scmp.ne.s32.totalorder %s111, %s112
    %p121 = scmp.eq.s32.totalorder %s15, 0
    %p122 = por %p120, %p121
    %p123 = scmp.ne.s32.totalorder %s111, %s112
    %p124 = scmp.eq.s32.totalorder %s16, 1
    %p125 = por %p123, %p124
    %p127 = scmp.ne.s32.totalorder %s112, %s126
    %p128 = scmp.eq.s32.totalorder %s16, 0
    %p129 = por %p127, %p128
    %s130 = ssub.s32 %s17, %s29
    %s131 = ssub.s32 %s18, %s25
    %s132 = sor.u32 %s130, %s131
    %p133 = scmp.eq.s32.totalorder %s132, 0
    %s135 = sadd.s32 %s134, 1
    %s136 = scalar_select %p133, %s134, %s135
    %p139 = pneg %p133
    %p140 = scmp.eq.s32.totalorder %s10, 1
    %p141 = por %p139, %p140
    %p142 = scmp.ne.s32.totalorder %s134, %s137
    %p143 = scmp.eq.s32.totalorder %s10, 0
    %p144 = por %p142, %p143
    %p145 = scmp.ne.s32.totalorder %s134, %s137
    %p146 = scmp.eq.s32.totalorder %s15, 1
    %p147 = por %p145, %p146
    %p148 = scmp.ne.s32.totalorder %s137, %s138
    %p149 = scmp.eq.s32.totalorder %s15, 0
    %p150 = por %p148, %p149
    %p151 = scmp.ne.s32.totalorder %s137, %s138
    %p152 = scmp.eq.s32.totalorder %s16, 1
    %p153 = por %p151, %p152
    %p155 = scmp.ne.s32.totalorder %s138, %s154
    %p156 = scmp.eq.s32.totalorder %s16, 0
    %p157 = por %p155, %p156
    %p158 = scmp.le.s32.totalorder 1, %s10
    %p159 = scmp.lt.s32.totalorder %s10, 3
    %p160 = pnand %p158, %p159
    %p161 = pneg %p160
    // Predicated region
    $region9: #{fwd.15} parent=5 // pred_check
      _
    $region10: #{fwd.15} parent=5 // pred_check_branch
      %163 = sbr.rel (%p160) target = $region12
    $region11: #{fwd.15} parent=5 // pred_region
      %s164 = ssub.s32 %s10, 1
      // Predicated region
      $region13: #{fwd.15} parent=11 // pred_check
        %p165 = pneg %p101
      $region14: #{fwd.15} parent=11 // pred_check_branch
        %167 = sbr.rel (%p165) target = $region16
      $region15: #{fwd.15} parent=11 // pred_region
        _
      $region16: #{fwd.15} parent=11 // pred_fallthru
        _
      // Predicated region
      $region17: #{fwd.15} parent=11 // pred_check
        %p168 = pneg %p122
      $region18: #{fwd.15} parent=11 // pred_check_branch
        %170 = sbr.rel (%p168) target = $region20
      $region19: #{fwd.15} parent=11 // pred_region
        _
      $region20: #{fwd.15} parent=11 // pred_fallthru
        _
    $region12: #{fwd.15} parent=5 // pred_fallthru
      _
    %p171 = scmp.lt.s32.totalorder %s10, 2
    // Predicated region
    $region21: #{fwd.15} parent=5 // pred_check
      %p172 = pneg %p171
    $region22: #{fwd.15} parent=5 // pred_check_branch
      %174 = sbr.rel (%p172) target = $region24
    $region23: #{fwd.15} parent=5 // pred_region
      // Predicated region
      $region25: #{fwd.15} parent=23 // pred_check
        %p175 = pneg %p44
      $region26: #{fwd.15} parent=23 // pred_check_branch
        %177 = sbr.rel (%p175) target = $region28
      $region27: #{fwd.15} parent=23 // pred_region
        %s178 = smul.u32 6, %s18
        %p179 = scmp.lt.s32.totalorder %s17, 1
        %s180 = scalar_select %p179, %s17, 1
        %p181 = scmp.lt.s32.totalorder %s178, 11
        %s182 = scalar_select %p181, %s178, 11
        %s183 = smul.addr %s180, 12
        %s184 = sadd.s32 %s182, %s183
        %s185 = smul.addr %s184, 4
        %s186 = scalar_lea.vmem %s0, %s185
        %s187 = smul.u32 6, %s18
      $region28: #{fwd.15} parent=23 // pred_fallthru
        _
      // Predicated region
      $region29: #{fwd.15} parent=23 // pred_check
        %p188 = pneg %p74
      $region30: #{fwd.15} parent=23 // pred_check_branch
        %190 = sbr.rel (%p188) target = $region32
      $region31: #{fwd.15} parent=23 // pred_region
        %s191 = sadd.s32 %s18, 1
        %s192 = smul.u32 6, %s191
        %p193 = scmp.lt.s32.totalorder %s17, 1
        %s194 = scalar_select %p193, %s17, 1
        %p195 = scmp.lt.s32.totalorder %s192, 11
        %s196 = scalar_select %p195, %s192, 11
        %s197 = smul.addr %s194, 12
        %s198 = sadd.s32 %s196, %s197
        %s199 = smul.addr %s198, 4
        %s200 = scalar_lea.vmem %s1, %s199
        %s201 = sadd.s32 %s18, 1
        %s202 = smul.u32 6, %s201
      $region32: #{fwd.15} parent=23 // pred_fallthru
        _
    $region24: #{fwd.15} parent=5 // pred_fallthru
      _
    %p203 = scmp.le.s32.totalorder 1, %s10
    %p204 = scmp.lt.s32.totalorder %s10, 3
    %p205 = pnand %p203, %p204
    %p206 = pneg %p205
    // Predicated region
    $region33: #{fwd.15} parent=5 // pred_check
      _
    $region34: #{fwd.15} parent=5 // pred_check_branch
      %208 = sbr.rel (%p205) target = $region36
    $region35: #{fwd.15} parent=5 // pred_region
      %s209 = ssub.s32 %s10, 1
      %s210 = smul.u32 6, %s20
      %p211 = scmp.lt.s32.totalorder %s19, 1
      %s212 = scalar_select %p211, %s19, 1
      %p213 = scmp.lt.s32.totalorder %s210, 11
      %s214 = scalar_select %p213, %s210, 11
      %s215 = smul.addr %s212, 12
      %s216 = sadd.s32 %s214, %s215
      %s217 = smul.addr %s216, 4
      %s218 = scalar_lea.vmem %s0, %s217
      %p219 = pneg %p50
      %p220 = pneg %p47
      %s221 = sadd.s32 %s20, 1
      %s222 = smul.u32 6, %s221
      %p223 = scmp.lt.s32.totalorder %s19, 1
      %s224 = scalar_select %p223, %s19, 1
      %p225 = scmp.lt.s32.totalorder %s222, 11
      %s226 = scalar_select %p225, %s222, 11
      %s227 = smul.addr %s224, 12
      %s228 = sadd.s32 %s226, %s227
      %s229 = smul.addr %s228, 4
      %s230 = scalar_lea.vmem %s1, %s229
      %p231 = pneg %p80
      %p232 = pneg %p77
      %p233 = pneg %p101
      %p234 = pneg %p98
      %p235 = pneg %p122
      %p236 = pneg %p119
      %p237 = pneg %p150
      %p238 = pneg %p147
      %s239 = smul.u32 6, %s20
      %p240 = scmp.lt.s32.totalorder %s19, 1
      %s241 = scalar_select %p240, %s19, 1
      %p242 = scmp.lt.s32.totalorder %s239, 5
      %s243 = scalar_select %p242, %s239, 5
      %s244 = smul.addr %s241, 6
      %s245 = sadd.s32 %s243, %s244
      %s246 = smul.addr %s245, 4
      %s247 = scalar_lea.vmem %s4, %s246
      %s248 = smul.u32 6, %s20
      %p249 = scmp.lt.s32.totalorder %s19, 1
      %s250 = scalar_select %p249, %s19, 1
      %p251 = scmp.lt.s32.totalorder %s248, 11
      %s252 = scalar_select %p251, %s248, 11
      %s253 = smul.addr %s250, 12
      %s254 = sadd.s32 %s252, %s253
      %s255 = smul.addr %s254, 4
      %s256 = scalar_lea.vmem %s0, %s255
      %s257 = smul.u32 6, %s20
      %s258 = sadd.s32 %s20, 1
      %s259 = smul.u32 6, %s258
      %p260 = scmp.lt.s32.totalorder %s19, 1
      %s261 = scalar_select %p260, %s19, 1
      %p262 = scmp.lt.s32.totalorder %s259, 11
      %s263 = scalar_select %p262, %s259, 11
      %s264 = smul.addr %s261, 12
      %s265 = sadd.s32 %s263, %s264
      %s266 = smul.addr %s265, 4
      %s267 = scalar_lea.vmem %s1, %s266
      %s268 = sadd.s32 %s20, 1
      %s269 = smul.u32 6, %s268
      %s270 = smul.u32 6, %s20
      %p271 = scmp.lt.s32.totalorder %s19, 1
      %s272 = scalar_select %p271, %s19, 1
      %p273 = scmp.lt.s32.totalorder %s270, 5
      %s274 = scalar_select %p273, %s270, 5
      %s275 = smul.addr %s272, 6
      %s276 = sadd.s32 %s274, %s275
      %s277 = smul.addr %s276, 4
      %s278 = scalar_lea.vmem %s4, %s277
      %s279 = smul.u32 6, %s20
      %v281 = vld [vmem:[%s256] sm:$0xf]
      %v282 = vld [vmem:[%s256 + $0x4] sm:$0xf]
      %v283 = vld [vmem:[%s256 + $0x8] sm:$0xf]
      %v284 = vld [vmem:[%s256 + $0xc] sm:$0xf]
      %v285 = vld [vmem:[%s256 + $0x10] sm:$0xf]
      %v286 = vld [vmem:[%s256 + $0x14] sm:$0xf]
      %v287 = vunpack.c.l.bf16 %v281
      %v288 = vunpack.c.l.bf16 %v282
      %v289 = vunpack.c.l.bf16 %v283
      %v290 = vunpack.c.l.bf16 %v284
      %v291 = vunpack.c.l.bf16 %v285
      %v292 = vunpack.c.l.bf16 %v286
      %vm293 = vcmask 523264
      %294 = vst.msk [vmem:[#allocation2] sm:$0xff] %vm293, %v287
      %295 = vst.msk [vmem:[#allocation2 + $0x8] sm:$0xff] %vm293, %v288
      %296 = vst.msk [vmem:[#allocation2 + $0x10] sm:$0xff] %vm293, %v289
      %297 = vst.msk [vmem:[#allocation2 + $0x18] sm:$0xff] %vm293, %v290
      %298 = vst.msk [vmem:[#allocation2 + $0x20] sm:$0xff] %vm293, %v291
      %299 = vst.msk [vmem:[#allocation2 + $0x28] sm:$0xff] %vm293, %v292
      %v300 = vld [vmem:[%s267] sm:$0xf]
      %v301 = vld [vmem:[%s267 + $0x4] sm:$0xf]
      %v302 = vld [vmem:[%s267 + $0x8] sm:$0xf]
      %v303 = vld [vmem:[%s267 + $0xc] sm:$0xf]
      %v304 = vld [vmem:[%s267 + $0x10] sm:$0xf]
      %v305 = vld [vmem:[%s267 + $0x14] sm:$0xf]
      %v306 = vunpack.c.l.bf16 %v300
      %v307 = vunpack.c.l.bf16 %v301
      %v308 = vunpack.c.l.bf16 %v302
      %v309 = vunpack.c.l.bf16 %v303
      %v310 = vunpack.c.l.bf16 %v304
      %v311 = vunpack.c.l.bf16 %v305
      %312 = vst.msk [vmem:[#allocation2 + $0x30] sm:$0xff] %vm293, %v306
      %313 = vst.msk [vmem:[#allocation2 + $0x38] sm:$0xff] %vm293, %v307
      %314 = vst.msk [vmem:[#allocation2 + $0x40] sm:$0xff] %vm293, %v308
      %315 = vst.msk [vmem:[#allocation2 + $0x48] sm:$0xff] %vm293, %v309
      %316 = vst.msk [vmem:[#allocation2 + $0x50] sm:$0xff] %vm293, %v310
      %317 = vst.msk [vmem:[#allocation2 + $0x58] sm:$0xff] %vm293, %v311
      %v318 = vld [vmem:[#allocation2] sm:$0xff]
      %v319 = vld [vmem:[#allocation2 + $0x8] sm:$0xff]
      %v320 = vld [vmem:[#allocation2 + $0x10] sm:$0xff]
      %v321 = vld [vmem:[#allocation2 + $0x18] sm:$0xff]
      %v322 = vld [vmem:[#allocation2 + $0x20] sm:$0xff]
      %v323 = vld [vmem:[#allocation2 + $0x28] sm:$0xff]
      %v324 = vpack.c.bf16 %v319, %v318
      %v325 = vpack.c.bf16 %v321, %v320
      %v326 = vpack.c.bf16 %v323, %v322
      %v327 = vld [vmem:[%s2] sm:$0xf]
      %v328 = vld [vmem:[%s2 + $0x4] sm:$0xf]
      %v329 = vld [vmem:[%s2 + $0x8] sm:$0xf]
      %v330 = vld [vmem:[%s2 + $0xc] sm:$0xf]
      %v331 = vld [vmem:[%s2 + $0x10] sm:$0xf]
      %v332 = vld [vmem:[%s2 + $0x14] sm:$0xf]
      %v333 = vld [vmem:[%s2 + $0x18] sm:$0xf]
      %v334 = vld [vmem:[%s2 + $0x1c] sm:$0xf]
      %v335 = vld [vmem:[#allocation2 + $0x1] sm:$0xff]
      %v336 = vld [vmem:[#allocation2 + $0x9] sm:$0xff]
      %v337 = vld [vmem:[#allocation2 + $0x11] sm:$0xff]
      %v338 = vld [vmem:[#allocation2 + $0x19] sm:$0xff]
      %v339 = vld [vmem:[#allocation2 + $0x21] sm:$0xff]
      %v340 = vld [vmem:[#allocation2 + $0x29] sm:$0xff]
      %v341 = vpack.c.bf16 %v336, %v335
      %v342 = vpack.c.bf16 %v338, %v337
      %v343 = vpack.c.bf16 %v340, %v339
      %s344 = scalar_lea.vmem %s2, 32
      %v345 = vld [vmem:[%s344] sm:$0xf]
      %v346 = vld [vmem:[%s344 + $0x4] sm:$0xf]
      %v347 = vld [vmem:[%s344 + $0x8] sm:$0xf]
      %v348 = vld [vmem:[%s344 + $0xc] sm:$0xf]
      %v349 = vld [vmem:[%s344 + $0x10] sm:$0xf]
      %v350 = vld [vmem:[%s344 + $0x14] sm:$0xf]
      %v351 = vld [vmem:[%s344 + $0x18] sm:$0xf]
      %v352 = vld [vmem:[%s344 + $0x1c] sm:$0xf]
      %v361 = vunpack.c.l.b16 %v345
      %v362 = vunpack.c.l.b16 %v346
      %v363 = vunpack.c.l.b16 %v347
      %v364 = vunpack.c.l.b16 %v348
      %v365 = vunpack.c.l.b16 %v349
      %v366 = vunpack.c.l.b16 %v350
      %v367 = vunpack.c.l.b16 %v351
      %v368 = vunpack.c.l.b16 %v352
      %v369 = vpack.c.b16 %v362, %v361
      %v370 = vpack.c.b16 %v364, %v363
      %v371 = vpack.c.b16 %v366, %v365
      %v372 = vpack.c.b16 %v368, %v367
      %v378 = vsel %vm293, %v341, 0
      %v381 = vsel %vm293, %v342, 0
      %v384 = vsel %vm293, %v343, 0
      %386 = vmatpush.bf16.msra.mxu0 0
      %387 = vmatpush.bf16.msra.mxu0 0
      %388 = vmatpush.bf16.msra.mxu0 0
      %389 = vmatpush.bf16.msra.mxu0 0
      %390 = vmatpush.bf16.msra.mxu0 %v372
      %391 = vmatpush.bf16.msra.mxu0 %v371
      %392 = vmatpush.bf16.msra.mxu0 %v370
      %393 = vmatpush.bf16.msra.mxu0 %v369
      %394 = vmatmul.bf16.gmra.mxu0 %v378
      %v395 = vpop.f32.mrf.mxu0
      %v396 = vadd.f32 0.0, %v395
      %v397 = vpop.f32.mrf.mxu0
      %v398 = vadd.f32 0.0, %v397
      %399 = vmatmul.bf16.gmra.mxu0 %v381
      %v400 = vpop.f32.mrf.mxu0
      %v401 = vadd.f32 0.0, %v400
      %v402 = vpop.f32.mrf.mxu0
      %v403 = vadd.f32 0.0, %v402
      %404 = vmatmul.bf16.gmra.mxu0 %v384
      %v405 = vpop.f32.mrf.mxu0
      %v406 = vadd.f32 0.0, %v405
      %v407 = vpop.f32.mrf.mxu0
      %v408 = vadd.f32 0.0, %v407
      %409 = vdwg.mxu0
      %v418 = vunpack.c.l.b16 %v327
      %v419 = vunpack.c.l.b16 %v328
      %v420 = vunpack.c.l.b16 %v329
      %v421 = vunpack.c.l.b16 %v330
      %v422 = vunpack.c.l.b16 %v331
      %v423 = vunpack.c.l.b16 %v332
      %v424 = vunpack.c.l.b16 %v333
      %v425 = vunpack.c.l.b16 %v334
      %v426 = vpack.c.b16 %v419, %v418
      %v427 = vpack.c.b16 %v421, %v420
      %v428 = vpack.c.b16 %v423, %v422
      %v429 = vpack.c.b16 %v425, %v424
      %v435 = vsel %vm293, %v324, 0
      %v438 = vsel %vm293, %v325, 0
      %v441 = vsel %vm293, %v326, 0
      %443 = vmatpush.bf16.msra.mxu0 0
      %444 = vmatpush.bf16.msra.mxu0 0
      %445 = vmatpush.bf16.msra.mxu0 0
      %446 = vmatpush.bf16.msra.mxu0 0
      %447 = vmatpush.bf16.msra.mxu0 %v429
      %448 = vmatpush.bf16.msra.mxu0 %v428
      %449 = vmatpush.bf16.msra.mxu0 %v427
      %450 = vmatpush.bf16.msra.mxu0 %v426
      %451 = vmatmul.bf16.gmra.mxu0 %v435
      %v452 = vpop.f32.mrf.mxu0
      %v453 = vadd.f32 %v396, %v452
      %v454 = vpop.f32.mrf.mxu0
      %v455 = vadd.f32 %v398, %v454
      %456 = vmatmul.bf16.gmra.mxu0 %v438
      %v457 = vpop.f32.mrf.mxu0
      %v458 = vadd.f32 %v401, %v457
      %v459 = vpop.f32.mrf.mxu0
      %v460 = vadd.f32 %v403, %v459
      %461 = vmatmul.bf16.gmra.mxu0 %v441
      %v462 = vpop.f32.mrf.mxu0
      %v463 = vadd.f32 %v406, %v462
      %v464 = vpop.f32.mrf.mxu0
      %v465 = vadd.f32 %v408, %v464
      %466 = vdwg.mxu0
      %v467 = vld [vmem:[#allocation2 + $0x2] sm:$0xff]
      %v468 = vld [vmem:[#allocation2 + $0xa] sm:$0xff]
      %v469 = vld [vmem:[#allocation2 + $0x12] sm:$0xff]
      %v470 = vld [vmem:[#allocation2 + $0x1a] sm:$0xff]
      %v471 = vld [vmem:[#allocation2 + $0x22] sm:$0xff]
      %v472 = vld [vmem:[#allocation2 + $0x2a] sm:$0xff]
      %v473 = vpack.c.bf16 %v468, %v467
      %v474 = vpack.c.bf16 %v470, %v469
      %v475 = vpack.c.bf16 %v472, %v471
      %s476 = scalar_lea.vmem %s2, 64
      %v477 = vld [vmem:[%s476] sm:$0xf]
      %v478 = vld [vmem:[%s476 + $0x4] sm:$0xf]
      %v479 = vld [vmem:[%s476 + $0x8] sm:$0xf]
      %v480 = vld [vmem:[%s476 + $0xc] sm:$0xf]
      %v481 = vld [vmem:[%s476 + $0x10] sm:$0xf]
      %v482 = vld [vmem:[%s476 + $0x14] sm:$0xf]
      %v483 = vld [vmem:[%s476 + $0x18] sm:$0xf]
      %v484 = vld [vmem:[%s476 + $0x1c] sm:$0xf]
      %v493 = vunpack.c.l.b16 %v477
      %v494 = vunpack.c.l.b16 %v478
      %v495 = vunpack.c.l.b16 %v479
      %v496 = vunpack.c.l.b16 %v480
      %v497 = vunpack.c.l.b16 %v481
      %v498 = vunpack.c.l.b16 %v482
      %v499 = vunpack.c.l.b16 %v483
      %v500 = vunpack.c.l.b16 %v484
      %v501 = vpack.c.b16 %v494, %v493
      %v502 = vpack.c.b16 %v496, %v495
      %v503 = vpack.c.b16 %v498, %v497
      %v504 = vpack.c.b16 %v500, %v499
      %v510 = vsel %vm293, %v473, 0
      %v513 = vsel %vm293, %v474, 0
      %v516 = vsel %vm293, %v475, 0
      %518 = vmatpush.bf16.msra.mxu0 0
      %519 = vmatpush.bf16.msra.mxu0 0
      %520 = vmatpush.bf16.msra.mxu0 0
      %521 = vmatpush.bf16.msra.mxu0 0
      %522 = vmatpush.bf16.msra.mxu0 %v504
      %523 = vmatpush.bf16.msra.mxu0 %v503
      %524 = vmatpush.bf16.msra.mxu0 %v502
      %525 = vmatpush.bf16.msra.mxu0 %v501
      %526 = vmatmul.bf16.gmra.mxu0 %v510
      %v527 = vpop.f32.mrf.mxu0
      %v528 = vadd.f32 0.0, %v527
      %v529 = vpop.f32.mrf.mxu0
      %v530 = vadd.f32 0.0, %v529
      %531 = vmatmul.bf16.gmra.mxu0 %v513
      %v532 = vpop.f32.mrf.mxu0
      %v533 = vadd.f32 0.0, %v532
      %v534 = vpop.f32.mrf.mxu0
      %v535 = vadd.f32 0.0, %v534
      %536 = vmatmul.bf16.gmra.mxu0 %v516
      %v537 = vpop.f32.mrf.mxu0
      %v538 = vadd.f32 0.0, %v537
      %v539 = vpop.f32.mrf.mxu0
      %v540 = vadd.f32 0.0, %v539
      %541 = vdwg.mxu0
      %v542 = vadd.f32 %v453, %v528
      %v543 = vadd.f32 %v455, %v530
      %v544 = vadd.f32 %v458, %v533
      %v545 = vadd.f32 %v460, %v535
      %v546 = vadd.f32 %v463, %v538
      %v547 = vadd.f32 %v465, %v540
      %v548 = vld [vmem:[#allocation2 + $0x3] sm:$0xff]
      %v549 = vld [vmem:[#allocation2 + $0xb] sm:$0xff]
      %v550 = vld [vmem:[#allocation2 + $0x13] sm:$0xff]
      %v551 = vld [vmem:[#allocation2 + $0x1b] sm:$0xff]
      %v552 = vld [vmem:[#allocation2 + $0x23] sm:$0xff]
      %v553 = vld [vmem:[#allocation2 + $0x2b] sm:$0xff]
      %v554 = vpack.c.bf16 %v549, %v548
      %v555 = vpack.c.bf16 %v551, %v550
      %v556 = vpack.c.bf16 %v553, %v552
      %s557 = scalar_lea.vmem %s2, 96
      %v558 = vld [vmem:[%s557] sm:$0xf]
      %v559 = vld [vmem:[%s557 + $0x4] sm:$0xf]
      %v560 = vld [vmem:[%s557 + $0x8] sm:$0xf]
      %v561 = vld [vmem:[%s557 + $0xc] sm:$0xf]
      %v562 = vld [vmem:[%s557 + $0x10] sm:$0xf]
      %v563 = vld [vmem:[%s557 + $0x14] sm:$0xf]
      %v564 = vld [vmem:[%s557 + $0x18] sm:$0xf]
      %v565 = vld [vmem:[%s557 + $0x1c] sm:$0xf]
      %v574 = vunpack.c.l.b16 %v558
      %v575 = vunpack.c.l.b16 %v559
      %v576 = vunpack.c.l.b16 %v560
      %v577 = vunpack.c.l.b16 %v561
      %v578 = vunpack.c.l.b16 %v562
      %v579 = vunpack.c.l.b16 %v563
      %v580 = vunpack.c.l.b16 %v564
      %v581 = vunpack.c.l.b16 %v565
      %v582 = vpack.c.b16 %v575, %v574
      %v583 = vpack.c.b16 %v577, %v576
      %v584 = vpack.c.b16 %v579, %v578
      %v585 = vpack.c.b16 %v581, %v580
      %v591 = vsel %vm293, %v554, 0
      %v594 = vsel %vm293, %v555, 0
      %v597 = vsel %vm293, %v556, 0
      %599 = vmatpush.bf16.msra.mxu0 0
      %600 = vmatpush.bf16.msra.mxu0 0
      %601 = vmatpush.bf16.msra.mxu0 0
      %602 = vmatpush.bf16.msra.mxu0 0
      %603 = vmatpush.bf16.msra.mxu0 %v585
      %604 = vmatpush.bf16.msra.mxu0 %v584
      %605 = vmatpush.bf16.msra.mxu0 %v583
      %606 = vmatpush.bf16.msra.mxu0 %v582
      %607 = vmatmul.bf16.gmra.mxu0 %v591
      %v608 = vpop.f32.mrf.mxu0
      %v609 = vadd.f32 0.0, %v608
      %v610 = vpop.f32.mrf.mxu0
      %v611 = vadd.f32 0.0, %v610
      %612 = vmatmul.bf16.gmra.mxu0 %v594
      %v613 = vpop.f32.mrf.mxu0
      %v614 = vadd.f32 0.0, %v613
      %v615 = vpop.f32.mrf.mxu0
      %v616 = vadd.f32 0.0, %v615
      %617 = vmatmul.bf16.gmra.mxu0 %v597
      %v618 = vpop.f32.mrf.mxu0
      %v619 = vadd.f32 0.0, %v618
      %v620 = vpop.f32.mrf.mxu0
      %v621 = vadd.f32 0.0, %v620
      %622 = vdwg.mxu0
      %v623 = vadd.f32 %v542, %v609
      %v624 = vadd.f32 %v543, %v611
      %v625 = vadd.f32 %v544, %v614
      %v626 = vadd.f32 %v545, %v616
      %v627 = vadd.f32 %v546, %v619
      %v628 = vadd.f32 %v547, %v621
      %v629 = vld [vmem:[%s3] sm:$0x1]
      %v631 = vperm.slane %v629, 0
      %v633 = vadd.f32 %v623, %v631
      %v634 = vadd.f32 %v624, %v631
      %v635 = vadd.f32 %v625, %v631
      %v636 = vadd.f32 %v626, %v631
      %v637 = vadd.f32 %v627, %v631
      %v638 = vadd.f32 %v628, %v631
      %vm639 = vcmp.ge.f32.partialorder %v633, 0.0
      %vm640 = vcmp.ge.f32.partialorder %v634, 0.0
      %vm641 = vcmp.ge.f32.partialorder %v635, 0.0
      %vm642 = vcmp.ge.f32.partialorder %v636, 0.0
      %vm643 = vcmp.ge.f32.partialorder %v637, 0.0
      %vm644 = vcmp.ge.f32.partialorder %v638, 0.0
      %v645 = vmul.f32 %v633, 0.1
      %v646 = vmul.f32 %v634, 0.1
      %v647 = vmul.f32 %v635, 0.1
      %v648 = vmul.f32 %v636, 0.1
      %v649 = vmul.f32 %v637, 0.1
      %v650 = vmul.f32 %v638, 0.1
      %v651 = vsel %vm639, %v633, %v645
      %v652 = vsel %vm640, %v634, %v646
      %v653 = vsel %vm641, %v635, %v647
      %v654 = vsel %vm642, %v636, %v648
      %v655 = vsel %vm643, %v637, %v649
      %v656 = vsel %vm644, %v638, %v650
      %v657 = vpack.c.bf16 %v651, %v651
      %v658 = vpack.c.bf16 %v652, %v652
      %v659 = vpack.c.bf16 %v653, %v653
      %v660 = vpack.c.bf16 %v654, %v654
      %v661 = vpack.c.bf16 %v655, %v655
      %v662 = vpack.c.bf16 %v656, %v656
      %vm663 = vcmask 257024
      %664 = vst.msk [vmem:[%s278] sm:$0xf] %vm663, %v657
      %665 = vst.msk [vmem:[%s278 + $0x4] sm:$0xf] %vm663, %v658
      %666 = vst.msk [vmem:[%s278 + $0x8] sm:$0xf] %vm663, %v659
      %667 = vst.msk [vmem:[%s278 + $0xc] sm:$0xf] %vm663, %v660
      %668 = vst.msk [vmem:[%s278 + $0x10] sm:$0xf] %vm663, %v661
      %669 = vst.msk [vmem:[%s278 + $0x14] sm:$0xf] %vm663, %v662
      %s670 = smul.u32 6, %s20
      %p671 = scmp.lt.s32.totalorder %s19, 1
      %s672 = scalar_select %p671, %s19, 1
      %p673 = scmp.lt.s32.totalorder %s670, 5
      %s674 = scalar_select %p673, %s670, 5
      %s675 = smul.addr %s672, 6
      %s676 = sadd.s32 %s674, %s675
      %s677 = smul.addr %s676, 4
      %s678 = scalar_lea.vmem %s4, %s677
      // Predicated region
      $region37: #{fwd.15} parent=35 // pred_check
        %p679 = pneg %p147
      $region38: #{fwd.15} parent=35 // pred_check_branch
        %681 = sbr.rel (%p679) target = $region40
      $region39: #{fwd.15} parent=35 // pred_region
        %s682 = smul.u32 6, %s20
      $region40: #{fwd.15} parent=35 // pred_fallthru
        _
    $region36: #{fwd.15} parent=5 // pred_fallthru
      _
    %p683 = scmp.le.s32.totalorder 2, %s10
    // Predicated region
    $region41: #{fwd.15} parent=5 // pred_check
      %p684 = pneg %p683
    $region42: #{fwd.15} parent=5 // pred_check_branch
      %686 = sbr.rel (%p684) target = $region44
    $region43: #{fwd.15} parent=5 // pred_region
      %s687 = ssub.s32 %s10, 2
      // Predicated region
      $region45: #{fwd.15} parent=43 // pred_check
        %p688 = pneg %p153
      $region46: #{fwd.15} parent=43 // pred_check_branch
        %690 = sbr.rel (%p688) target = $region48
      $region47: #{fwd.15} parent=43 // pred_region
        %s691 = smul.u32 6, %s22
        %p692 = scmp.lt.s32.totalorder %s21, 1
        %s693 = scalar_select %p692, %s21, 1
        %p694 = scmp.lt.s32.totalorder %s691, 5
        %s695 = scalar_select %p694, %s691, 5
        %s696 = smul.addr %s693, 6
        %s697 = sadd.s32 %s695, %s696
        %s698 = smul.addr %s697, 4
        %s699 = scalar_lea.vmem %s4, %s698
      $region48: #{fwd.15} parent=43 // pred_fallthru
        _
    $region44: #{fwd.15} parent=5 // pred_fallthru
      _
  $region6: #{fwd.15} parent=0 // loop_footer
    %s14 = sadd.s32 1, %s10
  $region7: #{fwd.15} parent=0 // loop_footer_branch
    %9 = sbr.rel target = $region3
  $region8: #{fwd.15} parent=0 // loop_exit
    _

// kernel: fwd.17
$region0: #{fwd.17}
  #allocation0 [shape = 'u32[]', space=smem, size = 0x4, offset = 0x4, fixed_abs, tag = 'smem constant byte address 0x4 - core index']
  #allocation1 [shape = 'u32[72,128]{1,0:T(1,128)}', space=vmem, size = 0x9000, scoped, tag = 'internal scratch']
  #allocation2 [shape = 'f32[64,32]{1,0:T(8,128)}', space=vmem, size = 0x8000, scoped, tag = 'scratch operand']
  %s0 = inlined_call_operand.vmem [shape: bf16[2,64,32], index: 0, kind: input, shape index: {}, may-alias: {0,1}]
  %s1 = inlined_call_operand.vmem [shape: bf16[2,64,32], index: 1, kind: input, shape index: {}, may-alias: {0,1}]
  %s2 = inlined_call_operand.vmem [shape: bf16[3,32,32], index: 2, kind: input, shape index: {}]
  %s3 = inlined_call_operand.vmem [shape: f32[1,32], index: 3, kind: input, shape index: {}]
  %s4 = inlined_call_operand.vmem [shape: bf16[2,32,32], index: 4, kind: input, shape index: {}]
  %s5 = inlined_call_operand.vmem [shape: bf16[2,32,32], index: 5, kind: output, shape index: {}]
  %s6 = sld [smem:[#allocation0]]
  $region53: #{fwd.17} parent=0
    _
  %s8 = ssub.s32 1, %s6
  %s9 = scalar_select 0, %s8, %s6
  loop: start=0, step=1, limit=4
  $region2: #{fwd.17} parent=0 // loop_pre_header
    _
  $region3: #{fwd.17} parent=0 // loop_header
    %s11 = sphi 0, %s15
    %p12 = scmp.ge.s32.totalorder %s11, 4
    %s18 = sphi 0, %s30
    %s19 = sphi 0, %s26
    %s20 = sphi 0, %s18
    %s21 = sphi 0, %s19
    %s22 = sphi 0, %s20
    %s23 = sphi 0, %s21
    %s35 = sphi 0, %s37
    %s38 = sphi 0, %s35
    %s39 = sphi 0, %s38
    %s55 = sphi 0, %s39
    %s65 = sphi 0, %s67
    %s68 = sphi 0, %s65
    %s69 = sphi 0, %s68
    %s85 = sphi 0, %s69
    %s89 = sphi 0, %s89
    %s91 = sphi 0, %s89
    %s92 = sphi 0, %s91
    %s106 = sphi 0, %s92
    %s110 = sphi 0, %s110
    %s112 = sphi 0, %s110
    %s113 = sphi 0, %s112
    %s127 = sphi 0, %s113
    %s135 = sphi 0, %s137
    %s138 = sphi 0, %s135
    %s139 = sphi 0, %s138
    %s155 = sphi 0, %s139
    %s163 = sphi 0, %s165
    %s166 = sphi 0, %s163
    %s167 = sphi 0, %s166
    %s183 = sphi 0, %s167
  $region4: #{fwd.17} parent=0 // loop_header_branch
    %14 = sbr.rel (%p12) target = $region8
  $region5: #{fwd.17} parent=0 // loop_body
    %s16 = ssub.s32 %s11, 1
    %s17 = ssub.s32 %s11, 2
    %s24 = sadd.s32 1, %s19
    %p25 = scmp.ge.s32.totalorder %s24, 1
    %s26 = scalar_select %p25, 0, %s24
    %s27 = sadd.s32 1, %s18
    %s28 = scalar_select %p25, %s27, %s18
    %p29 = scmp.ge.s32.totalorder %s28, 2
    %s30 = scalar_select %p29, 0, %s28
    %s31 = ssub.s32 %s18, %s30
    %s32 = ssub.s32 %s19, %s26
    %s33 = sor.u32 %s31, %s32
    %p34 = scmp.eq.s32.totalorder %s33, 0
    %s36 = sadd.s32 %s35, 1
    %s37 = scalar_select %p34, %s35, %s36
    %p40 = pneg %p34
    %p41 = scmp.eq.s32.totalorder %s11, 1
    %p42 = por %p40, %p41
    %p43 = scmp.ne.s32.totalorder %s35, %s38
    %p44 = scmp.eq.s32.totalorder %s11, 0
    %p45 = por %p43, %p44
    %p46 = scmp.ne.s32.totalorder %s35, %s38
    %p47 = scmp.eq.s32.totalorder %s16, 1
    %p48 = por %p46, %p47
    %p49 = scmp.ne.s32.totalorder %s38, %s39
    %p50 = scmp.eq.s32.totalorder %s16, 0
    %p51 = por %p49, %p50
    %p52 = scmp.ne.s32.totalorder %s38, %s39
    %p53 = scmp.eq.s32.totalorder %s17, 1
    %p54 = por %p52, %p53
    %p56 = scmp.ne.s32.totalorder %s39, %s55
    %p57 = scmp.eq.s32.totalorder %s17, 0
    %p58 = por %p56, %p57
    %s59 = sadd.s32 %s19, 1
    %s60 = sadd.s32 %s26, 1
    %s61 = ssub.s32 %s18, %s30
    %s62 = ssub.s32 %s59, %s60
    %s63 = sor.u32 %s61, %s62
    %p64 = scmp.eq.s32.totalorder %s63, 0
    %s66 = sadd.s32 %s65, 1
    %s67 = scalar_select %p64, %s65, %s66
    %p70 = pneg %p64
    %p71 = scmp.eq.s32.totalorder %s11, 1
    %p72 = por %p70, %p71
    %p73 = scmp.ne.s32.totalorder %s65, %s68
    %p74 = scmp.eq.s32.totalorder %s11, 0
    %p75 = por %p73, %p74
    %p76 = scmp.ne.s32.totalorder %s65, %s68
    %p77 = scmp.eq.s32.totalorder %s16, 1
    %p78 = por %p76, %p77
    %p79 = scmp.ne.s32.totalorder %s68, %s69
    %p80 = scmp.eq.s32.totalorder %s16, 0
    %p81 = por %p79, %p80
    %p82 = scmp.ne.s32.totalorder %s68, %s69
    %p83 = scmp.eq.s32.totalorder %s17, 1
    %p84 = por %p82, %p83
    %p86 = scmp.ne.s32.totalorder %s69, %s85
    %p87 = scmp.eq.s32.totalorder %s17, 0
    %p88 = por %p86, %p87
    %s90 = sadd.s32 %s89, 1
    %p93 = scmp.eq.s32.totalorder %s11, 1
    %p94 = scmp.ne.s32.totalorder %s89, %s91
    %p95 = scmp.eq.s32.totalorder %s11, 0
    %p96 = por %p94, %p95
    %p97 = scmp.ne.s32.totalorder %s89, %s91
    %p98 = scmp.eq.s32.totalorder %s16, 1
    %p99 = por %p97, %p98
    %p100 = scmp.ne.s32.totalorder %s91, %s92
    %p101 = scmp.eq.s32.totalorder %s16, 0
    %p102 = por %p100, %p101
    %p103 = scmp.ne.s32.totalorder %s91, %s92
    %p104 = scmp.eq.s32.totalorder %s17, 1
    %p105 = por %p103, %p104
    %p107 = scmp.ne.s32.totalorder %s92, %s106
    %p108 = scmp.eq.s32.totalorder %s17, 0
    %p109 = por %p107, %p108
    %s111 = sadd.s32 %s110, 1
    %p114 = scmp.eq.s32.totalorder %s11, 1
    %p115 = scmp.ne.s32.totalorder %s110, %s112
    %p116 = scmp.eq.s32.totalorder %s11, 0
    %p117 = por %p115, %p116
    %p118 = scmp.ne.s32.totalorder %s110, %s112
    %p119 = scmp.eq.s32.totalorder %s16, 1
    %p120 = por %p118, %p119
    %p121 = scmp.ne.s32.totalorder %s112, %s113
    %p122 = scmp.eq.s32.totalorder %s16, 0
    %p123 = por %p121, %p122
    %p124 = scmp.ne.s32.totalorder %s112, %s113
    %p125 = scmp.eq.s32.totalorder %s17, 1
    %p126 = por %p124, %p125
    %p128 = scmp.ne.s32.totalorder %s113, %s127
    %p129 = scmp.eq.s32.totalorder %s17, 0
    %p130 = por %p128, %p129
    %s131 = ssub.s32 %s18, %s30
    %s132 = ssub.s32 %s19, %s26
    %s133 = sor.u32 %s131, %s132
    %p134 = scmp.eq.s32.totalorder %s133, 0
    %s136 = sadd.s32 %s135, 1
    %s137 = scalar_select %p134, %s135, %s136
    %p140 = pneg %p134
    %p141 = scmp.eq.s32.totalorder %s11, 1
    %p142 = por %p140, %p141
    %p143 = scmp.ne.s32.totalorder %s135, %s138
    %p144 = scmp.eq.s32.totalorder %s11, 0
    %p145 = por %p143, %p144
    %p146 = scmp.ne.s32.totalorder %s135, %s138
    %p147 = scmp.eq.s32.totalorder %s16, 1
    %p148 = por %p146, %p147
    %p149 = scmp.ne.s32.totalorder %s138, %s139
    %p150 = scmp.eq.s32.totalorder %s16, 0
    %p151 = por %p149, %p150
    %p152 = scmp.ne.s32.totalorder %s138, %s139
    %p153 = scmp.eq.s32.totalorder %s17, 1
    %p154 = por %p152, %p153
    %p156 = scmp.ne.s32.totalorder %s139, %s155
    %p157 = scmp.eq.s32.totalorder %s17, 0
    %p158 = por %p156, %p157
    %s159 = ssub.s32 %s18, %s30
    %s160 = ssub.s32 %s19, %s26
    %s161 = sor.u32 %s159, %s160
    %p162 = scmp.eq.s32.totalorder %s161, 0
    %s164 = sadd.s32 %s163, 1
    %s165 = scalar_select %p162, %s163, %s164
    %p168 = pneg %p162
    %p169 = scmp.eq.s32.totalorder %s11, 1
    %p170 = por %p168, %p169
    %p171 = scmp.ne.s32.totalorder %s163, %s166
    %p172 = scmp.eq.s32.totalorder %s11, 0
    %p173 = por %p171, %p172
    %p174 = scmp.ne.s32.totalorder %s163, %s166
    %p175 = scmp.eq.s32.totalorder %s16, 1
    %p176 = por %p174, %p175
    %p177 = scmp.ne.s32.totalorder %s166, %s167
    %p178 = scmp.eq.s32.totalorder %s16, 0
    %p179 = por %p177, %p178
    %p180 = scmp.ne.s32.totalorder %s166, %s167
    %p181 = scmp.eq.s32.totalorder %s17, 1
    %p182 = por %p180, %p181
    %p184 = scmp.ne.s32.totalorder %s167, %s183
    %p185 = scmp.eq.s32.totalorder %s17, 0
    %p186 = por %p184, %p185
    %p187 = scmp.le.s32.totalorder 1, %s11
    %p188 = scmp.lt.s32.totalorder %s11, 3
    %p189 = pnand %p187, %p188
    %p190 = pneg %p189
    // Predicated region
    $region9: #{fwd.17} parent=5 // pred_check
      _
    $region10: #{fwd.17} parent=5 // pred_check_branch
      %192 = sbr.rel (%p189) target = $region12
    $region11: #{fwd.17} parent=5 // pred_region
      %s193 = ssub.s32 %s11, 1
      // Predicated region
      $region13: #{fwd.17} parent=11 // pred_check
        %p194 = pneg %p102
      $region14: #{fwd.17} parent=11 // pred_check_branch
        %196 = sbr.rel (%p194) target = $region16
      $region15: #{fwd.17} parent=11 // pred_region
        _
      $region16: #{fwd.17} parent=11 // pred_fallthru
        _
      // Predicated region
      $region17: #{fwd.17} parent=11 // pred_check
        %p197 = pneg %p123
      $region18: #{fwd.17} parent=11 // pred_check_branch
        %199 = sbr.rel (%p197) target = $region20
      $region19: #{fwd.17} parent=11 // pred_region
        _
      $region20: #{fwd.17} parent=11 // pred_fallthru
        _
    $region12: #{fwd.17} parent=5 // pred_fallthru
      _
    %p200 = scmp.lt.s32.totalorder %s11, 2
    // Predicated region
    $region21: #{fwd.17} parent=5 // pred_check
      %p201 = pneg %p200
    $region22: #{fwd.17} parent=5 // pred_check_branch
      %203 = sbr.rel (%p201) target = $region24
    $region23: #{fwd.17} parent=5 // pred_region
      // Predicated region
      $region25: #{fwd.17} parent=23 // pred_check
        %p204 = pneg %p45
      $region26: #{fwd.17} parent=23 // pred_check_branch
        %206 = sbr.rel (%p204) target = $region28
      $region27: #{fwd.17} parent=23 // pred_region
        %s207 = smul.u32 4, %s19
        %p208 = scmp.lt.s32.totalorder %s18, 1
        %s209 = scalar_select %p208, %s18, 1
        %p210 = scmp.lt.s32.totalorder %s207, 7
        %s211 = scalar_select %p210, %s207, 7
        %s212 = smul.addr %s209, 8
        %s213 = sadd.s32 %s211, %s212
        %s214 = smul.addr %s213, 4
        %s215 = scalar_lea.vmem %s0, %s214
        %s216 = smul.u32 4, %s19
      $region28: #{fwd.17} parent=23 // pred_fallthru
        _
      // Predicated region
      $region29: #{fwd.17} parent=23 // pred_check
        %p217 = pneg %p75
      $region30: #{fwd.17} parent=23 // pred_check_branch
        %219 = sbr.rel (%p217) target = $region32
      $region31: #{fwd.17} parent=23 // pred_region
        %s220 = sadd.s32 %s19, 1
        %s221 = smul.u32 4, %s220
        %p222 = scmp.lt.s32.totalorder %s18, 1
        %s223 = scalar_select %p222, %s18, 1
        %p224 = scmp.lt.s32.totalorder %s221, 7
        %s225 = scalar_select %p224, %s221, 7
        %s226 = smul.addr %s223, 8
        %s227 = sadd.s32 %s225, %s226
        %s228 = smul.addr %s227, 4
        %s229 = scalar_lea.vmem %s1, %s228
        %s230 = sadd.s32 %s19, 1
        %s231 = smul.u32 4, %s230
      $region32: #{fwd.17} parent=23 // pred_fallthru
        _
      // Predicated region
      $region33: #{fwd.17} parent=23 // pred_check
        %p232 = pneg %p145
      $region34: #{fwd.17} parent=23 // pred_check_branch
        %234 = sbr.rel (%p232) target = $region36
      $region35: #{fwd.17} parent=23 // pred_region
        %s235 = smul.u32 4, %s19
        %p236 = scmp.lt.s32.totalorder %s18, 1
        %s237 = scalar_select %p236, %s18, 1
        %p238 = scmp.lt.s32.totalorder %s235, 3
        %s239 = scalar_select %p238, %s235, 3
        %s240 = smul.addr %s237, 4
        %s241 = sadd.s32 %s239, %s240
        %s242 = smul.addr %s241, 4
        %s243 = scalar_lea.vmem %s4, %s242
        %s244 = smul.u32 4, %s19
      $region36: #{fwd.17} parent=23 // pred_fallthru
        _
    $region24: #{fwd.17} parent=5 // pred_fallthru
      _
    %p245 = scmp.le.s32.totalorder 1, %s11
    %p246 = scmp.lt.s32.totalorder %s11, 3
    %p247 = pnand %p245, %p246
    %p248 = pneg %p247
    // Predicated region
    $region37: #{fwd.17} parent=5 // pred_check
      _
    $region38: #{fwd.17} parent=5 // pred_check_branch
      %250 = sbr.rel (%p247) target = $region40
    $region39: #{fwd.17} parent=5 // pred_region
      %s251 = ssub.s32 %s11, 1
      %s252 = smul.u32 4, %s21
      %p253 = scmp.lt.s32.totalorder %s20, 1
      %s254 = scalar_select %p253, %s20, 1
      %p255 = scmp.lt.s32.totalorder %s252, 7
      %s256 = scalar_select %p255, %s252, 7
      %s257 = smul.addr %s254, 8
      %s258 = sadd.s32 %s256, %s257
      %s259 = smul.addr %s258, 4
      %s260 = scalar_lea.vmem %s0, %s259
      %p261 = pneg %p51
      %p262 = pneg %p48
      %s263 = sadd.s32 %s21, 1
      %s264 = smul.u32 4, %s263
      %p265 = scmp.lt.s32.totalorder %s20, 1
      %s266 = scalar_select %p265, %s20, 1
      %p267 = scmp.lt.s32.totalorder %s264, 7
      %s268 = scalar_select %p267, %s264, 7
      %s269 = smul.addr %s266, 8
      %s270 = sadd.s32 %s268, %s269
      %s271 = smul.addr %s270, 4
      %s272 = scalar_lea.vmem %s1, %s271
      %p273 = pneg %p81
      %p274 = pneg %p78
      %p275 = pneg %p102
      %p276 = pneg %p99
      %p277 = pneg %p123
      %p278 = pneg %p120
      %s279 = smul.u32 4, %s21
      %p280 = scmp.lt.s32.totalorder %s20, 1
      %s281 = scalar_select %p280, %s20, 1
      %p282 = scmp.lt.s32.totalorder %s279, 3
      %s283 = scalar_select %p282, %s279, 3
      %s284 = smul.addr %s281, 4
      %s285 = sadd.s32 %s283, %s284
      %s286 = smul.addr %s285, 4
      %s287 = scalar_lea.vmem %s4, %s286
      %p288 = pneg %p151
      %p289 = pneg %p148
      %p290 = pneg %p179
      %p291 = pneg %p176
      %s292 = smul.u32 4, %s21
      %p293 = scmp.lt.s32.totalorder %s20, 1
      %s294 = scalar_select %p293, %s20, 1
      %p295 = scmp.lt.s32.totalorder %s292, 3
      %s296 = scalar_select %p295, %s292, 3
      %s297 = smul.addr %s294, 4
      %s298 = sadd.s32 %s296, %s297
      %s299 = smul.addr %s298, 4
      %s300 = scalar_lea.vmem %s5, %s299
      %s301 = smul.u32 4, %s21
      %p302 = scmp.lt.s32.totalorder %s20, 1
      %s303 = scalar_select %p302, %s20, 1
      %p304 = scmp.lt.s32.totalorder %s301, 7
      %s305 = scalar_select %p304, %s301, 7
      %s306 = smul.addr %s303, 8
      %s307 = sadd.s32 %s305, %s306
      %s308 = smul.addr %s307, 4
      %s309 = scalar_lea.vmem %s0, %s308
      %s310 = smul.u32 4, %s21
      %s311 = sadd.s32 %s21, 1
      %s312 = smul.u32 4, %s311
      %p313 = scmp.lt.s32.totalorder %s20, 1
      %s314 = scalar_select %p313, %s20, 1
      %p315 = scmp.lt.s32.totalorder %s312, 7
      %s316 = scalar_select %p315, %s312, 7
      %s317 = smul.addr %s314, 8
      %s318 = sadd.s32 %s316, %s317
      %s319 = smul.addr %s318, 4
      %s320 = scalar_lea.vmem %s1, %s319
      %s321 = sadd.s32 %s21, 1
      %s322 = smul.u32 4, %s321
      %s323 = smul.u32 4, %s21
      %p324 = scmp.lt.s32.totalorder %s20, 1
      %s325 = scalar_select %p324, %s20, 1
      %p326 = scmp.lt.s32.totalorder %s323, 3
      %s327 = scalar_select %p326, %s323, 3
      %s328 = smul.addr %s325, 4
      %s329 = sadd.s32 %s327, %s328
      %s330 = smul.addr %s329, 4
      %s331 = scalar_lea.vmem %s4, %s330
      %s332 = smul.u32 4, %s21
      %s333 = smul.u32 4, %s21
      %p334 = scmp.lt.s32.totalorder %s20, 1
      %s335 = scalar_select %p334, %s20, 1
      %p336 = scmp.lt.s32.totalorder %s333, 3
      %s337 = scalar_select %p336, %s333, 3
      %s338 = smul.addr %s335, 4
      %s339 = sadd.s32 %s337, %s338
      %s340 = smul.addr %s339, 4
      %s341 = scalar_lea.vmem %s5, %s340
      %s342 = smul.u32 4, %s21
      %v344 = vld [vmem:[%s309] sm:$0xf]
      %v345 = vld [vmem:[%s309 + $0x4] sm:$0xf]
      %v346 = vld [vmem:[%s309 + $0x8] sm:$0xf]
      %v347 = vld [vmem:[%s309 + $0xc] sm:$0xf]
      %v348 = vunpack.c.l.bf16 %v344
      %v349 = vunpack.c.l.bf16 %v345
      %v350 = vunpack.c.l.bf16 %v346
      %v351 = vunpack.c.l.bf16 %v347
      %vm352 = vcmask 261120
      %353 = vst.msk [vmem:[#allocation2] sm:$0xff] %vm352, %v348
      %354 = vst.msk [vmem:[#allocation2 + $0x8] sm:$0xff] %vm352, %v349
      %355 = vst.msk [vmem:[#allocation2 + $0x10] sm:$0xff] %vm352, %v350
      %356 = vst.msk [vmem:[#allocation2 + $0x18] sm:$0xff] %vm352, %v351
      %v357 = vld [vmem:[%s320] sm:$0xf]
      %v358 = vld [vmem:[%s320 + $0x4] sm:$0xf]
      %v359 = vld [vmem:[%s320 + $0x8] sm:$0xf]
      %v360 = vld [vmem:[%s320 + $0xc] sm:$0xf]
      %v361 = vunpack.c.l.bf16 %v357
      %v362 = vunpack.c.l.bf16 %v358
      %v363 = vunpack.c.l.bf16 %v359
      %v364 = vunpack.c.l.bf16 %v360
      %365 = vst.msk [vmem:[#allocation2 + $0x20] sm:$0xff] %vm352, %v361
      %366 = vst.msk [vmem:[#allocation2 + $0x28] sm:$0xff] %vm352, %v362
      %367 = vst.msk [vmem:[#allocation2 + $0x30] sm:$0xff] %vm352, %v363
      %368 = vst.msk [vmem:[#allocation2 + $0x38] sm:$0xff] %vm352, %v364
      %v369 = vld [vmem:[#allocation2] sm:$0xff]
      %v370 = vld [vmem:[#allocation2 + $0x8] sm:$0xff]
      %v371 = vld [vmem:[#allocation2 + $0x10] sm:$0xff]
      %v372 = vld [vmem:[#allocation2 + $0x18] sm:$0xff]
      %v373 = vpack.c.bf16 %v370, %v369
      %v374 = vpack.c.bf16 %v372, %v371
      %v375 = vld [vmem:[%s2] sm:$0xf]
      %v376 = vld [vmem:[%s2 + $0x4] sm:$0xf]
      %v377 = vld [vmem:[%s2 + $0x8] sm:$0xf]
      %v378 = vld [vmem:[%s2 + $0xc] sm:$0xf]
      %v379 = vld [vmem:[#allocation2 + $0x1] sm:$0xff]
      %v380 = vld [vmem:[#allocation2 + $0x9] sm:$0xff]
      %v381 = vld [vmem:[#allocation2 + $0x11] sm:$0xff]
      %v382 = vld [vmem:[#allocation2 + $0x19] sm:$0xff]
      %v383 = vpack.c.bf16 %v380, %v379
      %v384 = vpack.c.bf16 %v382, %v381
      %s385 = scalar_lea.vmem %s2, 16
      %v386 = vld [vmem:[%s385] sm:$0xf]
      %v387 = vld [vmem:[%s385 + $0x4] sm:$0xf]
      %v388 = vld [vmem:[%s385 + $0x8] sm:$0xf]
      %v389 = vld [vmem:[%s385 + $0xc] sm:$0xf]
      %v394 = vunpack.c.l.b16 %v386
      %v395 = vunpack.c.l.b16 %v387
      %v396 = vunpack.c.l.b16 %v388
      %v397 = vunpack.c.l.b16 %v389
      %v398 = vpack.c.b16 %v395, %v394
      %v399 = vpack.c.b16 %v397, %v396
      %v403 = vsel %vm352, %v383, 0
      %v406 = vsel %vm352, %v384, 0
      %408 = vmatpush.bf16.msra.mxu0 0
      %409 = vmatpush.bf16.msra.mxu0 0
      %410 = vmatpush.bf16.msra.mxu0 0
      %411 = vmatpush.bf16.msra.mxu0 0
      %412 = vmatpush.bf16.msra.mxu0 0
      %413 = vmatpush.bf16.msra.mxu0 0
      %414 = vmatpush.bf16.msra.mxu0 %v399
      %415 = vmatpush.bf16.msra.mxu0 %v398
      %416 = vmatmul.bf16.gmra.mxu0 %v403
      %v417 = vpop.f32.mrf.mxu0
      %v418 = vadd.f32 0.0, %v417
      %v419 = vpop.f32.mrf.mxu0
      %v420 = vadd.f32 0.0, %v419
      %421 = vmatmul.bf16.gmra.mxu0 %v406
      %v422 = vpop.f32.mrf.mxu0
      %v423 = vadd.f32 0.0, %v422
      %v424 = vpop.f32.mrf.mxu0
      %v425 = vadd.f32 0.0, %v424
      %426 = vdwg.mxu0
      %v431 = vunpack.c.l.b16 %v375
      %v432 = vunpack.c.l.b16 %v376
      %v433 = vunpack.c.l.b16 %v377
      %v434 = vunpack.c.l.b16 %v378
      %v435 = vpack.c.b16 %v432, %v431
      %v436 = vpack.c.b16 %v434, %v433
      %v440 = vsel %vm352, %v373, 0
      %v443 = vsel %vm352, %v374, 0
      %445 = vmatpush.bf16.msra.mxu0 0
      %446 = vmatpush.bf16.msra.mxu0 0
      %447 = vmatpush.bf16.msra.mxu0 0
      %448 = vmatpush.bf16.msra.mxu0 0
      %449 = vmatpush.bf16.msra.mxu0 0
      %450 = vmatpush.bf16.msra.mxu0 0
      %451 = vmatpush.bf16.msra.mxu0 %v436
      %452 = vmatpush.bf16.msra.mxu0 %v435
      %453 = vmatmul.bf16.gmra.mxu0 %v440
      %v454 = vpop.f32.mrf.mxu0
      %v455 = vadd.f32 %v418, %v454
      %v456 = vpop.f32.mrf.mxu0
      %v457 = vadd.f32 %v420, %v456
      %458 = vmatmul.bf16.gmra.mxu0 %v443
      %v459 = vpop.f32.mrf.mxu0
      %v460 = vadd.f32 %v423, %v459
      %v461 = vpop.f32.mrf.mxu0
      %v462 = vadd.f32 %v425, %v461
      %463 = vdwg.mxu0
      %v464 = vld [vmem:[#allocation2 + $0x2] sm:$0xff]
      %v465 = vld [vmem:[#allocation2 + $0xa] sm:$0xff]
      %v466 = vld [vmem:[#allocation2 + $0x12] sm:$0xff]
      %v467 = vld [vmem:[#allocation2 + $0x1a] sm:$0xff]
      %v468 = vpack.c.bf16 %v465, %v464
      %v469 = vpack.c.bf16 %v467, %v466
      %s470 = scalar_lea.vmem %s2, 32
      %v471 = vld [vmem:[%s470] sm:$0xf]
      %v472 = vld [vmem:[%s470 + $0x4] sm:$0xf]
      %v473 = vld [vmem:[%s470 + $0x8] sm:$0xf]
      %v474 = vld [vmem:[%s470 + $0xc] sm:$0xf]
      %v479 = vunpack.c.l.b16 %v471
      %v480 = vunpack.c.l.b16 %v472
      %v481 = vunpack.c.l.b16 %v473
      %v482 = vunpack.c.l.b16 %v474
      %v483 = vpack.c.b16 %v480, %v479
      %v484 = vpack.c.b16 %v482, %v481
      %v488 = vsel %vm352, %v468, 0
      %v491 = vsel %vm352, %v469, 0
      %493 = vmatpush.bf16.msra.mxu0 0
      %494 = vmatpush.bf16.msra.mxu0 0
      %495 = vmatpush.bf16.msra.mxu0 0
      %496 = vmatpush.bf16.msra.mxu0 0
      %497 = vmatpush.bf16.msra.mxu0 0
      %498 = vmatpush.bf16.msra.mxu0 0
      %499 = vmatpush.bf16.msra.mxu0 %v484
      %500 = vmatpush.bf16.msra.mxu0 %v483
      %501 = vmatmul.bf16.gmra.mxu0 %v488
      %v502 = vpop.f32.mrf.mxu0
      %v503 = vadd.f32 0.0, %v502
      %v504 = vpop.f32.mrf.mxu0
      %v505 = vadd.f32 0.0, %v504
      %506 = vmatmul.bf16.gmra.mxu0 %v491
      %v507 = vpop.f32.mrf.mxu0
      %v508 = vadd.f32 0.0, %v507
      %v509 = vpop.f32.mrf.mxu0
      %v510 = vadd.f32 0.0, %v509
      %511 = vdwg.mxu0
      %v512 = vadd.f32 %v455, %v503
      %v513 = vadd.f32 %v457, %v505
      %v514 = vadd.f32 %v460, %v508
      %v515 = vadd.f32 %v462, %v510
      %v516 = vld [vmem:[%s3] sm:$0x1]
      %v518 = vperm.slane %v516, 0
      %v520 = vadd.f32 %v512, %v518
      %v521 = vadd.f32 %v513, %v518
      %v522 = vadd.f32 %v514, %v518
      %v523 = vadd.f32 %v515, %v518
      %v524 = vld [vmem:[%s331] sm:$0xf]
      %v525 = vld [vmem:[%s331 + $0x4] sm:$0xf]
      %v526 = vld [vmem:[%s331 + $0x8] sm:$0xf]
      %v527 = vld [vmem:[%s331 + $0xc] sm:$0xf]
      %v528 = vunpack.c.l.bf16 %v524
      %v529 = vunpack.c.l.bf16 %v525
      %v530 = vunpack.c.l.bf16 %v526
      %v531 = vunpack.c.l.bf16 %v527
      %v532 = vadd.f32 %v520, %v528
      %v533 = vadd.f32 %v521, %v529
      %v534 = vadd.f32 %v522, %v530
      %v535 = vadd.f32 %v523, %v531
      %v536 = vpack.c.bf16 %v532, %v532
      %v537 = vpack.c.bf16 %v533, %v533
      %v538 = vpack.c.bf16 %v534, %v534
      %v539 = vpack.c.bf16 %v535, %v535
      %vm540 = vcmask 257024
      %541 = vst.msk [vmem:[%s341] sm:$0xf] %vm540, %v536
      %542 = vst.msk [vmem:[%s341 + $0x4] sm:$0xf] %vm540, %v537
      %543 = vst.msk [vmem:[%s341 + $0x8] sm:$0xf] %vm540, %v538
      %544 = vst.msk [vmem:[%s341 + $0xc] sm:$0xf] %vm540, %v539
      %s545 = smul.u32 4, %s21
      %p546 = scmp.lt.s32.totalorder %s20, 1
      %s547 = scalar_select %p546, %s20, 1
      %p548 = scmp.lt.s32.totalorder %s545, 3
      %s549 = scalar_select %p548, %s545, 3
      %s550 = smul.addr %s547, 4
      %s551 = sadd.s32 %s549, %s550
      %s552 = smul.addr %s551, 4
      %s553 = scalar_lea.vmem %s5, %s552
      // Predicated region
      $region41: #{fwd.17} parent=39 // pred_check
        %p554 = pneg %p176
      $region42: #{fwd.17} parent=39 // pred_check_branch
        %556 = sbr.rel (%p554) target = $region44
      $region43: #{fwd.17} parent=39 // pred_region
        %s557 = smul.u32 4, %s21
      $region44: #{fwd.17} parent=39 // pred_fallthru
        _
    $region40: #{fwd.17} parent=5 // pred_fallthru
      _
    %p558 = scmp.le.s32.totalorder 2, %s11
    // Predicated region
    $region45: #{fwd.17} parent=5 // pred_check
      %p559 = pneg %p558
    $region46: #{fwd.17} parent=5 // pred_check_branch
      %561 = sbr.rel (%p559) target = $region48
    $region47: #{fwd.17} parent=5 // pred_region
      %s562 = ssub.s32 %s11, 2
      // Predicated region
      $region49: #{fwd.17} parent=47 // pred_check
        %p563 = pneg %p182
      $region50: #{fwd.17} parent=47 // pred_check_branch
        %565 = sbr.rel (%p563) target = $region52
      $region51: #{fwd.17} parent=47 // pred_region
        %s566 = smul.u32 4, %s23
        %p567 = scmp.lt.s32.totalorder %s22, 1
        %s568 = scalar_select %p567, %s22, 1
        %p569 = scmp.lt.s32.totalorder %s566, 3
        %s570 = scalar_select %p569, %s566, 3
        %s571 = smul.addr %s568, 4
        %s572 = sadd.s32 %s570, %s571
        %s573 = smul.addr %s572, 4
        %s574 = scalar_lea.vmem %s5, %s573
      $region52: #{fwd.17} parent=47 // pred_fallthru
        _
    $region48: #{fwd.17} parent=5 // pred_fallthru
      _
  $region6: #{fwd.17} parent=0 // loop_footer
    %s15 = sadd.s32 1, %s11
  $region7: #{fwd.17} parent=0 // loop_footer_branch
    %10 = sbr.rel target = $region3
  $region8: #{fwd.17} parent=0 // loop_exit
    _

// kernel: fwd.18
$region0: #{fwd.18}
  #allocation0 [shape = 'u32[]', space=smem, size = 0x4, offset = 0x4, fixed_abs, tag = 'smem constant byte address 0x4 - core index']
  #allocation1 [shape = 'u32[72,128]{1,0:T(1,128)}', space=vmem, size = 0x9000, scoped, tag = 'internal scratch']
  #allocation2 [shape = 'f32[64,32]{1,0:T(8,128)}', space=vmem, size = 0x8000, scoped, tag = 'scratch operand']
  %s0 = inlined_call_operand.vmem [shape: bf16[2,64,32], index: 0, kind: input, shape index: {}, may-alias: {0,1}]
  %s1 = inlined_call_operand.vmem [shape: bf16[2,64,32], index: 1, kind: input, shape index: {}, may-alias: {0,1}]
  %s2 = inlined_call_operand.vmem [shape: bf16[3,32,32], index: 2, kind: input, shape index: {}]
  %s3 = inlined_call_operand.vmem [shape: f32[1,32], index: 3, kind: input, shape index: {}]
  %s4 = inlined_call_operand.vmem [shape: bf16[2,32,32], index: 4, kind: output, shape index: {}]
  %s5 = sld [smem:[#allocation0]]
  $region49: #{fwd.18} parent=0
    _
  %s7 = ssub.s32 1, %s5
  %s8 = scalar_select 0, %s7, %s5
  loop: start=0, step=1, limit=4
  $region2: #{fwd.18} parent=0 // loop_pre_header
    _
  $region3: #{fwd.18} parent=0 // loop_header
    %s10 = sphi 0, %s14
    %p11 = scmp.ge.s32.totalorder %s10, 4
    %s17 = sphi 0, %s29
    %s18 = sphi 0, %s25
    %s19 = sphi 0, %s17
    %s20 = sphi 0, %s18
    %s21 = sphi 0, %s19
    %s22 = sphi 0, %s20
    %s34 = sphi 0, %s36
    %s37 = sphi 0, %s34
    %s38 = sphi 0, %s37
    %s54 = sphi 0, %s38
    %s64 = sphi 0, %s66
    %s67 = sphi 0, %s64
    %s68 = sphi 0, %s67
    %s84 = sphi 0, %s68
    %s88 = sphi 0, %s88
    %s90 = sphi 0, %s88
    %s91 = sphi 0, %s90
    %s105 = sphi 0, %s91
    %s109 = sphi 0, %s109
    %s111 = sphi 0, %s109
    %s112 = sphi 0, %s111
    %s126 = sphi 0, %s112
    %s134 = sphi 0, %s136
    %s137 = sphi 0, %s134
    %s138 = sphi 0, %s137
    %s154 = sphi 0, %s138
  $region4: #{fwd.18} parent=0 // loop_header_branch
    %13 = sbr.rel (%p11) target = $region8
  $region5: #{fwd.18} parent=0 // loop_body
    %s15 = ssub.s32 %s10, 1
    %s16 = ssub.s32 %s10, 2
    %s23 = sadd.s32 1, %s18
    %p24 = scmp.ge.s32.totalorder %s23, 1
    %s25 = scalar_select %p24, 0, %s23
    %s26 = sadd.s32 1, %s17
    %s27 = scalar_select %p24, %s26, %s17
    %p28 = scmp.ge.s32.totalorder %s27, 2
    %s29 = scalar_select %p28, 0, %s27
    %s30 = ssub.s32 %s17, %s29
    %s31 = ssub.s32 %s18, %s25
    %s32 = sor.u32 %s30, %s31
    %p33 = scmp.eq.s32.totalorder %s32, 0
    %s35 = sadd.s32 %s34, 1
    %s36 = scalar_select %p33, %s34, %s35
    %p39 = pneg %p33
    %p40 = scmp.eq.s32.totalorder %s10, 1
    %p41 = por %p39, %p40
    %p42 = scmp.ne.s32.totalorder %s34, %s37
    %p43 = scmp.eq.s32.totalorder %s10, 0
    %p44 = por %p42, %p43
    %p45 = scmp.ne.s32.totalorder %s34, %s37
    %p46 = scmp.eq.s32.totalorder %s15, 1
    %p47 = por %p45, %p46
    %p48 = scmp.ne.s32.totalorder %s37, %s38
    %p49 = scmp.eq.s32.totalorder %s15, 0
    %p50 = por %p48, %p49
    %p51 = scmp.ne.s32.totalorder %s37, %s38
    %p52 = scmp.eq.s32.totalorder %s16, 1
    %p53 = por %p51, %p52
    %p55 = scmp.ne.s32.totalorder %s38, %s54
    %p56 = scmp.eq.s32.totalorder %s16, 0
    %p57 = por %p55, %p56
    %s58 = sadd.s32 %s18, 1
    %s59 = sadd.s32 %s25, 1
    %s60 = ssub.s32 %s17, %s29
    %s61 = ssub.s32 %s58, %s59
    %s62 = sor.u32 %s60, %s61
    %p63 = scmp.eq.s32.totalorder %s62, 0
    %s65 = sadd.s32 %s64, 1
    %s66 = scalar_select %p63, %s64, %s65
    %p69 = pneg %p63
    %p70 = scmp.eq.s32.totalorder %s10, 1
    %p71 = por %p69, %p70
    %p72 = scmp.ne.s32.totalorder %s64, %s67
    %p73 = scmp.eq.s32.totalorder %s10, 0
    %p74 = por %p72, %p73
    %p75 = scmp.ne.s32.totalorder %s64, %s67
    %p76 = scmp.eq.s32.totalorder %s15, 1
    %p77 = por %p75, %p76
    %p78 = scmp.ne.s32.totalorder %s67, %s68
    %p79 = scmp.eq.s32.totalorder %s15, 0
    %p80 = por %p78, %p79
    %p81 = scmp.ne.s32.totalorder %s67, %s68
    %p82 = scmp.eq.s32.totalorder %s16, 1
    %p83 = por %p81, %p82
    %p85 = scmp.ne.s32.totalorder %s68, %s84
    %p86 = scmp.eq.s32.totalorder %s16, 0
    %p87 = por %p85, %p86
    %s89 = sadd.s32 %s88, 1
    %p92 = scmp.eq.s32.totalorder %s10, 1
    %p93 = scmp.ne.s32.totalorder %s88, %s90
    %p94 = scmp.eq.s32.totalorder %s10, 0
    %p95 = por %p93, %p94
    %p96 = scmp.ne.s32.totalorder %s88, %s90
    %p97 = scmp.eq.s32.totalorder %s15, 1
    %p98 = por %p96, %p97
    %p99 = scmp.ne.s32.totalorder %s90, %s91
    %p100 = scmp.eq.s32.totalorder %s15, 0
    %p101 = por %p99, %p100
    %p102 = scmp.ne.s32.totalorder %s90, %s91
    %p103 = scmp.eq.s32.totalorder %s16, 1
    %p104 = por %p102, %p103
    %p106 = scmp.ne.s32.totalorder %s91, %s105
    %p107 = scmp.eq.s32.totalorder %s16, 0
    %p108 = por %p106, %p107
    %s110 = sadd.s32 %s109, 1
    %p113 = scmp.eq.s32.totalorder %s10, 1
    %p114 = scmp.ne.s32.totalorder %s109, %s111
    %p115 = scmp.eq.s32.totalorder %s10, 0
    %p116 = por %p114, %p115
    %p117 = scmp.ne.s32.totalorder %s109, %s111
    %p118 = scmp.eq.s32.totalorder %s15, 1
    %p119 = por %p117, %p118
    %p120 = scmp.ne.s32.totalorder %s111, %s112
    %p121 = scmp.eq.s32.totalorder %s15, 0
    %p122 = por %p120, %p121
    %p123 = scmp.ne.s32.totalorder %s111, %s112
    %p124 = scmp.eq.s32.totalorder %s16, 1
    %p125 = por %p123, %p124
    %p127 = scmp.ne.s32.totalorder %s112, %s126
    %p128 = scmp.eq.s32.totalorder %s16, 0
    %p129 = por %p127, %p128
    %s130 = ssub.s32 %s17, %s29
    %s131 = ssub.s32 %s18, %s25
    %s132 = sor.u32 %s130, %s131
    %p133 = scmp.eq.s32.totalorder %s132, 0
    %s135 = sadd.s32 %s134, 1
    %s136 = scalar_select %p133, %s134, %s135
    %p139 = pneg %p133
    %p140 = scmp.eq.s32.totalorder %s10, 1
    %p141 = por %p139, %p140
    %p142 = scmp.ne.s32.totalorder %s134, %s137
    %p143 = scmp.eq.s32.totalorder %s10, 0
    %p144 = por %p142, %p143
    %p145 = scmp.ne.s32.totalorder %s134, %s137
    %p146 = scmp.eq.s32.totalorder %s15, 1
    %p147 = por %p145, %p146
    %p148 = scmp.ne.s32.totalorder %s137, %s138
    %p149 = scmp.eq.s32.totalorder %s15, 0
    %p150 = por %p148, %p149
    %p151 = scmp.ne.s32.totalorder %s137, %s138
    %p152 = scmp.eq.s32.totalorder %s16, 1
    %p153 = por %p151, %p152
    %p155 = scmp.ne.s32.totalorder %s138, %s154
    %p156 = scmp.eq.s32.totalorder %s16, 0
    %p157 = por %p155, %p156
    %p158 = scmp.le.s32.totalorder 1, %s10
    %p159 = scmp.lt.s32.totalorder %s10, 3
    %p160 = pnand %p158, %p159
    %p161 = pneg %p160
    // Predicated region
    $region9: #{fwd.18} parent=5 // pred_check
      _
    $region10: #{fwd.18} parent=5 // pred_check_branch
      %163 = sbr.rel (%p160) target = $region12
    $region11: #{fwd.18} parent=5 // pred_region
      %s164 = ssub.s32 %s10, 1
      // Predicated region
      $region13: #{fwd.18} parent=11 // pred_check
        %p165 = pneg %p101
      $region14: #{fwd.18} parent=11 // pred_check_branch
        %167 = sbr.rel (%p165) target = $region16
      $region15: #{fwd.18} parent=11 // pred_region
        _
      $region16: #{fwd.18} parent=11 // pred_fallthru
        _
      // Predicated region
      $region17: #{fwd.18} parent=11 // pred_check
        %p168 = pneg %p122
      $region18: #{fwd.18} parent=11 // pred_check_branch
        %170 = sbr.rel (%p168) target = $region20
      $region19: #{fwd.18} parent=11 // pred_region
        _
      $region20: #{fwd.18} parent=11 // pred_fallthru
        _
    $region12: #{fwd.18} parent=5 // pred_fallthru
      _
    %p171 = scmp.lt.s32.totalorder %s10, 2
    // Predicated region
    $region21: #{fwd.18} parent=5 // pred_check
      %p172 = pneg %p171
    $region22: #{fwd.18} parent=5 // pred_check_branch
      %174 = sbr.rel (%p172) target = $region24
    $region23: #{fwd.18} parent=5 // pred_region
      // Predicated region
      $region25: #{fwd.18} parent=23 // pred_check
        %p175 = pneg %p44
      $region26: #{fwd.18} parent=23 // pred_check_branch
        %177 = sbr.rel (%p175) target = $region28
      $region27: #{fwd.18} parent=23 // pred_region
        %s178 = smul.u32 4, %s18
        %p179 = scmp.lt.s32.totalorder %s17, 1
        %s180 = scalar_select %p179, %s17, 1
        %p181 = scmp.lt.s32.totalorder %s178, 7
        %s182 = scalar_select %p181, %s178, 7
        %s183 = smul.addr %s180, 8
        %s184 = sadd.s32 %s182, %s183
        %s185 = smul.addr %s184, 4
        %s186 = scalar_lea.vmem %s0, %s185
        %s187 = smul.u32 4, %s18
      $region28: #{fwd.18} parent=23 // pred_fallthru
        _
      // Predicated region
      $region29: #{fwd.18} parent=23 // pred_check
        %p188 = pneg %p74
      $region30: #{fwd.18} parent=23 // pred_check_branch
        %190 = sbr.rel (%p188) target = $region32
      $region31: #{fwd.18} parent=23 // pred_region
        %s191 = sadd.s32 %s18, 1
        %s192 = smul.u32 4, %s191
        %p193 = scmp.lt.s32.totalorder %s17, 1
        %s194 = scalar_select %p193, %s17, 1
        %p195 = scmp.lt.s32.totalorder %s192, 7
        %s196 = scalar_select %p195, %s192, 7
        %s197 = smul.addr %s194, 8
        %s198 = sadd.s32 %s196, %s197
        %s199 = smul.addr %s198, 4
        %s200 = scalar_lea.vmem %s1, %s199
        %s201 = sadd.s32 %s18, 1
        %s202 = smul.u32 4, %s201
      $region32: #{fwd.18} parent=23 // pred_fallthru
        _
    $region24: #{fwd.18} parent=5 // pred_fallthru
      _
    %p203 = scmp.le.s32.totalorder 1, %s10
    %p204 = scmp.lt.s32.totalorder %s10, 3
    %p205 = pnand %p203, %p204
    %p206 = pneg %p205
    // Predicated region
    $region33: #{fwd.18} parent=5 // pred_check
      _
    $region34: #{fwd.18} parent=5 // pred_check_branch
      %208 = sbr.rel (%p205) target = $region36
    $region35: #{fwd.18} parent=5 // pred_region
      %s209 = ssub.s32 %s10, 1
      %s210 = smul.u32 4, %s20
      %p211 = scmp.lt.s32.totalorder %s19, 1
      %s212 = scalar_select %p211, %s19, 1
      %p213 = scmp.lt.s32.totalorder %s210, 7
      %s214 = scalar_select %p213, %s210, 7
      %s215 = smul.addr %s212, 8
      %s216 = sadd.s32 %s214, %s215
      %s217 = smul.addr %s216, 4
      %s218 = scalar_lea.vmem %s0, %s217
      %p219 = pneg %p50
      %p220 = pneg %p47
      %s221 = sadd.s32 %s20, 1
      %s222 = smul.u32 4, %s221
      %p223 = scmp.lt.s32.totalorder %s19, 1
      %s224 = scalar_select %p223, %s19, 1
      %p225 = scmp.lt.s32.totalorder %s222, 7
      %s226 = scalar_select %p225, %s222, 7
      %s227 = smul.addr %s224, 8
      %s228 = sadd.s32 %s226, %s227
      %s229 = smul.addr %s228, 4
      %s230 = scalar_lea.vmem %s1, %s229
      %p231 = pneg %p80
      %p232 = pneg %p77
      %p233 = pneg %p101
      %p234 = pneg %p98
      %p235 = pneg %p122
      %p236 = pneg %p119
      %p237 = pneg %p150
      %p238 = pneg %p147
      %s239 = smul.u32 4, %s20
      %p240 = scmp.lt.s32.totalorder %s19, 1
      %s241 = scalar_select %p240, %s19, 1
      %p242 = scmp.lt.s32.totalorder %s239, 3
      %s243 = scalar_select %p242, %s239, 3
      %s244 = smul.addr %s241, 4
      %s245 = sadd.s32 %s243, %s244
      %s246 = smul.addr %s245, 4
      %s247 = scalar_lea.vmem %s4, %s246
      %s248 = smul.u32 4, %s20
      %p249 = scmp.lt.s32.totalorder %s19, 1
      %s250 = scalar_select %p249, %s19, 1
      %p251 = scmp.lt.s32.totalorder %s248, 7
      %s252 = scalar_select %p251, %s248, 7
      %s253 = smul.addr %s250, 8
      %s254 = sadd.s32 %s252, %s253
      %s255 = smul.addr %s254, 4
      %s256 = scalar_lea.vmem %s0, %s255
      %s257 = smul.u32 4, %s20
      %s258 = sadd.s32 %s20, 1
      %s259 = smul.u32 4, %s258
      %p260 = scmp.lt.s32.totalorder %s19, 1
      %s261 = scalar_select %p260, %s19, 1
      %p262 = scmp.lt.s32.totalorder %s259, 7
      %s263 = scalar_select %p262, %s259, 7
      %s264 = smul.addr %s261, 8
      %s265 = sadd.s32 %s263, %s264
      %s266 = smul.addr %s265, 4
      %s267 = scalar_lea.vmem %s1, %s266
      %s268 = sadd.s32 %s20, 1
      %s269 = smul.u32 4, %s268
      %s270 = smul.u32 4, %s20
      %p271 = scmp.lt.s32.totalorder %s19, 1
      %s272 = scalar_select %p271, %s19, 1
      %p273 = scmp.lt.s32.totalorder %s270, 3
      %s274 = scalar_select %p273, %s270, 3
      %s275 = smul.addr %s272, 4
      %s276 = sadd.s32 %s274, %s275
      %s277 = smul.addr %s276, 4
      %s278 = scalar_lea.vmem %s4, %s277
      %s279 = smul.u32 4, %s20
      %v281 = vld [vmem:[%s256] sm:$0xf]
      %v282 = vld [vmem:[%s256 + $0x4] sm:$0xf]
      %v283 = vld [vmem:[%s256 + $0x8] sm:$0xf]
      %v284 = vld [vmem:[%s256 + $0xc] sm:$0xf]
      %v285 = vunpack.c.l.bf16 %v281
      %v286 = vunpack.c.l.bf16 %v282
      %v287 = vunpack.c.l.bf16 %v283
      %v288 = vunpack.c.l.bf16 %v284
      %vm289 = vcmp.ge.f32.partialorder %v285, 0.0
      %vm290 = vcmp.ge.f32.partialorder %v286, 0.0
      %vm291 = vcmp.ge.f32.partialorder %v287, 0.0
      %vm292 = vcmp.ge.f32.partialorder %v288, 0.0
      %v293 = vmul.f32 %v285, 0.1
      %v294 = vmul.f32 %v286, 0.1
      %v295 = vmul.f32 %v287, 0.1
      %v296 = vmul.f32 %v288, 0.1
      %v297 = vsel %vm289, %v285, %v293
      %v298 = vsel %vm290, %v286, %v294
      %v299 = vsel %vm291, %v287, %v295
      %v300 = vsel %vm292, %v288, %v296
      %vm301 = vcmask 261120
      %302 = vst.msk [vmem:[#allocation2] sm:$0xff] %vm301, %v297
      %303 = vst.msk [vmem:[#allocation2 + $0x8] sm:$0xff] %vm301, %v298
      %304 = vst.msk [vmem:[#allocation2 + $0x10] sm:$0xff] %vm301, %v299
      %305 = vst.msk [vmem:[#allocation2 + $0x18] sm:$0xff] %vm301, %v300
      %v306 = vld [vmem:[%s267] sm:$0xf]
      %v307 = vld [vmem:[%s267 + $0x4] sm:$0xf]
      %v308 = vld [vmem:[%s267 + $0x8] sm:$0xf]
      %v309 = vld [vmem:[%s267 + $0xc] sm:$0xf]
      %v310 = vunpack.c.l.bf16 %v306
      %v311 = vunpack.c.l.bf16 %v307
      %v312 = vunpack.c.l.bf16 %v308
      %v313 = vunpack.c.l.bf16 %v309
      %vm314 = vcmp.ge.f32.partialorder %v310, 0.0
      %vm315 = vcmp.ge.f32.partialorder %v311, 0.0
      %vm316 = vcmp.ge.f32.partialorder %v312, 0.0
      %vm317 = vcmp.ge.f32.partialorder %v313, 0.0
      %v318 = vmul.f32 %v310, 0.1
      %v319 = vmul.f32 %v311, 0.1
      %v320 = vmul.f32 %v312, 0.1
      %v321 = vmul.f32 %v313, 0.1
      %v322 = vsel %vm314, %v310, %v318
      %v323 = vsel %vm315, %v311, %v319
      %v324 = vsel %vm316, %v312, %v320
      %v325 = vsel %vm317, %v313, %v321
      %326 = vst.msk [vmem:[#allocation2 + $0x20] sm:$0xff] %vm301, %v322
      %327 = vst.msk [vmem:[#allocation2 + $0x28] sm:$0xff] %vm301, %v323
      %328 = vst.msk [vmem:[#allocation2 + $0x30] sm:$0xff] %vm301, %v324
      %329 = vst.msk [vmem:[#allocation2 + $0x38] sm:$0xff] %vm301, %v325
      %v330 = vld [vmem:[#allocation2] sm:$0xff]
      %v331 = vld [vmem:[#allocation2 + $0x8] sm:$0xff]
      %v332 = vld [vmem:[#allocation2 + $0x10] sm:$0xff]
      %v333 = vld [vmem:[#allocation2 + $0x18] sm:$0xff]
      %v334 = vpack.c.bf16 %v331, %v330
      %v335 = vpack.c.bf16 %v333, %v332
      %v336 = vld [vmem:[%s2] sm:$0xf]
      %v337 = vld [vmem:[%s2 + $0x4] sm:$0xf]
      %v338 = vld [vmem:[%s2 + $0x8] sm:$0xf]
      %v339 = vld [vmem:[%s2 + $0xc] sm:$0xf]
      %v340 = vld [vmem:[#allocation2 + $0x3] sm:$0xff]
      %v341 = vld [vmem:[#allocation2 + $0xb] sm:$0xff]
      %v342 = vld [vmem:[#allocation2 + $0x13] sm:$0xff]
      %v343 = vld [vmem:[#allocation2 + $0x1b] sm:$0xff]
      %v344 = vpack.c.bf16 %v341, %v340
      %v345 = vpack.c.bf16 %v343, %v342
      %s346 = scalar_lea.vmem %s2, 16
      %v347 = vld [vmem:[%s346] sm:$0xf]
      %v348 = vld [vmem:[%s346 + $0x4] sm:$0xf]
      %v349 = vld [vmem:[%s346 + $0x8] sm:$0xf]
      %v350 = vld [vmem:[%s346 + $0xc] sm:$0xf]
      %v355 = vunpack.c.l.b16 %v347
      %v356 = vunpack.c.l.b16 %v348
      %v357 = vunpack.c.l.b16 %v349
      %v358 = vunpack.c.l.b16 %v350
      %v359 = vpack.c.b16 %v356, %v355
      %v360 = vpack.c.b16 %v358, %v357
      %v364 = vsel %vm301, %v344, 0
      %v367 = vsel %vm301, %v345, 0
      %369 = vmatpush.bf16.msra.mxu0 0
      %370 = vmatpush.bf16.msra.mxu0 0
      %371 = vmatpush.bf16.msra.mxu0 0
      %372 = vmatpush.bf16.msra.mxu0 0
      %373 = vmatpush.bf16.msra.mxu0 0
      %374 = vmatpush.bf16.msra.mxu0 0
      %375 = vmatpush.bf16.msra.mxu0 %v360
      %376 = vmatpush.bf16.msra.mxu0 %v359
      %377 = vmatmul.bf16.gmra.mxu0 %v364
      %v378 = vpop.f32.mrf.mxu0
      %v379 = vadd.f32 0.0, %v378
      %v380 = vpop.f32.mrf.mxu0
      %v381 = vadd.f32 0.0, %v380
      %382 = vmatmul.bf16.gmra.mxu0 %v367
      %v383 = vpop.f32.mrf.mxu0
      %v384 = vadd.f32 0.0, %v383
      %v385 = vpop.f32.mrf.mxu0
      %v386 = vadd.f32 0.0, %v385
      %387 = vdwg.mxu0
      %v392 = vunpack.c.l.b16 %v336
      %v393 = vunpack.c.l.b16 %v337
      %v394 = vunpack.c.l.b16 %v338
      %v395 = vunpack.c.l.b16 %v339
      %v396 = vpack.c.b16 %v393, %v392
      %v397 = vpack.c.b16 %v395, %v394
      %v401 = vsel %vm301, %v334, 0
      %v404 = vsel %vm301, %v335, 0
      %406 = vmatpush.bf16.msra.mxu0 0
      %407 = vmatpush.bf16.msra.mxu0 0
      %408 = vmatpush.bf16.msra.mxu0 0
      %409 = vmatpush.bf16.msra.mxu0 0
      %410 = vmatpush.bf16.msra.mxu0 0
      %411 = vmatpush.bf16.msra.mxu0 0
      %412 = vmatpush.bf16.msra.mxu0 %v397
      %413 = vmatpush.bf16.msra.mxu0 %v396
      %414 = vmatmul.bf16.gmra.mxu0 %v401
      %v415 = vpop.f32.mrf.mxu0
      %v416 = vadd.f32 %v379, %v415
      %v417 = vpop.f32.mrf.mxu0
      %v418 = vadd.f32 %v381, %v417
      %419 = vmatmul.bf16.gmra.mxu0 %v404
      %v420 = vpop.f32.mrf.mxu0
      %v421 = vadd.f32 %v384, %v420
      %v422 = vpop.f32.mrf.mxu0
      %v423 = vadd.f32 %v386, %v422
      %424 = vdwg.mxu0
      %v425 = vld [vmem:[#allocation2 + $0x6] sm:$0xff]
      %v426 = vld [vmem:[#allocation2 + $0xe] sm:$0xff]
      %v427 = vld [vmem:[#allocation2 + $0x16] sm:$0xff]
      %v428 = vld [vmem:[#allocation2 + $0x1e] sm:$0xff]
      %v429 = vpack.c.bf16 %v426, %v425
      %v430 = vpack.c.bf16 %v428, %v427
      %s431 = scalar_lea.vmem %s2, 32
      %v432 = vld [vmem:[%s431] sm:$0xf]
      %v433 = vld [vmem:[%s431 + $0x4] sm:$0xf]
      %v434 = vld [vmem:[%s431 + $0x8] sm:$0xf]
      %v435 = vld [vmem:[%s431 + $0xc] sm:$0xf]
      %v440 = vunpack.c.l.b16 %v432
      %v441 = vunpack.c.l.b16 %v433
      %v442 = vunpack.c.l.b16 %v434
      %v443 = vunpack.c.l.b16 %v435
      %v444 = vpack.c.b16 %v441, %v440
      %v445 = vpack.c.b16 %v443, %v442
      %v449 = vsel %vm301, %v429, 0
      %v452 = vsel %vm301, %v430, 0
      %454 = vmatpush.bf16.msra.mxu0 0
      %455 = vmatpush.bf16.msra.mxu0 0
      %456 = vmatpush.bf16.msra.mxu0 0
      %457 = vmatpush.bf16.msra.mxu0 0
      %458 = vmatpush.bf16.msra.mxu0 0
      %459 = vmatpush.bf16.msra.mxu0 0
      %460 = vmatpush.bf16.msra.mxu0 %v445
      %461 = vmatpush.bf16.msra.mxu0 %v444
      %462 = vmatmul.bf16.gmra.mxu0 %v449
      %v463 = vpop.f32.mrf.mxu0
      %v464 = vadd.f32 0.0, %v463
      %v465 = vpop.f32.mrf.mxu0
      %v466 = vadd.f32 0.0, %v465
      %467 = vmatmul.bf16.gmra.mxu0 %v452
      %v468 = vpop.f32.mrf.mxu0
      %v469 = vadd.f32 0.0, %v468
      %v470 = vpop.f32.mrf.mxu0
      %v471 = vadd.f32 0.0, %v470
      %472 = vdwg.mxu0
      %v473 = vadd.f32 %v416, %v464
      %v474 = vadd.f32 %v418, %v466
      %v475 = vadd.f32 %v421, %v469
      %v476 = vadd.f32 %v423, %v471
      %v477 = vld [vmem:[%s3] sm:$0x1]
      %v479 = vperm.slane %v477, 0
      %v481 = vadd.f32 %v473, %v479
      %v482 = vadd.f32 %v474, %v479
      %v483 = vadd.f32 %v475, %v479
      %v484 = vadd.f32 %v476, %v479
      %vm485 = vcmp.ge.f32.partialorder %v481, 0.0
      %vm486 = vcmp.ge.f32.partialorder %v482, 0.0
      %vm487 = vcmp.ge.f32.partialorder %v483, 0.0
      %vm488 = vcmp.ge.f32.partialorder %v484, 0.0
      %v489 = vmul.f32 %v481, 0.1
      %v490 = vmul.f32 %v482, 0.1
      %v491 = vmul.f32 %v483, 0.1
      %v492 = vmul.f32 %v484, 0.1
      %v493 = vsel %vm485, %v481, %v489
      %v494 = vsel %vm486, %v482, %v490
      %v495 = vsel %vm487, %v483, %v491
      %v496 = vsel %vm488, %v484, %v492
      %v497 = vpack.c.bf16 %v493, %v493
      %v498 = vpack.c.bf16 %v494, %v494
      %v499 = vpack.c.bf16 %v495, %v495
      %v500 = vpack.c.bf16 %v496, %v496
      %vm501 = vcmask 257024
      %502 = vst.msk [vmem:[%s278] sm:$0xf] %vm501, %v497
      %503 = vst.msk [vmem:[%s278 + $0x4] sm:$0xf] %vm501, %v498
      %504 = vst.msk [vmem:[%s278 + $0x8] sm:$0xf] %vm501, %v499
      %505 = vst.msk [vmem:[%s278 + $0xc] sm:$0xf] %vm501, %v500
      %s506 = smul.u32 4, %s20
      %p507 = scmp.lt.s32.totalorder %s19, 1
      %s508 = scalar_select %p507, %s19, 1
      %p509 = scmp.lt.s32.totalorder %s506, 3
      %s510 = scalar_select %p509, %s506, 3
      %s511 = smul.addr %s508, 4
      %s512 = sadd.s32 %s510, %s511
      %s513 = smul.addr %s512, 4
      %s514 = scalar_lea.vmem %s4, %s513
      // Predicated region
      $region37: #{fwd.18} parent=35 // pred_check
        %p515 = pneg %p147
      $region38: #{fwd.18} parent=35 // pred_check_branch
        %517 = sbr.rel (%p515) target = $region40
      $region39: #{fwd.18} parent=35 // pred_region
        %s518 = smul.u32 4, %s20
      $region40: #{fwd.18} parent=35 // pred_fallthru
        _
    $region36: #{fwd.18} parent=5 // pred_fallthru
      _
    %p519 = scmp.le.s32.totalorder 2, %s10
    // Predicated region
    $region41: #{fwd.18} parent=5 // pred_check
      %p520 = pneg %p519
    $region42: #{fwd.18} parent=5 // pred_check_branch
      %522 = sbr.rel (%p520) target = $region44
    $region43: #{fwd.18} parent=5 // pred_region
      %s523 = ssub.s32 %s10, 2
      // Predicated region
      $region45: #{fwd.18} parent=43 // pred_check
        %p524 = pneg %p153
      $region46: #{fwd.18} parent=43 // pred_check_branch
        %526 = sbr.rel (%p524) target = $region48
      $region47: #{fwd.18} parent=43 // pred_region
        %s527 = smul.u32 4, %s22
        %p528 = scmp.lt.s32.totalorder %s21, 1
        %s529 = scalar_select %p528, %s21, 1
        %p530 = scmp.lt.s32.totalorder %s527, 3
        %s531 = scalar_select %p530, %s527, 3
        %s532 = smul.addr %s529, 4
        %s533 = sadd.s32 %s531, %s532
        %s534 = smul.addr %s533, 4
        %s535 = scalar_lea.vmem %s4, %s534
      $region48: #{fwd.18} parent=43 // pred_fallthru
        _
    $region44: #{fwd.18} parent=5 // pred_fallthru
      _
  $region6: #{fwd.18} parent=0 // loop_footer
    %s14 = sadd.s32 1, %s10
  $region7: #{fwd.18} parent=0 // loop_footer_branch
    %9 = sbr.rel target = $region3
  $region8: #{fwd.18} parent=0 // loop_exit
    _

// kernel: fwd.16
$region0: #{fwd.16}
  #allocation0 [shape = 'u32[]', space=smem, size = 0x4, offset = 0x4, fixed_abs, tag = 'smem constant byte address 0x4 - core index']
  #allocation1 [shape = 'u32[72,128]{1,0:T(1,128)}', space=vmem, size = 0x9000, scoped, tag = 'internal scratch']
  #allocation2 [shape = 'f32[64,32]{1,0:T(8,128)}', space=vmem, size = 0x8000, scoped, tag = 'scratch operand']
  %s0 = inlined_call_operand.vmem [shape: bf16[2,64,32], index: 0, kind: input, shape index: {}, may-alias: {0,1}]
  %s1 = inlined_call_operand.vmem [shape: bf16[2,64,32], index: 1, kind: input, shape index: {}, may-alias: {0,1}]
  %s2 = inlined_call_operand.vmem [shape: bf16[3,32,32], index: 2, kind: input, shape index: {}]
  %s3 = inlined_call_operand.vmem [shape: f32[1,32], index: 3, kind: input, shape index: {}]
  %s4 = inlined_call_operand.vmem [shape: bf16[2,32,32], index: 4, kind: output, shape index: {}]
  %s5 = sld [smem:[#allocation0]]
  $region49: #{fwd.16} parent=0
    _
  %s7 = ssub.s32 1, %s5
  %s8 = scalar_select 0, %s7, %s5
  loop: start=0, step=1, limit=4
  $region2: #{fwd.16} parent=0 // loop_pre_header
    _
  $region3: #{fwd.16} parent=0 // loop_header
    %s10 = sphi 0, %s14
    %p11 = scmp.ge.s32.totalorder %s10, 4
    %s17 = sphi 0, %s29
    %s18 = sphi 0, %s25
    %s19 = sphi 0, %s17
    %s20 = sphi 0, %s18
    %s21 = sphi 0, %s19
    %s22 = sphi 0, %s20
    %s34 = sphi 0, %s36
    %s37 = sphi 0, %s34
    %s38 = sphi 0, %s37
    %s54 = sphi 0, %s38
    %s64 = sphi 0, %s66
    %s67 = sphi 0, %s64
    %s68 = sphi 0, %s67
    %s84 = sphi 0, %s68
    %s88 = sphi 0, %s88
    %s90 = sphi 0, %s88
    %s91 = sphi 0, %s90
    %s105 = sphi 0, %s91
    %s109 = sphi 0, %s109
    %s111 = sphi 0, %s109
    %s112 = sphi 0, %s111
    %s126 = sphi 0, %s112
    %s134 = sphi 0, %s136
    %s137 = sphi 0, %s134
    %s138 = sphi 0, %s137
    %s154 = sphi 0, %s138
  $region4: #{fwd.16} parent=0 // loop_header_branch
    %13 = sbr.rel (%p11) target = $region8
  $region5: #{fwd.16} parent=0 // loop_body
    %s15 = ssub.s32 %s10, 1
    %s16 = ssub.s32 %s10, 2
    %s23 = sadd.s32 1, %s18
    %p24 = scmp.ge.s32.totalorder %s23, 1
    %s25 = scalar_select %p24, 0, %s23
    %s26 = sadd.s32 1, %s17
    %s27 = scalar_select %p24, %s26, %s17
    %p28 = scmp.ge.s32.totalorder %s27, 2
    %s29 = scalar_select %p28, 0, %s27
    %s30 = ssub.s32 %s17, %s29
    %s31 = ssub.s32 %s18, %s25
    %s32 = sor.u32 %s30, %s31
    %p33 = scmp.eq.s32.totalorder %s32, 0
    %s35 = sadd.s32 %s34, 1
    %s36 = scalar_select %p33, %s34, %s35
    %p39 = pneg %p33
    %p40 = scmp.eq.s32.totalorder %s10, 1
    %p41 = por %p39, %p40
    %p42 = scmp.ne.s32.totalorder %s34, %s37
    %p43 = scmp.eq.s32.totalorder %s10, 0
    %p44 = por %p42, %p43
    %p45 = scmp.ne.s32.totalorder %s34, %s37
    %p46 = scmp.eq.s32.totalorder %s15, 1
    %p47 = por %p45, %p46
    %p48 = scmp.ne.s32.totalorder %s37, %s38
    %p49 = scmp.eq.s32.totalorder %s15, 0
    %p50 = por %p48, %p49
    %p51 = scmp.ne.s32.totalorder %s37, %s38
    %p52 = scmp.eq.s32.totalorder %s16, 1
    %p53 = por %p51, %p52
    %p55 = scmp.ne.s32.totalorder %s38, %s54
    %p56 = scmp.eq.s32.totalorder %s16, 0
    %p57 = por %p55, %p56
    %s58 = sadd.s32 %s18, 1
    %s59 = sadd.s32 %s25, 1
    %s60 = ssub.s32 %s17, %s29
    %s61 = ssub.s32 %s58, %s59
    %s62 = sor.u32 %s60, %s61
    %p63 = scmp.eq.s32.totalorder %s62, 0
    %s65 = sadd.s32 %s64, 1
    %s66 = scalar_select %p63, %s64, %s65
    %p69 = pneg %p63
    %p70 = scmp.eq.s32.totalorder %s10, 1
    %p71 = por %p69, %p70
    %p72 = scmp.ne.s32.totalorder %s64, %s67
    %p73 = scmp.eq.s32.totalorder %s10, 0
    %p74 = por %p72, %p73
    %p75 = scmp.ne.s32.totalorder %s64, %s67
    %p76 = scmp.eq.s32.totalorder %s15, 1
    %p77 = por %p75, %p76
    %p78 = scmp.ne.s32.totalorder %s67, %s68
    %p79 = scmp.eq.s32.totalorder %s15, 0
    %p80 = por %p78, %p79
    %p81 = scmp.ne.s32.totalorder %s67, %s68
    %p82 = scmp.eq.s32.totalorder %s16, 1
    %p83 = por %p81, %p82
    %p85 = scmp.ne.s32.totalorder %s68, %s84
    %p86 = scmp.eq.s32.totalorder %s16, 0
    %p87 = por %p85, %p86
    %s89 = sadd.s32 %s88, 1
    %p92 = scmp.eq.s32.totalorder %s10, 1
    %p93 = scmp.ne.s32.totalorder %s88, %s90
    %p94 = scmp.eq.s32.totalorder %s10, 0
    %p95 = por %p93, %p94
    %p96 = scmp.ne.s32.totalorder %s88, %s90
    %p97 = scmp.eq.s32.totalorder %s15, 1
    %p98 = por %p96, %p97
    %p99 = scmp.ne.s32.totalorder %s90, %s91
    %p100 = scmp.eq.s32.totalorder %s15, 0
    %p101 = por %p99, %p100
    %p102 = scmp.ne.s32.totalorder %s90, %s91
    %p103 = scmp.eq.s32.totalorder %s16, 1
    %p104 = por %p102, %p103
    %p106 = scmp.ne.s32.totalorder %s91, %s105
    %p107 = scmp.eq.s32.totalorder %s16, 0
    %p108 = por %p106, %p107
    %s110 = sadd.s32 %s109, 1
    %p113 = scmp.eq.s32.totalorder %s10, 1
    %p114 = scmp.ne.s32.totalorder %s109, %s111
    %p115 = scmp.eq.s32.totalorder %s10, 0
    %p116 = por %p114, %p115
    %p117 = scmp.ne.s32.totalorder %s109, %s111
    %p118 = scmp.eq.s32.totalorder %s15, 1
    %p119 = por %p117, %p118
    %p120 = scmp.ne.s32.totalorder %s111, %s112
    %p121 = scmp.eq.s32.totalorder %s15, 0
    %p122 = por %p120, %p121
    %p123 = scmp.ne.s32.totalorder %s111, %s112
    %p124 = scmp.eq.s32.totalorder %s16, 1
    %p125 = por %p123, %p124
    %p127 = scmp.ne.s32.totalorder %s112, %s126
    %p128 = scmp.eq.s32.totalorder %s16, 0
    %p129 = por %p127, %p128
    %s130 = ssub.s32 %s17, %s29
    %s131 = ssub.s32 %s18, %s25
    %s132 = sor.u32 %s130, %s131
    %p133 = scmp.eq.s32.totalorder %s132, 0
    %s135 = sadd.s32 %s134, 1
    %s136 = scalar_select %p133, %s134, %s135
    %p139 = pneg %p133
    %p140 = scmp.eq.s32.totalorder %s10, 1
    %p141 = por %p139, %p140
    %p142 = scmp.ne.s32.totalorder %s134, %s137
    %p143 = scmp.eq.s32.totalorder %s10, 0
    %p144 = por %p142, %p143
    %p145 = scmp.ne.s32.totalorder %s134, %s137
    %p146 = scmp.eq.s32.totalorder %s15, 1
    %p147 = por %p145, %p146
    %p148 = scmp.ne.s32.totalorder %s137, %s138
    %p149 = scmp.eq.s32.totalorder %s15, 0
    %p150 = por %p148, %p149
    %p151 = scmp.ne.s32.totalorder %s137, %s138
    %p152 = scmp.eq.s32.totalorder %s16, 1
    %p153 = por %p151, %p152
    %p155 = scmp.ne.s32.totalorder %s138, %s154
    %p156 = scmp.eq.s32.totalorder %s16, 0
    %p157 = por %p155, %p156
    %p158 = scmp.le.s32.totalorder 1, %s10
    %p159 = scmp.lt.s32.totalorder %s10, 3
    %p160 = pnand %p158, %p159
    %p161 = pneg %p160
    // Predicated region
    $region9: #{fwd.16} parent=5 // pred_check
      _
    $region10: #{fwd.16} parent=5 // pred_check_branch
      %163 = sbr.rel (%p160) target = $region12
    $region11: #{fwd.16} parent=5 // pred_region
      %s164 = ssub.s32 %s10, 1
      // Predicated region
      $region13: #{fwd.16} parent=11 // pred_check
        %p165 = pneg %p101
      $region14: #{fwd.16} parent=11 // pred_check_branch
        %167 = sbr.rel (%p165) target = $region16
      $region15: #{fwd.16} parent=11 // pred_region
        _
      $region16: #{fwd.16} parent=11 // pred_fallthru
        _
      // Predicated region
      $region17: #{fwd.16} parent=11 // pred_check
        %p168 = pneg %p122
      $region18: #{fwd.16} parent=11 // pred_check_branch
        %170 = sbr.rel (%p168) target = $region20
      $region19: #{fwd.16} parent=11 // pred_region
        _
      $region20: #{fwd.16} parent=11 // pred_fallthru
        _
    $region12: #{fwd.16} parent=5 // pred_fallthru
      _
    %p171 = scmp.lt.s32.totalorder %s10, 2
    // Predicated region
    $region21: #{fwd.16} parent=5 // pred_check
      %p172 = pneg %p171
    $region22: #{fwd.16} parent=5 // pred_check_branch
      %174 = sbr.rel (%p172) target = $region24
    $region23: #{fwd.16} parent=5 // pred_region
      // Predicated region
      $region25: #{fwd.16} parent=23 // pred_check
        %p175 = pneg %p44
      $region26: #{fwd.16} parent=23 // pred_check_branch
        %177 = sbr.rel (%p175) target = $region28
      $region27: #{fwd.16} parent=23 // pred_region
        %s178 = smul.u32 4, %s18
        %p179 = scmp.lt.s32.totalorder %s17, 1
        %s180 = scalar_select %p179, %s17, 1
        %p181 = scmp.lt.s32.totalorder %s178, 7
        %s182 = scalar_select %p181, %s178, 7
        %s183 = smul.addr %s180, 8
        %s184 = sadd.s32 %s182, %s183
        %s185 = smul.addr %s184, 4
        %s186 = scalar_lea.vmem %s0, %s185
        %s187 = smul.u32 4, %s18
      $region28: #{fwd.16} parent=23 // pred_fallthru
        _
      // Predicated region
      $region29: #{fwd.16} parent=23 // pred_check
        %p188 = pneg %p74
      $region30: #{fwd.16} parent=23 // pred_check_branch
        %190 = sbr.rel (%p188) target = $region32
      $region31: #{fwd.16} parent=23 // pred_region
        %s191 = sadd.s32 %s18, 1
        %s192 = smul.u32 4, %s191
        %p193 = scmp.lt.s32.totalorder %s17, 1
        %s194 = scalar_select %p193, %s17, 1
        %p195 = scmp.lt.s32.totalorder %s192, 7
        %s196 = scalar_select %p195, %s192, 7
        %s197 = smul.addr %s194, 8
        %s198 = sadd.s32 %s196, %s197
        %s199 = smul.addr %s198, 4
        %s200 = scalar_lea.vmem %s1, %s199
        %s201 = sadd.s32 %s18, 1
        %s202 = smul.u32 4, %s201
      $region32: #{fwd.16} parent=23 // pred_fallthru
        _
    $region24: #{fwd.16} parent=5 // pred_fallthru
      _
    %p203 = scmp.le.s32.totalorder 1, %s10
    %p204 = scmp.lt.s32.totalorder %s10, 3
    %p205 = pnand %p203, %p204
    %p206 = pneg %p205
    // Predicated region
    $region33: #{fwd.16} parent=5 // pred_check
      _
    $region34: #{fwd.16} parent=5 // pred_check_branch
      %208 = sbr.rel (%p205) target = $region36
    $region35: #{fwd.16} parent=5 // pred_region
      %s209 = ssub.s32 %s10, 1
      %s210 = smul.u32 4, %s20
      %p211 = scmp.lt.s32.totalorder %s19, 1
      %s212 = scalar_select %p211, %s19, 1
      %p213 = scmp.lt.s32.totalorder %s210, 7
      %s214 = scalar_select %p213, %s210, 7
      %s215 = smul.addr %s212, 8
      %s216 = sadd.s32 %s214, %s215
      %s217 = smul.addr %s216, 4
      %s218 = scalar_lea.vmem %s0, %s217
      %p219 = pneg %p50
      %p220 = pneg %p47
      %s221 = sadd.s32 %s20, 1
      %s222 = smul.u32 4, %s221
      %p223 = scmp.lt.s32.totalorder %s19, 1
      %s224 = scalar_select %p223, %s19, 1
      %p225 = scmp.lt.s32.totalorder %s222, 7
      %s226 = scalar_select %p225, %s222, 7
      %s227 = smul.addr %s224, 8
      %s228 = sadd.s32 %s226, %s227
      %s229 = smul.addr %s228, 4
      %s230 = scalar_lea.vmem %s1, %s229
      %p231 = pneg %p80
      %p232 = pneg %p77
      %p233 = pneg %p101
      %p234 = pneg %p98
      %p235 = pneg %p122
      %p236 = pneg %p119
      %p237 = pneg %p150
      %p238 = pneg %p147
      %s239 = smul.u32 4, %s20
      %p240 = scmp.lt.s32.totalorder %s19, 1
      %s241 = scalar_select %p240, %s19, 1
      %p242 = scmp.lt.s32.totalorder %s239, 3
      %s243 = scalar_select %p242, %s239, 3
      %s244 = smul.addr %s241, 4
      %s245 = sadd.s32 %s243, %s244
      %s246 = smul.addr %s245, 4
      %s247 = scalar_lea.vmem %s4, %s246
      %s248 = smul.u32 4, %s20
      %p249 = scmp.lt.s32.totalorder %s19, 1
      %s250 = scalar_select %p249, %s19, 1
      %p251 = scmp.lt.s32.totalorder %s248, 7
      %s252 = scalar_select %p251, %s248, 7
      %s253 = smul.addr %s250, 8
      %s254 = sadd.s32 %s252, %s253
      %s255 = smul.addr %s254, 4
      %s256 = scalar_lea.vmem %s0, %s255
      %s257 = smul.u32 4, %s20
      %s258 = sadd.s32 %s20, 1
      %s259 = smul.u32 4, %s258
      %p260 = scmp.lt.s32.totalorder %s19, 1
      %s261 = scalar_select %p260, %s19, 1
      %p262 = scmp.lt.s32.totalorder %s259, 7
      %s263 = scalar_select %p262, %s259, 7
      %s264 = smul.addr %s261, 8
      %s265 = sadd.s32 %s263, %s264
      %s266 = smul.addr %s265, 4
      %s267 = scalar_lea.vmem %s1, %s266
      %s268 = sadd.s32 %s20, 1
      %s269 = smul.u32 4, %s268
      %s270 = smul.u32 4, %s20
      %p271 = scmp.lt.s32.totalorder %s19, 1
      %s272 = scalar_select %p271, %s19, 1
      %p273 = scmp.lt.s32.totalorder %s270, 3
      %s274 = scalar_select %p273, %s270, 3
      %s275 = smul.addr %s272, 4
      %s276 = sadd.s32 %s274, %s275
      %s277 = smul.addr %s276, 4
      %s278 = scalar_lea.vmem %s4, %s277
      %s279 = smul.u32 4, %s20
      %v281 = vld [vmem:[%s256] sm:$0xf]
      %v282 = vld [vmem:[%s256 + $0x4] sm:$0xf]
      %v283 = vld [vmem:[%s256 + $0x8] sm:$0xf]
      %v284 = vld [vmem:[%s256 + $0xc] sm:$0xf]
      %v285 = vunpack.c.l.bf16 %v281
      %v286 = vunpack.c.l.bf16 %v282
      %v287 = vunpack.c.l.bf16 %v283
      %v288 = vunpack.c.l.bf16 %v284
      %vm289 = vcmp.ge.f32.partialorder %v285, 0.0
      %vm290 = vcmp.ge.f32.partialorder %v286, 0.0
      %vm291 = vcmp.ge.f32.partialorder %v287, 0.0
      %vm292 = vcmp.ge.f32.partialorder %v288, 0.0
      %v293 = vmul.f32 %v285, 0.1
      %v294 = vmul.f32 %v286, 0.1
      %v295 = vmul.f32 %v287, 0.1
      %v296 = vmul.f32 %v288, 0.1
      %v297 = vsel %vm289, %v285, %v293
      %v298 = vsel %vm290, %v286, %v294
      %v299 = vsel %vm291, %v287, %v295
      %v300 = vsel %vm292, %v288, %v296
      %vm301 = vcmask 261120
      %302 = vst.msk [vmem:[#allocation2] sm:$0xff] %vm301, %v297
      %303 = vst.msk [vmem:[#allocation2 + $0x8] sm:$0xff] %vm301, %v298
      %304 = vst.msk [vmem:[#allocation2 + $0x10] sm:$0xff] %vm301, %v299
      %305 = vst.msk [vmem:[#allocation2 + $0x18] sm:$0xff] %vm301, %v300
      %v306 = vld [vmem:[%s267] sm:$0xf]
      %v307 = vld [vmem:[%s267 + $0x4] sm:$0xf]
      %v308 = vld [vmem:[%s267 + $0x8] sm:$0xf]
      %v309 = vld [vmem:[%s267 + $0xc] sm:$0xf]
      %v310 = vunpack.c.l.bf16 %v306
      %v311 = vunpack.c.l.bf16 %v307
      %v312 = vunpack.c.l.bf16 %v308
      %v313 = vunpack.c.l.bf16 %v309
      %vm314 = vcmp.ge.f32.partialorder %v310, 0.0
      %vm315 = vcmp.ge.f32.partialorder %v311, 0.0
      %vm316 = vcmp.ge.f32.partialorder %v312, 0.0
      %vm317 = vcmp.ge.f32.partialorder %v313, 0.0
      %v318 = vmul.f32 %v310, 0.1
      %v319 = vmul.f32 %v311, 0.1
      %v320 = vmul.f32 %v312, 0.1
      %v321 = vmul.f32 %v313, 0.1
      %v322 = vsel %vm314, %v310, %v318
      %v323 = vsel %vm315, %v311, %v319
      %v324 = vsel %vm316, %v312, %v320
      %v325 = vsel %vm317, %v313, %v321
      %326 = vst.msk [vmem:[#allocation2 + $0x20] sm:$0xff] %vm301, %v322
      %327 = vst.msk [vmem:[#allocation2 + $0x28] sm:$0xff] %vm301, %v323
      %328 = vst.msk [vmem:[#allocation2 + $0x30] sm:$0xff] %vm301, %v324
      %329 = vst.msk [vmem:[#allocation2 + $0x38] sm:$0xff] %vm301, %v325
      %v330 = vld [vmem:[#allocation2] sm:$0xff]
      %v331 = vld [vmem:[#allocation2 + $0x8] sm:$0xff]
      %v332 = vld [vmem:[#allocation2 + $0x10] sm:$0xff]
      %v333 = vld [vmem:[#allocation2 + $0x18] sm:$0xff]
      %v334 = vpack.c.bf16 %v331, %v330
      %v335 = vpack.c.bf16 %v333, %v332
      %v336 = vld [vmem:[%s2] sm:$0xf]
      %v337 = vld [vmem:[%s2 + $0x4] sm:$0xf]
      %v338 = vld [vmem:[%s2 + $0x8] sm:$0xf]
      %v339 = vld [vmem:[%s2 + $0xc] sm:$0xf]
      %v340 = vld [vmem:[#allocation2 + $0x1] sm:$0xff]
      %v341 = vld [vmem:[#allocation2 + $0x9] sm:$0xff]
      %v342 = vld [vmem:[#allocation2 + $0x11] sm:$0xff]
      %v343 = vld [vmem:[#allocation2 + $0x19] sm:$0xff]
      %v344 = vpack.c.bf16 %v341, %v340
      %v345 = vpack.c.bf16 %v343, %v342
      %s346 = scalar_lea.vmem %s2, 16
      %v347 = vld [vmem:[%s346] sm:$0xf]
      %v348 = vld [vmem:[%s346 + $0x4] sm:$0xf]
      %v349 = vld [vmem:[%s346 + $0x8] sm:$0xf]
      %v350 = vld [vmem:[%s346 + $0xc] sm:$0xf]
      %v355 = vunpack.c.l.b16 %v347
      %v356 = vunpack.c.l.b16 %v348
      %v357 = vunpack.c.l.b16 %v349
      %v358 = vunpack.c.l.b16 %v350
      %v359 = vpack.c.b16 %v356, %v355
      %v360 = vpack.c.b16 %v358, %v357
      %v364 = vsel %vm301, %v344, 0
      %v367 = vsel %vm301, %v345, 0
      %369 = vmatpush.bf16.msra.mxu0 0
      %370 = vmatpush.bf16.msra.mxu0 0
      %371 = vmatpush.bf16.msra.mxu0 0
      %372 = vmatpush.bf16.msra.mxu0 0
      %373 = vmatpush.bf16.msra.mxu0 0
      %374 = vmatpush.bf16.msra.mxu0 0
      %375 = vmatpush.bf16.msra.mxu0 %v360
      %376 = vmatpush.bf16.msra.mxu0 %v359
      %377 = vmatmul.bf16.gmra.mxu0 %v364
      %v378 = vpop.f32.mrf.mxu0
      %v379 = vadd.f32 0.0, %v378
      %v380 = vpop.f32.mrf.mxu0
      %v381 = vadd.f32 0.0, %v380
      %382 = vmatmul.bf16.gmra.mxu0 %v367
      %v383 = vpop.f32.mrf.mxu0
      %v384 = vadd.f32 0.0, %v383
      %v385 = vpop.f32.mrf.mxu0
      %v386 = vadd.f32 0.0, %v385
      %387 = vdwg.mxu0
      %v392 = vunpack.c.l.b16 %v336
      %v393 = vunpack.c.l.b16 %v337
      %v394 = vunpack.c.l.b16 %v338
      %v395 = vunpack.c.l.b16 %v339
      %v396 = vpack.c.b16 %v393, %v392
      %v397 = vpack.c.b16 %v395, %v394
      %v401 = vsel %vm301, %v334, 0
      %v404 = vsel %vm301, %v335, 0
      %406 = vmatpush.bf16.msra.mxu0 0
      %407 = vmatpush.bf16.msra.mxu0 0
      %408 = vmatpush.bf16.msra.mxu0 0
      %409 = vmatpush.bf16.msra.mxu0 0
      %410 = vmatpush.bf16.msra.mxu0 0
      %411 = vmatpush.bf16.msra.mxu0 0
      %412 = vmatpush.bf16.msra.mxu0 %v397
      %413 = vmatpush.bf16.msra.mxu0 %v396
      %414 = vmatmul.bf16.gmra.mxu0 %v401
      %v415 = vpop.f32.mrf.mxu0
      %v416 = vadd.f32 %v379, %v415
      %v417 = vpop.f32.mrf.mxu0
      %v418 = vadd.f32 %v381, %v417
      %419 = vmatmul.bf16.gmra.mxu0 %v404
      %v420 = vpop.f32.mrf.mxu0
      %v421 = vadd.f32 %v384, %v420
      %v422 = vpop.f32.mrf.mxu0
      %v423 = vadd.f32 %v386, %v422
      %424 = vdwg.mxu0
      %v425 = vld [vmem:[#allocation2 + $0x2] sm:$0xff]
      %v426 = vld [vmem:[#allocation2 + $0xa] sm:$0xff]
      %v427 = vld [vmem:[#allocation2 + $0x12] sm:$0xff]
      %v428 = vld [vmem:[#allocation2 + $0x1a] sm:$0xff]
      %v429 = vpack.c.bf16 %v426, %v425
      %v430 = vpack.c.bf16 %v428, %v427
      %s431 = scalar_lea.vmem %s2, 32
      %v432 = vld [vmem:[%s431] sm:$0xf]
      %v433 = vld [vmem:[%s431 + $0x4] sm:$0xf]
      %v434 = vld [vmem:[%s431 + $0x8] sm:$0xf]
      %v435 = vld [vmem:[%s431 + $0xc] sm:$0xf]
      %v440 = vunpack.c.l.b16 %v432
      %v441 = vunpack.c.l.b16 %v433
      %v442 = vunpack.c.l.b16 %v434
      %v443 = vunpack.c.l.b16 %v435
      %v444 = vpack.c.b16 %v441, %v440
      %v445 = vpack.c.b16 %v443, %v442
      %v449 = vsel %vm301, %v429, 0
      %v452 = vsel %vm301, %v430, 0
      %454 = vmatpush.bf16.msra.mxu0 0
      %455 = vmatpush.bf16.msra.mxu0 0
      %456 = vmatpush.bf16.msra.mxu0 0
      %457 = vmatpush.bf16.msra.mxu0 0
      %458 = vmatpush.bf16.msra.mxu0 0
      %459 = vmatpush.bf16.msra.mxu0 0
      %460 = vmatpush.bf16.msra.mxu0 %v445
      %461 = vmatpush.bf16.msra.mxu0 %v444
      %462 = vmatmul.bf16.gmra.mxu0 %v449
      %v463 = vpop.f32.mrf.mxu0
      %v464 = vadd.f32 0.0, %v463
      %v465 = vpop.f32.mrf.mxu0
      %v466 = vadd.f32 0.0, %v465
      %467 = vmatmul.bf16.gmra.mxu0 %v452
      %v468 = vpop.f32.mrf.mxu0
      %v469 = vadd.f32 0.0, %v468
      %v470 = vpop.f32.mrf.mxu0
      %v471 = vadd.f32 0.0, %v470
      %472 = vdwg.mxu0
      %v473 = vadd.f32 %v416, %v464
      %v474 = vadd.f32 %v418, %v466
      %v475 = vadd.f32 %v421, %v469
      %v476 = vadd.f32 %v423, %v471
      %v477 = vld [vmem:[%s3] sm:$0x1]
      %v479 = vperm.slane %v477, 0
      %v481 = vadd.f32 %v473, %v479
      %v482 = vadd.f32 %v474, %v479
      %v483 = vadd.f32 %v475, %v479
      %v484 = vadd.f32 %v476, %v479
      %vm485 = vcmp.ge.f32.partialorder %v481, 0.0
      %vm486 = vcmp.ge.f32.partialorder %v482, 0.0
      %vm487 = vcmp.ge.f32.partialorder %v483, 0.0
      %vm488 = vcmp.ge.f32.partialorder %v484, 0.0
      %v489 = vmul.f32 %v481, 0.1
      %v490 = vmul.f32 %v482, 0.1
      %v491 = vmul.f32 %v483, 0.1
      %v492 = vmul.f32 %v484, 0.1
      %v493 = vsel %vm485, %v481, %v489
      %v494 = vsel %vm486, %v482, %v490
      %v495 = vsel %vm487, %v483, %v491
      %v496 = vsel %vm488, %v484, %v492
      %v497 = vpack.c.bf16 %v493, %v493
      %v498 = vpack.c.bf16 %v494, %v494
      %v499 = vpack.c.bf16 %v495, %v495
      %v500 = vpack.c.bf16 %v496, %v496
      %vm501 = vcmask 257024
      %502 = vst.msk [vmem:[%s278] sm:$0xf] %vm501, %v497
      %503 = vst.msk [vmem:[%s278 + $0x4] sm:$0xf] %vm501, %v498
      %504 = vst.msk [vmem:[%s278 + $0x8] sm:$0xf] %vm501, %v499
      %505 = vst.msk [vmem:[%s278 + $0xc] sm:$0xf] %vm501, %v500
      %s506 = smul.u32 4, %s20
      %p507 = scmp.lt.s32.totalorder %s19, 1
      %s508 = scalar_select %p507, %s19, 1
      %p509 = scmp.lt.s32.totalorder %s506, 3
      %s510 = scalar_select %p509, %s506, 3
      %s511 = smul.addr %s508, 4
      %s512 = sadd.s32 %s510, %s511
      %s513 = smul.addr %s512, 4
      %s514 = scalar_lea.vmem %s4, %s513
      // Predicated region
      $region37: #{fwd.16} parent=35 // pred_check
        %p515 = pneg %p147
      $region38: #{fwd.16} parent=35 // pred_check_branch
        %517 = sbr.rel (%p515) target = $region40
      $region39: #{fwd.16} parent=35 // pred_region
        %s518 = smul.u32 4, %s20
      $region40: #{fwd.16} parent=35 // pred_fallthru
        _
    $region36: #{fwd.16} parent=5 // pred_fallthru
      _
    %p519 = scmp.le.s32.totalorder 2, %s10
    // Predicated region
    $region41: #{fwd.16} parent=5 // pred_check
      %p520 = pneg %p519
    $region42: #{fwd.16} parent=5 // pred_check_branch
      %522 = sbr.rel (%p520) target = $region44
    $region43: #{fwd.16} parent=5 // pred_region
      %s523 = ssub.s32 %s10, 2
      // Predicated region
      $region45: #{fwd.16} parent=43 // pred_check
        %p524 = pneg %p153
      $region46: #{fwd.16} parent=43 // pred_check_branch
        %526 = sbr.rel (%p524) target = $region48
      $region47: #{fwd.16} parent=43 // pred_region
        %s527 = smul.u32 4, %s22
        %p528 = scmp.lt.s32.totalorder %s21, 1
        %s529 = scalar_select %p528, %s21, 1
        %p530 = scmp.lt.s32.totalorder %s527, 3
        %s531 = scalar_select %p530, %s527, 3
        %s532 = smul.addr %s529, 4
        %s533 = sadd.s32 %s531, %s532
        %s534 = smul.addr %s533, 4
        %s535 = scalar_lea.vmem %s4, %s534
      $region48: #{fwd.16} parent=43 // pred_fallthru
        _
    $region44: #{fwd.16} parent=5 // pred_fallthru
      _
  $region6: #{fwd.16} parent=0 // loop_footer
    %s14 = sadd.s32 1, %s10
  $region7: #{fwd.16} parent=0 // loop_footer_branch
    %9 = sbr.rel target = $region3
  $region8: #{fwd.16} parent=0 // loop_exit
    _

// kernel: fwd.20
$region0: #{fwd.20}
  #allocation0 [shape = 'u32[]', space=smem, size = 0x4, offset = 0x4, fixed_abs, tag = 'smem constant byte address 0x4 - core index']
  #allocation1 [shape = 'u32[72,128]{1,0:T(1,128)}', space=vmem, size = 0x9000, scoped, tag = 'internal scratch']
  #allocation2 [shape = 'f32[160,32]{1,0:T(8,128)}', space=vmem, size = 0x14000, scoped, tag = 'scratch operand']
  %s0 = inlined_call_operand.vmem [shape: bf16[2,160,32], index: 0, kind: input, shape index: {}, may-alias: {0,1}]
  %s1 = inlined_call_operand.vmem [shape: bf16[2,160,32], index: 1, kind: input, shape index: {}, may-alias: {0,1}]
  %s2 = inlined_call_operand.vmem [shape: bf16[4,32,16], index: 2, kind: input, shape index: {}]
  %s3 = inlined_call_operand.vmem [shape: f32[1,16], index: 3, kind: input, shape index: {}]
  %s4 = inlined_call_operand.vmem [shape: bf16[2,80,16], index: 4, kind: output, shape index: {}]
  %s5 = sld [smem:[#allocation0]]
  $region49: #{fwd.20} parent=0
    _
  %s7 = ssub.s32 1, %s5
  %s8 = scalar_select 0, %s7, %s5
  loop: start=0, step=1, limit=4
  $region2: #{fwd.20} parent=0 // loop_pre_header
    _
  $region3: #{fwd.20} parent=0 // loop_header
    %s10 = sphi 0, %s14
    %p11 = scmp.ge.s32.totalorder %s10, 4
    %s17 = sphi 0, %s29
    %s18 = sphi 0, %s25
    %s19 = sphi 0, %s17
    %s20 = sphi 0, %s18
    %s21 = sphi 0, %s19
    %s22 = sphi 0, %s20
    %s34 = sphi 0, %s36
    %s37 = sphi 0, %s34
    %s38 = sphi 0, %s37
    %s54 = sphi 0, %s38
    %s64 = sphi 0, %s66
    %s67 = sphi 0, %s64
    %s68 = sphi 0, %s67
    %s84 = sphi 0, %s68
    %s88 = sphi 0, %s88
    %s90 = sphi 0, %s88
    %s91 = sphi 0, %s90
    %s105 = sphi 0, %s91
    %s109 = sphi 0, %s109
    %s111 = sphi 0, %s109
    %s112 = sphi 0, %s111
    %s126 = sphi 0, %s112
    %s134 = sphi 0, %s136
    %s137 = sphi 0, %s134
    %s138 = sphi 0, %s137
    %s154 = sphi 0, %s138
  $region4: #{fwd.20} parent=0 // loop_header_branch
    %13 = sbr.rel (%p11) target = $region8
  $region5: #{fwd.20} parent=0 // loop_body
    %s15 = ssub.s32 %s10, 1
    %s16 = ssub.s32 %s10, 2
    %s23 = sadd.s32 1, %s18
    %p24 = scmp.ge.s32.totalorder %s23, 1
    %s25 = scalar_select %p24, 0, %s23
    %s26 = sadd.s32 1, %s17
    %s27 = scalar_select %p24, %s26, %s17
    %p28 = scmp.ge.s32.totalorder %s27, 2
    %s29 = scalar_select %p28, 0, %s27
    %s30 = ssub.s32 %s17, %s29
    %s31 = ssub.s32 %s18, %s25
    %s32 = sor.u32 %s30, %s31
    %p33 = scmp.eq.s32.totalorder %s32, 0
    %s35 = sadd.s32 %s34, 1
    %s36 = scalar_select %p33, %s34, %s35
    %p39 = pneg %p33
    %p40 = scmp.eq.s32.totalorder %s10, 1
    %p41 = por %p39, %p40
    %p42 = scmp.ne.s32.totalorder %s34, %s37
    %p43 = scmp.eq.s32.totalorder %s10, 0
    %p44 = por %p42, %p43
    %p45 = scmp.ne.s32.totalorder %s34, %s37
    %p46 = scmp.eq.s32.totalorder %s15, 1
    %p47 = por %p45, %p46
    %p48 = scmp.ne.s32.totalorder %s37, %s38
    %p49 = scmp.eq.s32.totalorder %s15, 0
    %p50 = por %p48, %p49
    %p51 = scmp.ne.s32.totalorder %s37, %s38
    %p52 = scmp.eq.s32.totalorder %s16, 1
    %p53 = por %p51, %p52
    %p55 = scmp.ne.s32.totalorder %s38, %s54
    %p56 = scmp.eq.s32.totalorder %s16, 0
    %p57 = por %p55, %p56
    %s58 = sadd.s32 %s18, 1
    %s59 = sadd.s32 %s25, 1
    %s60 = ssub.s32 %s17, %s29
    %s61 = ssub.s32 %s58, %s59
    %s62 = sor.u32 %s60, %s61
    %p63 = scmp.eq.s32.totalorder %s62, 0
    %s65 = sadd.s32 %s64, 1
    %s66 = scalar_select %p63, %s64, %s65
    %p69 = pneg %p63
    %p70 = scmp.eq.s32.totalorder %s10, 1
    %p71 = por %p69, %p70
    %p72 = scmp.ne.s32.totalorder %s64, %s67
    %p73 = scmp.eq.s32.totalorder %s10, 0
    %p74 = por %p72, %p73
    %p75 = scmp.ne.s32.totalorder %s64, %s67
    %p76 = scmp.eq.s32.totalorder %s15, 1
    %p77 = por %p75, %p76
    %p78 = scmp.ne.s32.totalorder %s67, %s68
    %p79 = scmp.eq.s32.totalorder %s15, 0
    %p80 = por %p78, %p79
    %p81 = scmp.ne.s32.totalorder %s67, %s68
    %p82 = scmp.eq.s32.totalorder %s16, 1
    %p83 = por %p81, %p82
    %p85 = scmp.ne.s32.totalorder %s68, %s84
    %p86 = scmp.eq.s32.totalorder %s16, 0
    %p87 = por %p85, %p86
    %s89 = sadd.s32 %s88, 1
    %p92 = scmp.eq.s32.totalorder %s10, 1
    %p93 = scmp.ne.s32.totalorder %s88, %s90
    %p94 = scmp.eq.s32.totalorder %s10, 0
    %p95 = por %p93, %p94
    %p96 = scmp.ne.s32.totalorder %s88, %s90
    %p97 = scmp.eq.s32.totalorder %s15, 1
    %p98 = por %p96, %p97
    %p99 = scmp.ne.s32.totalorder %s90, %s91
    %p100 = scmp.eq.s32.totalorder %s15, 0
    %p101 = por %p99, %p100
    %p102 = scmp.ne.s32.totalorder %s90, %s91
    %p103 = scmp.eq.s32.totalorder %s16, 1
    %p104 = por %p102, %p103
    %p106 = scmp.ne.s32.totalorder %s91, %s105
    %p107 = scmp.eq.s32.totalorder %s16, 0
    %p108 = por %p106, %p107
    %s110 = sadd.s32 %s109, 1
    %p113 = scmp.eq.s32.totalorder %s10, 1
    %p114 = scmp.ne.s32.totalorder %s109, %s111
    %p115 = scmp.eq.s32.totalorder %s10, 0
    %p116 = por %p114, %p115
    %p117 = scmp.ne.s32.totalorder %s109, %s111
    %p118 = scmp.eq.s32.totalorder %s15, 1
    %p119 = por %p117, %p118
    %p120 = scmp.ne.s32.totalorder %s111, %s112
    %p121 = scmp.eq.s32.totalorder %s15, 0
    %p122 = por %p120, %p121
    %p123 = scmp.ne.s32.totalorder %s111, %s112
    %p124 = scmp.eq.s32.totalorder %s16, 1
    %p125 = por %p123, %p124
    %p127 = scmp.ne.s32.totalorder %s112, %s126
    %p128 = scmp.eq.s32.totalorder %s16, 0
    %p129 = por %p127, %p128
    %s130 = ssub.s32 %s17, %s29
    %s131 = ssub.s32 %s18, %s25
    %s132 = sor.u32 %s130, %s131
    %p133 = scmp.eq.s32.totalorder %s132, 0
    %s135 = sadd.s32 %s134, 1
    %s136 = scalar_select %p133, %s134, %s135
    %p139 = pneg %p133
    %p140 = scmp.eq.s32.totalorder %s10, 1
    %p141 = por %p139, %p140
    %p142 = scmp.ne.s32.totalorder %s134, %s137
    %p143 = scmp.eq.s32.totalorder %s10, 0
    %p144 = por %p142, %p143
    %p145 = scmp.ne.s32.totalorder %s134, %s137
    %p146 = scmp.eq.s32.totalorder %s15, 1
    %p147 = por %p145, %p146
    %p148 = scmp.ne.s32.totalorder %s137, %s138
    %p149 = scmp.eq.s32.totalorder %s15, 0
    %p150 = por %p148, %p149
    %p151 = scmp.ne.s32.totalorder %s137, %s138
    %p152 = scmp.eq.s32.totalorder %s16, 1
    %p153 = por %p151, %p152
    %p155 = scmp.ne.s32.totalorder %s138, %s154
    %p156 = scmp.eq.s32.totalorder %s16, 0
    %p157 = por %p155, %p156
    %p158 = scmp.le.s32.totalorder 1, %s10
    %p159 = scmp.lt.s32.totalorder %s10, 3
    %p160 = pnand %p158, %p159
    %p161 = pneg %p160
    // Predicated region
    $region9: #{fwd.20} parent=5 // pred_check
      _
    $region10: #{fwd.20} parent=5 // pred_check_branch
      %163 = sbr.rel (%p160) target = $region12
    $region11: #{fwd.20} parent=5 // pred_region
      %s164 = ssub.s32 %s10, 1
      // Predicated region
      $region13: #{fwd.20} parent=11 // pred_check
        %p165 = pneg %p101
      $region14: #{fwd.20} parent=11 // pred_check_branch
        %167 = sbr.rel (%p165) target = $region16
      $region15: #{fwd.20} parent=11 // pred_region
        _
      $region16: #{fwd.20} parent=11 // pred_fallthru
        _
      // Predicated region
      $region17: #{fwd.20} parent=11 // pred_check
        %p168 = pneg %p122
      $region18: #{fwd.20} parent=11 // pred_check_branch
        %170 = sbr.rel (%p168) target = $region20
      $region19: #{fwd.20} parent=11 // pred_region
        _
      $region20: #{fwd.20} parent=11 // pred_fallthru
        _
    $region12: #{fwd.20} parent=5 // pred_fallthru
      _
    %p171 = scmp.lt.s32.totalorder %s10, 2
    // Predicated region
    $region21: #{fwd.20} parent=5 // pred_check
      %p172 = pneg %p171
    $region22: #{fwd.20} parent=5 // pred_check_branch
      %174 = sbr.rel (%p172) target = $region24
    $region23: #{fwd.20} parent=5 // pred_region
      // Predicated region
      $region25: #{fwd.20} parent=23 // pred_check
        %p175 = pneg %p44
      $region26: #{fwd.20} parent=23 // pred_check_branch
        %177 = sbr.rel (%p175) target = $region28
      $region27: #{fwd.20} parent=23 // pred_region
        %s178 = smul.u32 10, %s18
        %p179 = scmp.lt.s32.totalorder %s17, 1
        %s180 = scalar_select %p179, %s17, 1
        %p181 = scmp.lt.s32.totalorder %s178, 19
        %s182 = scalar_select %p181, %s178, 19
        %s183 = smul.addr %s180, 20
        %s184 = sadd.s32 %s182, %s183
        %s185 = smul.addr %s184, 4
        %s186 = scalar_lea.vmem %s0, %s185
        %s187 = smul.u32 10, %s18
      $region28: #{fwd.20} parent=23 // pred_fallthru
        _
      // Predicated region
      $region29: #{fwd.20} parent=23 // pred_check
        %p188 = pneg %p74
      $region30: #{fwd.20} parent=23 // pred_check_branch
        %190 = sbr.rel (%p188) target = $region32
      $region31: #{fwd.20} parent=23 // pred_region
        %s191 = sadd.s32 %s18, 1
        %s192 = smul.u32 10, %s191
        %p193 = scmp.lt.s32.totalorder %s17, 1
        %s194 = scalar_select %p193, %s17, 1
        %p195 = scmp.lt.s32.totalorder %s192, 19
        %s196 = scalar_select %p195, %s192, 19
        %s197 = smul.addr %s194, 20
        %s198 = sadd.s32 %s196, %s197
        %s199 = smul.addr %s198, 4
        %s200 = scalar_lea.vmem %s1, %s199
        %s201 = sadd.s32 %s18, 1
        %s202 = smul.u32 10, %s201
      $region32: #{fwd.20} parent=23 // pred_fallthru
        _
    $region24: #{fwd.20} parent=5 // pred_fallthru
      _
    %p203 = scmp.le.s32.totalorder 1, %s10
    %p204 = scmp.lt.s32.totalorder %s10, 3
    %p205 = pnand %p203, %p204
    %p206 = pneg %p205
    // Predicated region
    $region33: #{fwd.20} parent=5 // pred_check
      _
    $region34: #{fwd.20} parent=5 // pred_check_branch
      %208 = sbr.rel (%p205) target = $region36
    $region35: #{fwd.20} parent=5 // pred_region
      %s209 = ssub.s32 %s10, 1
      %s210 = smul.u32 10, %s20
      %p211 = scmp.lt.s32.totalorder %s19, 1
      %s212 = scalar_select %p211, %s19, 1
      %p213 = scmp.lt.s32.totalorder %s210, 19
      %s214 = scalar_select %p213, %s210, 19
      %s215 = smul.addr %s212, 20
      %s216 = sadd.s32 %s214, %s215
      %s217 = smul.addr %s216, 4
      %s218 = scalar_lea.vmem %s0, %s217
      %p219 = pneg %p50
      %p220 = pneg %p47
      %s221 = sadd.s32 %s20, 1
      %s222 = smul.u32 10, %s221
      %p223 = scmp.lt.s32.totalorder %s19, 1
      %s224 = scalar_select %p223, %s19, 1
      %p225 = scmp.lt.s32.totalorder %s222, 19
      %s226 = scalar_select %p225, %s222, 19
      %s227 = smul.addr %s224, 20
      %s228 = sadd.s32 %s226, %s227
      %s229 = smul.addr %s228, 4
      %s230 = scalar_lea.vmem %s1, %s229
      %p231 = pneg %p80
      %p232 = pneg %p77
      %p233 = pneg %p101
      %p234 = pneg %p98
      %p235 = pneg %p122
      %p236 = pneg %p119
      %p237 = pneg %p150
      %p238 = pneg %p147
      %s239 = smul.u32 10, %s20
      %p240 = scmp.lt.s32.totalorder %s19, 1
      %s241 = scalar_select %p240, %s19, 1
      %p242 = scmp.lt.s32.totalorder %s239, 9
      %s243 = scalar_select %p242, %s239, 9
      %s244 = smul.addr %s241, 10
      %s245 = sadd.s32 %s243, %s244
      %s246 = smul.addr %s245, 4
      %s247 = scalar_lea.vmem %s4, %s246
      %s248 = smul.u32 10, %s20
      %p249 = scmp.lt.s32.totalorder %s19, 1
      %s250 = scalar_select %p249, %s19, 1
      %p251 = scmp.lt.s32.totalorder %s248, 19
      %s252 = scalar_select %p251, %s248, 19
      %s253 = smul.addr %s250, 20
      %s254 = sadd.s32 %s252, %s253
      %s255 = smul.addr %s254, 4
      %s256 = scalar_lea.vmem %s0, %s255
      %s257 = smul.u32 10, %s20
      %s258 = sadd.s32 %s20, 1
      %s259 = smul.u32 10, %s258
      %p260 = scmp.lt.s32.totalorder %s19, 1
      %s261 = scalar_select %p260, %s19, 1
      %p262 = scmp.lt.s32.totalorder %s259, 19
      %s263 = scalar_select %p262, %s259, 19
      %s264 = smul.addr %s261, 20
      %s265 = sadd.s32 %s263, %s264
      %s266 = smul.addr %s265, 4
      %s267 = scalar_lea.vmem %s1, %s266
      %s268 = sadd.s32 %s20, 1
      %s269 = smul.u32 10, %s268
      %s270 = smul.u32 10, %s20
      %p271 = scmp.lt.s32.totalorder %s19, 1
      %s272 = scalar_select %p271, %s19, 1
      %p273 = scmp.lt.s32.totalorder %s270, 9
      %s274 = scalar_select %p273, %s270, 9
      %s275 = smul.addr %s272, 10
      %s276 = sadd.s32 %s274, %s275
      %s277 = smul.addr %s276, 4
      %s278 = scalar_lea.vmem %s4, %s277
      %s279 = smul.u32 10, %s20
      %v281 = vld [vmem:[%s256] sm:$0xf]
      %v282 = vld [vmem:[%s256 + $0x4] sm:$0xf]
      %v283 = vld [vmem:[%s256 + $0x8] sm:$0xf]
      %v284 = vld [vmem:[%s256 + $0xc] sm:$0xf]
      %v285 = vld [vmem:[%s256 + $0x10] sm:$0xf]
      %v286 = vld [vmem:[%s256 + $0x14] sm:$0xf]
      %v287 = vld [vmem:[%s256 + $0x18] sm:$0xf]
      %v288 = vld [vmem:[%s256 + $0x1c] sm:$0xf]
      %v289 = vld [vmem:[%s256 + $0x20] sm:$0xf]
      %v290 = vld [vmem:[%s256 + $0x24] sm:$0xf]
      %v291 = vunpack.c.l.bf16 %v281
      %v292 = vunpack.c.l.bf16 %v282
      %v293 = vunpack.c.l.bf16 %v283
      %v294 = vunpack.c.l.bf16 %v284
      %v295 = vunpack.c.l.bf16 %v285
      %v296 = vunpack.c.l.bf16 %v286
      %v297 = vunpack.c.l.bf16 %v287
      %v298 = vunpack.c.l.bf16 %v288
      %v299 = vunpack.c.l.bf16 %v289
      %v300 = vunpack.c.l.bf16 %v290
      %vm301 = vcmask 261120
      %302 = vst.msk [vmem:[#allocation2] sm:$0xff] %vm301, %v291
      %303 = vst.msk [vmem:[#allocation2 + $0x8] sm:$0xff] %vm301, %v292
      %304 = vst.msk [vmem:[#allocation2 + $0x10] sm:$0xff] %vm301, %v293
      %305 = vst.msk [vmem:[#allocation2 + $0x18] sm:$0xff] %vm301, %v294
      %306 = vst.msk [vmem:[#allocation2 + $0x20] sm:$0xff] %vm301, %v295
      %307 = vst.msk [vmem:[#allocation2 + $0x28] sm:$0xff] %vm301, %v296
      %308 = vst.msk [vmem:[#allocation2 + $0x30] sm:$0xff] %vm301, %v297
      %309 = vst.msk [vmem:[#allocation2 + $0x38] sm:$0xff] %vm301, %v298
      %310 = vst.msk [vmem:[#allocation2 + $0x40] sm:$0xff] %vm301, %v299
      %311 = vst.msk [vmem:[#allocation2 + $0x48] sm:$0xff] %vm301, %v300
      %v312 = vld [vmem:[%s267] sm:$0xf]
      %v313 = vld [vmem:[%s267 + $0x4] sm:$0xf]
      %v314 = vld [vmem:[%s267 + $0x8] sm:$0xf]
      %v315 = vld [vmem:[%s267 + $0xc] sm:$0xf]
      %v316 = vld [vmem:[%s267 + $0x10] sm:$0xf]
      %v317 = vld [vmem:[%s267 + $0x14] sm:$0xf]
      %v318 = vld [vmem:[%s267 + $0x18] sm:$0xf]
      %v319 = vld [vmem:[%s267 + $0x1c] sm:$0xf]
      %v320 = vld [vmem:[%s267 + $0x20] sm:$0xf]
      %v321 = vld [vmem:[%s267 + $0x24] sm:$0xf]
      %v322 = vunpack.c.l.bf16 %v312
      %v323 = vunpack.c.l.bf16 %v313
      %v324 = vunpack.c.l.bf16 %v314
      %v325 = vunpack.c.l.bf16 %v315
      %v326 = vunpack.c.l.bf16 %v316
      %v327 = vunpack.c.l.bf16 %v317
      %v328 = vunpack.c.l.bf16 %v318
      %v329 = vunpack.c.l.bf16 %v319
      %v330 = vunpack.c.l.bf16 %v320
      %v331 = vunpack.c.l.bf16 %v321
      %332 = vst.msk [vmem:[#allocation2 + $0x50] sm:$0xff] %vm301, %v322
      %333 = vst.msk [vmem:[#allocation2 + $0x58] sm:$0xff] %vm301, %v323
      %334 = vst.msk [vmem:[#allocation2 + $0x60] sm:$0xff] %vm301, %v324
      %335 = vst.msk [vmem:[#allocation2 + $0x68] sm:$0xff] %vm301, %v325
      %336 = vst.msk [vmem:[#allocation2 + $0x70] sm:$0xff] %vm301, %v326
      %337 = vst.msk [vmem:[#allocation2 + $0x78] sm:$0xff] %vm301, %v327
      %338 = vst.msk [vmem:[#allocation2 + $0x80] sm:$0xff] %vm301, %v328
      %339 = vst.msk [vmem:[#allocation2 + $0x88] sm:$0xff] %vm301, %v329
      %340 = vst.msk [vmem:[#allocation2 + $0x90] sm:$0xff] %vm301, %v330
      %341 = vst.msk [vmem:[#allocation2 + $0x98] sm:$0xff] %vm301, %v331
      %v342 = vld [vmem:[#allocation2] sm:$0xff]
      %v343 = vld [vmem:[#allocation2 + $0x8] sm:$0xff]
      %v344 = vld [vmem:[#allocation2 + $0x10] sm:$0xff]
      %v345 = vld [vmem:[#allocation2 + $0x18] sm:$0xff]
      %v346 = vld [vmem:[#allocation2 + $0x20] sm:$0xff]
      %v347 = vld [vmem:[#allocation2 + $0x28] sm:$0xff]
      %v348 = vld [vmem:[#allocation2 + $0x30] sm:$0xff]
      %v349 = vld [vmem:[#allocation2 + $0x38] sm:$0xff]
      %v350 = vld [vmem:[#allocation2 + $0x40] sm:$0xff]
      %v351 = vld [vmem:[#allocation2 + $0x48] sm:$0xff]
      %v352 = vpack.c.bf16 %v343, %v342
      %v353 = vpack.c.bf16 %v345, %v344
      %v354 = vpack.c.bf16 %v347, %v346
      %v355 = vpack.c.bf16 %v349, %v348
      %v356 = vpack.c.bf16 %v351, %v350
      %v357 = vld [vmem:[%s2] sm:$0xf]
      %v358 = vld [vmem:[%s2 + $0x4] sm:$0xf]
      %v359 = vld [vmem:[%s2 + $0x8] sm:$0xf]
      %v360 = vld [vmem:[%s2 + $0xc] sm:$0xf]
      %v361 = vld [vmem:[#allocation2 + $0x1] sm:$0xff]
      %v362 = vld [vmem:[#allocation2 + $0x9] sm:$0xff]
      %v363 = vld [vmem:[#allocation2 + $0x11] sm:$0xff]
      %v364 = vld [vmem:[#allocation2 + $0x19] sm:$0xff]
      %v365 = vld [vmem:[#allocation2 + $0x21] sm:$0xff]
      %v366 = vld [vmem:[#allocation2 + $0x29] sm:$0xff]
      %v367 = vld [vmem:[#allocation2 + $0x31] sm:$0xff]
      %v368 = vld [vmem:[#allocation2 + $0x39] sm:$0xff]
      %v369 = vld [vmem:[#allocation2 + $0x41] sm:$0xff]
      %v370 = vld [vmem:[#allocation2 + $0x49] sm:$0xff]
      %v371 = vpack.c.bf16 %v362, %v361
      %v372 = vpack.c.bf16 %v364, %v363
      %v373 = vpack.c.bf16 %v366, %v365
      %v374 = vpack.c.bf16 %v368, %v367
      %v375 = vpack.c.bf16 %v370, %v369
      %s376 = scalar_lea.vmem %s2, 16
      %v377 = vld [vmem:[%s376] sm:$0xf]
      %v378 = vld [vmem:[%s376 + $0x4] sm:$0xf]
      %v379 = vld [vmem:[%s376 + $0x8] sm:$0xf]
      %v380 = vld [vmem:[%s376 + $0xc] sm:$0xf]
      %v385 = vunpack.c.l.b16 %v377
      %v386 = vunpack.c.l.b16 %v378
      %v387 = vunpack.c.l.b16 %v379
      %v388 = vunpack.c.l.b16 %v380
      %v389 = vpack.c.b16 %v386, %v385
      %v390 = vpack.c.b16 %v388, %v387
      %v394 = vsel %vm301, %v371, 0
      %v397 = vsel %vm301, %v372, 0
      %v400 = vsel %vm301, %v373, 0
      %v403 = vsel %vm301, %v374, 0
      %v406 = vsel %vm301, %v375, 0
      %408 = vmatpush.bf16.msra.mxu0 0
      %409 = vmatpush.bf16.msra.mxu0 0
      %410 = vmatpush.bf16.msra.mxu0 0
      %411 = vmatpush.bf16.msra.mxu0 0
      %412 = vmatpush.bf16.msra.mxu0 0
      %413 = vmatpush.bf16.msra.mxu0 0
      %414 = vmatpush.bf16.msra.mxu0 %v390
      %415 = vmatpush.bf16.msra.mxu0 %v389
      %416 = vmatmul.bf16.gmra.mxu0 %v394
      %v417 = vpop.f32.mrf.mxu0
      %v418 = vadd.f32 0.0, %v417
      %v419 = vpop.f32.mrf.mxu0
      %v420 = vadd.f32 0.0, %v419
      %421 = vmatmul.bf16.gmra.mxu0 %v397
      %v422 = vpop.f32.mrf.mxu0
      %v423 = vadd.f32 0.0, %v422
      %v424 = vpop.f32.mrf.mxu0
      %v425 = vadd.f32 0.0, %v424
      %426 = vmatmul.bf16.gmra.mxu0 %v400
      %v427 = vpop.f32.mrf.mxu0
      %v428 = vadd.f32 0.0, %v427
      %v429 = vpop.f32.mrf.mxu0
      %v430 = vadd.f32 0.0, %v429
      %431 = vmatmul.bf16.gmra.mxu0 %v403
      %v432 = vpop.f32.mrf.mxu0
      %v433 = vadd.f32 0.0, %v432
      %v434 = vpop.f32.mrf.mxu0
      %v435 = vadd.f32 0.0, %v434
      %436 = vmatmul.bf16.gmra.mxu0 %v406
      %v437 = vpop.f32.mrf.mxu0
      %v438 = vadd.f32 0.0, %v437
      %v439 = vpop.f32.mrf.mxu0
      %v440 = vadd.f32 0.0, %v439
      %441 = vdwg.mxu0
      %v446 = vunpack.c.l.b16 %v357
      %v447 = vunpack.c.l.b16 %v358
      %v448 = vunpack.c.l.b16 %v359
      %v449 = vunpack.c.l.b16 %v360
      %v450 = vpack.c.b16 %v447, %v446
      %v451 = vpack.c.b16 %v449, %v448
      %v455 = vsel %vm301, %v352, 0
      %v458 = vsel %vm301, %v353, 0
      %v461 = vsel %vm301, %v354, 0
      %v464 = vsel %vm301, %v355, 0
      %v467 = vsel %vm301, %v356, 0
      %469 = vmatpush.bf16.msra.mxu0 0
      %470 = vmatpush.bf16.msra.mxu0 0
      %471 = vmatpush.bf16.msra.mxu0 0
      %472 = vmatpush.bf16.msra.mxu0 0
      %473 = vmatpush.bf16.msra.mxu0 0
      %474 = vmatpush.bf16.msra.mxu0 0
      %475 = vmatpush.bf16.msra.mxu0 %v451
      %476 = vmatpush.bf16.msra.mxu0 %v450
      %477 = vmatmul.bf16.gmra.mxu0 %v455
      %v478 = vpop.f32.mrf.mxu0
      %v479 = vadd.f32 %v418, %v478
      %v480 = vpop.f32.mrf.mxu0
      %v481 = vadd.f32 %v420, %v480
      %482 = vmatmul.bf16.gmra.mxu0 %v458
      %v483 = vpop.f32.mrf.mxu0
      %v484 = vadd.f32 %v423, %v483
      %v485 = vpop.f32.mrf.mxu0
      %v486 = vadd.f32 %v425, %v485
      %487 = vmatmul.bf16.gmra.mxu0 %v461
      %v488 = vpop.f32.mrf.mxu0
      %v489 = vadd.f32 %v428, %v488
      %v490 = vpop.f32.mrf.mxu0
      %v491 = vadd.f32 %v430, %v490
      %492 = vmatmul.bf16.gmra.mxu0 %v464
      %v493 = vpop.f32.mrf.mxu0
      %v494 = vadd.f32 %v433, %v493
      %v495 = vpop.f32.mrf.mxu0
      %v496 = vadd.f32 %v435, %v495
      %497 = vmatmul.bf16.gmra.mxu0 %v467
      %v498 = vpop.f32.mrf.mxu0
      %v499 = vadd.f32 %v438, %v498
      %v500 = vpop.f32.mrf.mxu0
      %v501 = vadd.f32 %v440, %v500
      %502 = vdwg.mxu0
      %v503 = vld [vmem:[#allocation2 + $0x2] sm:$0xff]
      %v504 = vld [vmem:[#allocation2 + $0xa] sm:$0xff]
      %v505 = vld [vmem:[#allocation2 + $0x12] sm:$0xff]
      %v506 = vld [vmem:[#allocation2 + $0x1a] sm:$0xff]
      %v507 = vld [vmem:[#allocation2 + $0x22] sm:$0xff]
      %v508 = vld [vmem:[#allocation2 + $0x2a] sm:$0xff]
      %v509 = vld [vmem:[#allocation2 + $0x32] sm:$0xff]
      %v510 = vld [vmem:[#allocation2 + $0x3a] sm:$0xff]
      %v511 = vld [vmem:[#allocation2 + $0x42] sm:$0xff]
      %v512 = vld [vmem:[#allocation2 + $0x4a] sm:$0xff]
      %v513 = vpack.c.bf16 %v504, %v503
      %v514 = vpack.c.bf16 %v506, %v505
      %v515 = vpack.c.bf16 %v508, %v507
      %v516 = vpack.c.bf16 %v510, %v509
      %v517 = vpack.c.bf16 %v512, %v511
      %s518 = scalar_lea.vmem %s2, 32
      %v519 = vld [vmem:[%s518] sm:$0xf]
      %v520 = vld [vmem:[%s518 + $0x4] sm:$0xf]
      %v521 = vld [vmem:[%s518 + $0x8] sm:$0xf]
      %v522 = vld [vmem:[%s518 + $0xc] sm:$0xf]
      %v527 = vunpack.c.l.b16 %v519
      %v528 = vunpack.c.l.b16 %v520
      %v529 = vunpack.c.l.b16 %v521
      %v530 = vunpack.c.l.b16 %v522
      %v531 = vpack.c.b16 %v528, %v527
      %v532 = vpack.c.b16 %v530, %v529
      %v536 = vsel %vm301, %v513, 0
      %v539 = vsel %vm301, %v514, 0
      %v542 = vsel %vm301, %v515, 0
      %v545 = vsel %vm301, %v516, 0
      %v548 = vsel %vm301, %v517, 0
      %550 = vmatpush.bf16.msra.mxu0 0
      %551 = vmatpush.bf16.msra.mxu0 0
      %552 = vmatpush.bf16.msra.mxu0 0
      %553 = vmatpush.bf16.msra.mxu0 0
      %554 = vmatpush.bf16.msra.mxu0 0
      %555 = vmatpush.bf16.msra.mxu0 0
      %556 = vmatpush.bf16.msra.mxu0 %v532
      %557 = vmatpush.bf16.msra.mxu0 %v531
      %558 = vmatmul.bf16.gmra.mxu0 %v536
      %v559 = vpop.f32.mrf.mxu0
      %v560 = vadd.f32 0.0, %v559
      %v561 = vpop.f32.mrf.mxu0
      %v562 = vadd.f32 0.0, %v561
      %563 = vmatmul.bf16.gmra.mxu0 %v539
      %v564 = vpop.f32.mrf.mxu0
      %v565 = vadd.f32 0.0, %v564
      %v566 = vpop.f32.mrf.mxu0
      %v567 = vadd.f32 0.0, %v566
      %568 = vmatmul.bf16.gmra.mxu0 %v542
      %v569 = vpop.f32.mrf.mxu0
      %v570 = vadd.f32 0.0, %v569
      %v571 = vpop.f32.mrf.mxu0
      %v572 = vadd.f32 0.0, %v571
      %573 = vmatmul.bf16.gmra.mxu0 %v545
      %v574 = vpop.f32.mrf.mxu0
      %v575 = vadd.f32 0.0, %v574
      %v576 = vpop.f32.mrf.mxu0
      %v577 = vadd.f32 0.0, %v576
      %578 = vmatmul.bf16.gmra.mxu0 %v548
      %v579 = vpop.f32.mrf.mxu0
      %v580 = vadd.f32 0.0, %v579
      %v581 = vpop.f32.mrf.mxu0
      %v582 = vadd.f32 0.0, %v581
      %583 = vdwg.mxu0
      %v584 = vadd.f32 %v479, %v560
      %v585 = vadd.f32 %v481, %v562
      %v586 = vadd.f32 %v484, %v565
      %v587 = vadd.f32 %v486, %v567
      %v588 = vadd.f32 %v489, %v570
      %v589 = vadd.f32 %v491, %v572
      %v590 = vadd.f32 %v494, %v575
      %v591 = vadd.f32 %v496, %v577
      %v592 = vadd.f32 %v499, %v580
      %v593 = vadd.f32 %v501, %v582
      %v594 = vld [vmem:[#allocation2 + $0x3] sm:$0xff]
      %v595 = vld [vmem:[#allocation2 + $0xb] sm:$0xff]
      %v596 = vld [vmem:[#allocation2 + $0x13] sm:$0xff]
      %v597 = vld [vmem:[#allocation2 + $0x1b] sm:$0xff]
      %v598 = vld [vmem:[#allocation2 + $0x23] sm:$0xff]
      %v599 = vld [vmem:[#allocation2 + $0x2b] sm:$0xff]
      %v600 = vld [vmem:[#allocation2 + $0x33] sm:$0xff]
      %v601 = vld [vmem:[#allocation2 + $0x3b] sm:$0xff]
      %v602 = vld [vmem:[#allocation2 + $0x43] sm:$0xff]
      %v603 = vld [vmem:[#allocation2 + $0x4b] sm:$0xff]
      %v604 = vpack.c.bf16 %v595, %v594
      %v605 = vpack.c.bf16 %v597, %v596
      %v606 = vpack.c.bf16 %v599, %v598
      %v607 = vpack.c.bf16 %v601, %v600
      %v608 = vpack.c.bf16 %v603, %v602
      %s609 = scalar_lea.vmem %s2, 48
      %v610 = vld [vmem:[%s609] sm:$0xf]
      %v611 = vld [vmem:[%s609 + $0x4] sm:$0xf]
      %v612 = vld [vmem:[%s609 + $0x8] sm:$0xf]
      %v613 = vld [vmem:[%s609 + $0xc] sm:$0xf]
      %v618 = vunpack.c.l.b16 %v610
      %v619 = vunpack.c.l.b16 %v611
      %v620 = vunpack.c.l.b16 %v612
      %v621 = vunpack.c.l.b16 %v613
      %v622 = vpack.c.b16 %v619, %v618
      %v623 = vpack.c.b16 %v621, %v620
      %v627 = vsel %vm301, %v604, 0
      %v630 = vsel %vm301, %v605, 0
      %v633 = vsel %vm301, %v606, 0
      %v636 = vsel %vm301, %v607, 0
      %v639 = vsel %vm301, %v608, 0
      %641 = vmatpush.bf16.msra.mxu0 0
      %642 = vmatpush.bf16.msra.mxu0 0
      %643 = vmatpush.bf16.msra.mxu0 0
      %644 = vmatpush.bf16.msra.mxu0 0
      %645 = vmatpush.bf16.msra.mxu0 0
      %646 = vmatpush.bf16.msra.mxu0 0
      %647 = vmatpush.bf16.msra.mxu0 %v623
      %648 = vmatpush.bf16.msra.mxu0 %v622
      %649 = vmatmul.bf16.gmra.mxu0 %v627
      %v650 = vpop.f32.mrf.mxu0
      %v651 = vadd.f32 0.0, %v650
      %v652 = vpop.f32.mrf.mxu0
      %v653 = vadd.f32 0.0, %v652
      %654 = vmatmul.bf16.gmra.mxu0 %v630
      %v655 = vpop.f32.mrf.mxu0
      %v656 = vadd.f32 0.0, %v655
      %v657 = vpop.f32.mrf.mxu0
      %v658 = vadd.f32 0.0, %v657
      %659 = vmatmul.bf16.gmra.mxu0 %v633
      %v660 = vpop.f32.mrf.mxu0
      %v661 = vadd.f32 0.0, %v660
      %v662 = vpop.f32.mrf.mxu0
      %v663 = vadd.f32 0.0, %v662
      %664 = vmatmul.bf16.gmra.mxu0 %v636
      %v665 = vpop.f32.mrf.mxu0
      %v666 = vadd.f32 0.0, %v665
      %v667 = vpop.f32.mrf.mxu0
      %v668 = vadd.f32 0.0, %v667
      %669 = vmatmul.bf16.gmra.mxu0 %v639
      %v670 = vpop.f32.mrf.mxu0
      %v671 = vadd.f32 0.0, %v670
      %v672 = vpop.f32.mrf.mxu0
      %v673 = vadd.f32 0.0, %v672
      %674 = vdwg.mxu0
      %v675 = vadd.f32 %v584, %v651
      %v676 = vadd.f32 %v585, %v653
      %v677 = vadd.f32 %v586, %v656
      %v678 = vadd.f32 %v587, %v658
      %v679 = vadd.f32 %v588, %v661
      %v680 = vadd.f32 %v589, %v663
      %v681 = vadd.f32 %v590, %v666
      %v682 = vadd.f32 %v591, %v668
      %v683 = vadd.f32 %v592, %v671
      %v684 = vadd.f32 %v593, %v673
      %v685 = vld [vmem:[%s3] sm:$0x1]
      %v687 = vperm.slane %v685, 0
      %v689 = vadd.f32 %v675, %v687
      %v690 = vadd.f32 %v676, %v687
      %v691 = vadd.f32 %v677, %v687
      %v692 = vadd.f32 %v678, %v687
      %v693 = vadd.f32 %v679, %v687
      %v694 = vadd.f32 %v680, %v687
      %v695 = vadd.f32 %v681, %v687
      %v696 = vadd.f32 %v682, %v687
      %v697 = vadd.f32 %v683, %v687
      %v698 = vadd.f32 %v684, %v687
      %vm699 = vcmp.ge.f32.partialorder %v689, 0.0
      %vm700 = vcmp.ge.f32.partialorder %v690, 0.0
      %vm701 = vcmp.ge.f32.partialorder %v691, 0.0
      %vm702 = vcmp.ge.f32.partialorder %v692, 0.0
      %vm703 = vcmp.ge.f32.partialorder %v693, 0.0
      %vm704 = vcmp.ge.f32.partialorder %v694, 0.0
      %vm705 = vcmp.ge.f32.partialorder %v695, 0.0
      %vm706 = vcmp.ge.f32.partialorder %v696, 0.0
      %vm707 = vcmp.ge.f32.partialorder %v697, 0.0
      %vm708 = vcmp.ge.f32.partialorder %v698, 0.0
      %v709 = vmul.f32 %v689, 0.1
      %v710 = vmul.f32 %v690, 0.1
      %v711 = vmul.f32 %v691, 0.1
      %v712 = vmul.f32 %v692, 0.1
      %v713 = vmul.f32 %v693, 0.1
      %v714 = vmul.f32 %v694, 0.1
      %v715 = vmul.f32 %v695, 0.1
      %v716 = vmul.f32 %v696, 0.1
      %v717 = vmul.f32 %v697, 0.1
      %v718 = vmul.f32 %v698, 0.1
      %v719 = vsel %vm699, %v689, %v709
      %v720 = vsel %vm700, %v690, %v710
      %v721 = vsel %vm701, %v691, %v711
      %v722 = vsel %vm702, %v692, %v712
      %v723 = vsel %vm703, %v693, %v713
      %v724 = vsel %vm704, %v694, %v714
      %v725 = vsel %vm705, %v695, %v715
      %v726 = vsel %vm706, %v696, %v716
      %v727 = vsel %vm707, %v697, %v717
      %v728 = vsel %vm708, %v698, %v718
      %v729 = vpack.c.bf16 %v719, %v719
      %v730 = vpack.c.bf16 %v720, %v720
      %v731 = vpack.c.bf16 %v721, %v721
      %v732 = vpack.c.bf16 %v722, %v722
      %v733 = vpack.c.bf16 %v723, %v723
      %v734 = vpack.c.bf16 %v724, %v724
      %v735 = vpack.c.bf16 %v725, %v725
      %v736 = vpack.c.bf16 %v726, %v726
      %v737 = vpack.c.bf16 %v727, %v727
      %v738 = vpack.c.bf16 %v728, %v728
      %vm739 = vcmask 125952
      %740 = vst.msk [vmem:[%s278] sm:$0xf] %vm739, %v729
      %741 = vst.msk [vmem:[%s278 + $0x4] sm:$0xf] %vm739, %v730
      %742 = vst.msk [vmem:[%s278 + $0x8] sm:$0xf] %vm739, %v731
      %743 = vst.msk [vmem:[%s278 + $0xc] sm:$0xf] %vm739, %v732
      %744 = vst.msk [vmem:[%s278 + $0x10] sm:$0xf] %vm739, %v733
      %745 = vst.msk [vmem:[%s278 + $0x14] sm:$0xf] %vm739, %v734
      %746 = vst.msk [vmem:[%s278 + $0x18] sm:$0xf] %vm739, %v735
      %747 = vst.msk [vmem:[%s278 + $0x1c] sm:$0xf] %vm739, %v736
      %748 = vst.msk [vmem:[%s278 + $0x20] sm:$0xf] %vm739, %v737
      %749 = vst.msk [vmem:[%s278 + $0x24] sm:$0xf] %vm739, %v738
      %s750 = smul.u32 10, %s20
      %p751 = scmp.lt.s32.totalorder %s19, 1
      %s752 = scalar_select %p751, %s19, 1
      %p753 = scmp.lt.s32.totalorder %s750, 9
      %s754 = scalar_select %p753, %s750, 9
      %s755 = smul.addr %s752, 10
      %s756 = sadd.s32 %s754, %s755
      %s757 = smul.addr %s756, 4
      %s758 = scalar_lea.vmem %s4, %s757
      // Predicated region
      $region37: #{fwd.20} parent=35 // pred_check
        %p759 = pneg %p147
      $region38: #{fwd.20} parent=35 // pred_check_branch
        %761 = sbr.rel (%p759) target = $region40
      $region39: #{fwd.20} parent=35 // pred_region
        %s762 = smul.u32 10, %s20
      $region40: #{fwd.20} parent=35 // pred_fallthru
        _
    $region36: #{fwd.20} parent=5 // pred_fallthru
      _
    %p763 = scmp.le.s32.totalorder 2, %s10
    // Predicated region
    $region41: #{fwd.20} parent=5 // pred_check
      %p764 = pneg %p763
    $region42: #{fwd.20} parent=5 // pred_check_branch
      %766 = sbr.rel (%p764) target = $region44
    $region43: #{fwd.20} parent=5 // pred_region
      %s767 = ssub.s32 %s10, 2
      // Predicated region
      $region45: #{fwd.20} parent=43 // pred_check
        %p768 = pneg %p153
      $region46: #{fwd.20} parent=43 // pred_check_branch
        %770 = sbr.rel (%p768) target = $region48
      $region47: #{fwd.20} parent=43 // pred_region
        %s771 = smul.u32 10, %s22
        %p772 = scmp.lt.s32.totalorder %s21, 1
        %s773 = scalar_select %p772, %s21, 1
        %p774 = scmp.lt.s32.totalorder %s771, 9
        %s775 = scalar_select %p774, %s771, 9
        %s776 = smul.addr %s773, 10
        %s777 = sadd.s32 %s775, %s776
        %s778 = smul.addr %s777, 4
        %s779 = scalar_lea.vmem %s4, %s778
      $region48: #{fwd.20} parent=43 // pred_fallthru
        _
    $region44: #{fwd.20} parent=5 // pred_fallthru
      _
  $region6: #{fwd.20} parent=0 // loop_footer
    %s14 = sadd.s32 1, %s10
  $region7: #{fwd.20} parent=0 // loop_footer_branch
    %9 = sbr.rel target = $region3
  $region8: #{fwd.20} parent=0 // loop_exit
    _

// kernel: fwd.21
$region0: #{fwd.21}
  #allocation0 [shape = 'u32[]', space=smem, size = 0x4, offset = 0x4, fixed_abs, tag = 'smem constant byte address 0x4 - core index']
  #allocation1 [shape = 'u32[72,128]{1,0:T(1,128)}', space=vmem, size = 0x9000, scoped, tag = 'internal scratch']
  #allocation2 [shape = 'f32[128,16]{1,0:T(8,128)}', space=vmem, size = 0x10000, scoped, tag = 'scratch operand']
  %s0 = inlined_call_operand.vmem [shape: bf16[2,128,16], index: 0, kind: input, shape index: {}, may-alias: {0,1}]
  %s1 = inlined_call_operand.vmem [shape: bf16[2,128,16], index: 1, kind: input, shape index: {}, may-alias: {0,1}]
  %s2 = inlined_call_operand.vmem [shape: bf16[3,16,16], index: 2, kind: input, shape index: {}]
  %s3 = inlined_call_operand.vmem [shape: f32[1,16], index: 3, kind: input, shape index: {}]
  %s4 = inlined_call_operand.vmem [shape: bf16[2,64,16], index: 4, kind: output, shape index: {}]
  %s5 = sld [smem:[#allocation0]]
  $region49: #{fwd.21} parent=0
    _
  %s7 = ssub.s32 1, %s5
  %s8 = scalar_select 0, %s7, %s5
  loop: start=0, step=1, limit=4
  $region2: #{fwd.21} parent=0 // loop_pre_header
    _
  $region3: #{fwd.21} parent=0 // loop_header
    %s10 = sphi 0, %s14
    %p11 = scmp.ge.s32.totalorder %s10, 4
    %s17 = sphi 0, %s29
    %s18 = sphi 0, %s25
    %s19 = sphi 0, %s17
    %s20 = sphi 0, %s18
    %s21 = sphi 0, %s19
    %s22 = sphi 0, %s20
    %s34 = sphi 0, %s36
    %s37 = sphi 0, %s34
    %s38 = sphi 0, %s37
    %s54 = sphi 0, %s38
    %s64 = sphi 0, %s66
    %s67 = sphi 0, %s64
    %s68 = sphi 0, %s67
    %s84 = sphi 0, %s68
    %s88 = sphi 0, %s88
    %s90 = sphi 0, %s88
    %s91 = sphi 0, %s90
    %s105 = sphi 0, %s91
    %s109 = sphi 0, %s109
    %s111 = sphi 0, %s109
    %s112 = sphi 0, %s111
    %s126 = sphi 0, %s112
    %s134 = sphi 0, %s136
    %s137 = sphi 0, %s134
    %s138 = sphi 0, %s137
    %s154 = sphi 0, %s138
  $region4: #{fwd.21} parent=0 // loop_header_branch
    %13 = sbr.rel (%p11) target = $region8
  $region5: #{fwd.21} parent=0 // loop_body
    %s15 = ssub.s32 %s10, 1
    %s16 = ssub.s32 %s10, 2
    %s23 = sadd.s32 1, %s18
    %p24 = scmp.ge.s32.totalorder %s23, 1
    %s25 = scalar_select %p24, 0, %s23
    %s26 = sadd.s32 1, %s17
    %s27 = scalar_select %p24, %s26, %s17
    %p28 = scmp.ge.s32.totalorder %s27, 2
    %s29 = scalar_select %p28, 0, %s27
    %s30 = ssub.s32 %s17, %s29
    %s31 = ssub.s32 %s18, %s25
    %s32 = sor.u32 %s30, %s31
    %p33 = scmp.eq.s32.totalorder %s32, 0
    %s35 = sadd.s32 %s34, 1
    %s36 = scalar_select %p33, %s34, %s35
    %p39 = pneg %p33
    %p40 = scmp.eq.s32.totalorder %s10, 1
    %p41 = por %p39, %p40
    %p42 = scmp.ne.s32.totalorder %s34, %s37
    %p43 = scmp.eq.s32.totalorder %s10, 0
    %p44 = por %p42, %p43
    %p45 = scmp.ne.s32.totalorder %s34, %s37
    %p46 = scmp.eq.s32.totalorder %s15, 1
    %p47 = por %p45, %p46
    %p48 = scmp.ne.s32.totalorder %s37, %s38
    %p49 = scmp.eq.s32.totalorder %s15, 0
    %p50 = por %p48, %p49
    %p51 = scmp.ne.s32.totalorder %s37, %s38
    %p52 = scmp.eq.s32.totalorder %s16, 1
    %p53 = por %p51, %p52
    %p55 = scmp.ne.s32.totalorder %s38, %s54
    %p56 = scmp.eq.s32.totalorder %s16, 0
    %p57 = por %p55, %p56
    %s58 = sadd.s32 %s18, 1
    %s59 = sadd.s32 %s25, 1
    %s60 = ssub.s32 %s17, %s29
    %s61 = ssub.s32 %s58, %s59
    %s62 = sor.u32 %s60, %s61
    %p63 = scmp.eq.s32.totalorder %s62, 0
    %s65 = sadd.s32 %s64, 1
    %s66 = scalar_select %p63, %s64, %s65
    %p69 = pneg %p63
    %p70 = scmp.eq.s32.totalorder %s10, 1
    %p71 = por %p69, %p70
    %p72 = scmp.ne.s32.totalorder %s64, %s67
    %p73 = scmp.eq.s32.totalorder %s10, 0
    %p74 = por %p72, %p73
    %p75 = scmp.ne.s32.totalorder %s64, %s67
    %p76 = scmp.eq.s32.totalorder %s15, 1
    %p77 = por %p75, %p76
    %p78 = scmp.ne.s32.totalorder %s67, %s68
    %p79 = scmp.eq.s32.totalorder %s15, 0
    %p80 = por %p78, %p79
    %p81 = scmp.ne.s32.totalorder %s67, %s68
    %p82 = scmp.eq.s32.totalorder %s16, 1
    %p83 = por %p81, %p82
    %p85 = scmp.ne.s32.totalorder %s68, %s84
    %p86 = scmp.eq.s32.totalorder %s16, 0
    %p87 = por %p85, %p86
    %s89 = sadd.s32 %s88, 1
    %p92 = scmp.eq.s32.totalorder %s10, 1
    %p93 = scmp.ne.s32.totalorder %s88, %s90
    %p94 = scmp.eq.s32.totalorder %s10, 0
    %p95 = por %p93, %p94
    %p96 = scmp.ne.s32.totalorder %s88, %s90
    %p97 = scmp.eq.s32.totalorder %s15, 1
    %p98 = por %p96, %p97
    %p99 = scmp.ne.s32.totalorder %s90, %s91
    %p100 = scmp.eq.s32.totalorder %s15, 0
    %p101 = por %p99, %p100
    %p102 = scmp.ne.s32.totalorder %s90, %s91
    %p103 = scmp.eq.s32.totalorder %s16, 1
    %p104 = por %p102, %p103
    %p106 = scmp.ne.s32.totalorder %s91, %s105
    %p107 = scmp.eq.s32.totalorder %s16, 0
    %p108 = por %p106, %p107
    %s110 = sadd.s32 %s109, 1
    %p113 = scmp.eq.s32.totalorder %s10, 1
    %p114 = scmp.ne.s32.totalorder %s109, %s111
    %p115 = scmp.eq.s32.totalorder %s10, 0
    %p116 = por %p114, %p115
    %p117 = scmp.ne.s32.totalorder %s109, %s111
    %p118 = scmp.eq.s32.totalorder %s15, 1
    %p119 = por %p117, %p118
    %p120 = scmp.ne.s32.totalorder %s111, %s112
    %p121 = scmp.eq.s32.totalorder %s15, 0
    %p122 = por %p120, %p121
    %p123 = scmp.ne.s32.totalorder %s111, %s112
    %p124 = scmp.eq.s32.totalorder %s16, 1
    %p125 = por %p123, %p124
    %p127 = scmp.ne.s32.totalorder %s112, %s126
    %p128 = scmp.eq.s32.totalorder %s16, 0
    %p129 = por %p127, %p128
    %s130 = ssub.s32 %s17, %s29
    %s131 = ssub.s32 %s18, %s25
    %s132 = sor.u32 %s130, %s131
    %p133 = scmp.eq.s32.totalorder %s132, 0
    %s135 = sadd.s32 %s134, 1
    %s136 = scalar_select %p133, %s134, %s135
    %p139 = pneg %p133
    %p140 = scmp.eq.s32.totalorder %s10, 1
    %p141 = por %p139, %p140
    %p142 = scmp.ne.s32.totalorder %s134, %s137
    %p143 = scmp.eq.s32.totalorder %s10, 0
    %p144 = por %p142, %p143
    %p145 = scmp.ne.s32.totalorder %s134, %s137
    %p146 = scmp.eq.s32.totalorder %s15, 1
    %p147 = por %p145, %p146
    %p148 = scmp.ne.s32.totalorder %s137, %s138
    %p149 = scmp.eq.s32.totalorder %s15, 0
    %p150 = por %p148, %p149
    %p151 = scmp.ne.s32.totalorder %s137, %s138
    %p152 = scmp.eq.s32.totalorder %s16, 1
    %p153 = por %p151, %p152
    %p155 = scmp.ne.s32.totalorder %s138, %s154
    %p156 = scmp.eq.s32.totalorder %s16, 0
    %p157 = por %p155, %p156
    %p158 = scmp.le.s32.totalorder 1, %s10
    %p159 = scmp.lt.s32.totalorder %s10, 3
    %p160 = pnand %p158, %p159
    %p161 = pneg %p160
    // Predicated region
    $region9: #{fwd.21} parent=5 // pred_check
      _
    $region10: #{fwd.21} parent=5 // pred_check_branch
      %163 = sbr.rel (%p160) target = $region12
    $region11: #{fwd.21} parent=5 // pred_region
      %s164 = ssub.s32 %s10, 1
      // Predicated region
      $region13: #{fwd.21} parent=11 // pred_check
        %p165 = pneg %p101
      $region14: #{fwd.21} parent=11 // pred_check_branch
        %167 = sbr.rel (%p165) target = $region16
      $region15: #{fwd.21} parent=11 // pred_region
        _
      $region16: #{fwd.21} parent=11 // pred_fallthru
        _
      // Predicated region
      $region17: #{fwd.21} parent=11 // pred_check
        %p168 = pneg %p122
      $region18: #{fwd.21} parent=11 // pred_check_branch
        %170 = sbr.rel (%p168) target = $region20
      $region19: #{fwd.21} parent=11 // pred_region
        _
      $region20: #{fwd.21} parent=11 // pred_fallthru
        _
    $region12: #{fwd.21} parent=5 // pred_fallthru
      _
    %p171 = scmp.lt.s32.totalorder %s10, 2
    // Predicated region
    $region21: #{fwd.21} parent=5 // pred_check
      %p172 = pneg %p171
    $region22: #{fwd.21} parent=5 // pred_check_branch
      %174 = sbr.rel (%p172) target = $region24
    $region23: #{fwd.21} parent=5 // pred_region
      // Predicated region
      $region25: #{fwd.21} parent=23 // pred_check
        %p175 = pneg %p44
      $region26: #{fwd.21} parent=23 // pred_check_branch
        %177 = sbr.rel (%p175) target = $region28
      $region27: #{fwd.21} parent=23 // pred_region
        %s178 = smul.u32 8, %s18
        %p179 = scmp.lt.s32.totalorder %s17, 1
        %s180 = scalar_select %p179, %s17, 1
        %p181 = scmp.lt.s32.totalorder %s178, 15
        %s182 = scalar_select %p181, %s178, 15
        %s183 = smul.addr %s180, 16
        %s184 = sadd.s32 %s182, %s183
        %s185 = smul.addr %s184, 4
        %s186 = scalar_lea.vmem %s0, %s185
        %s187 = smul.u32 8, %s18
      $region28: #{fwd.21} parent=23 // pred_fallthru
        _
      // Predicated region
      $region29: #{fwd.21} parent=23 // pred_check
        %p188 = pneg %p74
      $region30: #{fwd.21} parent=23 // pred_check_branch
        %190 = sbr.rel (%p188) target = $region32
      $region31: #{fwd.21} parent=23 // pred_region
        %s191 = sadd.s32 %s18, 1
        %s192 = smul.u32 8, %s191
        %p193 = scmp.lt.s32.totalorder %s17, 1
        %s194 = scalar_select %p193, %s17, 1
        %p195 = scmp.lt.s32.totalorder %s192, 15
        %s196 = scalar_select %p195, %s192, 15
        %s197 = smul.addr %s194, 16
        %s198 = sadd.s32 %s196, %s197
        %s199 = smul.addr %s198, 4
        %s200 = scalar_lea.vmem %s1, %s199
        %s201 = sadd.s32 %s18, 1
        %s202 = smul.u32 8, %s201
      $region32: #{fwd.21} parent=23 // pred_fallthru
        _
    $region24: #{fwd.21} parent=5 // pred_fallthru
      _
    %p203 = scmp.le.s32.totalorder 1, %s10
    %p204 = scmp.lt.s32.totalorder %s10, 3
    %p205 = pnand %p203, %p204
    %p206 = pneg %p205
    // Predicated region
    $region33: #{fwd.21} parent=5 // pred_check
      _
    $region34: #{fwd.21} parent=5 // pred_check_branch
      %208 = sbr.rel (%p205) target = $region36
    $region35: #{fwd.21} parent=5 // pred_region
      %s209 = ssub.s32 %s10, 1
      %s210 = smul.u32 8, %s20
      %p211 = scmp.lt.s32.totalorder %s19, 1
      %s212 = scalar_select %p211, %s19, 1
      %p213 = scmp.lt.s32.totalorder %s210, 15
      %s214 = scalar_select %p213, %s210, 15
      %s215 = smul.addr %s212, 16
      %s216 = sadd.s32 %s214, %s215
      %s217 = smul.addr %s216, 4
      %s218 = scalar_lea.vmem %s0, %s217
      %p219 = pneg %p50
      %p220 = pneg %p47
      %s221 = sadd.s32 %s20, 1
      %s222 = smul.u32 8, %s221
      %p223 = scmp.lt.s32.totalorder %s19, 1
      %s224 = scalar_select %p223, %s19, 1
      %p225 = scmp.lt.s32.totalorder %s222, 15
      %s226 = scalar_select %p225, %s222, 15
      %s227 = smul.addr %s224, 16
      %s228 = sadd.s32 %s226, %s227
      %s229 = smul.addr %s228, 4
      %s230 = scalar_lea.vmem %s1, %s229
      %p231 = pneg %p80
      %p232 = pneg %p77
      %p233 = pneg %p101
      %p234 = pneg %p98
      %p235 = pneg %p122
      %p236 = pneg %p119
      %p237 = pneg %p150
      %p238 = pneg %p147
      %s239 = smul.u32 8, %s20
      %p240 = scmp.lt.s32.totalorder %s19, 1
      %s241 = scalar_select %p240, %s19, 1
      %p242 = scmp.lt.s32.totalorder %s239, 7
      %s243 = scalar_select %p242, %s239, 7
      %s244 = smul.addr %s241, 8
      %s245 = sadd.s32 %s243, %s244
      %s246 = smul.addr %s245, 4
      %s247 = scalar_lea.vmem %s4, %s246
      %s248 = smul.u32 8, %s20
      %p249 = scmp.lt.s32.totalorder %s19, 1
      %s250 = scalar_select %p249, %s19, 1
      %p251 = scmp.lt.s32.totalorder %s248, 15
      %s252 = scalar_select %p251, %s248, 15
      %s253 = smul.addr %s250, 16
      %s254 = sadd.s32 %s252, %s253
      %s255 = smul.addr %s254, 4
      %s256 = scalar_lea.vmem %s0, %s255
      %s257 = smul.u32 8, %s20
      %s258 = sadd.s32 %s20, 1
      %s259 = smul.u32 8, %s258
      %p260 = scmp.lt.s32.totalorder %s19, 1
      %s261 = scalar_select %p260, %s19, 1
      %p262 = scmp.lt.s32.totalorder %s259, 15
      %s263 = scalar_select %p262, %s259, 15
      %s264 = smul.addr %s261, 16
      %s265 = sadd.s32 %s263, %s264
      %s266 = smul.addr %s265, 4
      %s267 = scalar_lea.vmem %s1, %s266
      %s268 = sadd.s32 %s20, 1
      %s269 = smul.u32 8, %s268
      %s270 = smul.u32 8, %s20
      %p271 = scmp.lt.s32.totalorder %s19, 1
      %s272 = scalar_select %p271, %s19, 1
      %p273 = scmp.lt.s32.totalorder %s270, 7
      %s274 = scalar_select %p273, %s270, 7
      %s275 = smul.addr %s272, 8
      %s276 = sadd.s32 %s274, %s275
      %s277 = smul.addr %s276, 4
      %s278 = scalar_lea.vmem %s4, %s277
      %s279 = smul.u32 8, %s20
      %v281 = vld [vmem:[%s256] sm:$0xf]
      %v282 = vld [vmem:[%s256 + $0x4] sm:$0xf]
      %v283 = vld [vmem:[%s256 + $0x8] sm:$0xf]
      %v284 = vld [vmem:[%s256 + $0xc] sm:$0xf]
      %v285 = vld [vmem:[%s256 + $0x10] sm:$0xf]
      %v286 = vld [vmem:[%s256 + $0x14] sm:$0xf]
      %v287 = vld [vmem:[%s256 + $0x18] sm:$0xf]
      %v288 = vld [vmem:[%s256 + $0x1c] sm:$0xf]
      %v289 = vunpack.c.l.bf16 %v281
      %v290 = vunpack.c.l.bf16 %v282
      %v291 = vunpack.c.l.bf16 %v283
      %v292 = vunpack.c.l.bf16 %v284
      %v293 = vunpack.c.l.bf16 %v285
      %v294 = vunpack.c.l.bf16 %v286
      %v295 = vunpack.c.l.bf16 %v287
      %v296 = vunpack.c.l.bf16 %v288
      %vm297 = vcmp.ge.f32.partialorder %v289, 0.0
      %vm298 = vcmp.ge.f32.partialorder %v290, 0.0
      %vm299 = vcmp.ge.f32.partialorder %v291, 0.0
      %vm300 = vcmp.ge.f32.partialorder %v292, 0.0
      %vm301 = vcmp.ge.f32.partialorder %v293, 0.0
      %vm302 = vcmp.ge.f32.partialorder %v294, 0.0
      %vm303 = vcmp.ge.f32.partialorder %v295, 0.0
      %vm304 = vcmp.ge.f32.partialorder %v296, 0.0
      %v305 = vmul.f32 %v289, 0.1
      %v306 = vmul.f32 %v290, 0.1
      %v307 = vmul.f32 %v291, 0.1
      %v308 = vmul.f32 %v292, 0.1
      %v309 = vmul.f32 %v293, 0.1
      %v310 = vmul.f32 %v294, 0.1
      %v311 = vmul.f32 %v295, 0.1
      %v312 = vmul.f32 %v296, 0.1
      %v313 = vsel %vm297, %v289, %v305
      %v314 = vsel %vm298, %v290, %v306
      %v315 = vsel %vm299, %v291, %v307
      %v316 = vsel %vm300, %v292, %v308
      %v317 = vsel %vm301, %v293, %v309
      %v318 = vsel %vm302, %v294, %v310
      %v319 = vsel %vm303, %v295, %v311
      %v320 = vsel %vm304, %v296, %v312
      %vm321 = vcmask 130048
      %322 = vst.msk [vmem:[#allocation2] sm:$0xff] %vm321, %v313
      %323 = vst.msk [vmem:[#allocation2 + $0x8] sm:$0xff] %vm321, %v314
      %324 = vst.msk [vmem:[#allocation2 + $0x10] sm:$0xff] %vm321, %v315
      %325 = vst.msk [vmem:[#allocation2 + $0x18] sm:$0xff] %vm321, %v316
      %326 = vst.msk [vmem:[#allocation2 + $0x20] sm:$0xff] %vm321, %v317
      %327 = vst.msk [vmem:[#allocation2 + $0x28] sm:$0xff] %vm321, %v318
      %328 = vst.msk [vmem:[#allocation2 + $0x30] sm:$0xff] %vm321, %v319
      %329 = vst.msk [vmem:[#allocation2 + $0x38] sm:$0xff] %vm321, %v320
      %v330 = vld [vmem:[%s267] sm:$0xf]
      %v331 = vld [vmem:[%s267 + $0x4] sm:$0xf]
      %v332 = vld [vmem:[%s267 + $0x8] sm:$0xf]
      %v333 = vld [vmem:[%s267 + $0xc] sm:$0xf]
      %v334 = vld [vmem:[%s267 + $0x10] sm:$0xf]
      %v335 = vld [vmem:[%s267 + $0x14] sm:$0xf]
      %v336 = vld [vmem:[%s267 + $0x18] sm:$0xf]
      %v337 = vld [vmem:[%s267 + $0x1c] sm:$0xf]
      %v338 = vunpack.c.l.bf16 %v330
      %v339 = vunpack.c.l.bf16 %v331
      %v340 = vunpack.c.l.bf16 %v332
      %v341 = vunpack.c.l.bf16 %v333
      %v342 = vunpack.c.l.bf16 %v334
      %v343 = vunpack.c.l.bf16 %v335
      %v344 = vunpack.c.l.bf16 %v336
      %v345 = vunpack.c.l.bf16 %v337
      %vm346 = vcmp.ge.f32.partialorder %v338, 0.0
      %vm347 = vcmp.ge.f32.partialorder %v339, 0.0
      %vm348 = vcmp.ge.f32.partialorder %v340, 0.0
      %vm349 = vcmp.ge.f32.partialorder %v341, 0.0
      %vm350 = vcmp.ge.f32.partialorder %v342, 0.0
      %vm351 = vcmp.ge.f32.partialorder %v343, 0.0
      %vm352 = vcmp.ge.f32.partialorder %v344, 0.0
      %vm353 = vcmp.ge.f32.partialorder %v345, 0.0
      %v354 = vmul.f32 %v338, 0.1
      %v355 = vmul.f32 %v339, 0.1
      %v356 = vmul.f32 %v340, 0.1
      %v357 = vmul.f32 %v341, 0.1
      %v358 = vmul.f32 %v342, 0.1
      %v359 = vmul.f32 %v343, 0.1
      %v360 = vmul.f32 %v344, 0.1
      %v361 = vmul.f32 %v345, 0.1
      %v362 = vsel %vm346, %v338, %v354
      %v363 = vsel %vm347, %v339, %v355
      %v364 = vsel %vm348, %v340, %v356
      %v365 = vsel %vm349, %v341, %v357
      %v366 = vsel %vm350, %v342, %v358
      %v367 = vsel %vm351, %v343, %v359
      %v368 = vsel %vm352, %v344, %v360
      %v369 = vsel %vm353, %v345, %v361
      %370 = vst.msk [vmem:[#allocation2 + $0x40] sm:$0xff] %vm321, %v362
      %371 = vst.msk [vmem:[#allocation2 + $0x48] sm:$0xff] %vm321, %v363
      %372 = vst.msk [vmem:[#allocation2 + $0x50] sm:$0xff] %vm321, %v364
      %373 = vst.msk [vmem:[#allocation2 + $0x58] sm:$0xff] %vm321, %v365
      %374 = vst.msk [vmem:[#allocation2 + $0x60] sm:$0xff] %vm321, %v366
      %375 = vst.msk [vmem:[#allocation2 + $0x68] sm:$0xff] %vm321, %v367
      %376 = vst.msk [vmem:[#allocation2 + $0x70] sm:$0xff] %vm321, %v368
      %377 = vst.msk [vmem:[#allocation2 + $0x78] sm:$0xff] %vm321, %v369
      %v378 = vld [vmem:[#allocation2] sm:$0xff]
      %v379 = vld [vmem:[#allocation2 + $0x8] sm:$0xff]
      %v380 = vld [vmem:[#allocation2 + $0x10] sm:$0xff]
      %v381 = vld [vmem:[#allocation2 + $0x18] sm:$0xff]
      %v382 = vld [vmem:[#allocation2 + $0x20] sm:$0xff]
      %v383 = vld [vmem:[#allocation2 + $0x28] sm:$0xff]
      %v384 = vld [vmem:[#allocation2 + $0x30] sm:$0xff]
      %v385 = vld [vmem:[#allocation2 + $0x38] sm:$0xff]
      %v386 = vpack.c.bf16 %v379, %v378
      %v387 = vpack.c.bf16 %v381, %v380
      %v388 = vpack.c.bf16 %v383, %v382
      %v389 = vpack.c.bf16 %v385, %v384
      %v390 = vld [vmem:[%s2] sm:$0xf]
      %v391 = vld [vmem:[%s2 + $0x4] sm:$0xf]
      %v392 = vld [vmem:[#allocation2 + $0x1] sm:$0xff]
      %v393 = vld [vmem:[#allocation2 + $0x9] sm:$0xff]
      %v394 = vld [vmem:[#allocation2 + $0x11] sm:$0xff]
      %v395 = vld [vmem:[#allocation2 + $0x19] sm:$0xff]
      %v396 = vld [vmem:[#allocation2 + $0x21] sm:$0xff]
      %v397 = vld [vmem:[#allocation2 + $0x29] sm:$0xff]
      %v398 = vld [vmem:[#allocation2 + $0x31] sm:$0xff]
      %v399 = vld [vmem:[#allocation2 + $0x39] sm:$0xff]
      %v400 = vpack.c.bf16 %v393, %v392
      %v401 = vpack.c.bf16 %v395, %v394
      %v402 = vpack.c.bf16 %v397, %v396
      %v403 = vpack.c.bf16 %v399, %v398
      %s404 = scalar_lea.vmem %s2, 8
      %v405 = vld [vmem:[%s404] sm:$0xf]
      %v406 = vld [vmem:[%s404 + $0x4] sm:$0xf]
      %v409 = vunpack.c.l.b16 %v405
      %v410 = vunpack.c.l.b16 %v406
      %v411 = vpack.c.b16 %v410, %v409
      %v414 = vsel %vm321, %v400, 0
      %v417 = vsel %vm321, %v401, 0
      %v420 = vsel %vm321, %v402, 0
      %v423 = vsel %vm321, %v403, 0
      %425 = vmatpush.bf16.msra.mxu0 0
      %426 = vmatpush.bf16.msra.mxu0 0
      %427 = vmatpush.bf16.msra.mxu0 0
      %428 = vmatpush.bf16.msra.mxu0 0
      %429 = vmatpush.bf16.msra.mxu0 0
      %430 = vmatpush.bf16.msra.mxu0 0
      %431 = vmatpush.bf16.msra.mxu0 0
      %432 = vmatpush.bf16.msra.mxu0 %v411
      %433 = vmatmul.bf16.gmra.mxu0 %v414
      %v434 = vpop.f32.mrf.mxu0
      %v435 = vadd.f32 0.0, %v434
      %v436 = vpop.f32.mrf.mxu0
      %v437 = vadd.f32 0.0, %v436
      %438 = vmatmul.bf16.gmra.mxu0 %v417
      %v439 = vpop.f32.mrf.mxu0
      %v440 = vadd.f32 0.0, %v439
      %v441 = vpop.f32.mrf.mxu0
      %v442 = vadd.f32 0.0, %v441
      %443 = vmatmul.bf16.gmra.mxu0 %v420
      %v444 = vpop.f32.mrf.mxu0
      %v445 = vadd.f32 0.0, %v444
      %v446 = vpop.f32.mrf.mxu0
      %v447 = vadd.f32 0.0, %v446
      %448 = vmatmul.bf16.gmra.mxu0 %v423
      %v449 = vpop.f32.mrf.mxu0
      %v450 = vadd.f32 0.0, %v449
      %v451 = vpop.f32.mrf.mxu0
      %v452 = vadd.f32 0.0, %v451
      %453 = vdwg.mxu0
      %v456 = vunpack.c.l.b16 %v390
      %v457 = vunpack.c.l.b16 %v391
      %v458 = vpack.c.b16 %v457, %v456
      %v461 = vsel %vm321, %v386, 0
      %v464 = vsel %vm321, %v387, 0
      %v467 = vsel %vm321, %v388, 0
      %v470 = vsel %vm321, %v389, 0
      %472 = vmatpush.bf16.msra.mxu0 0
      %473 = vmatpush.bf16.msra.mxu0 0
      %474 = vmatpush.bf16.msra.mxu0 0
      %475 = vmatpush.bf16.msra.mxu0 0
      %476 = vmatpush.bf16.msra.mxu0 0
      %477 = vmatpush.bf16.msra.mxu0 0
      %478 = vmatpush.bf16.msra.mxu0 0
      %479 = vmatpush.bf16.msra.mxu0 %v458
      %480 = vmatmul.bf16.gmra.mxu0 %v461
      %v481 = vpop.f32.mrf.mxu0
      %v482 = vadd.f32 %v435, %v481
      %v483 = vpop.f32.mrf.mxu0
      %v484 = vadd.f32 %v437, %v483
      %485 = vmatmul.bf16.gmra.mxu0 %v464
      %v486 = vpop.f32.mrf.mxu0
      %v487 = vadd.f32 %v440, %v486
      %v488 = vpop.f32.mrf.mxu0
      %v489 = vadd.f32 %v442, %v488
      %490 = vmatmul.bf16.gmra.mxu0 %v467
      %v491 = vpop.f32.mrf.mxu0
      %v492 = vadd.f32 %v445, %v491
      %v493 = vpop.f32.mrf.mxu0
      %v494 = vadd.f32 %v447, %v493
      %495 = vmatmul.bf16.gmra.mxu0 %v470
      %v496 = vpop.f32.mrf.mxu0
      %v497 = vadd.f32 %v450, %v496
      %v498 = vpop.f32.mrf.mxu0
      %v499 = vadd.f32 %v452, %v498
      %500 = vdwg.mxu0
      %v501 = vld [vmem:[#allocation2 + $0x2] sm:$0xff]
      %v502 = vld [vmem:[#allocation2 + $0xa] sm:$0xff]
      %v503 = vld [vmem:[#allocation2 + $0x12] sm:$0xff]
      %v504 = vld [vmem:[#allocation2 + $0x1a] sm:$0xff]
      %v505 = vld [vmem:[#allocation2 + $0x22] sm:$0xff]
      %v506 = vld [vmem:[#allocation2 + $0x2a] sm:$0xff]
      %v507 = vld [vmem:[#allocation2 + $0x32] sm:$0xff]
      %v508 = vld [vmem:[#allocation2 + $0x3a] sm:$0xff]
      %v509 = vpack.c.bf16 %v502, %v501
      %v510 = vpack.c.bf16 %v504, %v503
      %v511 = vpack.c.bf16 %v506, %v505
      %v512 = vpack.c.bf16 %v508, %v507
      %s513 = scalar_lea.vmem %s2, 16
      %v514 = vld [vmem:[%s513] sm:$0xf]
      %v515 = vld [vmem:[%s513 + $0x4] sm:$0xf]
      %v518 = vunpack.c.l.b16 %v514
      %v519 = vunpack.c.l.b16 %v515
      %v520 = vpack.c.b16 %v519, %v518
      %v523 = vsel %vm321, %v509, 0
      %v526 = vsel %vm321, %v510, 0
      %v529 = vsel %vm321, %v511, 0
      %v532 = vsel %vm321, %v512, 0
      %534 = vmatpush.bf16.msra.mxu0 0
      %535 = vmatpush.bf16.msra.mxu0 0
      %536 = vmatpush.bf16.msra.mxu0 0
      %537 = vmatpush.bf16.msra.mxu0 0
      %538 = vmatpush.bf16.msra.mxu0 0
      %539 = vmatpush.bf16.msra.mxu0 0
      %540 = vmatpush.bf16.msra.mxu0 0
      %541 = vmatpush.bf16.msra.mxu0 %v520
      %542 = vmatmul.bf16.gmra.mxu0 %v523
      %v543 = vpop.f32.mrf.mxu0
      %v544 = vadd.f32 0.0, %v543
      %v545 = vpop.f32.mrf.mxu0
      %v546 = vadd.f32 0.0, %v545
      %547 = vmatmul.bf16.gmra.mxu0 %v526
      %v548 = vpop.f32.mrf.mxu0
      %v549 = vadd.f32 0.0, %v548
      %v550 = vpop.f32.mrf.mxu0
      %v551 = vadd.f32 0.0, %v550
      %552 = vmatmul.bf16.gmra.mxu0 %v529
      %v553 = vpop.f32.mrf.mxu0
      %v554 = vadd.f32 0.0, %v553
      %v555 = vpop.f32.mrf.mxu0
      %v556 = vadd.f32 0.0, %v555
      %557 = vmatmul.bf16.gmra.mxu0 %v532
      %v558 = vpop.f32.mrf.mxu0
      %v559 = vadd.f32 0.0, %v558
      %v560 = vpop.f32.mrf.mxu0
      %v561 = vadd.f32 0.0, %v560
      %562 = vdwg.mxu0
      %v563 = vadd.f32 %v482, %v544
      %v564 = vadd.f32 %v484, %v546
      %v565 = vadd.f32 %v487, %v549
      %v566 = vadd.f32 %v489, %v551
      %v567 = vadd.f32 %v492, %v554
      %v568 = vadd.f32 %v494, %v556
      %v569 = vadd.f32 %v497, %v559
      %v570 = vadd.f32 %v499, %v561
      %v571 = vld [vmem:[%s3] sm:$0x1]
      %v573 = vperm.slane %v571, 0
      %v575 = vadd.f32 %v563, %v573
      %v576 = vadd.f32 %v564, %v573
      %v577 = vadd.f32 %v565, %v573
      %v578 = vadd.f32 %v566, %v573
      %v579 = vadd.f32 %v567, %v573
      %v580 = vadd.f32 %v568, %v573
      %v581 = vadd.f32 %v569, %v573
      %v582 = vadd.f32 %v570, %v573
      %vm583 = vcmp.ge.f32.partialorder %v575, 0.0
      %vm584 = vcmp.ge.f32.partialorder %v576, 0.0
      %vm585 = vcmp.ge.f32.partialorder %v577, 0.0
      %vm586 = vcmp.ge.f32.partialorder %v578, 0.0
      %vm587 = vcmp.ge.f32.partialorder %v579, 0.0
      %vm588 = vcmp.ge.f32.partialorder %v580, 0.0
      %vm589 = vcmp.ge.f32.partialorder %v581, 0.0
      %vm590 = vcmp.ge.f32.partialorder %v582, 0.0
      %v591 = vmul.f32 %v575, 0.1
      %v592 = vmul.f32 %v576, 0.1
      %v593 = vmul.f32 %v577, 0.1
      %v594 = vmul.f32 %v578, 0.1
      %v595 = vmul.f32 %v579, 0.1
      %v596 = vmul.f32 %v580, 0.1
      %v597 = vmul.f32 %v581, 0.1
      %v598 = vmul.f32 %v582, 0.1
      %v599 = vsel %vm583, %v575, %v591
      %v600 = vsel %vm584, %v576, %v592
      %v601 = vsel %vm585, %v577, %v593
      %v602 = vsel %vm586, %v578, %v594
      %v603 = vsel %vm587, %v579, %v595
      %v604 = vsel %vm588, %v580, %v596
      %v605 = vsel %vm589, %v581, %v597
      %v606 = vsel %vm590, %v582, %v598
      %v607 = vpack.c.bf16 %v599, %v599
      %v608 = vpack.c.bf16 %v600, %v600
      %v609 = vpack.c.bf16 %v601, %v601
      %v610 = vpack.c.bf16 %v602, %v602
      %v611 = vpack.c.bf16 %v603, %v603
      %v612 = vpack.c.bf16 %v604, %v604
      %v613 = vpack.c.bf16 %v605, %v605
      %v614 = vpack.c.bf16 %v606, %v606
      %vm615 = vcmask 125952
      %616 = vst.msk [vmem:[%s278] sm:$0xf] %vm615, %v607
      %617 = vst.msk [vmem:[%s278 + $0x4] sm:$0xf] %vm615, %v608
      %618 = vst.msk [vmem:[%s278 + $0x8] sm:$0xf] %vm615, %v609
      %619 = vst.msk [vmem:[%s278 + $0xc] sm:$0xf] %vm615, %v610
      %620 = vst.msk [vmem:[%s278 + $0x10] sm:$0xf] %vm615, %v611
      %621 = vst.msk [vmem:[%s278 + $0x14] sm:$0xf] %vm615, %v612
      %622 = vst.msk [vmem:[%s278 + $0x18] sm:$0xf] %vm615, %v613
      %623 = vst.msk [vmem:[%s278 + $0x1c] sm:$0xf] %vm615, %v614
      %s624 = smul.u32 8, %s20
      %p625 = scmp.lt.s32.totalorder %s19, 1
      %s626 = scalar_select %p625, %s19, 1
      %p627 = scmp.lt.s32.totalorder %s624, 7
      %s628 = scalar_select %p627, %s624, 7
      %s629 = smul.addr %s626, 8
      %s630 = sadd.s32 %s628, %s629
      %s631 = smul.addr %s630, 4
      %s632 = scalar_lea.vmem %s4, %s631
      // Predicated region
      $region37: #{fwd.21} parent=35 // pred_check
        %p633 = pneg %p147
      $region38: #{fwd.21} parent=35 // pred_check_branch
        %635 = sbr.rel (%p633) target = $region40
      $region39: #{fwd.21} parent=35 // pred_region
        %s636 = smul.u32 8, %s20
      $region40: #{fwd.21} parent=35 // pred_fallthru
        _
    $region36: #{fwd.21} parent=5 // pred_fallthru
      _
    %p637 = scmp.le.s32.totalorder 2, %s10
    // Predicated region
    $region41: #{fwd.21} parent=5 // pred_check
      %p638 = pneg %p637
    $region42: #{fwd.21} parent=5 // pred_check_branch
      %640 = sbr.rel (%p638) target = $region44
    $region43: #{fwd.21} parent=5 // pred_region
      %s641 = ssub.s32 %s10, 2
      // Predicated region
      $region45: #{fwd.21} parent=43 // pred_check
        %p642 = pneg %p153
      $region46: #{fwd.21} parent=43 // pred_check_branch
        %644 = sbr.rel (%p642) target = $region48
      $region47: #{fwd.21} parent=43 // pred_region
        %s645 = smul.u32 8, %s22
        %p646 = scmp.lt.s32.totalorder %s21, 1
        %s647 = scalar_select %p646, %s21, 1
        %p648 = scmp.lt.s32.totalorder %s645, 7
        %s649 = scalar_select %p648, %s645, 7
        %s650 = smul.addr %s647, 8
        %s651 = sadd.s32 %s649, %s650
        %s652 = smul.addr %s651, 4
        %s653 = scalar_lea.vmem %s4, %s652
      $region48: #{fwd.21} parent=43 // pred_fallthru
        _
    $region44: #{fwd.21} parent=5 // pred_fallthru
      _
  $region6: #{fwd.21} parent=0 // loop_footer
    %s14 = sadd.s32 1, %s10
  $region7: #{fwd.21} parent=0 // loop_footer_branch
    %9 = sbr.rel target = $region3
  $region8: #{fwd.21} parent=0 // loop_exit
    _

// kernel: fwd.22
$region0: #{fwd.22}
  #allocation0 [shape = 'u32[]', space=smem, size = 0x4, offset = 0x4, fixed_abs, tag = 'smem constant byte address 0x4 - core index']
  #allocation1 [shape = 'u32[72,128]{1,0:T(1,128)}', space=vmem, size = 0x9000, scoped, tag = 'internal scratch']
  #allocation2 [shape = 'f32[128,16]{1,0:T(8,128)}', space=vmem, size = 0x10000, scoped, tag = 'scratch operand']
  %s0 = inlined_call_operand.vmem [shape: bf16[2,128,16], index: 0, kind: input, shape index: {}, may-alias: {0,1}]
  %s1 = inlined_call_operand.vmem [shape: bf16[2,128,16], index: 1, kind: input, shape index: {}, may-alias: {0,1}]
  %s2 = inlined_call_operand.vmem [shape: bf16[3,16,16], index: 2, kind: input, shape index: {}]
  %s3 = inlined_call_operand.vmem [shape: f32[1,16], index: 3, kind: input, shape index: {}]
  %s4 = inlined_call_operand.vmem [shape: bf16[2,64,16], index: 4, kind: input, shape index: {}]
  %s5 = inlined_call_operand.vmem [shape: bf16[2,64,16], index: 5, kind: output, shape index: {}]
  %s6 = sld [smem:[#allocation0]]
  $region53: #{fwd.22} parent=0
    _
  %s8 = ssub.s32 1, %s6
  %s9 = scalar_select 0, %s8, %s6
  loop: start=0, step=1, limit=4
  $region2: #{fwd.22} parent=0 // loop_pre_header
    _
  $region3: #{fwd.22} parent=0 // loop_header
    %s11 = sphi 0, %s15
    %p12 = scmp.ge.s32.totalorder %s11, 4
    %s18 = sphi 0, %s30
    %s19 = sphi 0, %s26
    %s20 = sphi 0, %s18
    %s21 = sphi 0, %s19
    %s22 = sphi 0, %s20
    %s23 = sphi 0, %s21
    %s35 = sphi 0, %s37
    %s38 = sphi 0, %s35
    %s39 = sphi 0, %s38
    %s55 = sphi 0, %s39
    %s65 = sphi 0, %s67
    %s68 = sphi 0, %s65
    %s69 = sphi 0, %s68
    %s85 = sphi 0, %s69
    %s89 = sphi 0, %s89
    %s91 = sphi 0, %s89
    %s92 = sphi 0, %s91
    %s106 = sphi 0, %s92
    %s110 = sphi 0, %s110
    %s112 = sphi 0, %s110
    %s113 = sphi 0, %s112
    %s127 = sphi 0, %s113
    %s135 = sphi 0, %s137
    %s138 = sphi 0, %s135
    %s139 = sphi 0, %s138
    %s155 = sphi 0, %s139
    %s163 = sphi 0, %s165
    %s166 = sphi 0, %s163
    %s167 = sphi 0, %s166
    %s183 = sphi 0, %s167
  $region4: #{fwd.22} parent=0 // loop_header_branch
    %14 = sbr.rel (%p12) target = $region8
  $region5: #{fwd.22} parent=0 // loop_body
    %s16 = ssub.s32 %s11, 1
    %s17 = ssub.s32 %s11, 2
    %s24 = sadd.s32 1, %s19
    %p25 = scmp.ge.s32.totalorder %s24, 1
    %s26 = scalar_select %p25, 0, %s24
    %s27 = sadd.s32 1, %s18
    %s28 = scalar_select %p25, %s27, %s18
    %p29 = scmp.ge.s32.totalorder %s28, 2
    %s30 = scalar_select %p29, 0, %s28
    %s31 = ssub.s32 %s18, %s30
    %s32 = ssub.s32 %s19, %s26
    %s33 = sor.u32 %s31, %s32
    %p34 = scmp.eq.s32.totalorder %s33, 0
    %s36 = sadd.s32 %s35, 1
    %s37 = scalar_select %p34, %s35, %s36
    %p40 = pneg %p34
    %p41 = scmp.eq.s32.totalorder %s11, 1
    %p42 = por %p40, %p41
    %p43 = scmp.ne.s32.totalorder %s35, %s38
    %p44 = scmp.eq.s32.totalorder %s11, 0
    %p45 = por %p43, %p44
    %p46 = scmp.ne.s32.totalorder %s35, %s38
    %p47 = scmp.eq.s32.totalorder %s16, 1
    %p48 = por %p46, %p47
    %p49 = scmp.ne.s32.totalorder %s38, %s39
    %p50 = scmp.eq.s32.totalorder %s16, 0
    %p51 = por %p49, %p50
    %p52 = scmp.ne.s32.totalorder %s38, %s39
    %p53 = scmp.eq.s32.totalorder %s17, 1
    %p54 = por %p52, %p53
    %p56 = scmp.ne.s32.totalorder %s39, %s55
    %p57 = scmp.eq.s32.totalorder %s17, 0
    %p58 = por %p56, %p57
    %s59 = sadd.s32 %s19, 1
    %s60 = sadd.s32 %s26, 1
    %s61 = ssub.s32 %s18, %s30
    %s62 = ssub.s32 %s59, %s60
    %s63 = sor.u32 %s61, %s62
    %p64 = scmp.eq.s32.totalorder %s63, 0
    %s66 = sadd.s32 %s65, 1
    %s67 = scalar_select %p64, %s65, %s66
    %p70 = pneg %p64
    %p71 = scmp.eq.s32.totalorder %s11, 1
    %p72 = por %p70, %p71
    %p73 = scmp.ne.s32.totalorder %s65, %s68
    %p74 = scmp.eq.s32.totalorder %s11, 0
    %p75 = por %p73, %p74
    %p76 = scmp.ne.s32.totalorder %s65, %s68
    %p77 = scmp.eq.s32.totalorder %s16, 1
    %p78 = por %p76, %p77
    %p79 = scmp.ne.s32.totalorder %s68, %s69
    %p80 = scmp.eq.s32.totalorder %s16, 0
    %p81 = por %p79, %p80
    %p82 = scmp.ne.s32.totalorder %s68, %s69
    %p83 = scmp.eq.s32.totalorder %s17, 1
    %p84 = por %p82, %p83
    %p86 = scmp.ne.s32.totalorder %s69, %s85
    %p87 = scmp.eq.s32.totalorder %s17, 0
    %p88 = por %p86, %p87
    %s90 = sadd.s32 %s89, 1
    %p93 = scmp.eq.s32.totalorder %s11, 1
    %p94 = scmp.ne.s32.totalorder %s89, %s91
    %p95 = scmp.eq.s32.totalorder %s11, 0
    %p96 = por %p94, %p95
    %p97 = scmp.ne.s32.totalorder %s89, %s91
    %p98 = scmp.eq.s32.totalorder %s16, 1
    %p99 = por %p97, %p98
    %p100 = scmp.ne.s32.totalorder %s91, %s92
    %p101 = scmp.eq.s32.totalorder %s16, 0
    %p102 = por %p100, %p101
    %p103 = scmp.ne.s32.totalorder %s91, %s92
    %p104 = scmp.eq.s32.totalorder %s17, 1
    %p105 = por %p103, %p104
    %p107 = scmp.ne.s32.totalorder %s92, %s106
    %p108 = scmp.eq.s32.totalorder %s17, 0
    %p109 = por %p107, %p108
    %s111 = sadd.s32 %s110, 1
    %p114 = scmp.eq.s32.totalorder %s11, 1
    %p115 = scmp.ne.s32.totalorder %s110, %s112
    %p116 = scmp.eq.s32.totalorder %s11, 0
    %p117 = por %p115, %p116
    %p118 = scmp.ne.s32.totalorder %s110, %s112
    %p119 = scmp.eq.s32.totalorder %s16, 1
    %p120 = por %p118, %p119
    %p121 = scmp.ne.s32.totalorder %s112, %s113
    %p122 = scmp.eq.s32.totalorder %s16, 0
    %p123 = por %p121, %p122
    %p124 = scmp.ne.s32.totalorder %s112, %s113
    %p125 = scmp.eq.s32.totalorder %s17, 1
    %p126 = por %p124, %p125
    %p128 = scmp.ne.s32.totalorder %s113, %s127
    %p129 = scmp.eq.s32.totalorder %s17, 0
    %p130 = por %p128, %p129
    %s131 = ssub.s32 %s18, %s30
    %s132 = ssub.s32 %s19, %s26
    %s133 = sor.u32 %s131, %s132
    %p134 = scmp.eq.s32.totalorder %s133, 0
    %s136 = sadd.s32 %s135, 1
    %s137 = scalar_select %p134, %s135, %s136
    %p140 = pneg %p134
    %p141 = scmp.eq.s32.totalorder %s11, 1
    %p142 = por %p140, %p141
    %p143 = scmp.ne.s32.totalorder %s135, %s138
    %p144 = scmp.eq.s32.totalorder %s11, 0
    %p145 = por %p143, %p144
    %p146 = scmp.ne.s32.totalorder %s135, %s138
    %p147 = scmp.eq.s32.totalorder %s16, 1
    %p148 = por %p146, %p147
    %p149 = scmp.ne.s32.totalorder %s138, %s139
    %p150 = scmp.eq.s32.totalorder %s16, 0
    %p151 = por %p149, %p150
    %p152 = scmp.ne.s32.totalorder %s138, %s139
    %p153 = scmp.eq.s32.totalorder %s17, 1
    %p154 = por %p152, %p153
    %p156 = scmp.ne.s32.totalorder %s139, %s155
    %p157 = scmp.eq.s32.totalorder %s17, 0
    %p158 = por %p156, %p157
    %s159 = ssub.s32 %s18, %s30
    %s160 = ssub.s32 %s19, %s26
    %s161 = sor.u32 %s159, %s160
    %p162 = scmp.eq.s32.totalorder %s161, 0
    %s164 = sadd.s32 %s163, 1
    %s165 = scalar_select %p162, %s163, %s164
    %p168 = pneg %p162
    %p169 = scmp.eq.s32.totalorder %s11, 1
    %p170 = por %p168, %p169
    %p171 = scmp.ne.s32.totalorder %s163, %s166
    %p172 = scmp.eq.s32.totalorder %s11, 0
    %p173 = por %p171, %p172
    %p174 = scmp.ne.s32.totalorder %s163, %s166
    %p175 = scmp.eq.s32.totalorder %s16, 1
    %p176 = por %p174, %p175
    %p177 = scmp.ne.s32.totalorder %s166, %s167
    %p178 = scmp.eq.s32.totalorder %s16, 0
    %p179 = por %p177, %p178
    %p180 = scmp.ne.s32.totalorder %s166, %s167
    %p181 = scmp.eq.s32.totalorder %s17, 1
    %p182 = por %p180, %p181
    %p184 = scmp.ne.s32.totalorder %s167, %s183
    %p185 = scmp.eq.s32.totalorder %s17, 0
    %p186 = por %p184, %p185
    %p187 = scmp.le.s32.totalorder 1, %s11
    %p188 = scmp.lt.s32.totalorder %s11, 3
    %p189 = pnand %p187, %p188
    %p190 = pneg %p189
    // Predicated region
    $region9: #{fwd.22} parent=5 // pred_check
      _
    $region10: #{fwd.22} parent=5 // pred_check_branch
      %192 = sbr.rel (%p189) target = $region12
    $region11: #{fwd.22} parent=5 // pred_region
      %s193 = ssub.s32 %s11, 1
      // Predicated region
      $region13: #{fwd.22} parent=11 // pred_check
        %p194 = pneg %p102
      $region14: #{fwd.22} parent=11 // pred_check_branch
        %196 = sbr.rel (%p194) target = $region16
      $region15: #{fwd.22} parent=11 // pred_region
        _
      $region16: #{fwd.22} parent=11 // pred_fallthru
        _
      // Predicated region
      $region17: #{fwd.22} parent=11 // pred_check
        %p197 = pneg %p123
      $region18: #{fwd.22} parent=11 // pred_check_branch
        %199 = sbr.rel (%p197) target = $region20
      $region19: #{fwd.22} parent=11 // pred_region
        _
      $region20: #{fwd.22} parent=11 // pred_fallthru
        _
    $region12: #{fwd.22} parent=5 // pred_fallthru
      _
    %p200 = scmp.lt.s32.totalorder %s11, 2
    // Predicated region
    $region21: #{fwd.22} parent=5 // pred_check
      %p201 = pneg %p200
    $region22: #{fwd.22} parent=5 // pred_check_branch
      %203 = sbr.rel (%p201) target = $region24
    $region23: #{fwd.22} parent=5 // pred_region
      // Predicated region
      $region25: #{fwd.22} parent=23 // pred_check
        %p204 = pneg %p45
      $region26: #{fwd.22} parent=23 // pred_check_branch
        %206 = sbr.rel (%p204) target = $region28
      $region27: #{fwd.22} parent=23 // pred_region
        %s207 = smul.u32 8, %s19
        %p208 = scmp.lt.s32.totalorder %s18, 1
        %s209 = scalar_select %p208, %s18, 1
        %p210 = scmp.lt.s32.totalorder %s207, 15
        %s211 = scalar_select %p210, %s207, 15
        %s212 = smul.addr %s209, 16
        %s213 = sadd.s32 %s211, %s212
        %s214 = smul.addr %s213, 4
        %s215 = scalar_lea.vmem %s0, %s214
        %s216 = smul.u32 8, %s19
      $region28: #{fwd.22} parent=23 // pred_fallthru
        _
      // Predicated region
      $region29: #{fwd.22} parent=23 // pred_check
        %p217 = pneg %p75
      $region30: #{fwd.22} parent=23 // pred_check_branch
        %219 = sbr.rel (%p217) target = $region32
      $region31: #{fwd.22} parent=23 // pred_region
        %s220 = sadd.s32 %s19, 1
        %s221 = smul.u32 8, %s220
        %p222 = scmp.lt.s32.totalorder %s18, 1
        %s223 = scalar_select %p222, %s18, 1
        %p224 = scmp.lt.s32.totalorder %s221, 15
        %s225 = scalar_select %p224, %s221, 15
        %s226 = smul.addr %s223, 16
        %s227 = sadd.s32 %s225, %s226
        %s228 = smul.addr %s227, 4
        %s229 = scalar_lea.vmem %s1, %s228
        %s230 = sadd.s32 %s19, 1
        %s231 = smul.u32 8, %s230
      $region32: #{fwd.22} parent=23 // pred_fallthru
        _
      // Predicated region
      $region33: #{fwd.22} parent=23 // pred_check
        %p232 = pneg %p145
      $region34: #{fwd.22} parent=23 // pred_check_branch
        %234 = sbr.rel (%p232) target = $region36
      $region35: #{fwd.22} parent=23 // pred_region
        %s235 = smul.u32 8, %s19
        %p236 = scmp.lt.s32.totalorder %s18, 1
        %s237 = scalar_select %p236, %s18, 1
        %p238 = scmp.lt.s32.totalorder %s235, 7
        %s239 = scalar_select %p238, %s235, 7
        %s240 = smul.addr %s237, 8
        %s241 = sadd.s32 %s239, %s240
        %s242 = smul.addr %s241, 4
        %s243 = scalar_lea.vmem %s4, %s242
        %s244 = smul.u32 8, %s19
      $region36: #{fwd.22} parent=23 // pred_fallthru
        _
    $region24: #{fwd.22} parent=5 // pred_fallthru
      _
    %p245 = scmp.le.s32.totalorder 1, %s11
    %p246 = scmp.lt.s32.totalorder %s11, 3
    %p247 = pnand %p245, %p246
    %p248 = pneg %p247
    // Predicated region
    $region37: #{fwd.22} parent=5 // pred_check
      _
    $region38: #{fwd.22} parent=5 // pred_check_branch
      %250 = sbr.rel (%p247) target = $region40
    $region39: #{fwd.22} parent=5 // pred_region
      %s251 = ssub.s32 %s11, 1
      %s252 = smul.u32 8, %s21
      %p253 = scmp.lt.s32.totalorder %s20, 1
      %s254 = scalar_select %p253, %s20, 1
      %p255 = scmp.lt.s32.totalorder %s252, 15
      %s256 = scalar_select %p255, %s252, 15
      %s257 = smul.addr %s254, 16
      %s258 = sadd.s32 %s256, %s257
      %s259 = smul.addr %s258, 4
      %s260 = scalar_lea.vmem %s0, %s259
      %p261 = pneg %p51
      %p262 = pneg %p48
      %s263 = sadd.s32 %s21, 1
      %s264 = smul.u32 8, %s263
      %p265 = scmp.lt.s32.totalorder %s20, 1
      %s266 = scalar_select %p265, %s20, 1
      %p267 = scmp.lt.s32.totalorder %s264, 15
      %s268 = scalar_select %p267, %s264, 15
      %s269 = smul.addr %s266, 16
      %s270 = sadd.s32 %s268, %s269
      %s271 = smul.addr %s270, 4
      %s272 = scalar_lea.vmem %s1, %s271
      %p273 = pneg %p81
      %p274 = pneg %p78
      %p275 = pneg %p102
      %p276 = pneg %p99
      %p277 = pneg %p123
      %p278 = pneg %p120
      %s279 = smul.u32 8, %s21
      %p280 = scmp.lt.s32.totalorder %s20, 1
      %s281 = scalar_select %p280, %s20, 1
      %p282 = scmp.lt.s32.totalorder %s279, 7
      %s283 = scalar_select %p282, %s279, 7
      %s284 = smul.addr %s281, 8
      %s285 = sadd.s32 %s283, %s284
      %s286 = smul.addr %s285, 4
      %s287 = scalar_lea.vmem %s4, %s286
      %p288 = pneg %p151
      %p289 = pneg %p148
      %p290 = pneg %p179
      %p291 = pneg %p176
      %s292 = smul.u32 8, %s21
      %p293 = scmp.lt.s32.totalorder %s20, 1
      %s294 = scalar_select %p293, %s20, 1
      %p295 = scmp.lt.s32.totalorder %s292, 7
      %s296 = scalar_select %p295, %s292, 7
      %s297 = smul.addr %s294, 8
      %s298 = sadd.s32 %s296, %s297
      %s299 = smul.addr %s298, 4
      %s300 = scalar_lea.vmem %s5, %s299
      %s301 = smul.u32 8, %s21
      %p302 = scmp.lt.s32.totalorder %s20, 1
      %s303 = scalar_select %p302, %s20, 1
      %p304 = scmp.lt.s32.totalorder %s301, 15
      %s305 = scalar_select %p304, %s301, 15
      %s306 = smul.addr %s303, 16
      %s307 = sadd.s32 %s305, %s306
      %s308 = smul.addr %s307, 4
      %s309 = scalar_lea.vmem %s0, %s308
      %s310 = smul.u32 8, %s21
      %s311 = sadd.s32 %s21, 1
      %s312 = smul.u32 8, %s311
      %p313 = scmp.lt.s32.totalorder %s20, 1
      %s314 = scalar_select %p313, %s20, 1
      %p315 = scmp.lt.s32.totalorder %s312, 15
      %s316 = scalar_select %p315, %s312, 15
      %s317 = smul.addr %s314, 16
      %s318 = sadd.s32 %s316, %s317
      %s319 = smul.addr %s318, 4
      %s320 = scalar_lea.vmem %s1, %s319
      %s321 = sadd.s32 %s21, 1
      %s322 = smul.u32 8, %s321
      %s323 = smul.u32 8, %s21
      %p324 = scmp.lt.s32.totalorder %s20, 1
      %s325 = scalar_select %p324, %s20, 1
      %p326 = scmp.lt.s32.totalorder %s323, 7
      %s327 = scalar_select %p326, %s323, 7
      %s328 = smul.addr %s325, 8
      %s329 = sadd.s32 %s327, %s328
      %s330 = smul.addr %s329, 4
      %s331 = scalar_lea.vmem %s4, %s330
      %s332 = smul.u32 8, %s21
      %s333 = smul.u32 8, %s21
      %p334 = scmp.lt.s32.totalorder %s20, 1
      %s335 = scalar_select %p334, %s20, 1
      %p336 = scmp.lt.s32.totalorder %s333, 7
      %s337 = scalar_select %p336, %s333, 7
      %s338 = smul.addr %s335, 8
      %s339 = sadd.s32 %s337, %s338
      %s340 = smul.addr %s339, 4
      %s341 = scalar_lea.vmem %s5, %s340
      %s342 = smul.u32 8, %s21
      %v344 = vld [vmem:[%s309] sm:$0xf]
      %v345 = vld [vmem:[%s309 + $0x4] sm:$0xf]
      %v346 = vld [vmem:[%s309 + $0x8] sm:$0xf]
      %v347 = vld [vmem:[%s309 + $0xc] sm:$0xf]
      %v348 = vld [vmem:[%s309 + $0x10] sm:$0xf]
      %v349 = vld [vmem:[%s309 + $0x14] sm:$0xf]
      %v350 = vld [vmem:[%s309 + $0x18] sm:$0xf]
      %v351 = vld [vmem:[%s309 + $0x1c] sm:$0xf]
      %v352 = vunpack.c.l.bf16 %v344
      %v353 = vunpack.c.l.bf16 %v345
      %v354 = vunpack.c.l.bf16 %v346
      %v355 = vunpack.c.l.bf16 %v347
      %v356 = vunpack.c.l.bf16 %v348
      %v357 = vunpack.c.l.bf16 %v349
      %v358 = vunpack.c.l.bf16 %v350
      %v359 = vunpack.c.l.bf16 %v351
      %vm360 = vcmask 130048
      %361 = vst.msk [vmem:[#allocation2] sm:$0xff] %vm360, %v352
      %362 = vst.msk [vmem:[#allocation2 + $0x8] sm:$0xff] %vm360, %v353
      %363 = vst.msk [vmem:[#allocation2 + $0x10] sm:$0xff] %vm360, %v354
      %364 = vst.msk [vmem:[#allocation2 + $0x18] sm:$0xff] %vm360, %v355
      %365 = vst.msk [vmem:[#allocation2 + $0x20] sm:$0xff] %vm360, %v356
      %366 = vst.msk [vmem:[#allocation2 + $0x28] sm:$0xff] %vm360, %v357
      %367 = vst.msk [vmem:[#allocation2 + $0x30] sm:$0xff] %vm360, %v358
      %368 = vst.msk [vmem:[#allocation2 + $0x38] sm:$0xff] %vm360, %v359
      %v369 = vld [vmem:[%s320] sm:$0xf]
      %v370 = vld [vmem:[%s320 + $0x4] sm:$0xf]
      %v371 = vld [vmem:[%s320 + $0x8] sm:$0xf]
      %v372 = vld [vmem:[%s320 + $0xc] sm:$0xf]
      %v373 = vld [vmem:[%s320 + $0x10] sm:$0xf]
      %v374 = vld [vmem:[%s320 + $0x14] sm:$0xf]
      %v375 = vld [vmem:[%s320 + $0x18] sm:$0xf]
      %v376 = vld [vmem:[%s320 + $0x1c] sm:$0xf]
      %v377 = vunpack.c.l.bf16 %v369
      %v378 = vunpack.c.l.bf16 %v370
      %v379 = vunpack.c.l.bf16 %v371
      %v380 = vunpack.c.l.bf16 %v372
      %v381 = vunpack.c.l.bf16 %v373
      %v382 = vunpack.c.l.bf16 %v374
      %v383 = vunpack.c.l.bf16 %v375
      %v384 = vunpack.c.l.bf16 %v376
      %385 = vst.msk [vmem:[#allocation2 + $0x40] sm:$0xff] %vm360, %v377
      %386 = vst.msk [vmem:[#allocation2 + $0x48] sm:$0xff] %vm360, %v378
      %387 = vst.msk [vmem:[#allocation2 + $0x50] sm:$0xff] %vm360, %v379
      %388 = vst.msk [vmem:[#allocation2 + $0x58] sm:$0xff] %vm360, %v380
      %389 = vst.msk [vmem:[#allocation2 + $0x60] sm:$0xff] %vm360, %v381
      %390 = vst.msk [vmem:[#allocation2 + $0x68] sm:$0xff] %vm360, %v382
      %391 = vst.msk [vmem:[#allocation2 + $0x70] sm:$0xff] %vm360, %v383
      %392 = vst.msk [vmem:[#allocation2 + $0x78] sm:$0xff] %vm360, %v384
      %v393 = vld [vmem:[#allocation2] sm:$0xff]
      %v394 = vld [vmem:[#allocation2 + $0x8] sm:$0xff]
      %v395 = vld [vmem:[#allocation2 + $0x10] sm:$0xff]
      %v396 = vld [vmem:[#allocation2 + $0x18] sm:$0xff]
      %v397 = vld [vmem:[#allocation2 + $0x20] sm:$0xff]
      %v398 = vld [vmem:[#allocation2 + $0x28] sm:$0xff]
      %v399 = vld [vmem:[#allocation2 + $0x30] sm:$0xff]
      %v400 = vld [vmem:[#allocation2 + $0x38] sm:$0xff]
      %v401 = vpack.c.bf16 %v394, %v393
      %v402 = vpack.c.bf16 %v396, %v395
      %v403 = vpack.c.bf16 %v398, %v397
      %v404 = vpack.c.bf16 %v400, %v399
      %v405 = vld [vmem:[%s2] sm:$0xf]
      %v406 = vld [vmem:[%s2 + $0x4] sm:$0xf]
      %v407 = vld [vmem:[#allocation2 + $0x1] sm:$0xff]
      %v408 = vld [vmem:[#allocation2 + $0x9] sm:$0xff]
      %v409 = vld [vmem:[#allocation2 + $0x11] sm:$0xff]
      %v410 = vld [vmem:[#allocation2 + $0x19] sm:$0xff]
      %v411 = vld [vmem:[#allocation2 + $0x21] sm:$0xff]
      %v412 = vld [vmem:[#allocation2 + $0x29] sm:$0xff]
      %v413 = vld [vmem:[#allocation2 + $0x31] sm:$0xff]
      %v414 = vld [vmem:[#allocation2 + $0x39] sm:$0xff]
      %v415 = vpack.c.bf16 %v408, %v407
      %v416 = vpack.c.bf16 %v410, %v409
      %v417 = vpack.c.bf16 %v412, %v411
      %v418 = vpack.c.bf16 %v414, %v413
      %s419 = scalar_lea.vmem %s2, 8
      %v420 = vld [vmem:[%s419] sm:$0xf]
      %v421 = vld [vmem:[%s419 + $0x4] sm:$0xf]
      %v424 = vunpack.c.l.b16 %v420
      %v425 = vunpack.c.l.b16 %v421
      %v426 = vpack.c.b16 %v425, %v424
      %v429 = vsel %vm360, %v415, 0
      %v432 = vsel %vm360, %v416, 0
      %v435 = vsel %vm360, %v417, 0
      %v438 = vsel %vm360, %v418, 0
      %440 = vmatpush.bf16.msra.mxu0 0
      %441 = vmatpush.bf16.msra.mxu0 0
      %442 = vmatpush.bf16.msra.mxu0 0
      %443 = vmatpush.bf16.msra.mxu0 0
      %444 = vmatpush.bf16.msra.mxu0 0
      %445 = vmatpush.bf16.msra.mxu0 0
      %446 = vmatpush.bf16.msra.mxu0 0
      %447 = vmatpush.bf16.msra.mxu0 %v426
      %448 = vmatmul.bf16.gmra.mxu0 %v429
      %v449 = vpop.f32.mrf.mxu0
      %v450 = vadd.f32 0.0, %v449
      %v451 = vpop.f32.mrf.mxu0
      %v452 = vadd.f32 0.0, %v451
      %453 = vmatmul.bf16.gmra.mxu0 %v432
      %v454 = vpop.f32.mrf.mxu0
      %v455 = vadd.f32 0.0, %v454
      %v456 = vpop.f32.mrf.mxu0
      %v457 = vadd.f32 0.0, %v456
      %458 = vmatmul.bf16.gmra.mxu0 %v435
      %v459 = vpop.f32.mrf.mxu0
      %v460 = vadd.f32 0.0, %v459
      %v461 = vpop.f32.mrf.mxu0
      %v462 = vadd.f32 0.0, %v461
      %463 = vmatmul.bf16.gmra.mxu0 %v438
      %v464 = vpop.f32.mrf.mxu0
      %v465 = vadd.f32 0.0, %v464
      %v466 = vpop.f32.mrf.mxu0
      %v467 = vadd.f32 0.0, %v466
      %468 = vdwg.mxu0
      %v471 = vunpack.c.l.b16 %v405
      %v472 = vunpack.c.l.b16 %v406
      %v473 = vpack.c.b16 %v472, %v471
      %v476 = vsel %vm360, %v401, 0
      %v479 = vsel %vm360, %v402, 0
      %v482 = vsel %vm360, %v403, 0
      %v485 = vsel %vm360, %v404, 0
      %487 = vmatpush.bf16.msra.mxu0 0
      %488 = vmatpush.bf16.msra.mxu0 0
      %489 = vmatpush.bf16.msra.mxu0 0
      %490 = vmatpush.bf16.msra.mxu0 0
      %491 = vmatpush.bf16.msra.mxu0 0
      %492 = vmatpush.bf16.msra.mxu0 0
      %493 = vmatpush.bf16.msra.mxu0 0
      %494 = vmatpush.bf16.msra.mxu0 %v473
      %495 = vmatmul.bf16.gmra.mxu0 %v476
      %v496 = vpop.f32.mrf.mxu0
      %v497 = vadd.f32 %v450, %v496
      %v498 = vpop.f32.mrf.mxu0
      %v499 = vadd.f32 %v452, %v498
      %500 = vmatmul.bf16.gmra.mxu0 %v479
      %v501 = vpop.f32.mrf.mxu0
      %v502 = vadd.f32 %v455, %v501
      %v503 = vpop.f32.mrf.mxu0
      %v504 = vadd.f32 %v457, %v503
      %505 = vmatmul.bf16.gmra.mxu0 %v482
      %v506 = vpop.f32.mrf.mxu0
      %v507 = vadd.f32 %v460, %v506
      %v508 = vpop.f32.mrf.mxu0
      %v509 = vadd.f32 %v462, %v508
      %510 = vmatmul.bf16.gmra.mxu0 %v485
      %v511 = vpop.f32.mrf.mxu0
      %v512 = vadd.f32 %v465, %v511
      %v513 = vpop.f32.mrf.mxu0
      %v514 = vadd.f32 %v467, %v513
      %515 = vdwg.mxu0
      %v516 = vld [vmem:[#allocation2 + $0x2] sm:$0xff]
      %v517 = vld [vmem:[#allocation2 + $0xa] sm:$0xff]
      %v518 = vld [vmem:[#allocation2 + $0x12] sm:$0xff]
      %v519 = vld [vmem:[#allocation2 + $0x1a] sm:$0xff]
      %v520 = vld [vmem:[#allocation2 + $0x22] sm:$0xff]
      %v521 = vld [vmem:[#allocation2 + $0x2a] sm:$0xff]
      %v522 = vld [vmem:[#allocation2 + $0x32] sm:$0xff]
      %v523 = vld [vmem:[#allocation2 + $0x3a] sm:$0xff]
      %v524 = vpack.c.bf16 %v517, %v516
      %v525 = vpack.c.bf16 %v519, %v518
      %v526 = vpack.c.bf16 %v521, %v520
      %v527 = vpack.c.bf16 %v523, %v522
      %s528 = scalar_lea.vmem %s2, 16
      %v529 = vld [vmem:[%s528] sm:$0xf]
      %v530 = vld [vmem:[%s528 + $0x4] sm:$0xf]
      %v533 = vunpack.c.l.b16 %v529
      %v534 = vunpack.c.l.b16 %v530
      %v535 = vpack.c.b16 %v534, %v533
      %v538 = vsel %vm360, %v524, 0
      %v541 = vsel %vm360, %v525, 0
      %v544 = vsel %vm360, %v526, 0
      %v547 = vsel %vm360, %v527, 0
      %549 = vmatpush.bf16.msra.mxu0 0
      %550 = vmatpush.bf16.msra.mxu0 0
      %551 = vmatpush.bf16.msra.mxu0 0
      %552 = vmatpush.bf16.msra.mxu0 0
      %553 = vmatpush.bf16.msra.mxu0 0
      %554 = vmatpush.bf16.msra.mxu0 0
      %555 = vmatpush.bf16.msra.mxu0 0
      %556 = vmatpush.bf16.msra.mxu0 %v535
      %557 = vmatmul.bf16.gmra.mxu0 %v538
      %v558 = vpop.f32.mrf.mxu0
      %v559 = vadd.f32 0.0, %v558
      %v560 = vpop.f32.mrf.mxu0
      %v561 = vadd.f32 0.0, %v560
      %562 = vmatmul.bf16.gmra.mxu0 %v541
      %v563 = vpop.f32.mrf.mxu0
      %v564 = vadd.f32 0.0, %v563
      %v565 = vpop.f32.mrf.mxu0
      %v566 = vadd.f32 0.0, %v565
      %567 = vmatmul.bf16.gmra.mxu0 %v544
      %v568 = vpop.f32.mrf.mxu0
      %v569 = vadd.f32 0.0, %v568
      %v570 = vpop.f32.mrf.mxu0
      %v571 = vadd.f32 0.0, %v570
      %572 = vmatmul.bf16.gmra.mxu0 %v547
      %v573 = vpop.f32.mrf.mxu0
      %v574 = vadd.f32 0.0, %v573
      %v575 = vpop.f32.mrf.mxu0
      %v576 = vadd.f32 0.0, %v575
      %577 = vdwg.mxu0
      %v578 = vadd.f32 %v497, %v559
      %v579 = vadd.f32 %v499, %v561
      %v580 = vadd.f32 %v502, %v564
      %v581 = vadd.f32 %v504, %v566
      %v582 = vadd.f32 %v507, %v569
      %v583 = vadd.f32 %v509, %v571
      %v584 = vadd.f32 %v512, %v574
      %v585 = vadd.f32 %v514, %v576
      %v586 = vld [vmem:[%s3] sm:$0x1]
      %v588 = vperm.slane %v586, 0
      %v590 = vadd.f32 %v578, %v588
      %v591 = vadd.f32 %v579, %v588
      %v592 = vadd.f32 %v580, %v588
      %v593 = vadd.f32 %v581, %v588
      %v594 = vadd.f32 %v582, %v588
      %v595 = vadd.f32 %v583, %v588
      %v596 = vadd.f32 %v584, %v588
      %v597 = vadd.f32 %v585, %v588
      %v598 = vld [vmem:[%s331] sm:$0xf]
      %v599 = vld [vmem:[%s331 + $0x4] sm:$0xf]
      %v600 = vld [vmem:[%s331 + $0x8] sm:$0xf]
      %v601 = vld [vmem:[%s331 + $0xc] sm:$0xf]
      %v602 = vld [vmem:[%s331 + $0x10] sm:$0xf]
      %v603 = vld [vmem:[%s331 + $0x14] sm:$0xf]
      %v604 = vld [vmem:[%s331 + $0x18] sm:$0xf]
      %v605 = vld [vmem:[%s331 + $0x1c] sm:$0xf]
      %v606 = vunpack.c.l.bf16 %v598
      %v607 = vunpack.c.l.bf16 %v599
      %v608 = vunpack.c.l.bf16 %v600
      %v609 = vunpack.c.l.bf16 %v601
      %v610 = vunpack.c.l.bf16 %v602
      %v611 = vunpack.c.l.bf16 %v603
      %v612 = vunpack.c.l.bf16 %v604
      %v613 = vunpack.c.l.bf16 %v605
      %v614 = vadd.f32 %v590, %v606
      %v615 = vadd.f32 %v591, %v607
      %v616 = vadd.f32 %v592, %v608
      %v617 = vadd.f32 %v593, %v609
      %v618 = vadd.f32 %v594, %v610
      %v619 = vadd.f32 %v595, %v611
      %v620 = vadd.f32 %v596, %v612
      %v621 = vadd.f32 %v597, %v613
      %v622 = vpack.c.bf16 %v614, %v614
      %v623 = vpack.c.bf16 %v615, %v615
      %v624 = vpack.c.bf16 %v616, %v616
      %v625 = vpack.c.bf16 %v617, %v617
      %v626 = vpack.c.bf16 %v618, %v618
      %v627 = vpack.c.bf16 %v619, %v619
      %v628 = vpack.c.bf16 %v620, %v620
      %v629 = vpack.c.bf16 %v621, %v621
      %vm630 = vcmask 125952
      %631 = vst.msk [vmem:[%s341] sm:$0xf] %vm630, %v622
      %632 = vst.msk [vmem:[%s341 + $0x4] sm:$0xf] %vm630, %v623
      %633 = vst.msk [vmem:[%s341 + $0x8] sm:$0xf] %vm630, %v624
      %634 = vst.msk [vmem:[%s341 + $0xc] sm:$0xf] %vm630, %v625
      %635 = vst.msk [vmem:[%s341 + $0x10] sm:$0xf] %vm630, %v626
      %636 = vst.msk [vmem:[%s341 + $0x14] sm:$0xf] %vm630, %v627
      %637 = vst.msk [vmem:[%s341 + $0x18] sm:$0xf] %vm630, %v628
      %638 = vst.msk [vmem:[%s341 + $0x1c] sm:$0xf] %vm630, %v629
      %s639 = smul.u32 8, %s21
      %p640 = scmp.lt.s32.totalorder %s20, 1
      %s641 = scalar_select %p640, %s20, 1
      %p642 = scmp.lt.s32.totalorder %s639, 7
      %s643 = scalar_select %p642, %s639, 7
      %s644 = smul.addr %s641, 8
      %s645 = sadd.s32 %s643, %s644
      %s646 = smul.addr %s645, 4
      %s647 = scalar_lea.vmem %s5, %s646
      // Predicated region
      $region41: #{fwd.22} parent=39 // pred_check
        %p648 = pneg %p176
      $region42: #{fwd.22} parent=39 // pred_check_branch
        %650 = sbr.rel (%p648) target = $region44
      $region43: #{fwd.22} parent=39 // pred_region
        %s651 = smul.u32 8, %s21
      $region44: #{fwd.22} parent=39 // pred_fallthru
        _
    $region40: #{fwd.22} parent=5 // pred_fallthru
      _
    %p652 = scmp.le.s32.totalorder 2, %s11
    // Predicated region
    $region45: #{fwd.22} parent=5 // pred_check
      %p653 = pneg %p652
    $region46: #{fwd.22} parent=5 // pred_check_branch
      %655 = sbr.rel (%p653) target = $region48
    $region47: #{fwd.22} parent=5 // pred_region
      %s656 = ssub.s32 %s11, 2
      // Predicated region
      $region49: #{fwd.22} parent=47 // pred_check
        %p657 = pneg %p182
      $region50: #{fwd.22} parent=47 // pred_check_branch
        %659 = sbr.rel (%p657) target = $region52
      $region51: #{fwd.22} parent=47 // pred_region
        %s660 = smul.u32 8, %s23
        %p661 = scmp.lt.s32.totalorder %s22, 1
        %s662 = scalar_select %p661, %s22, 1
        %p663 = scmp.lt.s32.totalorder %s660, 7
        %s664 = scalar_select %p663, %s660, 7
        %s665 = smul.addr %s662, 8
        %s666 = sadd.s32 %s664, %s665
        %s667 = smul.addr %s666, 4
        %s668 = scalar_lea.vmem %s5, %s667
      $region52: #{fwd.22} parent=47 // pred_fallthru
        _
    $region48: #{fwd.22} parent=5 // pred_fallthru
      _
  $region6: #{fwd.22} parent=0 // loop_footer
    %s15 = sadd.s32 1, %s11
  $region7: #{fwd.22} parent=0 // loop_footer_branch
    %10 = sbr.rel target = $region3
  $region8: #{fwd.22} parent=0 // loop_exit
    _

// kernel: fwd.23
$region0: #{fwd.23}
  #allocation0 [shape = 'u32[]', space=smem, size = 0x4, offset = 0x4, fixed_abs, tag = 'smem constant byte address 0x4 - core index']
  #allocation1 [shape = 'u32[72,128]{1,0:T(1,128)}', space=vmem, size = 0x9000, scoped, tag = 'internal scratch']
  #allocation2 [shape = 'f32[128,16]{1,0:T(8,128)}', space=vmem, size = 0x10000, scoped, tag = 'scratch operand']
  %s0 = inlined_call_operand.vmem [shape: bf16[2,128,16], index: 0, kind: input, shape index: {}, may-alias: {0,1}]
  %s1 = inlined_call_operand.vmem [shape: bf16[2,128,16], index: 1, kind: input, shape index: {}, may-alias: {0,1}]
  %s2 = inlined_call_operand.vmem [shape: bf16[3,16,16], index: 2, kind: input, shape index: {}]
  %s3 = inlined_call_operand.vmem [shape: f32[1,16], index: 3, kind: input, shape index: {}]
  %s4 = inlined_call_operand.vmem [shape: bf16[2,64,16], index: 4, kind: output, shape index: {}]
  %s5 = sld [smem:[#allocation0]]
  $region49: #{fwd.23} parent=0
    _
  %s7 = ssub.s32 1, %s5
  %s8 = scalar_select 0, %s7, %s5
  loop: start=0, step=1, limit=4
  $region2: #{fwd.23} parent=0 // loop_pre_header
    _
  $region3: #{fwd.23} parent=0 // loop_header
    %s10 = sphi 0, %s14
    %p11 = scmp.ge.s32.totalorder %s10, 4
    %s17 = sphi 0, %s29
    %s18 = sphi 0, %s25
    %s19 = sphi 0, %s17
    %s20 = sphi 0, %s18
    %s21 = sphi 0, %s19
    %s22 = sphi 0, %s20
    %s34 = sphi 0, %s36
    %s37 = sphi 0, %s34
    %s38 = sphi 0, %s37
    %s54 = sphi 0, %s38
    %s64 = sphi 0, %s66
    %s67 = sphi 0, %s64
    %s68 = sphi 0, %s67
    %s84 = sphi 0, %s68
    %s88 = sphi 0, %s88
    %s90 = sphi 0, %s88
    %s91 = sphi 0, %s90
    %s105 = sphi 0, %s91
    %s109 = sphi 0, %s109
    %s111 = sphi 0, %s109
    %s112 = sphi 0, %s111
    %s126 = sphi 0, %s112
    %s134 = sphi 0, %s136
    %s137 = sphi 0, %s134
    %s138 = sphi 0, %s137
    %s154 = sphi 0, %s138
  $region4: #{fwd.23} parent=0 // loop_header_branch
    %13 = sbr.rel (%p11) target = $region8
  $region5: #{fwd.23} parent=0 // loop_body
    %s15 = ssub.s32 %s10, 1
    %s16 = ssub.s32 %s10, 2
    %s23 = sadd.s32 1, %s18
    %p24 = scmp.ge.s32.totalorder %s23, 1
    %s25 = scalar_select %p24, 0, %s23
    %s26 = sadd.s32 1, %s17
    %s27 = scalar_select %p24, %s26, %s17
    %p28 = scmp.ge.s32.totalorder %s27, 2
    %s29 = scalar_select %p28, 0, %s27
    %s30 = ssub.s32 %s17, %s29
    %s31 = ssub.s32 %s18, %s25
    %s32 = sor.u32 %s30, %s31
    %p33 = scmp.eq.s32.totalorder %s32, 0
    %s35 = sadd.s32 %s34, 1
    %s36 = scalar_select %p33, %s34, %s35
    %p39 = pneg %p33
    %p40 = scmp.eq.s32.totalorder %s10, 1
    %p41 = por %p39, %p40
    %p42 = scmp.ne.s32.totalorder %s34, %s37
    %p43 = scmp.eq.s32.totalorder %s10, 0
    %p44 = por %p42, %p43
    %p45 = scmp.ne.s32.totalorder %s34, %s37
    %p46 = scmp.eq.s32.totalorder %s15, 1
    %p47 = por %p45, %p46
    %p48 = scmp.ne.s32.totalorder %s37, %s38
    %p49 = scmp.eq.s32.totalorder %s15, 0
    %p50 = por %p48, %p49
    %p51 = scmp.ne.s32.totalorder %s37, %s38
    %p52 = scmp.eq.s32.totalorder %s16, 1
    %p53 = por %p51, %p52
    %p55 = scmp.ne.s32.totalorder %s38, %s54
    %p56 = scmp.eq.s32.totalorder %s16, 0
    %p57 = por %p55, %p56
    %s58 = sadd.s32 %s18, 1
    %s59 = sadd.s32 %s25, 1
    %s60 = ssub.s32 %s17, %s29
    %s61 = ssub.s32 %s58, %s59
    %s62 = sor.u32 %s60, %s61
    %p63 = scmp.eq.s32.totalorder %s62, 0
    %s65 = sadd.s32 %s64, 1
    %s66 = scalar_select %p63, %s64, %s65
    %p69 = pneg %p63
    %p70 = scmp.eq.s32.totalorder %s10, 1
    %p71 = por %p69, %p70
    %p72 = scmp.ne.s32.totalorder %s64, %s67
    %p73 = scmp.eq.s32.totalorder %s10, 0
    %p74 = por %p72, %p73
    %p75 = scmp.ne.s32.totalorder %s64, %s67
    %p76 = scmp.eq.s32.totalorder %s15, 1
    %p77 = por %p75, %p76
    %p78 = scmp.ne.s32.totalorder %s67, %s68
    %p79 = scmp.eq.s32.totalorder %s15, 0
    %p80 = por %p78, %p79
    %p81 = scmp.ne.s32.totalorder %s67, %s68
    %p82 = scmp.eq.s32.totalorder %s16, 1
    %p83 = por %p81, %p82
    %p85 = scmp.ne.s32.totalorder %s68, %s84
    %p86 = scmp.eq.s32.totalorder %s16, 0
    %p87 = por %p85, %p86
    %s89 = sadd.s32 %s88, 1
    %p92 = scmp.eq.s32.totalorder %s10, 1
    %p93 = scmp.ne.s32.totalorder %s88, %s90
    %p94 = scmp.eq.s32.totalorder %s10, 0
    %p95 = por %p93, %p94
    %p96 = scmp.ne.s32.totalorder %s88, %s90
    %p97 = scmp.eq.s32.totalorder %s15, 1
    %p98 = por %p96, %p97
    %p99 = scmp.ne.s32.totalorder %s90, %s91
    %p100 = scmp.eq.s32.totalorder %s15, 0
    %p101 = por %p99, %p100
    %p102 = scmp.ne.s32.totalorder %s90, %s91
    %p103 = scmp.eq.s32.totalorder %s16, 1
    %p104 = por %p102, %p103
    %p106 = scmp.ne.s32.totalorder %s91, %s105
    %p107 = scmp.eq.s32.totalorder %s16, 0
    %p108 = por %p106, %p107
    %s110 = sadd.s32 %s109, 1
    %p113 = scmp.eq.s32.totalorder %s10, 1
    %p114 = scmp.ne.s32.totalorder %s109, %s111
    %p115 = scmp.eq.s32.totalorder %s10, 0
    %p116 = por %p114, %p115
    %p117 = scmp.ne.s32.totalorder %s109, %s111
    %p118 = scmp.eq.s32.totalorder %s15, 1
    %p119 = por %p117, %p118
    %p120 = scmp.ne.s32.totalorder %s111, %s112
    %p121 = scmp.eq.s32.totalorder %s15, 0
    %p122 = por %p120, %p121
    %p123 = scmp.ne.s32.totalorder %s111, %s112
    %p124 = scmp.eq.s32.totalorder %s16, 1
    %p125 = por %p123, %p124
    %p127 = scmp.ne.s32.totalorder %s112, %s126
    %p128 = scmp.eq.s32.totalorder %s16, 0
    %p129 = por %p127, %p128
    %s130 = ssub.s32 %s17, %s29
    %s131 = ssub.s32 %s18, %s25
    %s132 = sor.u32 %s130, %s131
    %p133 = scmp.eq.s32.totalorder %s132, 0
    %s135 = sadd.s32 %s134, 1
    %s136 = scalar_select %p133, %s134, %s135
    %p139 = pneg %p133
    %p140 = scmp.eq.s32.totalorder %s10, 1
    %p141 = por %p139, %p140
    %p142 = scmp.ne.s32.totalorder %s134, %s137
    %p143 = scmp.eq.s32.totalorder %s10, 0
    %p144 = por %p142, %p143
    %p145 = scmp.ne.s32.totalorder %s134, %s137
    %p146 = scmp.eq.s32.totalorder %s15, 1
    %p147 = por %p145, %p146
    %p148 = scmp.ne.s32.totalorder %s137, %s138
    %p149 = scmp.eq.s32.totalorder %s15, 0
    %p150 = por %p148, %p149
    %p151 = scmp.ne.s32.totalorder %s137, %s138
    %p152 = scmp.eq.s32.totalorder %s16, 1
    %p153 = por %p151, %p152
    %p155 = scmp.ne.s32.totalorder %s138, %s154
    %p156 = scmp.eq.s32.totalorder %s16, 0
    %p157 = por %p155, %p156
    %p158 = scmp.le.s32.totalorder 1, %s10
    %p159 = scmp.lt.s32.totalorder %s10, 3
    %p160 = pnand %p158, %p159
    %p161 = pneg %p160
    // Predicated region
    $region9: #{fwd.23} parent=5 // pred_check
      _
    $region10: #{fwd.23} parent=5 // pred_check_branch
      %163 = sbr.rel (%p160) target = $region12
    $region11: #{fwd.23} parent=5 // pred_region
      %s164 = ssub.s32 %s10, 1
      // Predicated region
      $region13: #{fwd.23} parent=11 // pred_check
        %p165 = pneg %p101
      $region14: #{fwd.23} parent=11 // pred_check_branch
        %167 = sbr.rel (%p165) target = $region16
      $region15: #{fwd.23} parent=11 // pred_region
        _
      $region16: #{fwd.23} parent=11 // pred_fallthru
        _
      // Predicated region
      $region17: #{fwd.23} parent=11 // pred_check
        %p168 = pneg %p122
      $region18: #{fwd.23} parent=11 // pred_check_branch
        %170 = sbr.rel (%p168) target = $region20
      $region19: #{fwd.23} parent=11 // pred_region
        _
      $region20: #{fwd.23} parent=11 // pred_fallthru
        _
    $region12: #{fwd.23} parent=5 // pred_fallthru
      _
    %p171 = scmp.lt.s32.totalorder %s10, 2
    // Predicated region
    $region21: #{fwd.23} parent=5 // pred_check
      %p172 = pneg %p171
    $region22: #{fwd.23} parent=5 // pred_check_branch
      %174 = sbr.rel (%p172) target = $region24
    $region23: #{fwd.23} parent=5 // pred_region
      // Predicated region
      $region25: #{fwd.23} parent=23 // pred_check
        %p175 = pneg %p44
      $region26: #{fwd.23} parent=23 // pred_check_branch
        %177 = sbr.rel (%p175) target = $region28
      $region27: #{fwd.23} parent=23 // pred_region
        %s178 = smul.u32 8, %s18
        %p179 = scmp.lt.s32.totalorder %s17, 1
        %s180 = scalar_select %p179, %s17, 1
        %p181 = scmp.lt.s32.totalorder %s178, 15
        %s182 = scalar_select %p181, %s178, 15
        %s183 = smul.addr %s180, 16
        %s184 = sadd.s32 %s182, %s183
        %s185 = smul.addr %s184, 4
        %s186 = scalar_lea.vmem %s0, %s185
        %s187 = smul.u32 8, %s18
      $region28: #{fwd.23} parent=23 // pred_fallthru
        _
      // Predicated region
      $region29: #{fwd.23} parent=23 // pred_check
        %p188 = pneg %p74
      $region30: #{fwd.23} parent=23 // pred_check_branch
        %190 = sbr.rel (%p188) target = $region32
      $region31: #{fwd.23} parent=23 // pred_region
        %s191 = sadd.s32 %s18, 1
        %s192 = smul.u32 8, %s191
        %p193 = scmp.lt.s32.totalorder %s17, 1
        %s194 = scalar_select %p193, %s17, 1
        %p195 = scmp.lt.s32.totalorder %s192, 15
        %s196 = scalar_select %p195, %s192, 15
        %s197 = smul.addr %s194, 16
        %s198 = sadd.s32 %s196, %s197
        %s199 = smul.addr %s198, 4
        %s200 = scalar_lea.vmem %s1, %s199
        %s201 = sadd.s32 %s18, 1
        %s202 = smul.u32 8, %s201
      $region32: #{fwd.23} parent=23 // pred_fallthru
        _
    $region24: #{fwd.23} parent=5 // pred_fallthru
      _
    %p203 = scmp.le.s32.totalorder 1, %s10
    %p204 = scmp.lt.s32.totalorder %s10, 3
    %p205 = pnand %p203, %p204
    %p206 = pneg %p205
    // Predicated region
    $region33: #{fwd.23} parent=5 // pred_check
      _
    $region34: #{fwd.23} parent=5 // pred_check_branch
      %208 = sbr.rel (%p205) target = $region36
    $region35: #{fwd.23} parent=5 // pred_region
      %s209 = ssub.s32 %s10, 1
      %s210 = smul.u32 8, %s20
      %p211 = scmp.lt.s32.totalorder %s19, 1
      %s212 = scalar_select %p211, %s19, 1
      %p213 = scmp.lt.s32.totalorder %s210, 15
      %s214 = scalar_select %p213, %s210, 15
      %s215 = smul.addr %s212, 16
      %s216 = sadd.s32 %s214, %s215
      %s217 = smul.addr %s216, 4
      %s218 = scalar_lea.vmem %s0, %s217
      %p219 = pneg %p50
      %p220 = pneg %p47
      %s221 = sadd.s32 %s20, 1
      %s222 = smul.u32 8, %s221
      %p223 = scmp.lt.s32.totalorder %s19, 1
      %s224 = scalar_select %p223, %s19, 1
      %p225 = scmp.lt.s32.totalorder %s222, 15
      %s226 = scalar_select %p225, %s222, 15
      %s227 = smul.addr %s224, 16
      %s228 = sadd.s32 %s226, %s227
      %s229 = smul.addr %s228, 4
      %s230 = scalar_lea.vmem %s1, %s229
      %p231 = pneg %p80
      %p232 = pneg %p77
      %p233 = pneg %p101
      %p234 = pneg %p98
      %p235 = pneg %p122
      %p236 = pneg %p119
      %p237 = pneg %p150
      %p238 = pneg %p147
      %s239 = smul.u32 8, %s20
      %p240 = scmp.lt.s32.totalorder %s19, 1
      %s241 = scalar_select %p240, %s19, 1
      %p242 = scmp.lt.s32.totalorder %s239, 7
      %s243 = scalar_select %p242, %s239, 7
      %s244 = smul.addr %s241, 8
      %s245 = sadd.s32 %s243, %s244
      %s246 = smul.addr %s245, 4
      %s247 = scalar_lea.vmem %s4, %s246
      %s248 = smul.u32 8, %s20
      %p249 = scmp.lt.s32.totalorder %s19, 1
      %s250 = scalar_select %p249, %s19, 1
      %p251 = scmp.lt.s32.totalorder %s248, 15
      %s252 = scalar_select %p251, %s248, 15
      %s253 = smul.addr %s250, 16
      %s254 = sadd.s32 %s252, %s253
      %s255 = smul.addr %s254, 4
      %s256 = scalar_lea.vmem %s0, %s255
      %s257 = smul.u32 8, %s20
      %s258 = sadd.s32 %s20, 1
      %s259 = smul.u32 8, %s258
      %p260 = scmp.lt.s32.totalorder %s19, 1
      %s261 = scalar_select %p260, %s19, 1
      %p262 = scmp.lt.s32.totalorder %s259, 15
      %s263 = scalar_select %p262, %s259, 15
      %s264 = smul.addr %s261, 16
      %s265 = sadd.s32 %s263, %s264
      %s266 = smul.addr %s265, 4
      %s267 = scalar_lea.vmem %s1, %s266
      %s268 = sadd.s32 %s20, 1
      %s269 = smul.u32 8, %s268
      %s270 = smul.u32 8, %s20
      %p271 = scmp.lt.s32.totalorder %s19, 1
      %s272 = scalar_select %p271, %s19, 1
      %p273 = scmp.lt.s32.totalorder %s270, 7
      %s274 = scalar_select %p273, %s270, 7
      %s275 = smul.addr %s272, 8
      %s276 = sadd.s32 %s274, %s275
      %s277 = smul.addr %s276, 4
      %s278 = scalar_lea.vmem %s4, %s277
      %s279 = smul.u32 8, %s20
      %v281 = vld [vmem:[%s256] sm:$0xf]
      %v282 = vld [vmem:[%s256 + $0x4] sm:$0xf]
      %v283 = vld [vmem:[%s256 + $0x8] sm:$0xf]
      %v284 = vld [vmem:[%s256 + $0xc] sm:$0xf]
      %v285 = vld [vmem:[%s256 + $0x10] sm:$0xf]
      %v286 = vld [vmem:[%s256 + $0x14] sm:$0xf]
      %v287 = vld [vmem:[%s256 + $0x18] sm:$0xf]
      %v288 = vld [vmem:[%s256 + $0x1c] sm:$0xf]
      %v289 = vunpack.c.l.bf16 %v281
      %v290 = vunpack.c.l.bf16 %v282
      %v291 = vunpack.c.l.bf16 %v283
      %v292 = vunpack.c.l.bf16 %v284
      %v293 = vunpack.c.l.bf16 %v285
      %v294 = vunpack.c.l.bf16 %v286
      %v295 = vunpack.c.l.bf16 %v287
      %v296 = vunpack.c.l.bf16 %v288
      %vm297 = vcmp.ge.f32.partialorder %v289, 0.0
      %vm298 = vcmp.ge.f32.partialorder %v290, 0.0
      %vm299 = vcmp.ge.f32.partialorder %v291, 0.0
      %vm300 = vcmp.ge.f32.partialorder %v292, 0.0
      %vm301 = vcmp.ge.f32.partialorder %v293, 0.0
      %vm302 = vcmp.ge.f32.partialorder %v294, 0.0
      %vm303 = vcmp.ge.f32.partialorder %v295, 0.0
      %vm304 = vcmp.ge.f32.partialorder %v296, 0.0
      %v305 = vmul.f32 %v289, 0.1
      %v306 = vmul.f32 %v290, 0.1
      %v307 = vmul.f32 %v291, 0.1
      %v308 = vmul.f32 %v292, 0.1
      %v309 = vmul.f32 %v293, 0.1
      %v310 = vmul.f32 %v294, 0.1
      %v311 = vmul.f32 %v295, 0.1
      %v312 = vmul.f32 %v296, 0.1
      %v313 = vsel %vm297, %v289, %v305
      %v314 = vsel %vm298, %v290, %v306
      %v315 = vsel %vm299, %v291, %v307
      %v316 = vsel %vm300, %v292, %v308
      %v317 = vsel %vm301, %v293, %v309
      %v318 = vsel %vm302, %v294, %v310
      %v319 = vsel %vm303, %v295, %v311
      %v320 = vsel %vm304, %v296, %v312
      %vm321 = vcmask 130048
      %322 = vst.msk [vmem:[#allocation2] sm:$0xff] %vm321, %v313
      %323 = vst.msk [vmem:[#allocation2 + $0x8] sm:$0xff] %vm321, %v314
      %324 = vst.msk [vmem:[#allocation2 + $0x10] sm:$0xff] %vm321, %v315
      %325 = vst.msk [vmem:[#allocation2 + $0x18] sm:$0xff] %vm321, %v316
      %326 = vst.msk [vmem:[#allocation2 + $0x20] sm:$0xff] %vm321, %v317
      %327 = vst.msk [vmem:[#allocation2 + $0x28] sm:$0xff] %vm321, %v318
      %328 = vst.msk [vmem:[#allocation2 + $0x30] sm:$0xff] %vm321, %v319
      %329 = vst.msk [vmem:[#allocation2 + $0x38] sm:$0xff] %vm321, %v320
      %v330 = vld [vmem:[%s267] sm:$0xf]
      %v331 = vld [vmem:[%s267 + $0x4] sm:$0xf]
      %v332 = vld [vmem:[%s267 + $0x8] sm:$0xf]
      %v333 = vld [vmem:[%s267 + $0xc] sm:$0xf]
      %v334 = vld [vmem:[%s267 + $0x10] sm:$0xf]
      %v335 = vld [vmem:[%s267 + $0x14] sm:$0xf]
      %v336 = vld [vmem:[%s267 + $0x18] sm:$0xf]
      %v337 = vld [vmem:[%s267 + $0x1c] sm:$0xf]
      %v338 = vunpack.c.l.bf16 %v330
      %v339 = vunpack.c.l.bf16 %v331
      %v340 = vunpack.c.l.bf16 %v332
      %v341 = vunpack.c.l.bf16 %v333
      %v342 = vunpack.c.l.bf16 %v334
      %v343 = vunpack.c.l.bf16 %v335
      %v344 = vunpack.c.l.bf16 %v336
      %v345 = vunpack.c.l.bf16 %v337
      %vm346 = vcmp.ge.f32.partialorder %v338, 0.0
      %vm347 = vcmp.ge.f32.partialorder %v339, 0.0
      %vm348 = vcmp.ge.f32.partialorder %v340, 0.0
      %vm349 = vcmp.ge.f32.partialorder %v341, 0.0
      %vm350 = vcmp.ge.f32.partialorder %v342, 0.0
      %vm351 = vcmp.ge.f32.partialorder %v343, 0.0
      %vm352 = vcmp.ge.f32.partialorder %v344, 0.0
      %vm353 = vcmp.ge.f32.partialorder %v345, 0.0
      %v354 = vmul.f32 %v338, 0.1
      %v355 = vmul.f32 %v339, 0.1
      %v356 = vmul.f32 %v340, 0.1
      %v357 = vmul.f32 %v341, 0.1
      %v358 = vmul.f32 %v342, 0.1
      %v359 = vmul.f32 %v343, 0.1
      %v360 = vmul.f32 %v344, 0.1
      %v361 = vmul.f32 %v345, 0.1
      %v362 = vsel %vm346, %v338, %v354
      %v363 = vsel %vm347, %v339, %v355
      %v364 = vsel %vm348, %v340, %v356
      %v365 = vsel %vm349, %v341, %v357
      %v366 = vsel %vm350, %v342, %v358
      %v367 = vsel %vm351, %v343, %v359
      %v368 = vsel %vm352, %v344, %v360
      %v369 = vsel %vm353, %v345, %v361
      %370 = vst.msk [vmem:[#allocation2 + $0x40] sm:$0xff] %vm321, %v362
      %371 = vst.msk [vmem:[#allocation2 + $0x48] sm:$0xff] %vm321, %v363
      %372 = vst.msk [vmem:[#allocation2 + $0x50] sm:$0xff] %vm321, %v364
      %373 = vst.msk [vmem:[#allocation2 + $0x58] sm:$0xff] %vm321, %v365
      %374 = vst.msk [vmem:[#allocation2 + $0x60] sm:$0xff] %vm321, %v366
      %375 = vst.msk [vmem:[#allocation2 + $0x68] sm:$0xff] %vm321, %v367
      %376 = vst.msk [vmem:[#allocation2 + $0x70] sm:$0xff] %vm321, %v368
      %377 = vst.msk [vmem:[#allocation2 + $0x78] sm:$0xff] %vm321, %v369
      %v378 = vld [vmem:[#allocation2] sm:$0xff]
      %v379 = vld [vmem:[#allocation2 + $0x8] sm:$0xff]
      %v380 = vld [vmem:[#allocation2 + $0x10] sm:$0xff]
      %v381 = vld [vmem:[#allocation2 + $0x18] sm:$0xff]
      %v382 = vld [vmem:[#allocation2 + $0x20] sm:$0xff]
      %v383 = vld [vmem:[#allocation2 + $0x28] sm:$0xff]
      %v384 = vld [vmem:[#allocation2 + $0x30] sm:$0xff]
      %v385 = vld [vmem:[#allocation2 + $0x38] sm:$0xff]
      %v386 = vpack.c.bf16 %v379, %v378
      %v387 = vpack.c.bf16 %v381, %v380
      %v388 = vpack.c.bf16 %v383, %v382
      %v389 = vpack.c.bf16 %v385, %v384
      %v390 = vld [vmem:[%s2] sm:$0xf]
      %v391 = vld [vmem:[%s2 + $0x4] sm:$0xf]
      %v392 = vld [vmem:[#allocation2 + $0x3] sm:$0xff]
      %v393 = vld [vmem:[#allocation2 + $0xb] sm:$0xff]
      %v394 = vld [vmem:[#allocation2 + $0x13] sm:$0xff]
      %v395 = vld [vmem:[#allocation2 + $0x1b] sm:$0xff]
      %v396 = vld [vmem:[#allocation2 + $0x23] sm:$0xff]
      %v397 = vld [vmem:[#allocation2 + $0x2b] sm:$0xff]
      %v398 = vld [vmem:[#allocation2 + $0x33] sm:$0xff]
      %v399 = vld [vmem:[#allocation2 + $0x3b] sm:$0xff]
      %v400 = vpack.c.bf16 %v393, %v392
      %v401 = vpack.c.bf16 %v395, %v394
      %v402 = vpack.c.bf16 %v397, %v396
      %v403 = vpack.c.bf16 %v399, %v398
      %s404 = scalar_lea.vmem %s2, 8
      %v405 = vld [vmem:[%s404] sm:$0xf]
      %v406 = vld [vmem:[%s404 + $0x4] sm:$0xf]
      %v409 = vunpack.c.l.b16 %v405
      %v410 = vunpack.c.l.b16 %v406
      %v411 = vpack.c.b16 %v410, %v409
      %v414 = vsel %vm321, %v400, 0
      %v417 = vsel %vm321, %v401, 0
      %v420 = vsel %vm321, %v402, 0
      %v423 = vsel %vm321, %v403, 0
      %425 = vmatpush.bf16.msra.mxu0 0
      %426 = vmatpush.bf16.msra.mxu0 0
      %427 = vmatpush.bf16.msra.mxu0 0
      %428 = vmatpush.bf16.msra.mxu0 0
      %429 = vmatpush.bf16.msra.mxu0 0
      %430 = vmatpush.bf16.msra.mxu0 0
      %431 = vmatpush.bf16.msra.mxu0 0
      %432 = vmatpush.bf16.msra.mxu0 %v411
      %433 = vmatmul.bf16.gmra.mxu0 %v414
      %v434 = vpop.f32.mrf.mxu0
      %v435 = vadd.f32 0.0, %v434
      %v436 = vpop.f32.mrf.mxu0
      %v437 = vadd.f32 0.0, %v436
      %438 = vmatmul.bf16.gmra.mxu0 %v417
      %v439 = vpop.f32.mrf.mxu0
      %v440 = vadd.f32 0.0, %v439
      %v441 = vpop.f32.mrf.mxu0
      %v442 = vadd.f32 0.0, %v441
      %443 = vmatmul.bf16.gmra.mxu0 %v420
      %v444 = vpop.f32.mrf.mxu0
      %v445 = vadd.f32 0.0, %v444
      %v446 = vpop.f32.mrf.mxu0
      %v447 = vadd.f32 0.0, %v446
      %448 = vmatmul.bf16.gmra.mxu0 %v423
      %v449 = vpop.f32.mrf.mxu0
      %v450 = vadd.f32 0.0, %v449
      %v451 = vpop.f32.mrf.mxu0
      %v452 = vadd.f32 0.0, %v451
      %453 = vdwg.mxu0
      %v456 = vunpack.c.l.b16 %v390
      %v457 = vunpack.c.l.b16 %v391
      %v458 = vpack.c.b16 %v457, %v456
      %v461 = vsel %vm321, %v386, 0
      %v464 = vsel %vm321, %v387, 0
      %v467 = vsel %vm321, %v388, 0
      %v470 = vsel %vm321, %v389, 0
      %472 = vmatpush.bf16.msra.mxu0 0
      %473 = vmatpush.bf16.msra.mxu0 0
      %474 = vmatpush.bf16.msra.mxu0 0
      %475 = vmatpush.bf16.msra.mxu0 0
      %476 = vmatpush.bf16.msra.mxu0 0
      %477 = vmatpush.bf16.msra.mxu0 0
      %478 = vmatpush.bf16.msra.mxu0 0
      %479 = vmatpush.bf16.msra.mxu0 %v458
      %480 = vmatmul.bf16.gmra.mxu0 %v461
      %v481 = vpop.f32.mrf.mxu0
      %v482 = vadd.f32 %v435, %v481
      %v483 = vpop.f32.mrf.mxu0
      %v484 = vadd.f32 %v437, %v483
      %485 = vmatmul.bf16.gmra.mxu0 %v464
      %v486 = vpop.f32.mrf.mxu0
      %v487 = vadd.f32 %v440, %v486
      %v488 = vpop.f32.mrf.mxu0
      %v489 = vadd.f32 %v442, %v488
      %490 = vmatmul.bf16.gmra.mxu0 %v467
      %v491 = vpop.f32.mrf.mxu0
      %v492 = vadd.f32 %v445, %v491
      %v493 = vpop.f32.mrf.mxu0
      %v494 = vadd.f32 %v447, %v493
      %495 = vmatmul.bf16.gmra.mxu0 %v470
      %v496 = vpop.f32.mrf.mxu0
      %v497 = vadd.f32 %v450, %v496
      %v498 = vpop.f32.mrf.mxu0
      %v499 = vadd.f32 %v452, %v498
      %500 = vdwg.mxu0
      %v501 = vld [vmem:[#allocation2 + $0x6] sm:$0xff]
      %v502 = vld [vmem:[#allocation2 + $0xe] sm:$0xff]
      %v503 = vld [vmem:[#allocation2 + $0x16] sm:$0xff]
      %v504 = vld [vmem:[#allocation2 + $0x1e] sm:$0xff]
      %v505 = vld [vmem:[#allocation2 + $0x26] sm:$0xff]
      %v506 = vld [vmem:[#allocation2 + $0x2e] sm:$0xff]
      %v507 = vld [vmem:[#allocation2 + $0x36] sm:$0xff]
      %v508 = vld [vmem:[#allocation2 + $0x3e] sm:$0xff]
      %v509 = vpack.c.bf16 %v502, %v501
      %v510 = vpack.c.bf16 %v504, %v503
      %v511 = vpack.c.bf16 %v506, %v505
      %v512 = vpack.c.bf16 %v508, %v507
      %s513 = scalar_lea.vmem %s2, 16
      %v514 = vld [vmem:[%s513] sm:$0xf]
      %v515 = vld [vmem:[%s513 + $0x4] sm:$0xf]
      %v518 = vunpack.c.l.b16 %v514
      %v519 = vunpack.c.l.b16 %v515
      %v520 = vpack.c.b16 %v519, %v518
      %v523 = vsel %vm321, %v509, 0
      %v526 = vsel %vm321, %v510, 0
      %v529 = vsel %vm321, %v511, 0
      %v532 = vsel %vm321, %v512, 0
      %534 = vmatpush.bf16.msra.mxu0 0
      %535 = vmatpush.bf16.msra.mxu0 0
      %536 = vmatpush.bf16.msra.mxu0 0
      %537 = vmatpush.bf16.msra.mxu0 0
      %538 = vmatpush.bf16.msra.mxu0 0
      %539 = vmatpush.bf16.msra.mxu0 0
      %540 = vmatpush.bf16.msra.mxu0 0
      %541 = vmatpush.bf16.msra.mxu0 %v520
      %542 = vmatmul.bf16.gmra.mxu0 %v523
      %v543 = vpop.f32.mrf.mxu0
      %v544 = vadd.f32 0.0, %v543
      %v545 = vpop.f32.mrf.mxu0
      %v546 = vadd.f32 0.0, %v545
      %547 = vmatmul.bf16.gmra.mxu0 %v526
      %v548 = vpop.f32.mrf.mxu0
      %v549 = vadd.f32 0.0, %v548
      %v550 = vpop.f32.mrf.mxu0
      %v551 = vadd.f32 0.0, %v550
      %552 = vmatmul.bf16.gmra.mxu0 %v529
      %v553 = vpop.f32.mrf.mxu0
      %v554 = vadd.f32 0.0, %v553
      %v555 = vpop.f32.mrf.mxu0
      %v556 = vadd.f32 0.0, %v555
      %557 = vmatmul.bf16.gmra.mxu0 %v532
      %v558 = vpop.f32.mrf.mxu0
      %v559 = vadd.f32 0.0, %v558
      %v560 = vpop.f32.mrf.mxu0
      %v561 = vadd.f32 0.0, %v560
      %562 = vdwg.mxu0
      %v563 = vadd.f32 %v482, %v544
      %v564 = vadd.f32 %v484, %v546
      %v565 = vadd.f32 %v487, %v549
      %v566 = vadd.f32 %v489, %v551
      %v567 = vadd.f32 %v492, %v554
      %v568 = vadd.f32 %v494, %v556
      %v569 = vadd.f32 %v497, %v559
      %v570 = vadd.f32 %v499, %v561
      %v571 = vld [vmem:[%s3] sm:$0x1]
      %v573 = vperm.slane %v571, 0
      %v575 = vadd.f32 %v563, %v573
      %v576 = vadd.f32 %v564, %v573
      %v577 = vadd.f32 %v565, %v573
      %v578 = vadd.f32 %v566, %v573
      %v579 = vadd.f32 %v567, %v573
      %v580 = vadd.f32 %v568, %v573
      %v581 = vadd.f32 %v569, %v573
      %v582 = vadd.f32 %v570, %v573
      %vm583 = vcmp.ge.f32.partialorder %v575, 0.0
      %vm584 = vcmp.ge.f32.partialorder %v576, 0.0
      %vm585 = vcmp.ge.f32.partialorder %v577, 0.0
      %vm586 = vcmp.ge.f32.partialorder %v578, 0.0
      %vm587 = vcmp.ge.f32.partialorder %v579, 0.0
      %vm588 = vcmp.ge.f32.partialorder %v580, 0.0
      %vm589 = vcmp.ge.f32.partialorder %v581, 0.0
      %vm590 = vcmp.ge.f32.partialorder %v582, 0.0
      %v591 = vmul.f32 %v575, 0.1
      %v592 = vmul.f32 %v576, 0.1
      %v593 = vmul.f32 %v577, 0.1
      %v594 = vmul.f32 %v578, 0.1
      %v595 = vmul.f32 %v579, 0.1
      %v596 = vmul.f32 %v580, 0.1
      %v597 = vmul.f32 %v581, 0.1
      %v598 = vmul.f32 %v582, 0.1
      %v599 = vsel %vm583, %v575, %v591
      %v600 = vsel %vm584, %v576, %v592
      %v601 = vsel %vm585, %v577, %v593
      %v602 = vsel %vm586, %v578, %v594
      %v603 = vsel %vm587, %v579, %v595
      %v604 = vsel %vm588, %v580, %v596
      %v605 = vsel %vm589, %v581, %v597
      %v606 = vsel %vm590, %v582, %v598
      %v607 = vpack.c.bf16 %v599, %v599
      %v608 = vpack.c.bf16 %v600, %v600
      %v609 = vpack.c.bf16 %v601, %v601
      %v610 = vpack.c.bf16 %v602, %v602
      %v611 = vpack.c.bf16 %v603, %v603
      %v612 = vpack.c.bf16 %v604, %v604
      %v613 = vpack.c.bf16 %v605, %v605
      %v614 = vpack.c.bf16 %v606, %v606
      %vm615 = vcmask 125952
      %616 = vst.msk [vmem:[%s278] sm:$0xf] %vm615, %v607
      %617 = vst.msk [vmem:[%s278 + $0x4] sm:$0xf] %vm615, %v608
      %618 = vst.msk [vmem:[%s278 + $0x8] sm:$0xf] %vm615, %v609
      %619 = vst.msk [vmem:[%s278 + $0xc] sm:$0xf] %vm615, %v610
      %620 = vst.msk [vmem:[%s278 + $0x10] sm:$0xf] %vm615, %v611
      %621 = vst.msk [vmem:[%s278 + $0x14] sm:$0xf] %vm615, %v612
      %622 = vst.msk [vmem:[%s278 + $0x18] sm:$0xf] %vm615, %v613
      %623 = vst.msk [vmem:[%s278 + $0x1c] sm:$0xf] %vm615, %v614
      %s624 = smul.u32 8, %s20
      %p625 = scmp.lt.s32.totalorder %s19, 1
      %s626 = scalar_select %p625, %s19, 1
      %p627 = scmp.lt.s32.totalorder %s624, 7
      %s628 = scalar_select %p627, %s624, 7
      %s629 = smul.addr %s626, 8
      %s630 = sadd.s32 %s628, %s629
      %s631 = smul.addr %s630, 4
      %s632 = scalar_lea.vmem %s4, %s631
      // Predicated region
      $region37: #{fwd.23} parent=35 // pred_check
        %p633 = pneg %p147
      $region38: #{fwd.23} parent=35 // pred_check_branch
        %635 = sbr.rel (%p633) target = $region40
      $region39: #{fwd.23} parent=35 // pred_region
        %s636 = smul.u32 8, %s20
      $region40: #{fwd.23} parent=35 // pred_fallthru
        _
    $region36: #{fwd.23} parent=5 // pred_fallthru
      _
    %p637 = scmp.le.s32.totalorder 2, %s10
    // Predicated region
    $region41: #{fwd.23} parent=5 // pred_check
      %p638 = pneg %p637
    $region42: #{fwd.23} parent=5 // pred_check_branch
      %640 = sbr.rel (%p638) target = $region44
    $region43: #{fwd.23} parent=5 // pred_region
      %s641 = ssub.s32 %s10, 2
      // Predicated region
      $region45: #{fwd.23} parent=43 // pred_check
        %p642 = pneg %p153
      $region46: #{fwd.23} parent=43 // pred_check_branch
        %644 = sbr.rel (%p642) target = $region48
      $region47: #{fwd.23} parent=43 // pred_region
        %s645 = smul.u32 8, %s22
        %p646 = scmp.lt.s32.totalorder %s21, 1
        %s647 = scalar_select %p646, %s21, 1
        %p648 = scmp.lt.s32.totalorder %s645, 7
        %s649 = scalar_select %p648, %s645, 7
        %s650 = smul.addr %s647, 8
        %s651 = sadd.s32 %s649, %s650
        %s652 = smul.addr %s651, 4
        %s653 = scalar_lea.vmem %s4, %s652
      $region48: #{fwd.23} parent=43 // pred_fallthru
        _
    $region44: #{fwd.23} parent=5 // pred_fallthru
      _
  $region6: #{fwd.23} parent=0 // loop_footer
    %s14 = sadd.s32 1, %s10
  $region7: #{fwd.23} parent=0 // loop_footer_branch
    %9 = sbr.rel target = $region3
  $region8: #{fwd.23} parent=0 // loop_exit
    _

// kernel: fwd.25
$region0: #{fwd.25}
  #allocation0 [shape = 'u32[]', space=smem, size = 0x4, offset = 0x4, fixed_abs, tag = 'smem constant byte address 0x4 - core index']
  #allocation1 [shape = 'u32[72,128]{1,0:T(1,128)}', space=vmem, size = 0x9000, scoped, tag = 'internal scratch']
  #allocation2 [shape = 'f32[2,128,16]{2,1,0:T(8,128)}', space=vmem, size = 0x20000, scoped, tag = 'scratch operand']
  #allocation3 [shape = 'f32[1,1]{1,0:T(1,128)S(1)}', space=vmem, size = 0x200, scoped, tag = 'scoped memory for fwd.25']
  %s0 = inlined_call_operand.vmem [shape: bf16[2,128,16], index: 0, kind: input, shape index: {}, may-alias: {0,1}]
  %s1 = inlined_call_operand.vmem [shape: bf16[2,128,16], index: 1, kind: input, shape index: {}, may-alias: {0,1}]
  %s2 = inlined_call_operand.vmem [shape: f32[7,1,16], index: 2, kind: input, shape index: {}]
  %s3 = inlined_call_operand.<no memory space> [shape: f32[1,1], index: 3, kind: input, shape index: {}]
  %s4 = inlined_call_operand.hbm [shape: f32[2,64], index: 4, kind: output, shape index: {}]
  %s5 = sld [smem:[#allocation0]]
  $region108: #{fwd.25} parent=0
    _
  %s7 = ssub.s32 1, %s5
  %s8 = scalar_select 0, %s7, %s5
  %v9 = vstv %s3
  %10 = vst [vmem:[#allocation3] sm:$0x1] %v9
  $region1: #{fwd.25} parent=0
    #allocation4 [shape = 'u8[32768]{0}', space=vmem, size = 0x8000, scoped, tag = 'input window, operand 0, single buffered']
    #allocation5 [shape = 'u8[32768]{0}', space=vmem, size = 0x8000, scoped, tag = 'input window, operand 1, single buffered']
    #allocation6 [shape = 'u8[1024]{0}', space=vmem, size = 0x400, scoped, tag = 'output window, operand 0, single buffered']
    #allocation7 [shape = 's32[1]{0}', space=sflag, size = 0x4, scoped, tag = 'scoped memory for fwd.25']
    %11 = vsyncpa [#allocation7], 0
    // Predicated region
    $region2: #{fwd.25} parent=1 // pred_check
      _
    $region3: #{fwd.25} parent=1 // pred_check_branch
      %13 = sbr.rel (0) target = $region5
    $region4: #{fwd.25} parent=1 // pred_region
      // Predicated region
      $region6: #{fwd.25} parent=4 // pred_check
        _
      $region7: #{fwd.25} parent=4 // pred_check_branch
        %15 = sbr.rel (0) target = $region9
      $region8: #{fwd.25} parent=4 // pred_region
        // Predicated region
        $region10: #{fwd.25} parent=8 // pred_check
          _
        $region11: #{fwd.25} parent=8 // pred_check_branch
          %17 = sbr.rel target = $region13
        $region12: #{fwd.25} parent=8 // pred_region
          // Predicated region
          $region25: #{fwd.25} parent=12 // pred_check
            _
          $region26: #{fwd.25} parent=12 // pred_check_branch
            %63 = sbr.rel (0) target = $region28
          $region27: #{fwd.25} parent=12 // pred_region
            loop: start=0, step=1, limit=1
            $region29: #{fwd.25} parent=27 // loop_pre_header
              _
            $region30: #{fwd.25} parent=27 // loop_header
              %s65 = sphi 0, %s69
              %p66 = scmp.ge.s32.totalorder %s65, 1
              %s70 = sphi %s0, %s0
              %s71 = sphi [#allocation4], [#allocation4]
            $region31: #{fwd.25} parent=27 // loop_header_branch
              %68 = sbr.rel (%p66) target = $region35
            $region32: #{fwd.25} parent=27 // loop_body
              _
            $region33: #{fwd.25} parent=27 // loop_footer
              %s69 = sadd.s32 1, %s65
            $region34: #{fwd.25} parent=27 // loop_footer_branch
              %64 = sbr.rel target = $region30
            $region35: #{fwd.25} parent=27 // loop_exit
              _
            %s73 = ssub.s32 16, 1
            loop: start=0, step=1, limit=1
            $region36: #{fwd.25} parent=27 // loop_pre_header
              _
            $region37: #{fwd.25} parent=27 // loop_header
              %s75 = sphi 0, %s79
              %p76 = scmp.ge.s32.totalorder %s75, 1
              %s80 = sphi %s0, %s0
              %s81 = sphi [#allocation4], [#allocation4]
            $region38: #{fwd.25} parent=27 // loop_header_branch
              %78 = sbr.rel (%p76) target = $region42
            $region39: #{fwd.25} parent=27 // loop_body
              %v82 = vld [vmem:[%s80] sm:%s73]
              %83 = vst [vmem:[%s81] sm:%s73] %v82
              %v84 = vld [vmem:[%s80 + $0x4] sm:%s73]
              %85 = vst [vmem:[%s81 + $0x4] sm:%s73] %v84
              %v86 = vld [vmem:[%s80 + $0x8] sm:%s73]
              %87 = vst [vmem:[%s81 + $0x8] sm:%s73] %v86
              %v88 = vld [vmem:[%s80 + $0xc] sm:%s73]
              %89 = vst [vmem:[%s81 + $0xc] sm:%s73] %v88
              %v90 = vld [vmem:[%s80 + $0x10] sm:%s73]
              %91 = vst [vmem:[%s81 + $0x10] sm:%s73] %v90
              %v92 = vld [vmem:[%s80 + $0x14] sm:%s73]
              %93 = vst [vmem:[%s81 + $0x14] sm:%s73] %v92
              %v94 = vld [vmem:[%s80 + $0x18] sm:%s73]
              %95 = vst [vmem:[%s81 + $0x18] sm:%s73] %v94
              %v96 = vld [vmem:[%s80 + $0x1c] sm:%s73]
              %97 = vst [vmem:[%s81 + $0x1c] sm:%s73] %v96
              %v98 = vld [vmem:[%s80 + $0x40] sm:%s73]
              %99 = vst [vmem:[%s81 + $0x20] sm:%s73] %v98
              %v100 = vld [vmem:[%s80 + $0x44] sm:%s73]
              %101 = vst [vmem:[%s81 + $0x24] sm:%s73] %v100
              %v102 = vld [vmem:[%s80 + $0x48] sm:%s73]
              %103 = vst [vmem:[%s81 + $0x28] sm:%s73] %v102
              %v104 = vld [vmem:[%s80 + $0x4c] sm:%s73]
              %105 = vst [vmem:[%s81 + $0x2c] sm:%s73] %v104
              %v106 = vld [vmem:[%s80 + $0x50] sm:%s73]
              %107 = vst [vmem:[%s81 + $0x30] sm:%s73] %v106
              %v108 = vld [vmem:[%s80 + $0x54] sm:%s73]
              %109 = vst [vmem:[%s81 + $0x34] sm:%s73] %v108
              %v110 = vld [vmem:[%s80 + $0x58] sm:%s73]
              %111 = vst [vmem:[%s81 + $0x38] sm:%s73] %v110
              %v112 = vld [vmem:[%s80 + $0x5c] sm:%s73]
              %113 = vst [vmem:[%s81 + $0x3c] sm:%s73] %v112
            $region40: #{fwd.25} parent=27 // loop_footer
              %s79 = sadd.s32 1, %s75
            $region41: #{fwd.25} parent=27 // loop_footer_branch
              %74 = sbr.rel target = $region37
            $region42: #{fwd.25} parent=27 // loop_exit
              _
          $region28: #{fwd.25} parent=12 // pred_fallthru
            _
        $region13: #{fwd.25} parent=8 // pred_fallthru
          _
        // Predicated region
        $region14: #{fwd.25} parent=8 // pred_check
          _
        $region15: #{fwd.25} parent=8 // pred_check_branch
          %19 = sbr.rel (0) target = $region17
        $region16: #{fwd.25} parent=8 // pred_region
          %s21 = ssub.s32 16, 1
          loop: start=0, step=1, limit=1
          $region18: #{fwd.25} parent=16 // loop_pre_header
            _
          $region19: #{fwd.25} parent=16 // loop_header
            %s23 = sphi 0, %s27
            %p24 = scmp.ge.s32.totalorder %s23, 1
            %s28 = sphi %s0, %s0
            %s29 = sphi [#allocation4], [#allocation4]
          $region20: #{fwd.25} parent=16 // loop_header_branch
            %26 = sbr.rel (%p24) target = $region24
          $region21: #{fwd.25} parent=16 // loop_body
            %v30 = vld [vmem:[%s28] sm:%s21]
            %31 = vst [vmem:[%s29] sm:%s21] %v30
            %v32 = vld [vmem:[%s28 + $0x4] sm:%s21]
            %33 = vst [vmem:[%s29 + $0x4] sm:%s21] %v32
            %v34 = vld [vmem:[%s28 + $0x8] sm:%s21]
            %35 = vst [vmem:[%s29 + $0x8] sm:%s21] %v34
            %v36 = vld [vmem:[%s28 + $0xc] sm:%s21]
            %37 = vst [vmem:[%s29 + $0xc] sm:%s21] %v36
            %v38 = vld [vmem:[%s28 + $0x10] sm:%s21]
            %39 = vst [vmem:[%s29 + $0x10] sm:%s21] %v38
            %v40 = vld [vmem:[%s28 + $0x14] sm:%s21]
            %41 = vst [vmem:[%s29 + $0x14] sm:%s21] %v40
            %v42 = vld [vmem:[%s28 + $0x18] sm:%s21]
            %43 = vst [vmem:[%s29 + $0x18] sm:%s21] %v42
            %v44 = vld [vmem:[%s28 + $0x1c] sm:%s21]
            %45 = vst [vmem:[%s29 + $0x1c] sm:%s21] %v44
            %v46 = vld [vmem:[%s28 + $0x40] sm:%s21]
            %47 = vst [vmem:[%s29 + $0x20] sm:%s21] %v46
            %v48 = vld [vmem:[%s28 + $0x44] sm:%s21]
            %49 = vst [vmem:[%s29 + $0x24] sm:%s21] %v48
            %v50 = vld [vmem:[%s28 + $0x48] sm:%s21]
            %51 = vst [vmem:[%s29 + $0x28] sm:%s21] %v50
            %v52 = vld [vmem:[%s28 + $0x4c] sm:%s21]
            %53 = vst [vmem:[%s29 + $0x2c] sm:%s21] %v52
            %v54 = vld [vmem:[%s28 + $0x50] sm:%s21]
            %55 = vst [vmem:[%s29 + $0x30] sm:%s21] %v54
            %v56 = vld [vmem:[%s28 + $0x54] sm:%s21]
            %57 = vst [vmem:[%s29 + $0x34] sm:%s21] %v56
            %v58 = vld [vmem:[%s28 + $0x58] sm:%s21]
            %59 = vst [vmem:[%s29 + $0x38] sm:%s21] %v58
            %v60 = vld [vmem:[%s28 + $0x5c] sm:%s21]
            %61 = vst [vmem:[%s29 + $0x3c] sm:%s21] %v60
          $region22: #{fwd.25} parent=16 // loop_footer
            %s27 = sadd.s32 1, %s23
          $region23: #{fwd.25} parent=16 // loop_footer_branch
            %22 = sbr.rel target = $region19
          $region24: #{fwd.25} parent=16 // loop_exit
            _
        $region17: #{fwd.25} parent=8 // pred_fallthru
          _
      $region9: #{fwd.25} parent=4 // pred_fallthru
        _
      %114 = vnop
    $region5: #{fwd.25} parent=1 // pred_fallthru
      _
    // Predicated region
    $region43: #{fwd.25} parent=1 // pred_check
      _
    $region44: #{fwd.25} parent=1 // pred_check_branch
      %116 = sbr.rel (0) target = $region46
    $region45: #{fwd.25} parent=1 // pred_region
      %s117 = sadd.s32 0, 1
      %s118 = smul.u32 8, %s117
      %s119 = smul.addr %s118, 4
      %s120 = scalar_lea.vmem %s1, %s119
      // Predicated region
      $region47: #{fwd.25} parent=45 // pred_check
        _
      $region48: #{fwd.25} parent=45 // pred_check_branch
        %122 = sbr.rel (0) target = $region50
      $region49: #{fwd.25} parent=45 // pred_region
        // Predicated region
        $region51: #{fwd.25} parent=49 // pred_check
          _
        $region52: #{fwd.25} parent=49 // pred_check_branch
          %124 = sbr.rel target = $region54
        $region53: #{fwd.25} parent=49 // pred_region
          // Predicated region
          $region66: #{fwd.25} parent=53 // pred_check
            _
          $region67: #{fwd.25} parent=53 // pred_check_branch
            %170 = sbr.rel (0) target = $region69
          $region68: #{fwd.25} parent=53 // pred_region
            loop: start=0, step=1, limit=1
            $region70: #{fwd.25} parent=68 // loop_pre_header
              _
            $region71: #{fwd.25} parent=68 // loop_header
              %s172 = sphi 0, %s176
              %p173 = scmp.ge.s32.totalorder %s172, 1
              %s177 = sphi %s120, %s120
              %s178 = sphi [#allocation5], [#allocation5]
            $region72: #{fwd.25} parent=68 // loop_header_branch
              %175 = sbr.rel (%p173) target = $region76
            $region73: #{fwd.25} parent=68 // loop_body
              _
            $region74: #{fwd.25} parent=68 // loop_footer
              %s176 = sadd.s32 1, %s172
            $region75: #{fwd.25} parent=68 // loop_footer_branch
              %171 = sbr.rel target = $region71
            $region76: #{fwd.25} parent=68 // loop_exit
              _
            %s180 = ssub.s32 16, 1
            loop: start=0, step=1, limit=1
            $region77: #{fwd.25} parent=68 // loop_pre_header
              _
            $region78: #{fwd.25} parent=68 // loop_header
              %s182 = sphi 0, %s186
              %p183 = scmp.ge.s32.totalorder %s182, 1
              %s187 = sphi %s120, %s120
              %s188 = sphi [#allocation5], [#allocation5]
            $region79: #{fwd.25} parent=68 // loop_header_branch
              %185 = sbr.rel (%p183) target = $region83
            $region80: #{fwd.25} parent=68 // loop_body
              %v189 = vld [vmem:[%s187] sm:%s180]
              %190 = vst [vmem:[%s188] sm:%s180] %v189
              %v191 = vld [vmem:[%s187 + $0x4] sm:%s180]
              %192 = vst [vmem:[%s188 + $0x4] sm:%s180] %v191
              %v193 = vld [vmem:[%s187 + $0x8] sm:%s180]
              %194 = vst [vmem:[%s188 + $0x8] sm:%s180] %v193
              %v195 = vld [vmem:[%s187 + $0xc] sm:%s180]
              %196 = vst [vmem:[%s188 + $0xc] sm:%s180] %v195
              %v197 = vld [vmem:[%s187 + $0x10] sm:%s180]
              %198 = vst [vmem:[%s188 + $0x10] sm:%s180] %v197
              %v199 = vld [vmem:[%s187 + $0x14] sm:%s180]
              %200 = vst [vmem:[%s188 + $0x14] sm:%s180] %v199
              %v201 = vld [vmem:[%s187 + $0x18] sm:%s180]
              %202 = vst [vmem:[%s188 + $0x18] sm:%s180] %v201
              %v203 = vld [vmem:[%s187 + $0x1c] sm:%s180]
              %204 = vst [vmem:[%s188 + $0x1c] sm:%s180] %v203
              %v205 = vld [vmem:[%s187 + $0x40] sm:%s180]
              %206 = vst [vmem:[%s188 + $0x20] sm:%s180] %v205
              %v207 = vld [vmem:[%s187 + $0x44] sm:%s180]
              %208 = vst [vmem:[%s188 + $0x24] sm:%s180] %v207
              %v209 = vld [vmem:[%s187 + $0x48] sm:%s180]
              %210 = vst [vmem:[%s188 + $0x28] sm:%s180] %v209
              %v211 = vld [vmem:[%s187 + $0x4c] sm:%s180]
              %212 = vst [vmem:[%s188 + $0x2c] sm:%s180] %v211
              %v213 = vld [vmem:[%s187 + $0x50] sm:%s180]
              %214 = vst [vmem:[%s188 + $0x30] sm:%s180] %v213
              %v215 = vld [vmem:[%s187 + $0x54] sm:%s180]
              %216 = vst [vmem:[%s188 + $0x34] sm:%s180] %v215
              %v217 = vld [vmem:[%s187 + $0x58] sm:%s180]
              %218 = vst [vmem:[%s188 + $0x38] sm:%s180] %v217
              %v219 = vld [vmem:[%s187 + $0x5c] sm:%s180]
              %220 = vst [vmem:[%s188 + $0x3c] sm:%s180] %v219
            $region81: #{fwd.25} parent=68 // loop_footer
              %s186 = sadd.s32 1, %s182
            $region82: #{fwd.25} parent=68 // loop_footer_branch
              %181 = sbr.rel target = $region78
            $region83: #{fwd.25} parent=68 // loop_exit
              _
          $region69: #{fwd.25} parent=53 // pred_fallthru
            _
        $region54: #{fwd.25} parent=49 // pred_fallthru
          _
        // Predicated region
        $region55: #{fwd.25} parent=49 // pred_check
          _
        $region56: #{fwd.25} parent=49 // pred_check_branch
          %126 = sbr.rel (0) target = $region58
        $region57: #{fwd.25} parent=49 // pred_region
          %s128 = ssub.s32 16, 1
          loop: start=0, step=1, limit=1
          $region59: #{fwd.25} parent=57 // loop_pre_header
            _
          $region60: #{fwd.25} parent=57 // loop_header
            %s130 = sphi 0, %s134
            %p131 = scmp.ge.s32.totalorder %s130, 1
            %s135 = sphi %s120, %s120
            %s136 = sphi [#allocation5], [#allocation5]
          $region61: #{fwd.25} parent=57 // loop_header_branch
            %133 = sbr.rel (%p131) target = $region65
          $region62: #{fwd.25} parent=57 // loop_body
            %v137 = vld [vmem:[%s135] sm:%s128]
            %138 = vst [vmem:[%s136] sm:%s128] %v137
            %v139 = vld [vmem:[%s135 + $0x4] sm:%s128]
            %140 = vst [vmem:[%s136 + $0x4] sm:%s128] %v139
            %v141 = vld [vmem:[%s135 + $0x8] sm:%s128]
            %142 = vst [vmem:[%s136 + $0x8] sm:%s128] %v141
            %v143 = vld [vmem:[%s135 + $0xc] sm:%s128]
            %144 = vst [vmem:[%s136 + $0xc] sm:%s128] %v143
            %v145 = vld [vmem:[%s135 + $0x10] sm:%s128]
            %146 = vst [vmem:[%s136 + $0x10] sm:%s128] %v145
            %v147 = vld [vmem:[%s135 + $0x14] sm:%s128]
            %148 = vst [vmem:[%s136 + $0x14] sm:%s128] %v147
            %v149 = vld [vmem:[%s135 + $0x18] sm:%s128]
            %150 = vst [vmem:[%s136 + $0x18] sm:%s128] %v149
            %v151 = vld [vmem:[%s135 + $0x1c] sm:%s128]
            %152 = vst [vmem:[%s136 + $0x1c] sm:%s128] %v151
            %v153 = vld [vmem:[%s135 + $0x40] sm:%s128]
            %154 = vst [vmem:[%s136 + $0x20] sm:%s128] %v153
            %v155 = vld [vmem:[%s135 + $0x44] sm:%s128]
            %156 = vst [vmem:[%s136 + $0x24] sm:%s128] %v155
            %v157 = vld [vmem:[%s135 + $0x48] sm:%s128]
            %158 = vst [vmem:[%s136 + $0x28] sm:%s128] %v157
            %v159 = vld [vmem:[%s135 + $0x4c] sm:%s128]
            %160 = vst [vmem:[%s136 + $0x2c] sm:%s128] %v159
            %v161 = vld [vmem:[%s135 + $0x50] sm:%s128]
            %162 = vst [vmem:[%s136 + $0x30] sm:%s128] %v161
            %v163 = vld [vmem:[%s135 + $0x54] sm:%s128]
            %164 = vst [vmem:[%s136 + $0x34] sm:%s128] %v163
            %v165 = vld [vmem:[%s135 + $0x58] sm:%s128]
            %166 = vst [vmem:[%s136 + $0x38] sm:%s128] %v165
            %v167 = vld [vmem:[%s135 + $0x5c] sm:%s128]
            %168 = vst [vmem:[%s136 + $0x3c] sm:%s128] %v167
          $region63: #{fwd.25} parent=57 // loop_footer
            %s134 = sadd.s32 1, %s130
          $region64: #{fwd.25} parent=57 // loop_footer_branch
            %129 = sbr.rel target = $region60
          $region65: #{fwd.25} parent=57 // loop_exit
            _
        $region58: #{fwd.25} parent=49 // pred_fallthru
          _
      $region50: #{fwd.25} parent=45 // pred_fallthru
        _
      %221 = vnop
    $region46: #{fwd.25} parent=1 // pred_fallthru
      _
    // Predicated region
    $region84: #{fwd.25} parent=1 // pred_check
      _
    $region85: #{fwd.25} parent=1 // pred_check_branch
      %223 = sbr.rel (0) target = $region87
    $region86: #{fwd.25} parent=1 // pred_region
      _
    $region87: #{fwd.25} parent=1 // pred_fallthru
      _
    // Predicated region
    $region88: #{fwd.25} parent=1 // pred_check
      _
    $region89: #{fwd.25} parent=1 // pred_check_branch
      %225 = sbr.rel (0) target = $region91
    $region90: #{fwd.25} parent=1 // pred_region
      _
    $region91: #{fwd.25} parent=1 // pred_fallthru
      _
    // Predicated region
    $region92: #{fwd.25} parent=1 // pred_check
      _
    $region93: #{fwd.25} parent=1 // pred_check_branch
      %227 = sbr.rel (0) target = $region95
    $region94: #{fwd.25} parent=1 // pred_region
      _
    $region95: #{fwd.25} parent=1 // pred_fallthru
      _
    // Predicated region
    $region96: #{fwd.25} parent=1 // pred_check
      _
    $region97: #{fwd.25} parent=1 // pred_check_branch
      %229 = sbr.rel (0) target = $region99
    $region98: #{fwd.25} parent=1 // pred_region
      _
    $region99: #{fwd.25} parent=1 // pred_fallthru
      _
    %s230 = sadd.s32 0, 1
    %s231 = smul.u32 8, %s230
    %v232 = vld [vmem:[#allocation4] sm:$0xf]
    %v233 = vld [vmem:[#allocation4 + $0x4] sm:$0xf]
    %v234 = vld [vmem:[#allocation4 + $0x8] sm:$0xf]
    %v235 = vld [vmem:[#allocation4 + $0xc] sm:$0xf]
    %v236 = vld [vmem:[#allocation4 + $0x10] sm:$0xf]
    %v237 = vld [vmem:[#allocation4 + $0x14] sm:$0xf]
    %v238 = vld [vmem:[#allocation4 + $0x18] sm:$0xf]
    %v239 = vld [vmem:[#allocation4 + $0x1c] sm:$0xf]
    %v240 = vld [vmem:[#allocation4 + $0x20] sm:$0xf]
    %v241 = vld [vmem:[#allocation4 + $0x24] sm:$0xf]
    %v242 = vld [vmem:[#allocation4 + $0x28] sm:$0xf]
    %v243 = vld [vmem:[#allocation4 + $0x2c] sm:$0xf]
    %v244 = vld [vmem:[#allocation4 + $0x30] sm:$0xf]
    %v245 = vld [vmem:[#allocation4 + $0x34] sm:$0xf]
    %v246 = vld [vmem:[#allocation4 + $0x38] sm:$0xf]
    %v247 = vld [vmem:[#allocation4 + $0x3c] sm:$0xf]
    %v248 = vunpack.c.l.bf16 %v232
    %v249 = vunpack.c.l.bf16 %v233
    %v250 = vunpack.c.l.bf16 %v234
    %v251 = vunpack.c.l.bf16 %v235
    %v252 = vunpack.c.l.bf16 %v236
    %v253 = vunpack.c.l.bf16 %v237
    %v254 = vunpack.c.l.bf16 %v238
    %v255 = vunpack.c.l.bf16 %v239
    %v256 = vunpack.c.l.bf16 %v240
    %v257 = vunpack.c.l.bf16 %v241
    %v258 = vunpack.c.l.bf16 %v242
    %v259 = vunpack.c.l.bf16 %v243
    %v260 = vunpack.c.l.bf16 %v244
    %v261 = vunpack.c.l.bf16 %v245
    %v262 = vunpack.c.l.bf16 %v246
    %v263 = vunpack.c.l.bf16 %v247
    %vm264 = vcmp.ge.f32.partialorder %v248, 0.0
    %vm265 = vcmp.ge.f32.partialorder %v249, 0.0
    %vm266 = vcmp.ge.f32.partialorder %v250, 0.0
    %vm267 = vcmp.ge.f32.partialorder %v251, 0.0
    %vm268 = vcmp.ge.f32.partialorder %v252, 0.0
    %vm269 = vcmp.ge.f32.partialorder %v253, 0.0
    %vm270 = vcmp.ge.f32.partialorder %v254, 0.0
    %vm271 = vcmp.ge.f32.partialorder %v255, 0.0
    %vm272 = vcmp.ge.f32.partialorder %v256, 0.0
    %vm273 = vcmp.ge.f32.partialorder %v257, 0.0
    %vm274 = vcmp.ge.f32.partialorder %v258, 0.0
    %vm275 = vcmp.ge.f32.partialorder %v259, 0.0
    %vm276 = vcmp.ge.f32.partialorder %v260, 0.0
    %vm277 = vcmp.ge.f32.partialorder %v261, 0.0
    %vm278 = vcmp.ge.f32.partialorder %v262, 0.0
    %vm279 = vcmp.ge.f32.partialorder %v263, 0.0
    %v280 = vmul.f32 %v248, 0.1
    %v281 = vmul.f32 %v249, 0.1
    %v282 = vmul.f32 %v250, 0.1
    %v283 = vmul.f32 %v251, 0.1
    %v284 = vmul.f32 %v252, 0.1
    %v285 = vmul.f32 %v253, 0.1
    %v286 = vmul.f32 %v254, 0.1
    %v287 = vmul.f32 %v255, 0.1
    %v288 = vmul.f32 %v256, 0.1
    %v289 = vmul.f32 %v257, 0.1
    %v290 = vmul.f32 %v258, 0.1
    %v291 = vmul.f32 %v259, 0.1
    %v292 = vmul.f32 %v260, 0.1
    %v293 = vmul.f32 %v261, 0.1
    %v294 = vmul.f32 %v262, 0.1
    %v295 = vmul.f32 %v263, 0.1
    %v296 = vsel %vm264, %v248, %v280
    %v297 = vsel %vm265, %v249, %v281
    %v298 = vsel %vm266, %v250, %v282
    %v299 = vsel %vm267, %v251, %v283
    %v300 = vsel %vm268, %v252, %v284
    %v301 = vsel %vm269, %v253, %v285
    %v302 = vsel %vm270, %v254, %v286
    %v303 = vsel %vm271, %v255, %v287
    %v304 = vsel %vm272, %v256, %v288
    %v305 = vsel %vm273, %v257, %v289
    %v306 = vsel %vm274, %v258, %v290
    %v307 = vsel %vm275, %v259, %v291
    %v308 = vsel %vm276, %v260, %v292
    %v309 = vsel %vm277, %v261, %v293
    %v310 = vsel %vm278, %v262, %v294
    %v311 = vsel %vm279, %v263, %v295
    %vm312 = vcmask 130048
    %313 = vst.msk [vmem:[#allocation2] sm:$0xff] %vm312, %v296
    %314 = vst.msk [vmem:[#allocation2 + $0x8] sm:$0xff] %vm312, %v297
    %315 = vst.msk [vmem:[#allocation2 + $0x10] sm:$0xff] %vm312, %v298
    %316 = vst.msk [vmem:[#allocation2 + $0x18] sm:$0xff] %vm312, %v299
    %317 = vst.msk [vmem:[#allocation2 + $0x20] sm:$0xff] %vm312, %v300
    %318 = vst.msk [vmem:[#allocation2 + $0x28] sm:$0xff] %vm312, %v301
    %319 = vst.msk [vmem:[#allocation2 + $0x30] sm:$0xff] %vm312, %v302
    %320 = vst.msk [vmem:[#allocation2 + $0x38] sm:$0xff] %vm312, %v303
    %321 = vst.msk [vmem:[#allocation2 + $0x80] sm:$0xff] %vm312, %v304
    %322 = vst.msk [vmem:[#allocation2 + $0x88] sm:$0xff] %vm312, %v305
    %323 = vst.msk [vmem:[#allocation2 + $0x90] sm:$0xff] %vm312, %v306
    %324 = vst.msk [vmem:[#allocation2 + $0x98] sm:$0xff] %vm312, %v307
    %325 = vst.msk [vmem:[#allocation2 + $0xa0] sm:$0xff] %vm312, %v308
    %326 = vst.msk [vmem:[#allocation2 + $0xa8] sm:$0xff] %vm312, %v309
    %327 = vst.msk [vmem:[#allocation2 + $0xb0] sm:$0xff] %vm312, %v310
    %328 = vst.msk [vmem:[#allocation2 + $0xb8] sm:$0xff] %vm312, %v311
    %v329 = vld [vmem:[#allocation5] sm:$0xf]
    %v330 = vld [vmem:[#allocation5 + $0x4] sm:$0xf]
    %v331 = vld [vmem:[#allocation5 + $0x8] sm:$0xf]
    %v332 = vld [vmem:[#allocation5 + $0xc] sm:$0xf]
    %v333 = vld [vmem:[#allocation5 + $0x10] sm:$0xf]
    %v334 = vld [vmem:[#allocation5 + $0x14] sm:$0xf]
    %v335 = vld [vmem:[#allocation5 + $0x18] sm:$0xf]
    %v336 = vld [vmem:[#allocation5 + $0x1c] sm:$0xf]
    %v337 = vld [vmem:[#allocation5 + $0x20] sm:$0xf]
    %v338 = vld [vmem:[#allocation5 + $0x24] sm:$0xf]
    %v339 = vld [vmem:[#allocation5 + $0x28] sm:$0xf]
    %v340 = vld [vmem:[#allocation5 + $0x2c] sm:$0xf]
    %v341 = vld [vmem:[#allocation5 + $0x30] sm:$0xf]
    %v342 = vld [vmem:[#allocation5 + $0x34] sm:$0xf]
    %v343 = vld [vmem:[#allocation5 + $0x38] sm:$0xf]
    %v344 = vld [vmem:[#allocation5 + $0x3c] sm:$0xf]
    %v345 = vunpack.c.l.bf16 %v329
    %v346 = vunpack.c.l.bf16 %v330
    %v347 = vunpack.c.l.bf16 %v331
    %v348 = vunpack.c.l.bf16 %v332
    %v349 = vunpack.c.l.bf16 %v333
    %v350 = vunpack.c.l.bf16 %v334
    %v351 = vunpack.c.l.bf16 %v335
    %v352 = vunpack.c.l.bf16 %v336
    %v353 = vunpack.c.l.bf16 %v337
    %v354 = vunpack.c.l.bf16 %v338
    %v355 = vunpack.c.l.bf16 %v339
    %v356 = vunpack.c.l.bf16 %v340
    %v357 = vunpack.c.l.bf16 %v341
    %v358 = vunpack.c.l.bf16 %v342
    %v359 = vunpack.c.l.bf16 %v343
    %v360 = vunpack.c.l.bf16 %v344
    %vm361 = vcmp.ge.f32.partialorder %v345, 0.0
    %vm362 = vcmp.ge.f32.partialorder %v346, 0.0
    %vm363 = vcmp.ge.f32.partialorder %v347, 0.0
    %vm364 = vcmp.ge.f32.partialorder %v348, 0.0
    %vm365 = vcmp.ge.f32.partialorder %v349, 0.0
    %vm366 = vcmp.ge.f32.partialorder %v350, 0.0
    %vm367 = vcmp.ge.f32.partialorder %v351, 0.0
    %vm368 = vcmp.ge.f32.partialorder %v352, 0.0
    %vm369 = vcmp.ge.f32.partialorder %v353, 0.0
    %vm370 = vcmp.ge.f32.partialorder %v354, 0.0
    %vm371 = vcmp.ge.f32.partialorder %v355, 0.0
    %vm372 = vcmp.ge.f32.partialorder %v356, 0.0
    %vm373 = vcmp.ge.f32.partialorder %v357, 0.0
    %vm374 = vcmp.ge.f32.partialorder %v358, 0.0
    %vm375 = vcmp.ge.f32.partialorder %v359, 0.0
    %vm376 = vcmp.ge.f32.partialorder %v360, 0.0
    %v377 = vmul.f32 %v345, 0.1
    %v378 = vmul.f32 %v346, 0.1
    %v379 = vmul.f32 %v347, 0.1
    %v380 = vmul.f32 %v348, 0.1
    %v381 = vmul.f32 %v349, 0.1
    %v382 = vmul.f32 %v350, 0.1
    %v383 = vmul.f32 %v351, 0.1
    %v384 = vmul.f32 %v352, 0.1
    %v385 = vmul.f32 %v353, 0.1
    %v386 = vmul.f32 %v354, 0.1
    %v387 = vmul.f32 %v355, 0.1
    %v388 = vmul.f32 %v356, 0.1
    %v389 = vmul.f32 %v357, 0.1
    %v390 = vmul.f32 %v358, 0.1
    %v391 = vmul.f32 %v359, 0.1
    %v392 = vmul.f32 %v360, 0.1
    %v393 = vsel %vm361, %v345, %v377
    %v394 = vsel %vm362, %v346, %v378
    %v395 = vsel %vm363, %v347, %v379
    %v396 = vsel %vm364, %v348, %v380
    %v397 = vsel %vm365, %v349, %v381
    %v398 = vsel %vm366, %v350, %v382
    %v399 = vsel %vm367, %v351, %v383
    %v400 = vsel %vm368, %v352, %v384
    %v401 = vsel %vm369, %v353, %v385
    %v402 = vsel %vm370, %v354, %v386
    %v403 = vsel %vm371, %v355, %v387
    %v404 = vsel %vm372, %v356, %v388
    %v405 = vsel %vm373, %v357, %v389
    %v406 = vsel %vm374, %v358, %v390
    %v407 = vsel %vm375, %v359, %v391
    %v408 = vsel %vm376, %v360, %v392
    %409 = vst.msk [vmem:[#allocation2 + $0x40] sm:$0xff] %vm312, %v393
    %410 = vst.msk [vmem:[#allocation2 + $0x48] sm:$0xff] %vm312, %v394
    %411 = vst.msk [vmem:[#allocation2 + $0x50] sm:$0xff] %vm312, %v395
    %412 = vst.msk [vmem:[#allocation2 + $0x58] sm:$0xff] %vm312, %v396
    %413 = vst.msk [vmem:[#allocation2 + $0x60] sm:$0xff] %vm312, %v397
    %414 = vst.msk [vmem:[#allocation2 + $0x68] sm:$0xff] %vm312, %v398
    %415 = vst.msk [vmem:[#allocation2 + $0x70] sm:$0xff] %vm312, %v399
    %416 = vst.msk [vmem:[#allocation2 + $0x78] sm:$0xff] %vm312, %v400
    %417 = vst.msk [vmem:[#allocation2 + $0xc0] sm:$0xff] %vm312, %v401
    %418 = vst.msk [vmem:[#allocation2 + $0xc8] sm:$0xff] %vm312, %v402
    %419 = vst.msk [vmem:[#allocation2 + $0xd0] sm:$0xff] %vm312, %v403
    %420 = vst.msk [vmem:[#allocation2 + $0xd8] sm:$0xff] %vm312, %v404
    %421 = vst.msk [vmem:[#allocation2 + $0xe0] sm:$0xff] %vm312, %v405
    %422 = vst.msk [vmem:[#allocation2 + $0xe8] sm:$0xff] %vm312, %v406
    %423 = vst.msk [vmem:[#allocation2 + $0xf0] sm:$0xff] %vm312, %v407
    %424 = vst.msk [vmem:[#allocation2 + $0xf8] sm:$0xff] %vm312, %v408
    %v425 = vld [vmem:[#allocation2] sm:$0xff]
    %v426 = vld [vmem:[#allocation2 + $0x8] sm:$0xff]
    %v427 = vld [vmem:[#allocation2 + $0x10] sm:$0xff]
    %v428 = vld [vmem:[#allocation2 + $0x18] sm:$0xff]
    %v429 = vld [vmem:[#allocation2 + $0x20] sm:$0xff]
    %v430 = vld [vmem:[#allocation2 + $0x28] sm:$0xff]
    %v431 = vld [vmem:[#allocation2 + $0x30] sm:$0xff]
    %v432 = vld [vmem:[#allocation2 + $0x38] sm:$0xff]
    %v433 = vld [vmem:[#allocation2 + $0x80] sm:$0xff]
    %v434 = vld [vmem:[#allocation2 + $0x88] sm:$0xff]
    %v435 = vld [vmem:[#allocation2 + $0x90] sm:$0xff]
    %v436 = vld [vmem:[#allocation2 + $0x98] sm:$0xff]
    %v437 = vld [vmem:[#allocation2 + $0xa0] sm:$0xff]
    %v438 = vld [vmem:[#allocation2 + $0xa8] sm:$0xff]
    %v439 = vld [vmem:[#allocation2 + $0xb0] sm:$0xff]
    %v440 = vld [vmem:[#allocation2 + $0xb8] sm:$0xff]
    %v441 = vld [vmem:[%s2] sm:$0x1]
    %v443 = vperm.slane %v441, 0
    %v445 = vmul.f32 %v425, %v443
    %v446 = vmul.f32 %v426, %v443
    %v447 = vmul.f32 %v427, %v443
    %v448 = vmul.f32 %v428, %v443
    %v449 = vmul.f32 %v429, %v443
    %v450 = vmul.f32 %v430, %v443
    %v451 = vmul.f32 %v431, %v443
    %v452 = vmul.f32 %v432, %v443
    %v453 = vmul.f32 %v433, %v443
    %v454 = vmul.f32 %v434, %v443
    %v455 = vmul.f32 %v435, %v443
    %v456 = vmul.f32 %v436, %v443
    %v457 = vmul.f32 %v437, %v443
    %v458 = vmul.f32 %v438, %v443
    %v459 = vmul.f32 %v439, %v443
    %v460 = vmul.f32 %v440, %v443
    %v461 = vadd.f32 %v445, 0.0
    %v462 = vadd.f32 %v446, 0.0
    %v463 = vadd.f32 %v447, 0.0
    %v464 = vadd.f32 %v448, 0.0
    %v465 = vadd.f32 %v449, 0.0
    %v466 = vadd.f32 %v450, 0.0
    %v467 = vadd.f32 %v451, 0.0
    %v468 = vadd.f32 %v452, 0.0
    %v469 = vadd.f32 %v453, 0.0
    %v470 = vadd.f32 %v454, 0.0
    %v471 = vadd.f32 %v455, 0.0
    %v472 = vadd.f32 %v456, 0.0
    %v473 = vadd.f32 %v457, 0.0
    %v474 = vadd.f32 %v458, 0.0
    %v475 = vadd.f32 %v459, 0.0
    %v476 = vadd.f32 %v460, 0.0
    %v477 = vld [vmem:[#allocation2 + $0x1] sm:$0xff]
    %v478 = vld [vmem:[#allocation2 + $0x9] sm:$0xff]
    %v479 = vld [vmem:[#allocation2 + $0x11] sm:$0xff]
    %v480 = vld [vmem:[#allocation2 + $0x19] sm:$0xff]
    %v481 = vld [vmem:[#allocation2 + $0x21] sm:$0xff]
    %v482 = vld [vmem:[#allocation2 + $0x29] sm:$0xff]
    %v483 = vld [vmem:[#allocation2 + $0x31] sm:$0xff]
    %v484 = vld [vmem:[#allocation2 + $0x39] sm:$0xff]
    %v485 = vld [vmem:[#allocation2 + $0x81] sm:$0xff]
    %v486 = vld [vmem:[#allocation2 + $0x89] sm:$0xff]
    %v487 = vld [vmem:[#allocation2 + $0x91] sm:$0xff]
    %v488 = vld [vmem:[#allocation2 + $0x99] sm:$0xff]
    %v489 = vld [vmem:[#allocation2 + $0xa1] sm:$0xff]
    %v490 = vld [vmem:[#allocation2 + $0xa9] sm:$0xff]
    %v491 = vld [vmem:[#allocation2 + $0xb1] sm:$0xff]
    %v492 = vld [vmem:[#allocation2 + $0xb9] sm:$0xff]
    %s493 = scalar_lea.vmem %s2, 1
    %v494 = vld [vmem:[%s493] sm:$0x1]
    %v496 = vperm.slane %v494, 0
    %v498 = vmul.f32 %v477, %v496
    %v499 = vmul.f32 %v478, %v496
    %v500 = vmul.f32 %v479, %v496
    %v501 = vmul.f32 %v480, %v496
    %v502 = vmul.f32 %v481, %v496
    %v503 = vmul.f32 %v482, %v496
    %v504 = vmul.f32 %v483, %v496
    %v505 = vmul.f32 %v484, %v496
    %v506 = vmul.f32 %v485, %v496
    %v507 = vmul.f32 %v486, %v496
    %v508 = vmul.f32 %v487, %v496
    %v509 = vmul.f32 %v488, %v496
    %v510 = vmul.f32 %v489, %v496
    %v511 = vmul.f32 %v490, %v496
    %v512 = vmul.f32 %v491, %v496
    %v513 = vmul.f32 %v492, %v496
    %v514 = vadd.f32 %v461, %v498
    %v515 = vadd.f32 %v462, %v499
    %v516 = vadd.f32 %v463, %v500
    %v517 = vadd.f32 %v464, %v501
    %v518 = vadd.f32 %v465, %v502
    %v519 = vadd.f32 %v466, %v503
    %v520 = vadd.f32 %v467, %v504
    %v521 = vadd.f32 %v468, %v505
    %v522 = vadd.f32 %v469, %v506
    %v523 = vadd.f32 %v470, %v507
    %v524 = vadd.f32 %v471, %v508
    %v525 = vadd.f32 %v472, %v509
    %v526 = vadd.f32 %v473, %v510
    %v527 = vadd.f32 %v474, %v511
    %v528 = vadd.f32 %v475, %v512
    %v529 = vadd.f32 %v476, %v513
    %v530 = vld [vmem:[#allocation2 + $0x2] sm:$0xff]
    %v531 = vld [vmem:[#allocation2 + $0xa] sm:$0xff]
    %v532 = vld [vmem:[#allocation2 + $0x12] sm:$0xff]
    %v533 = vld [vmem:[#allocation2 + $0x1a] sm:$0xff]
    %v534 = vld [vmem:[#allocation2 + $0x22] sm:$0xff]
    %v535 = vld [vmem:[#allocation2 + $0x2a] sm:$0xff]
    %v536 = vld [vmem:[#allocation2 + $0x32] sm:$0xff]
    %v537 = vld [vmem:[#allocation2 + $0x3a] sm:$0xff]
    %v538 = vld [vmem:[#allocation2 + $0x82] sm:$0xff]
    %v539 = vld [vmem:[#allocation2 + $0x8a] sm:$0xff]
    %v540 = vld [vmem:[#allocation2 + $0x92] sm:$0xff]
    %v541 = vld [vmem:[#allocation2 + $0x9a] sm:$0xff]
    %v542 = vld [vmem:[#allocation2 + $0xa2] sm:$0xff]
    %v543 = vld [vmem:[#allocation2 + $0xaa] sm:$0xff]
    %v544 = vld [vmem:[#allocation2 + $0xb2] sm:$0xff]
    %v545 = vld [vmem:[#allocation2 + $0xba] sm:$0xff]
    %s546 = scalar_lea.vmem %s2, 2
    %v547 = vld [vmem:[%s546] sm:$0x1]
    %v549 = vperm.slane %v547, 0
    %v551 = vmul.f32 %v530, %v549
    %v552 = vmul.f32 %v531, %v549
    %v553 = vmul.f32 %v532, %v549
    %v554 = vmul.f32 %v533, %v549
    %v555 = vmul.f32 %v534, %v549
    %v556 = vmul.f32 %v535, %v549
    %v557 = vmul.f32 %v536, %v549
    %v558 = vmul.f32 %v537, %v549
    %v559 = vmul.f32 %v538, %v549
    %v560 = vmul.f32 %v539, %v549
    %v561 = vmul.f32 %v540, %v549
    %v562 = vmul.f32 %v541, %v549
    %v563 = vmul.f32 %v542, %v549
    %v564 = vmul.f32 %v543, %v549
    %v565 = vmul.f32 %v544, %v549
    %v566 = vmul.f32 %v545, %v549
    %v567 = vadd.f32 %v514, %v551
    %v568 = vadd.f32 %v515, %v552
    %v569 = vadd.f32 %v516, %v553
    %v570 = vadd.f32 %v517, %v554
    %v571 = vadd.f32 %v518, %v555
    %v572 = vadd.f32 %v519, %v556
    %v573 = vadd.f32 %v520, %v557
    %v574 = vadd.f32 %v521, %v558
    %v575 = vadd.f32 %v522, %v559
    %v576 = vadd.f32 %v523, %v560
    %v577 = vadd.f32 %v524, %v561
    %v578 = vadd.f32 %v525, %v562
    %v579 = vadd.f32 %v526, %v563
    %v580 = vadd.f32 %v527, %v564
    %v581 = vadd.f32 %v528, %v565
    %v582 = vadd.f32 %v529, %v566
    %v583 = vld [vmem:[#allocation2 + $0x3] sm:$0xff]
    %v584 = vld [vmem:[#allocation2 + $0xb] sm:$0xff]
    %v585 = vld [vmem:[#allocation2 + $0x13] sm:$0xff]
    %v586 = vld [vmem:[#allocation2 + $0x1b] sm:$0xff]
    %v587 = vld [vmem:[#allocation2 + $0x23] sm:$0xff]
    %v588 = vld [vmem:[#allocation2 + $0x2b] sm:$0xff]
    %v589 = vld [vmem:[#allocation2 + $0x33] sm:$0xff]
    %v590 = vld [vmem:[#allocation2 + $0x3b] sm:$0xff]
    %v591 = vld [vmem:[#allocation2 + $0x83] sm:$0xff]
    %v592 = vld [vmem:[#allocation2 + $0x8b] sm:$0xff]
    %v593 = vld [vmem:[#allocation2 + $0x93] sm:$0xff]
    %v594 = vld [vmem:[#allocation2 + $0x9b] sm:$0xff]
    %v595 = vld [vmem:[#allocation2 + $0xa3] sm:$0xff]
    %v596 = vld [vmem:[#allocation2 + $0xab] sm:$0xff]
    %v597 = vld [vmem:[#allocation2 + $0xb3] sm:$0xff]
    %v598 = vld [vmem:[#allocation2 + $0xbb] sm:$0xff]
    %s599 = scalar_lea.vmem %s2, 3
    %v600 = vld [vmem:[%s599] sm:$0x1]
    %v602 = vperm.slane %v600, 0
    %v604 = vmul.f32 %v583, %v602
    %v605 = vmul.f32 %v584, %v602
    %v606 = vmul.f32 %v585, %v602
    %v607 = vmul.f32 %v586, %v602
    %v608 = vmul.f32 %v587, %v602
    %v609 = vmul.f32 %v588, %v602
    %v610 = vmul.f32 %v589, %v602
    %v611 = vmul.f32 %v590, %v602
    %v612 = vmul.f32 %v591, %v602
    %v613 = vmul.f32 %v592, %v602
    %v614 = vmul.f32 %v593, %v602
    %v615 = vmul.f32 %v594, %v602
    %v616 = vmul.f32 %v595, %v602
    %v617 = vmul.f32 %v596, %v602
    %v618 = vmul.f32 %v597, %v602
    %v619 = vmul.f32 %v598, %v602
    %v620 = vadd.f32 %v567, %v604
    %v621 = vadd.f32 %v568, %v605
    %v622 = vadd.f32 %v569, %v606
    %v623 = vadd.f32 %v570, %v607
    %v624 = vadd.f32 %v571, %v608
    %v625 = vadd.f32 %v572, %v609
    %v626 = vadd.f32 %v573, %v610
    %v627 = vadd.f32 %v574, %v611
    %v628 = vadd.f32 %v575, %v612
    %v629 = vadd.f32 %v576, %v613
    %v630 = vadd.f32 %v577, %v614
    %v631 = vadd.f32 %v578, %v615
    %v632 = vadd.f32 %v579, %v616
    %v633 = vadd.f32 %v580, %v617
    %v634 = vadd.f32 %v581, %v618
    %v635 = vadd.f32 %v582, %v619
    %v636 = vld [vmem:[#allocation2 + $0x4] sm:$0xff]
    %v637 = vld [vmem:[#allocation2 + $0xc] sm:$0xff]
    %v638 = vld [vmem:[#allocation2 + $0x14] sm:$0xff]
    %v639 = vld [vmem:[#allocation2 + $0x1c] sm:$0xff]
    %v640 = vld [vmem:[#allocation2 + $0x24] sm:$0xff]
    %v641 = vld [vmem:[#allocation2 + $0x2c] sm:$0xff]
    %v642 = vld [vmem:[#allocation2 + $0x34] sm:$0xff]
    %v643 = vld [vmem:[#allocation2 + $0x3c] sm:$0xff]
    %v644 = vld [vmem:[#allocation2 + $0x84] sm:$0xff]
    %v645 = vld [vmem:[#allocation2 + $0x8c] sm:$0xff]
    %v646 = vld [vmem:[#allocation2 + $0x94] sm:$0xff]
    %v647 = vld [vmem:[#allocation2 + $0x9c] sm:$0xff]
    %v648 = vld [vmem:[#allocation2 + $0xa4] sm:$0xff]
    %v649 = vld [vmem:[#allocation2 + $0xac] sm:$0xff]
    %v650 = vld [vmem:[#allocation2 + $0xb4] sm:$0xff]
    %v651 = vld [vmem:[#allocation2 + $0xbc] sm:$0xff]
    %s652 = scalar_lea.vmem %s2, 4
    %v653 = vld [vmem:[%s652] sm:$0x1]
    %v655 = vperm.slane %v653, 0
    %v657 = vmul.f32 %v636, %v655
    %v658 = vmul.f32 %v637, %v655
    %v659 = vmul.f32 %v638, %v655
    %v660 = vmul.f32 %v639, %v655
    %v661 = vmul.f32 %v640, %v655
    %v662 = vmul.f32 %v641, %v655
    %v663 = vmul.f32 %v642, %v655
    %v664 = vmul.f32 %v643, %v655
    %v665 = vmul.f32 %v644, %v655
    %v666 = vmul.f32 %v645, %v655
    %v667 = vmul.f32 %v646, %v655
    %v668 = vmul.f32 %v647, %v655
    %v669 = vmul.f32 %v648, %v655
    %v670 = vmul.f32 %v649, %v655
    %v671 = vmul.f32 %v650, %v655
    %v672 = vmul.f32 %v651, %v655
    %v673 = vadd.f32 %v620, %v657
    %v674 = vadd.f32 %v621, %v658
    %v675 = vadd.f32 %v622, %v659
    %v676 = vadd.f32 %v623, %v660
    %v677 = vadd.f32 %v624, %v661
    %v678 = vadd.f32 %v625, %v662
    %v679 = vadd.f32 %v626, %v663
    %v680 = vadd.f32 %v627, %v664
    %v681 = vadd.f32 %v628, %v665
    %v682 = vadd.f32 %v629, %v666
    %v683 = vadd.f32 %v630, %v667
    %v684 = vadd.f32 %v631, %v668
    %v685 = vadd.f32 %v632, %v669
    %v686 = vadd.f32 %v633, %v670
    %v687 = vadd.f32 %v634, %v671
    %v688 = vadd.f32 %v635, %v672
    %v689 = vld [vmem:[#allocation2 + $0x5] sm:$0xff]
    %v690 = vld [vmem:[#allocation2 + $0xd] sm:$0xff]
    %v691 = vld [vmem:[#allocation2 + $0x15] sm:$0xff]
    %v692 = vld [vmem:[#allocation2 + $0x1d] sm:$0xff]
    %v693 = vld [vmem:[#allocation2 + $0x25] sm:$0xff]
    %v694 = vld [vmem:[#allocation2 + $0x2d] sm:$0xff]
    %v695 = vld [vmem:[#allocation2 + $0x35] sm:$0xff]
    %v696 = vld [vmem:[#allocation2 + $0x3d] sm:$0xff]
    %v697 = vld [vmem:[#allocation2 + $0x85] sm:$0xff]
    %v698 = vld [vmem:[#allocation2 + $0x8d] sm:$0xff]
    %v699 = vld [vmem:[#allocation2 + $0x95] sm:$0xff]
    %v700 = vld [vmem:[#allocation2 + $0x9d] sm:$0xff]
    %v701 = vld [vmem:[#allocation2 + $0xa5] sm:$0xff]
    %v702 = vld [vmem:[#allocation2 + $0xad] sm:$0xff]
    %v703 = vld [vmem:[#allocation2 + $0xb5] sm:$0xff]
    %v704 = vld [vmem:[#allocation2 + $0xbd] sm:$0xff]
    %s705 = scalar_lea.vmem %s2, 5
    %v706 = vld [vmem:[%s705] sm:$0x1]
    %v708 = vperm.slane %v706, 0
    %v710 = vmul.f32 %v689, %v708
    %v711 = vmul.f32 %v690, %v708
    %v712 = vmul.f32 %v691, %v708
    %v713 = vmul.f32 %v692, %v708
    %v714 = vmul.f32 %v693, %v708
    %v715 = vmul.f32 %v694, %v708
    %v716 = vmul.f32 %v695, %v708
    %v717 = vmul.f32 %v696, %v708
    %v718 = vmul.f32 %v697, %v708
    %v719 = vmul.f32 %v698, %v708
    %v720 = vmul.f32 %v699, %v708
    %v721 = vmul.f32 %v700, %v708
    %v722 = vmul.f32 %v701, %v708
    %v723 = vmul.f32 %v702, %v708
    %v724 = vmul.f32 %v703, %v708
    %v725 = vmul.f32 %v704, %v708
    %v726 = vadd.f32 %v673, %v710
    %v727 = vadd.f32 %v674, %v711
    %v728 = vadd.f32 %v675, %v712
    %v729 = vadd.f32 %v676, %v713
    %v730 = vadd.f32 %v677, %v714
    %v731 = vadd.f32 %v678, %v715
    %v732 = vadd.f32 %v679, %v716
    %v733 = vadd.f32 %v680, %v717
    %v734 = vadd.f32 %v681, %v718
    %v735 = vadd.f32 %v682, %v719
    %v736 = vadd.f32 %v683, %v720
    %v737 = vadd.f32 %v684, %v721
    %v738 = vadd.f32 %v685, %v722
    %v739 = vadd.f32 %v686, %v723
    %v740 = vadd.f32 %v687, %v724
    %v741 = vadd.f32 %v688, %v725
    %v742 = vld [vmem:[#allocation2 + $0x6] sm:$0xff]
    %v743 = vld [vmem:[#allocation2 + $0xe] sm:$0xff]
    %v744 = vld [vmem:[#allocation2 + $0x16] sm:$0xff]
    %v745 = vld [vmem:[#allocation2 + $0x1e] sm:$0xff]
    %v746 = vld [vmem:[#allocation2 + $0x26] sm:$0xff]
    %v747 = vld [vmem:[#allocation2 + $0x2e] sm:$0xff]
    %v748 = vld [vmem:[#allocation2 + $0x36] sm:$0xff]
    %v749 = vld [vmem:[#allocation2 + $0x3e] sm:$0xff]
    %v750 = vld [vmem:[#allocation2 + $0x86] sm:$0xff]
    %v751 = vld [vmem:[#allocation2 + $0x8e] sm:$0xff]
    %v752 = vld [vmem:[#allocation2 + $0x96] sm:$0xff]
    %v753 = vld [vmem:[#allocation2 + $0x9e] sm:$0xff]
    %v754 = vld [vmem:[#allocation2 + $0xa6] sm:$0xff]
    %v755 = vld [vmem:[#allocation2 + $0xae] sm:$0xff]
    %v756 = vld [vmem:[#allocation2 + $0xb6] sm:$0xff]
    %v757 = vld [vmem:[#allocation2 + $0xbe] sm:$0xff]
    %s758 = scalar_lea.vmem %s2, 6
    %v759 = vld [vmem:[%s758] sm:$0x1]
    %v761 = vperm.slane %v759, 0
    %v763 = vmul.f32 %v742, %v761
    %v764 = vmul.f32 %v743, %v761
    %v765 = vmul.f32 %v744, %v761
    %v766 = vmul.f32 %v745, %v761
    %v767 = vmul.f32 %v746, %v761
    %v768 = vmul.f32 %v747, %v761
    %v769 = vmul.f32 %v748, %v761
    %v770 = vmul.f32 %v749, %v761
    %v771 = vmul.f32 %v750, %v761
    %v772 = vmul.f32 %v751, %v761
    %v773 = vmul.f32 %v752, %v761
    %v774 = vmul.f32 %v753, %v761
    %v775 = vmul.f32 %v754, %v761
    %v776 = vmul.f32 %v755, %v761
    %v777 = vmul.f32 %v756, %v761
    %v778 = vmul.f32 %v757, %v761
    %v779 = vadd.f32 %v726, %v763
    %v780 = vadd.f32 %v727, %v764
    %v781 = vadd.f32 %v728, %v765
    %v782 = vadd.f32 %v729, %v766
    %v783 = vadd.f32 %v730, %v767
    %v784 = vadd.f32 %v731, %v768
    %v785 = vadd.f32 %v732, %v769
    %v786 = vadd.f32 %v733, %v770
    %v787 = vadd.f32 %v734, %v771
    %v788 = vadd.f32 %v735, %v772
    %v789 = vadd.f32 %v736, %v773
    %v790 = vadd.f32 %v737, %v774
    %v791 = vadd.f32 %v738, %v775
    %v792 = vadd.f32 %v739, %v776
    %v793 = vadd.f32 %v740, %v777
    %v794 = vadd.f32 %v741, %v778
    %v795 = vsel %vm312, %v779, 0.0
    %796 = vadd.xlane.f32.xlu0 %v795
    %v797 = vpop.xlane.xlu0 %796
    %v798 = vsel %vm312, %v780, 0.0
    %799 = vadd.xlane.f32.xlu0 %v798
    %v800 = vpop.xlane.xlu0 %799
    %v801 = vsel %vm312, %v781, 0.0
    %802 = vadd.xlane.f32.xlu0 %v801
    %v803 = vpop.xlane.xlu0 %802
    %v804 = vsel %vm312, %v782, 0.0
    %805 = vadd.xlane.f32.xlu0 %v804
    %v806 = vpop.xlane.xlu0 %805
    %v807 = vsel %vm312, %v783, 0.0
    %808 = vadd.xlane.f32.xlu0 %v807
    %v809 = vpop.xlane.xlu0 %808
    %v810 = vsel %vm312, %v784, 0.0
    %811 = vadd.xlane.f32.xlu0 %v810
    %v812 = vpop.xlane.xlu0 %811
    %v813 = vsel %vm312, %v785, 0.0
    %814 = vadd.xlane.f32.xlu0 %v813
    %v815 = vpop.xlane.xlu0 %814
    %v816 = vsel %vm312, %v786, 0.0
    %817 = vadd.xlane.f32.xlu0 %v816
    %v818 = vpop.xlane.xlu0 %817
    %v819 = vsel %vm312, %v787, 0.0
    %820 = vadd.xlane.f32.xlu0 %v819
    %v821 = vpop.xlane.xlu0 %820
    %v822 = vsel %vm312, %v788, 0.0
    %823 = vadd.xlane.f32.xlu0 %v822
    %v824 = vpop.xlane.xlu0 %823
    %v825 = vsel %vm312, %v789, 0.0
    %826 = vadd.xlane.f32.xlu0 %v825
    %v827 = vpop.xlane.xlu0 %826
    %v828 = vsel %vm312, %v790, 0.0
    %829 = vadd.xlane.f32.xlu0 %v828
    %v830 = vpop.xlane.xlu0 %829
    %v831 = vsel %vm312, %v791, 0.0
    %832 = vadd.xlane.f32.xlu0 %v831
    %v833 = vpop.xlane.xlu0 %832
    %v834 = vsel %vm312, %v792, 0.0
    %835 = vadd.xlane.f32.xlu0 %v834
    %v836 = vpop.xlane.xlu0 %835
    %v837 = vsel %vm312, %v793, 0.0
    %838 = vadd.xlane.f32.xlu0 %v837
    %v839 = vpop.xlane.xlu0 %838
    %v840 = vsel %vm312, %v794, 0.0
    %841 = vadd.xlane.f32.xlu0 %v840
    %v842 = vpop.xlane.xlu0 %841
    %v843 = vld [vmem:[#allocation3] sm:$0x1]
    %v845 = vperm.slane %v843, 0
    %846 = vset.pattern.permute.xlu0 0
    %847 = vperm.xlu0 %846, %v845
    %v848 = vpop.permute.xlu0 %847
    %v850 = vadd.f32 %v797, %v848
    %v851 = vadd.f32 %v800, %v848
    %v852 = vadd.f32 %v803, %v848
    %v853 = vadd.f32 %v806, %v848
    %v854 = vadd.f32 %v809, %v848
    %v855 = vadd.f32 %v812, %v848
    %v856 = vadd.f32 %v815, %v848
    %v857 = vadd.f32 %v818, %v848
    %v858 = vadd.f32 %v821, %v848
    %v859 = vadd.f32 %v824, %v848
    %v860 = vadd.f32 %v827, %v848
    %v861 = vadd.f32 %v830, %v848
    %v862 = vadd.f32 %v833, %v848
    %v863 = vadd.f32 %v836, %v848
    %v864 = vadd.f32 %v839, %v848
    %v865 = vadd.f32 %v842, %v848
    %v866 = vtanh.pop %v850
    %v867 = vtanh.pop %v851
    %v868 = vtanh.pop %v852
    %v869 = vtanh.pop %v853
    %v870 = vtanh.pop %v854
    %v871 = vtanh.pop %v855
    %v872 = vtanh.pop %v856
    %v873 = vtanh.pop %v857
    %v874 = vtanh.pop %v858
    %v875 = vtanh.pop %v859
    %v876 = vtanh.pop %v860
    %v877 = vtanh.pop %v861
    %v878 = vtanh.pop %v862
    %v879 = vtanh.pop %v863
    %v880 = vtanh.pop %v864
    %v881 = vtanh.pop %v865
    %v898 = vlaneseq
    %v899 = vand.u32 %v898, 127
    %v900 = vperm.slane %v866, %v899
    %v901 = vadd.s32 %v899, 4294967288
    %v902 = vperm.slane %v867, %v901
    %vm903 = vcmask 130112
    %v904 = vsel %vm903, %v902, %v900
    %v905 = vadd.s32 %v899, 4294967280
    %v906 = vperm.slane %v868, %v905
    %vm907 = vcmask 195712
    %v908 = vsel %vm907, %v906, %v904
    %v909 = vadd.s32 %v899, 4294967272
    %v910 = vperm.slane %v869, %v909
    %vm911 = vcmask 261312
    %v912 = vsel %vm911, %v910, %v908
    %v913 = vadd.s32 %v899, 4294967264
    %v914 = vperm.slane %v870, %v913
    %vm915 = vcmask 326912
    %v916 = vsel %vm915, %v914, %v912
    %v917 = vadd.s32 %v899, 4294967256
    %v918 = vperm.slane %v871, %v917
    %vm919 = vcmask 392512
    %v920 = vsel %vm919, %v918, %v916
    %v921 = vadd.s32 %v899, 4294967248
    %v922 = vperm.slane %v872, %v921
    %vm923 = vcmask 458112
    %v924 = vsel %vm923, %v922, %v920
    %v925 = vadd.s32 %v899, 4294967240
    %v926 = vperm.slane %v873, %v925
    %vm927 = vcmask 523712
    %v928 = vsel %vm927, %v926, %v924
    %v929 = vperm.slane %v874, %v899
    %v930 = vperm.slane %v875, %v901
    %v931 = vsel %vm903, %v930, %v929
    %v932 = vperm.slane %v876, %v905
    %v933 = vsel %vm907, %v932, %v931
    %v934 = vperm.slane %v877, %v909
    %v935 = vsel %vm911, %v934, %v933
    %v936 = vperm.slane %v878, %v913
    %v937 = vsel %vm915, %v936, %v935
    %v938 = vperm.slane %v879, %v917
    %v939 = vsel %vm919, %v938, %v937
    %v940 = vperm.slane %v880, %v921
    %v941 = vsel %vm923, %v940, %v939
    %v942 = vperm.slane %v881, %v925
    %v943 = vsel %vm927, %v942, %v941
    %vm944 = vcmask 1041409
    %v945 = vsel %vm944, %v943, %v928
    %vm947 = vcmask 517120
    %948 = vst.msk [vmem:[#allocation6] sm:$0x3] %vm947, %v945
    // Predicated region
    $region100: #{fwd.25} parent=1 // pred_check
      _
    $region101: #{fwd.25} parent=1 // pred_check_branch
      %950 = sbr.rel (0) target = $region103
    $region102: #{fwd.25} parent=1 // pred_region
      %952 = vsyncadd [#allocation7], 0
      %s954 = sshll.u32 [#allocation6], 4
      %s955 = int_to_ptr.vmem [resolvable:$true] %s954
      %s956 = sshll.u32 %s4, 4
      %s957 = int_to_ptr.hbm [resolvable:$true] %s956
      %959 = dma.vmem_to_hbm [thread:$0]  %s955, 32, %s957, [#allocation7]
    $region103: #{fwd.25} parent=1 // pred_fallthru
      _
    // Predicated region
    $region104: #{fwd.25} parent=1 // pred_check
      _
    $region105: #{fwd.25} parent=1 // pred_check_branch
      %961 = sbr.rel (0) target = $region107
    $region106: #{fwd.25} parent=1 // pred_region
      %963 = dma.done [#allocation7], 32
    $region107: #{fwd.25} parent=1 // pred_fallthru
      _
    %964 = vsyncpa [#allocation7], 1

</llo_original>
